<compile_context>
chip_gen: v5e
topology: v5e:2x2
jax: 0.10.0
libtpu: 0.0.40
codegen_flags: <defaults>
</compile_context>

<pallas_src>
import jax
import jax.numpy as jnp
from jax.experimental import pallas as pl
from jax.experimental.pallas import tpu as pltpu

EPS = 1e-5
NUM_BITS = 8
IN_CH = NUM_BITS * 2          # 16
H1, H2, H3 = 1024, 1024, 512
OUT_PAD = 128                 # lane-dense width for the final layer / output


def mimo_decoder_kernel(x_ref,
                        w1_ref, g1_ref, be1_ref,
                        s2_ref, g2_ref, be2_ref,
                        s3_ref, g3_ref, be3_ref,
                        b4_ref,
                        w2_hbm, w3_hbm, w4_hbm,
                        o_ref,
                        w2_buf, w3_buf, w4_buf, sem):
    """Entire MLP forward fused in one kernel."""
    # Kick off the big weight DMAs immediately; earlier-layer compute hides them.
    cp2 = pltpu.make_async_copy(w2_hbm, w2_buf, sem.at[0])
    cp3 = pltpu.make_async_copy(w3_hbm, w3_buf, sem.at[1])
    cp4 = pltpu.make_async_copy(w4_hbm, w4_buf, sem.at[2])
    cp2.start()
    cp3.start()
    cp4.start()

    def dot_bf16(h_f32, w):
        # bf16 x bf16 -> f32 accumulation on the MXU (native on v5e/v6e/v7x).
        return jnp.dot(h_f32.astype(jnp.bfloat16), w.astype(jnp.bfloat16),
                       preferred_element_type=jnp.float32)

    def bn_relu(h, g_ref, be_ref):
        # Training-mode BatchNorm1d (batch mean, biased batch var) fused with ReLU
        # into a single scale/shift FMA over the activation tile.
        mean = jnp.mean(h, axis=0, keepdims=True)
        centered = h - mean
        var = jnp.mean(centered * centered, axis=0, keepdims=True)
        scale = g_ref[...] * jax.lax.rsqrt(var + EPS)      # rsqrt -> EUP slot
        shift = be_ref[...] - mean * scale
        return jnp.maximum(h * scale + shift, 0.0)

    x = x_ref[...].astype(jnp.float32)

    # Layer 1: tiny bf16 weight, already VMEM-resident via BlockSpec.
    h = bn_relu(dot_bf16(x, w1_ref[...]), g1_ref, be1_ref)

    # Layer 2: int8 weight (dequant via per-output-channel scale on the (B, H2) tile).
    cp2.wait()
    h = bn_relu(dot_bf16(h, w2_buf[...]) * s2_ref[...], g2_ref, be2_ref)

    # Layer 3: int8 weight.
    cp3.wait()
    h = bn_relu(dot_bf16(h, w3_buf[...]) * s3_ref[...], g3_ref, be3_ref)

    # Layer 4 (lane-padded to 128 outputs) + sigmoid; only b4 survives (b1..b3 cancel).
    cp4.wait()
    logits = dot_bf16(h, w4_buf[...]) + b4_ref[...]
    o_ref[...] = (1.0 / (1.0 + jnp.exp(-logits))).astype(o_ref.dtype)


def init_params(key):
    """PyTorch-style init: Linear W,b ~ U(-1/sqrt(fan_in), +); BN gamma=1, beta=0.
    Weights stored as (in, out); vectors as (1, out)."""
    dims = [(IN_CH, H1), (H1, H2), (H2, H3), (H3, NUM_BITS)]
    params = []
    keys = jax.random.split(key, 2 * len(dims))
    for i, (fin, fout) in enumerate(dims):
        bound = 1.0 / (fin ** 0.5)
        w = jax.random.uniform(keys[2 * i], (fin, fout), jnp.float32, -bound, bound)
        b = jax.random.uniform(keys[2 * i + 1], (1, fout), jnp.float32, -bound, bound)
        params.append((w, b))
    bn = [(jnp.ones((1, d), jnp.float32), jnp.zeros((1, d), jnp.float32))
          for d in (H1, H2, H3)]
    return params, bn


def quantize_int8_per_col(w):
    """Symmetric per-output-channel int8 quantization of an (in, out) weight."""
    amax = jnp.max(jnp.abs(w), axis=0, keepdims=True)
    scale = (jnp.maximum(amax, 1e-12) / 127.0).astype(jnp.float32)   # (1, out)
    q = jnp.clip(jnp.round(w / scale), -127.0, 127.0).astype(jnp.int8)
    return q, scale


def mimo_decoder_forward(x, params, bn):
    (w1, _b1), (w2, _b2), (w3, _b3), (w4, b4) = params
    (g1, be1), (g2, be2), (g3, be3) = bn
    B = x.shape[0]

    # W1 is tiny -> bf16.  W2/W3 dominate HBM traffic -> int8 + per-channel scale.
    # b1/b2/b3 are intentionally NOT passed: cancelled exactly by training-mode BN.
    w1b = w1.astype(jnp.bfloat16)
    w2q, s2 = quantize_int8_per_col(w2)
    w3q, s3 = quantize_int8_per_col(w3)

    # Pad the last layer to 128 output lanes (zero columns) for lane-dense MXU/store.
    w4p = jnp.zeros((H3, OUT_PAD), jnp.bfloat16).at[:, :NUM_BITS].set(
        w4.astype(jnp.bfloat16))
    b4p = jnp.zeros((1, OUT_PAD), jnp.float32).at[:, :NUM_BITS].set(b4)

    vmem = pl.BlockSpec(memory_space=pltpu.MemorySpace.VMEM)
    hbm_any = pl.BlockSpec(memory_space=pl.ANY)

    args = (x, w1b, g1, be1, s2, g2, be2, s3, g3, be3, b4p, w2q, w3q, w4p)
    in_specs = [vmem] * 11 + [hbm_any] * 3

    out = pl.pallas_call(
        mimo_decoder_kernel,
        out_shape=jax.ShapeDtypeStruct((B, OUT_PAD), jnp.float32),
        in_specs=in_specs,
        out_specs=vmem,
        scratch_shapes=[
            pltpu.VMEM((H1, H2), jnp.int8),        # W2 buffer (manual DMA)
            pltpu.VMEM((H2, H3), jnp.int8),        # W3 buffer
            pltpu.VMEM((H3, OUT_PAD), jnp.bfloat16),  # W4 buffer (padded)
            pltpu.SemaphoreType.DMA((3,)),
        ],
        compiler_params=pltpu.CompilerParams(vmem_limit_bytes=32 << 20),
    )(*args)
    return out[:, :NUM_BITS]


def reference_forward(x, params, bn):
    """Pure-JAX f32 reference (training-mode BatchNorm1d, exact PyTorch semantics)."""
    (w1, b1), (w2, b2), (w3, b3), (w4, b4) = params
    (g1, be1), (g2, be2), (g3, be3) = bn

    def bn_relu(h, g, be):
        mean = jnp.mean(h, axis=0, keepdims=True)
        var = jnp.mean((h - mean) ** 2, axis=0, keepdims=True)
        return jnp.maximum(g * (h - mean) * jax.lax.rsqrt(var + EPS) + be, 0.0)

    h = bn_relu(x @ w1 + b1, g1, be1)
    h = bn_relu(h @ w2 + b2, g2, be2)
    h = bn_relu(h @ w3 + b3, g3, be3)
    return jax.nn.sigmoid(h @ w4 + b4)


if __name__ == "__main__":
    key = jax.random.PRNGKey(0)
    k_param, k_x = jax.random.split(key)
    params, bn = init_params(k_param)

    batch = 8
    x = jax.random.normal(k_x, (batch, IN_CH), jnp.float32)  # receive_signal

    out = mimo_decoder_forward(x, params, bn)
    out = jax.block_until_ready(out)

    assert out.shape == (batch, NUM_BITS)
    assert bool(jnp.all(jnp.isfinite(out)))
    assert bool(jnp.all((out >= 0.0) & (out <= 1.0)))  # sigmoid range

    # Numerical check vs f32 reference (int8 weight quant + bf16 matmuls => loose tol).
    ref = reference_forward(x, params, bn)
    max_err = float(jnp.max(jnp.abs(out - ref)))
    assert max_err < 5e-2, f"max abs error vs f32 reference: {max_err}"

    print("KERNEL_OK")
</pallas_src>

<mosaic_0001>
module attributes {stable_mosaic.version = 11 : i64} {
  func.func @mimo_decoder_kernel(%arg0: memref<8x16xf32, #tpu.memory_space<vmem>>, %arg1: memref<16x1024xbf16, #tpu.memory_space<vmem>>, %arg2: memref<1x1024xf32, #tpu.memory_space<vmem>>, %arg3: memref<1x1024xf32, #tpu.memory_space<vmem>>, %arg4: memref<1x1024xf32, #tpu.memory_space<vmem>>, %arg5: memref<1x1024xf32, #tpu.memory_space<vmem>>, %arg6: memref<1x1024xf32, #tpu.memory_space<vmem>>, %arg7: memref<1x512xf32, #tpu.memory_space<vmem>>, %arg8: memref<1x512xf32, #tpu.memory_space<vmem>>, %arg9: memref<1x512xf32, #tpu.memory_space<vmem>>, %arg10: memref<1x128xf32, #tpu.memory_space<vmem>>, %arg11: memref<1024x1024xi8, #tpu.memory_space<any>>, %arg12: memref<1024x512xi8, #tpu.memory_space<any>>, %arg13: memref<512x128xbf16, #tpu.memory_space<any>>, %arg14: memref<8x128xf32, #tpu.memory_space<vmem>>, %arg15: memref<1024x1024xi8, #tpu.memory_space<vmem>>, %arg16: memref<1024x512xi8, #tpu.memory_space<vmem>>, %arg17: memref<512x128xbf16, #tpu.memory_space<vmem>>, %arg18: memref<3x!tpu.dma_semaphore, #tpu.memory_space<semaphore_mem>>) attributes {dimension_semantics = [], scalar_prefetch = 0 : i64, scratch_operands = 4 : i64, tpu.core_type = #tpu.core_type<tc>} {
    %c0_i32 = arith.constant 0 : i32
    %0 = tpu.memref_slice %arg18[%c0_i32] : memref<3x!tpu.dma_semaphore, #tpu.memory_space<semaphore_mem>> -> memref<1x!tpu.dma_semaphore, #tpu.memory_space<semaphore_mem>>
    %1 = tpu.memref_squeeze %0 : memref<1x!tpu.dma_semaphore, #tpu.memory_space<semaphore_mem>> -> memref<!tpu.dma_semaphore, #tpu.memory_space<semaphore_mem>>
    tpu.enqueue_dma source(%arg11 : memref<1024x1024xi8, #tpu.memory_space<any>>) target(%arg15 : memref<1024x1024xi8, #tpu.memory_space<vmem>>) target_semaphore(%1 : memref<!tpu.dma_semaphore, #tpu.memory_space<semaphore_mem>>)
    %c1_i32 = arith.constant 1 : i32
    %2 = tpu.memref_slice %arg18[%c1_i32] : memref<3x!tpu.dma_semaphore, #tpu.memory_space<semaphore_mem>> -> memref<1x!tpu.dma_semaphore, #tpu.memory_space<semaphore_mem>>
    %3 = tpu.memref_squeeze %2 : memref<1x!tpu.dma_semaphore, #tpu.memory_space<semaphore_mem>> -> memref<!tpu.dma_semaphore, #tpu.memory_space<semaphore_mem>>
    tpu.enqueue_dma source(%arg12 : memref<1024x512xi8, #tpu.memory_space<any>>) target(%arg16 : memref<1024x512xi8, #tpu.memory_space<vmem>>) target_semaphore(%3 : memref<!tpu.dma_semaphore, #tpu.memory_space<semaphore_mem>>)
    %c2_i32 = arith.constant 2 : i32
    %4 = tpu.memref_slice %arg18[%c2_i32] : memref<3x!tpu.dma_semaphore, #tpu.memory_space<semaphore_mem>> -> memref<1x!tpu.dma_semaphore, #tpu.memory_space<semaphore_mem>>
    %5 = tpu.memref_squeeze %4 : memref<1x!tpu.dma_semaphore, #tpu.memory_space<semaphore_mem>> -> memref<!tpu.dma_semaphore, #tpu.memory_space<semaphore_mem>>
    tpu.enqueue_dma source(%arg13 : memref<512x128xbf16, #tpu.memory_space<any>>) target(%arg17 : memref<512x128xbf16, #tpu.memory_space<vmem>>) target_semaphore(%5 : memref<!tpu.dma_semaphore, #tpu.memory_space<semaphore_mem>>)
    %c0 = arith.constant 0 : index
    %c0_0 = arith.constant 0 : index
    %6 = vector.load %arg0[%c0, %c0_0] : memref<8x16xf32, #tpu.memory_space<vmem>>, vector<8x16xf32>
    %c0_1 = arith.constant 0 : index
    %c0_2 = arith.constant 0 : index
    %7 = vector.load %arg1[%c0_1, %c0_2] : memref<16x1024xbf16, #tpu.memory_space<vmem>>, vector<16x1024xbf16>
    %8 = arith.truncf %6 : vector<8x16xf32> to vector<8x16xbf16>
    %cst = arith.constant dense<0.000000e+00> : vector<8x1024xf32>
    %9 = tpu.matmul %8, %7, %cst {dimension_numbers = #tpu.dot_dimension_numbers<[1], [0], [0], [1], [0, 0, 1, 1], [], []>} : vector<8x16xbf16>, vector<16x1024xbf16>, vector<8x1024xf32> -> vector<8x1024xf32>
    %cst_3 = arith.constant dense<0.000000e+00> : vector<1024xf32>
    %10 = vector.multi_reduction <add>, %9, %cst_3 [0] : vector<8x1024xf32> to vector<1024xf32>
    %11 = vector.shape_cast %10 : vector<1024xf32> to vector<1x1024xf32>
    %cst_4 = arith.constant 8.000000e+00 : f32
    %12 = vector.broadcast %cst_4 : f32 to vector<1x1024xf32>
    %13 = arith.divf %11, %12 : vector<1x1024xf32>
    %14 = vector.broadcast %13 : vector<1x1024xf32> to vector<8x1024xf32>
    %15 = arith.subf %9, %14 : vector<8x1024xf32>
    %16 = arith.mulf %15, %15 : vector<8x1024xf32>
    %cst_5 = arith.constant dense<0.000000e+00> : vector<1024xf32>
    %17 = vector.multi_reduction <add>, %16, %cst_5 [0] : vector<8x1024xf32> to vector<1024xf32>
    %18 = vector.shape_cast %17 : vector<1024xf32> to vector<1x1024xf32>
    %cst_6 = arith.constant 8.000000e+00 : f32
    %19 = vector.broadcast %cst_6 : f32 to vector<1x1024xf32>
    %20 = arith.divf %18, %19 : vector<1x1024xf32>
    %c0_7 = arith.constant 0 : index
    %c0_8 = arith.constant 0 : index
    %21 = vector.load %arg2[%c0_7, %c0_8] : memref<1x1024xf32, #tpu.memory_space<vmem>>, vector<1x1024xf32>
    %cst_9 = arith.constant 9.99999974E-6 : f32
    %22 = vector.broadcast %cst_9 : f32 to vector<1x1024xf32>
    %23 = arith.addf %20, %22 : vector<1x1024xf32>
    %24 = math.rsqrt %23 : vector<1x1024xf32>
    %25 = arith.mulf %21, %24 : vector<1x1024xf32>
    %c0_10 = arith.constant 0 : index
    %c0_11 = arith.constant 0 : index
    %26 = vector.load %arg3[%c0_10, %c0_11] : memref<1x1024xf32, #tpu.memory_space<vmem>>, vector<1x1024xf32>
    %27 = arith.mulf %13, %25 : vector<1x1024xf32>
    %28 = arith.subf %26, %27 : vector<1x1024xf32>
    %29 = vector.broadcast %25 : vector<1x1024xf32> to vector<8x1024xf32>
    %30 = arith.mulf %9, %29 : vector<8x1024xf32>
    %31 = vector.broadcast %28 : vector<1x1024xf32> to vector<8x1024xf32>
    %32 = arith.addf %30, %31 : vector<8x1024xf32>
    %cst_12 = arith.constant 0.000000e+00 : f32
    %33 = vector.broadcast %cst_12 : f32 to vector<8x1024xf32>
    %34 = arith.maximumf %32, %33 : vector<8x1024xf32>
    %c0_i32_13 = arith.constant 0 : i32
    %35 = tpu.memref_slice %arg18[%c0_i32_13] : memref<3x!tpu.dma_semaphore, #tpu.memory_space<semaphore_mem>> -> memref<1x!tpu.dma_semaphore, #tpu.memory_space<semaphore_mem>>
    %36 = tpu.memref_squeeze %35 : memref<1x!tpu.dma_semaphore, #tpu.memory_space<semaphore_mem>> -> memref<!tpu.dma_semaphore, #tpu.memory_space<semaphore_mem>>
    tpu.wait_dma2 semaphore(%36 : memref<!tpu.dma_semaphore, #tpu.memory_space<semaphore_mem>>) src(%arg11 : memref<1024x1024xi8, #tpu.memory_space<any>>) dst(%arg15 : memref<1024x1024xi8, #tpu.memory_space<vmem>>)
    %c0_14 = arith.constant 0 : index
    %c0_15 = arith.constant 0 : index
    %37 = vector.load %arg15[%c0_14, %c0_15] : memref<1024x1024xi8, #tpu.memory_space<vmem>>, vector<1024x1024xi8>
    %38 = arith.truncf %34 : vector<8x1024xf32> to vector<8x1024xbf16>
    %39 = arith.sitofp %37 : vector<1024x1024xi8> to vector<1024x1024xbf16>
    %cst_16 = arith.constant dense<0.000000e+00> : vector<8x1024xf32>
    %40 = tpu.matmul %38, %39, %cst_16 {dimension_numbers = #tpu.dot_dimension_numbers<[1], [0], [0], [1], [0, 0, 1, 1], [], []>} : vector<8x1024xbf16>, vector<1024x1024xbf16>, vector<8x1024xf32> -> vector<8x1024xf32>
    %c0_17 = arith.constant 0 : index
    %c0_18 = arith.constant 0 : index
    %41 = vector.load %arg4[%c0_17, %c0_18] : memref<1x1024xf32, #tpu.memory_space<vmem>>, vector<1x1024xf32>
    %42 = vector.broadcast %41 : vector<1x1024xf32> to vector<8x1024xf32>
    %43 = arith.mulf %40, %42 : vector<8x1024xf32>
    %cst_19 = arith.constant dense<0.000000e+00> : vector<1024xf32>
    %44 = vector.multi_reduction <add>, %43, %cst_19 [0] : vector<8x1024xf32> to vector<1024xf32>
    %45 = vector.shape_cast %44 : vector<1024xf32> to vector<1x1024xf32>
    %cst_20 = arith.constant 8.000000e+00 : f32
    %46 = vector.broadcast %cst_20 : f32 to vector<1x1024xf32>
    %47 = arith.divf %45, %46 : vector<1x1024xf32>
    %48 = vector.broadcast %47 : vector<1x1024xf32> to vector<8x1024xf32>
    %49 = arith.subf %43, %48 : vector<8x1024xf32>
    %50 = arith.mulf %49, %49 : vector<8x1024xf32>
    %cst_21 = arith.constant dense<0.000000e+00> : vector<1024xf32>
    %51 = vector.multi_reduction <add>, %50, %cst_21 [0] : vector<8x1024xf32> to vector<1024xf32>
    %52 = vector.shape_cast %51 : vector<1024xf32> to vector<1x1024xf32>
    %cst_22 = arith.constant 8.000000e+00 : f32
    %53 = vector.broadcast %cst_22 : f32 to vector<1x1024xf32>
    %54 = arith.divf %52, %53 : vector<1x1024xf32>
    %c0_23 = arith.constant 0 : index
    %c0_24 = arith.constant 0 : index
    %55 = vector.load %arg5[%c0_23, %c0_24] : memref<1x1024xf32, #tpu.memory_space<vmem>>, vector<1x1024xf32>
    %cst_25 = arith.constant 9.99999974E-6 : f32
    %56 = vector.broadcast %cst_25 : f32 to vector<1x1024xf32>
    %57 = arith.addf %54, %56 : vector<1x1024xf32>
    %58 = math.rsqrt %57 : vector<1x1024xf32>
    %59 = arith.mulf %55, %58 : vector<1x1024xf32>
    %c0_26 = arith.constant 0 : index
    %c0_27 = arith.constant 0 : index
    %60 = vector.load %arg6[%c0_26, %c0_27] : memref<1x1024xf32, #tpu.memory_space<vmem>>, vector<1x1024xf32>
    %61 = arith.mulf %47, %59 : vector<1x1024xf32>
    %62 = arith.subf %60, %61 : vector<1x1024xf32>
    %63 = vector.broadcast %59 : vector<1x1024xf32> to vector<8x1024xf32>
    %64 = arith.mulf %43, %63 : vector<8x1024xf32>
    %65 = vector.broadcast %62 : vector<1x1024xf32> to vector<8x1024xf32>
    %66 = arith.addf %64, %65 : vector<8x1024xf32>
    %cst_28 = arith.constant 0.000000e+00 : f32
    %67 = vector.broadcast %cst_28 : f32 to vector<8x1024xf32>
    %68 = arith.maximumf %66, %67 : vector<8x1024xf32>
    %c1_i32_29 = arith.constant 1 : i32
    %69 = tpu.memref_slice %arg18[%c1_i32_29] : memref<3x!tpu.dma_semaphore, #tpu.memory_space<semaphore_mem>> -> memref<1x!tpu.dma_semaphore, #tpu.memory_space<semaphore_mem>>
    %70 = tpu.memref_squeeze %69 : memref<1x!tpu.dma_semaphore, #tpu.memory_space<semaphore_mem>> -> memref<!tpu.dma_semaphore, #tpu.memory_space<semaphore_mem>>
    tpu.wait_dma2 semaphore(%70 : memref<!tpu.dma_semaphore, #tpu.memory_space<semaphore_mem>>) src(%arg12 : memref<1024x512xi8, #tpu.memory_space<any>>) dst(%arg16 : memref<1024x512xi8, #tpu.memory_space<vmem>>)
    %c0_30 = arith.constant 0 : index
    %c0_31 = arith.constant 0 : index
    %71 = vector.load %arg16[%c0_30, %c0_31] : memref<1024x512xi8, #tpu.memory_space<vmem>>, vector<1024x512xi8>
    %72 = arith.truncf %68 : vector<8x1024xf32> to vector<8x1024xbf16>
    %73 = arith.sitofp %71 : vector<1024x512xi8> to vector<1024x512xbf16>
    %cst_32 = arith.constant dense<0.000000e+00> : vector<8x512xf32>
    %74 = tpu.matmul %72, %73, %cst_32 {dimension_numbers = #tpu.dot_dimension_numbers<[1], [0], [0], [1], [0, 0, 1, 1], [], []>} : vector<8x1024xbf16>, vector<1024x512xbf16>, vector<8x512xf32> -> vector<8x512xf32>
    %c0_33 = arith.constant 0 : index
    %c0_34 = arith.constant 0 : index
    %75 = vector.load %arg7[%c0_33, %c0_34] : memref<1x512xf32, #tpu.memory_space<vmem>>, vector<1x512xf32>
    %76 = vector.broadcast %75 : vector<1x512xf32> to vector<8x512xf32>
    %77 = arith.mulf %74, %76 : vector<8x512xf32>
    %cst_35 = arith.constant dense<0.000000e+00> : vector<512xf32>
    %78 = vector.multi_reduction <add>, %77, %cst_35 [0] : vector<8x512xf32> to vector<512xf32>
    %79 = vector.shape_cast %78 : vector<512xf32> to vector<1x512xf32>
    %cst_36 = arith.constant 8.000000e+00 : f32
    %80 = vector.broadcast %cst_36 : f32 to vector<1x512xf32>
    %81 = arith.divf %79, %80 : vector<1x512xf32>
    %82 = vector.broadcast %81 : vector<1x512xf32> to vector<8x512xf32>
    %83 = arith.subf %77, %82 : vector<8x512xf32>
    %84 = arith.mulf %83, %83 : vector<8x512xf32>
    %cst_37 = arith.constant dense<0.000000e+00> : vector<512xf32>
    %85 = vector.multi_reduction <add>, %84, %cst_37 [0] : vector<8x512xf32> to vector<512xf32>
    %86 = vector.shape_cast %85 : vector<512xf32> to vector<1x512xf32>
    %cst_38 = arith.constant 8.000000e+00 : f32
    %87 = vector.broadcast %cst_38 : f32 to vector<1x512xf32>
    %88 = arith.divf %86, %87 : vector<1x512xf32>
    %c0_39 = arith.constant 0 : index
    %c0_40 = arith.constant 0 : index
    %89 = vector.load %arg8[%c0_39, %c0_40] : memref<1x512xf32, #tpu.memory_space<vmem>>, vector<1x512xf32>
    %cst_41 = arith.constant 9.99999974E-6 : f32
    %90 = vector.broadcast %cst_41 : f32 to vector<1x512xf32>
    %91 = arith.addf %88, %90 : vector<1x512xf32>
    %92 = math.rsqrt %91 : vector<1x512xf32>
    %93 = arith.mulf %89, %92 : vector<1x512xf32>
    %c0_42 = arith.constant 0 : index
    %c0_43 = arith.constant 0 : index
    %94 = vector.load %arg9[%c0_42, %c0_43] : memref<1x512xf32, #tpu.memory_space<vmem>>, vector<1x512xf32>
    %95 = arith.mulf %81, %93 : vector<1x512xf32>
    %96 = arith.subf %94, %95 : vector<1x512xf32>
    %97 = vector.broadcast %93 : vector<1x512xf32> to vector<8x512xf32>
    %98 = arith.mulf %77, %97 : vector<8x512xf32>
    %99 = vector.broadcast %96 : vector<1x512xf32> to vector<8x512xf32>
    %100 = arith.addf %98, %99 : vector<8x512xf32>
    %cst_44 = arith.constant 0.000000e+00 : f32
    %101 = vector.broadcast %cst_44 : f32 to vector<8x512xf32>
    %102 = arith.maximumf %100, %101 : vector<8x512xf32>
    %c2_i32_45 = arith.constant 2 : i32
    %103 = tpu.memref_slice %arg18[%c2_i32_45] : memref<3x!tpu.dma_semaphore, #tpu.memory_space<semaphore_mem>> -> memref<1x!tpu.dma_semaphore, #tpu.memory_space<semaphore_mem>>
    %104 = tpu.memref_squeeze %103 : memref<1x!tpu.dma_semaphore, #tpu.memory_space<semaphore_mem>> -> memref<!tpu.dma_semaphore, #tpu.memory_space<semaphore_mem>>
    tpu.wait_dma2 semaphore(%104 : memref<!tpu.dma_semaphore, #tpu.memory_space<semaphore_mem>>) src(%arg13 : memref<512x128xbf16, #tpu.memory_space<any>>) dst(%arg17 : memref<512x128xbf16, #tpu.memory_space<vmem>>)
    %c0_46 = arith.constant 0 : index
    %c0_47 = arith.constant 0 : index
    %105 = vector.load %arg17[%c0_46, %c0_47] : memref<512x128xbf16, #tpu.memory_space<vmem>>, vector<512x128xbf16>
    %106 = arith.truncf %102 : vector<8x512xf32> to vector<8x512xbf16>
    %cst_48 = arith.constant dense<0.000000e+00> : vector<8x128xf32>
    %107 = tpu.matmul %106, %105, %cst_48 {dimension_numbers = #tpu.dot_dimension_numbers<[1], [0], [0], [1], [0, 0, 1, 1], [], []>} : vector<8x512xbf16>, vector<512x128xbf16>, vector<8x128xf32> -> vector<8x128xf32>
    %c0_49 = arith.constant 0 : index
    %c0_50 = arith.constant 0 : index
    %108 = vector.load %arg10[%c0_49, %c0_50] : memref<1x128xf32, #tpu.memory_space<vmem>>, vector<1x128xf32>
    %109 = vector.broadcast %108 : vector<1x128xf32> to vector<8x128xf32>
    %110 = arith.addf %107, %109 : vector<8x128xf32>
    %cst_51 = arith.constant 0.000000e+00 : f32
    %111 = vector.broadcast %cst_51 : f32 to vector<8x128xf32>
    %112 = arith.subf %111, %110 : vector<8x128xf32>
    %113 = math.exp %112 : vector<8x128xf32>
    %cst_52 = arith.constant 1.000000e+00 : f32
    %114 = vector.broadcast %cst_52 : f32 to vector<8x128xf32>
    %115 = arith.addf %114, %113 : vector<8x128xf32>
    %cst_53 = arith.constant 1.000000e+00 : f32
    %116 = vector.broadcast %cst_53 : f32 to vector<8x128xf32>
    %117 = arith.divf %116, %115 : vector<8x128xf32>
    %c0_54 = arith.constant 0 : index
    %c0_55 = arith.constant 0 : index
    %118 = vector.load %arg14[%c0_54, %c0_55] : memref<8x128xf32, #tpu.memory_space<vmem>>, vector<8x128xf32>
    tpu.vector_store %arg14[%c0_54, %c0_55], %117 {strides = array<i32>} : memref<8x128xf32, #tpu.memory_space<vmem>>, vector<8x128xf32>,
    return
  }
}

</mosaic_0001>

<llo_original>
// kernel: tpu_custom_call.1
$region0: #{tpu_custom_call.1}
  #allocation0 [shape = 'u32[]', space=smem, size = 0x4, offset = 0x4, fixed_abs, tag = 'smem constant byte address 0x4 - core index']
  #allocation1 [shape = 'u32[72,128]{1,0:T(1,128)}', space=vmem, size = 0x9000, scoped, tag = 'internal scratch']
  #allocation2 [shape = 's8[1024,1024]{1,0:T(32,128)(4,1)}', space=vmem, size = 0x100000, scoped, tag = 'scratch operand']
  #allocation3 [shape = 's8[1024,512]{1,0:T(32,128)(4,1)}', space=vmem, size = 0x80000, scoped, tag = 'scratch operand']
  #allocation4 [shape = 'bf16[512,128]{1,0:T(8,128)(2,1)}', space=vmem, size = 0x20000, scoped, tag = 'scratch operand']
  #allocation5 [shape = 's32[3]{0}', space=sflag, size = 0xc, scoped, tag = 'scratch operand']
  #allocation21 [shape = 's32[]', space=sflag, size = 0x4, offset = 0, fixed_abs, tag = 'sflag constant byte address 0x0 - dummy sync flag']
  #allocation22 [shape = 's32[]', space=sflag, size = 0x4, offset = 0, fixed_abs, tag = 'sflag constant byte address 0x0 - dummy sync flag']
  #allocation23 [shape = 'u32[]', space=smem, size = 0x4, offset = 0x44, fixed_abs, tag = 'smem constant byte address 0x44 - assertion arg 0']
  #allocation24 [shape = 'u32[]', space=smem, size = 0x4, offset = 0x48, fixed_abs, tag = 'smem constant byte address 0x48 - assertion arg 1']
  #allocation25 [shape = 's32[]', space=sflag, size = 0x4, offset = 0, fixed_abs, tag = 'sflag constant byte address 0x0 - dummy sync flag']
  #allocation26 [shape = 's32[]', space=sflag, size = 0x4, offset = 0, fixed_abs, tag = 'sflag constant byte address 0x0 - dummy sync flag']
  #allocation27 [shape = 's32[]', space=sflag, size = 0x4, offset = 0, fixed_abs, tag = 'sflag constant byte address 0x0 - dummy sync flag']
  #allocation28 [shape = 's32[]', space=sflag, size = 0x4, offset = 0, fixed_abs, tag = 'sflag constant byte address 0x0 - dummy sync flag']
  %s0 = inlined_call_operand.hbm [shape: f32[8,16], index: 0, kind: input, shape index: {}]
  %s1 = inlined_call_operand.hbm [shape: bf16[16,1024], index: 1, kind: input, shape index: {}]
  %s2 = inlined_call_operand.hbm [shape: f32[1,1024], index: 2, kind: input, shape index: {}]
  %s3 = inlined_call_operand.hbm [shape: f32[1,1024], index: 3, kind: input, shape index: {}]
  %s4 = inlined_call_operand.hbm [shape: f32[1,1024], index: 4, kind: input, shape index: {}]
  %s5 = inlined_call_operand.hbm [shape: f32[1,1024], index: 5, kind: input, shape index: {}]
  %s6 = inlined_call_operand.hbm [shape: f32[1,1024], index: 6, kind: input, shape index: {}]
  %s7 = inlined_call_operand.vmem [shape: f32[1,512], index: 7, kind: input, shape index: {}]
  %s8 = inlined_call_operand.hbm [shape: f32[1,512], index: 8, kind: input, shape index: {}]
  %s9 = inlined_call_operand.vmem [shape: f32[1,512], index: 9, kind: input, shape index: {}]
  %s10 = inlined_call_operand.vmem [shape: f32[1,128], index: 10, kind: input, shape index: {}]
  %s11 = inlined_call_operand.hbm [shape: s8[1024,1024], index: 11, kind: input, shape index: {}]
  %s12 = inlined_call_operand.hbm [shape: s8[1024,512], index: 12, kind: input, shape index: {}]
  %s13 = inlined_call_operand.hbm [shape: bf16[512,128], index: 13, kind: input, shape index: {}]
  %s14 = inlined_call_operand.hbm [shape: f32[8,128], index: 14, kind: output, shape index: {}]
  %s15 = sld [smem:[#allocation0]]
  $region98: #{tpu_custom_call.1} parent=0
    _
  %s17 = ssub.s32 1, %s15
  %s18 = scalar_select 0, %s17, %s15
  $region1: #{tpu_custom_call.1} parent=0
    #allocation6 [shape = 'u8[4096]{0}', space=vmem, size = 0x1000, scoped, tag = 'input window, operand 0, single buffered']
    #allocation7 [shape = 's32[1]{0}', space=sflag, size = 0x4, scoped, tag = 'scoped memory for tpu_custom_call.1']
    #allocation8 [shape = 's32[1]{0}', space=sflag, size = 0x4, scoped, tag = 'scoped memory for tpu_custom_call.1']
    #allocation9 [shape = 'u8[32768]{0}', space=vmem, size = 0x8000, scoped, tag = 'input window, operand 1, single buffered']
    #allocation10 [shape = 's32[1]{0}', space=sflag, size = 0x4, scoped, tag = 'scoped memory for tpu_custom_call.1']
    #allocation11 [shape = 'u8[4096]{0}', space=vmem, size = 0x1000, scoped, tag = 'input window, operand 2, single buffered']
    #allocation12 [shape = 'u8[4096]{0}', space=vmem, size = 0x1000, scoped, tag = 'input window, operand 3, single buffered']
    #allocation13 [shape = 's32[1]{0}', space=sflag, size = 0x4, scoped, tag = 'scoped memory for tpu_custom_call.1']
    #allocation14 [shape = 'u8[4096]{0}', space=vmem, size = 0x1000, scoped, tag = 'input window, operand 4, single buffered']
    #allocation15 [shape = 'u8[4096]{0}', space=vmem, size = 0x1000, scoped, tag = 'input window, operand 5, single buffered']
    #allocation16 [shape = 's32[1]{0}', space=sflag, size = 0x4, scoped, tag = 'scoped memory for tpu_custom_call.1']
    #allocation17 [shape = 'u8[4096]{0}', space=vmem, size = 0x1000, scoped, tag = 'input window, operand 6, single buffered']
    #allocation18 [shape = 'u8[2048]{0}', space=vmem, size = 0x800, scoped, tag = 'input window, operand 8, single buffered']
    #allocation19 [shape = 's32[1]{0}', space=sflag, size = 0x4, scoped, tag = 'scoped memory for tpu_custom_call.1']
    #allocation20 [shape = 'u8[4096]{0}', space=vmem, size = 0x1000, scoped, tag = 'output window, operand 0, single buffered']
    %19 = vsyncpa [#allocation7], 0
    %20 = vsyncpa [#allocation10], 0
    %21 = vsyncpa [#allocation13], 0
    %22 = vsyncpa [#allocation16], 0
    %23 = vsyncpa [#allocation19], 0
    %24 = vsyncpa [#allocation8], 0
    // Predicated region
    $region2: #{tpu_custom_call.1} parent=1 // pred_check
      _
    $region3: #{tpu_custom_call.1} parent=1 // pred_check_branch
      %26 = sbr.rel (0) target = $region5
    $region4: #{tpu_custom_call.1} parent=1 // pred_region
      %28 = vsyncadd [#allocation7], 0
      %s30 = sshll.u32 %s0, 4
      %s31 = int_to_ptr.hbm [resolvable:$true] %s30
      %s32 = sshll.u32 [#allocation6], 4
      %s33 = int_to_ptr.vmem [resolvable:$true] %s32
      %35 = dma.hbm_to_vmem [thread:$0]  %s31, 128, %s33, [#allocation7]
    $region5: #{tpu_custom_call.1} parent=1 // pred_fallthru
      _
    // Predicated region
    $region6: #{tpu_custom_call.1} parent=1 // pred_check
      _
    $region7: #{tpu_custom_call.1} parent=1 // pred_check_branch
      %37 = sbr.rel (0) target = $region9
    $region8: #{tpu_custom_call.1} parent=1 // pred_region
      %39 = vsyncadd [#allocation10], 0
      %s40 = sshll.u32 %s1, 4
      %s41 = int_to_ptr.hbm [resolvable:$true] %s40
      %s42 = sshll.u32 [#allocation9], 4
      %s43 = int_to_ptr.vmem [resolvable:$true] %s42
      %48 = dma.hbm_to_vmem [thread:$0]  %s41, 1024, %s43, [#allocation10], 512, 512, 32
    $region9: #{tpu_custom_call.1} parent=1 // pred_fallthru
      _
    // Predicated region
    $region10: #{tpu_custom_call.1} parent=1 // pred_check
      _
    $region11: #{tpu_custom_call.1} parent=1 // pred_check_branch
      %50 = sbr.rel (0) target = $region13
    $region12: #{tpu_custom_call.1} parent=1 // pred_region
      %52 = vsyncadd [#allocation10], 0
      %s54 = sshll.u32 %s2, 4
      %s55 = int_to_ptr.hbm [resolvable:$true] %s54
      %s56 = sshll.u32 [#allocation11], 4
      %s57 = int_to_ptr.vmem [resolvable:$true] %s56
      %59 = dma.hbm_to_vmem [thread:$0]  %s55, 128, %s57, [#allocation10]
    $region13: #{tpu_custom_call.1} parent=1 // pred_fallthru
      _
    // Predicated region
    $region14: #{tpu_custom_call.1} parent=1 // pred_check
      _
    $region15: #{tpu_custom_call.1} parent=1 // pred_check_branch
      %61 = sbr.rel (0) target = $region17
    $region16: #{tpu_custom_call.1} parent=1 // pred_region
      %63 = vsyncadd [#allocation13], 0
      %s65 = sshll.u32 %s3, 4
      %s66 = int_to_ptr.hbm [resolvable:$true] %s65
      %s67 = sshll.u32 [#allocation12], 4
      %s68 = int_to_ptr.vmem [resolvable:$true] %s67
      %70 = dma.hbm_to_vmem [thread:$0]  %s66, 128, %s68, [#allocation13]
    $region17: #{tpu_custom_call.1} parent=1 // pred_fallthru
      _
    // Predicated region
    $region18: #{tpu_custom_call.1} parent=1 // pred_check
      _
    $region19: #{tpu_custom_call.1} parent=1 // pred_check_branch
      %72 = sbr.rel (0) target = $region21
    $region20: #{tpu_custom_call.1} parent=1 // pred_region
      %74 = vsyncadd [#allocation13], 0
      %s76 = sshll.u32 %s4, 4
      %s77 = int_to_ptr.hbm [resolvable:$true] %s76
      %s78 = sshll.u32 [#allocation14], 4
      %s79 = int_to_ptr.vmem [resolvable:$true] %s78
      %81 = dma.hbm_to_vmem [thread:$0]  %s77, 128, %s79, [#allocation13]
    $region21: #{tpu_custom_call.1} parent=1 // pred_fallthru
      _
    // Predicated region
    $region22: #{tpu_custom_call.1} parent=1 // pred_check
      _
    $region23: #{tpu_custom_call.1} parent=1 // pred_check_branch
      %83 = sbr.rel (0) target = $region25
    $region24: #{tpu_custom_call.1} parent=1 // pred_region
      %85 = vsyncadd [#allocation16], 0
      %s87 = sshll.u32 %s5, 4
      %s88 = int_to_ptr.hbm [resolvable:$true] %s87
      %s89 = sshll.u32 [#allocation15], 4
      %s90 = int_to_ptr.vmem [resolvable:$true] %s89
      %92 = dma.hbm_to_vmem [thread:$0]  %s88, 128, %s90, [#allocation16]
    $region25: #{tpu_custom_call.1} parent=1 // pred_fallthru
      _
    // Predicated region
    $region26: #{tpu_custom_call.1} parent=1 // pred_check
      _
    $region27: #{tpu_custom_call.1} parent=1 // pred_check_branch
      %94 = sbr.rel (0) target = $region29
    $region28: #{tpu_custom_call.1} parent=1 // pred_region
      %96 = vsyncadd [#allocation16], 0
      %s98 = sshll.u32 %s6, 4
      %s99 = int_to_ptr.hbm [resolvable:$true] %s98
      %s100 = sshll.u32 [#allocation17], 4
      %s101 = int_to_ptr.vmem [resolvable:$true] %s100
      %103 = dma.hbm_to_vmem [thread:$0]  %s99, 128, %s101, [#allocation16]
    $region29: #{tpu_custom_call.1} parent=1 // pred_fallthru
      _
    // Predicated region
    $region30: #{tpu_custom_call.1} parent=1 // pred_check
      _
    $region31: #{tpu_custom_call.1} parent=1 // pred_check_branch
      %105 = sbr.rel (0) target = $region33
    $region32: #{tpu_custom_call.1} parent=1 // pred_region
      _
    $region33: #{tpu_custom_call.1} parent=1 // pred_fallthru
      _
    // Predicated region
    $region34: #{tpu_custom_call.1} parent=1 // pred_check
      _
    $region35: #{tpu_custom_call.1} parent=1 // pred_check_branch
      %107 = sbr.rel (0) target = $region37
    $region36: #{tpu_custom_call.1} parent=1 // pred_region
      %109 = vsyncadd [#allocation19], 0
      %s111 = sshll.u32 %s8, 4
      %s112 = int_to_ptr.hbm [resolvable:$true] %s111
      %s113 = sshll.u32 [#allocation18], 4
      %s114 = int_to_ptr.vmem [resolvable:$true] %s113
      %116 = dma.hbm_to_vmem [thread:$0]  %s112, 64, %s114, [#allocation19]
    $region37: #{tpu_custom_call.1} parent=1 // pred_fallthru
      _
    // Predicated region
    $region38: #{tpu_custom_call.1} parent=1 // pred_check
      _
    $region39: #{tpu_custom_call.1} parent=1 // pred_check_branch
      %118 = sbr.rel (0) target = $region41
    $region40: #{tpu_custom_call.1} parent=1 // pred_region
      _
    $region41: #{tpu_custom_call.1} parent=1 // pred_fallthru
      _
    // Predicated region
    $region42: #{tpu_custom_call.1} parent=1 // pred_check
      _
    $region43: #{tpu_custom_call.1} parent=1 // pred_check_branch
      %120 = sbr.rel (0) target = $region45
    $region44: #{tpu_custom_call.1} parent=1 // pred_region
      _
    $region45: #{tpu_custom_call.1} parent=1 // pred_fallthru
      _
    // Predicated region
    $region46: #{tpu_custom_call.1} parent=1 // pred_check
      _
    $region47: #{tpu_custom_call.1} parent=1 // pred_check_branch
      %122 = sbr.rel (0) target = $region49
    $region48: #{tpu_custom_call.1} parent=1 // pred_region
      %124 = dma.done [#allocation7], 128
    $region49: #{tpu_custom_call.1} parent=1 // pred_fallthru
      _
    // Predicated region
    $region50: #{tpu_custom_call.1} parent=1 // pred_check
      _
    $region51: #{tpu_custom_call.1} parent=1 // pred_check_branch
      %126 = sbr.rel (0) target = $region53
    $region52: #{tpu_custom_call.1} parent=1 // pred_region
      %128 = dma.done [#allocation10], 1024
    $region53: #{tpu_custom_call.1} parent=1 // pred_fallthru
      _
    // Predicated region
    $region54: #{tpu_custom_call.1} parent=1 // pred_check
      _
    $region55: #{tpu_custom_call.1} parent=1 // pred_check_branch
      %130 = sbr.rel (0) target = $region57
    $region56: #{tpu_custom_call.1} parent=1 // pred_region
      %132 = dma.done [#allocation10], 128
    $region57: #{tpu_custom_call.1} parent=1 // pred_fallthru
      _
    // Predicated region
    $region58: #{tpu_custom_call.1} parent=1 // pred_check
      _
    $region59: #{tpu_custom_call.1} parent=1 // pred_check_branch
      %134 = sbr.rel (0) target = $region61
    $region60: #{tpu_custom_call.1} parent=1 // pred_region
      %136 = dma.done [#allocation13], 128
    $region61: #{tpu_custom_call.1} parent=1 // pred_fallthru
      _
    // Predicated region
    $region62: #{tpu_custom_call.1} parent=1 // pred_check
      _
    $region63: #{tpu_custom_call.1} parent=1 // pred_check_branch
      %138 = sbr.rel (0) target = $region65
    $region64: #{tpu_custom_call.1} parent=1 // pred_region
      %140 = dma.done [#allocation13], 128
    $region65: #{tpu_custom_call.1} parent=1 // pred_fallthru
      _
    // Predicated region
    $region66: #{tpu_custom_call.1} parent=1 // pred_check
      _
    $region67: #{tpu_custom_call.1} parent=1 // pred_check_branch
      %142 = sbr.rel (0) target = $region69
    $region68: #{tpu_custom_call.1} parent=1 // pred_region
      %144 = dma.done [#allocation16], 128
    $region69: #{tpu_custom_call.1} parent=1 // pred_fallthru
      _
    // Predicated region
    $region70: #{tpu_custom_call.1} parent=1 // pred_check
      _
    $region71: #{tpu_custom_call.1} parent=1 // pred_check_branch
      %146 = sbr.rel (0) target = $region73
    $region72: #{tpu_custom_call.1} parent=1 // pred_region
      %148 = dma.done [#allocation16], 128
    $region73: #{tpu_custom_call.1} parent=1 // pred_fallthru
      _
    // Predicated region
    $region74: #{tpu_custom_call.1} parent=1 // pred_check
      _
    $region75: #{tpu_custom_call.1} parent=1 // pred_check_branch
      %150 = sbr.rel (0) target = $region77
    $region76: #{tpu_custom_call.1} parent=1 // pred_region
      %152 = dma.done [#allocation19], 64
    $region77: #{tpu_custom_call.1} parent=1 // pred_fallthru
      _
    // Predicated region
    $region78: #{tpu_custom_call.1} parent=1 // pred_check
      _
    $region79: #{tpu_custom_call.1} parent=1 // pred_check_branch
      %155 = sbr.rel target = $region81
    $region80: #{tpu_custom_call.1} parent=1 // pred_region
      %156 = sst [smem:[#allocation23]] [#allocation22]
      %157 = sst [smem:[#allocation24]] [#allocation21]
    $region81: #{tpu_custom_call.1} parent=1 // pred_fallthru
      _
    %159 = shalt.err (0)
    %s161 = sshll.u32 %s11, 4
    %s162 = int_to_ptr.hbm [resolvable:$true] %s161
    %s163 = sshll.u32 [#allocation2], 4
    %s164 = int_to_ptr.vmem [resolvable:$true] %s163
    %166 = dma.hbm_to_vmem [thread:$0]  %s162, 32768, %s164, [#allocation5]
    %s167 = scalar_lea.sflag [#allocation5], 1
    // Predicated region
    $region82: #{tpu_custom_call.1} parent=1 // pred_check
      _
    $region83: #{tpu_custom_call.1} parent=1 // pred_check_branch
      %169 = sbr.rel target = $region85
    $region84: #{tpu_custom_call.1} parent=1 // pred_region
      %170 = sst [smem:[#allocation23]] [#allocation26]
      %171 = sst [smem:[#allocation24]] [#allocation25]
    $region85: #{tpu_custom_call.1} parent=1 // pred_fallthru
      _
    %173 = shalt.err (0)
    %s175 = sshll.u32 %s12, 4
    %s176 = int_to_ptr.hbm [resolvable:$true] %s175
    %s177 = sshll.u32 [#allocation3], 4
    %s178 = int_to_ptr.vmem [resolvable:$true] %s177
    %180 = dma.hbm_to_vmem [thread:$0]  %s176, 16384, %s178, %s167
    %s181 = scalar_lea.sflag [#allocation5], 2
    // Predicated region
    $region86: #{tpu_custom_call.1} parent=1 // pred_check
      _
    $region87: #{tpu_custom_call.1} parent=1 // pred_check_branch
      %183 = sbr.rel target = $region89
    $region88: #{tpu_custom_call.1} parent=1 // pred_region
      %184 = sst [smem:[#allocation23]] [#allocation28]
      %185 = sst [smem:[#allocation24]] [#allocation27]
    $region89: #{tpu_custom_call.1} parent=1 // pred_fallthru
      _
    %187 = shalt.err (0)
    %s189 = sshll.u32 %s13, 4
    %s190 = int_to_ptr.hbm [resolvable:$true] %s189
    %s191 = sshll.u32 [#allocation4], 4
    %s192 = int_to_ptr.vmem [resolvable:$true] %s191
    %194 = dma.hbm_to_vmem [thread:$0]  %s190, 4096, %s192, %s181
    %v195 = vld [vmem:[#allocation6] sm:$0xff]
    %v196 = vld [vmem:[#allocation9] sm:$0xff]
    %v197 = vld [vmem:[#allocation9 + $0x8] sm:$0xff]
    %v198 = vld [vmem:[#allocation9 + $0x10] sm:$0xff]
    %v199 = vld [vmem:[#allocation9 + $0x18] sm:$0xff]
    %v200 = vld [vmem:[#allocation9 + $0x20] sm:$0xff]
    %v201 = vld [vmem:[#allocation9 + $0x28] sm:$0xff]
    %v202 = vld [vmem:[#allocation9 + $0x30] sm:$0xff]
    %v203 = vld [vmem:[#allocation9 + $0x38] sm:$0xff]
    %v204 = vpack.c.bf16 %v195, %v195
    %v213 = vunpack.c.l.b16 %v196
    %v214 = vunpack.c.h.b16 %v196
    %v215 = vunpack.c.l.b16 %v197
    %v216 = vunpack.c.h.b16 %v197
    %v217 = vunpack.c.l.b16 %v198
    %v218 = vunpack.c.h.b16 %v198
    %v219 = vunpack.c.l.b16 %v199
    %v220 = vunpack.c.h.b16 %v199
    %v221 = vunpack.c.l.b16 %v200
    %v222 = vunpack.c.h.b16 %v200
    %v223 = vunpack.c.l.b16 %v201
    %v224 = vunpack.c.h.b16 %v201
    %v225 = vunpack.c.l.b16 %v202
    %v226 = vunpack.c.h.b16 %v202
    %v227 = vunpack.c.l.b16 %v203
    %v228 = vunpack.c.h.b16 %v203
    %v229 = vpack.c.b16 %v221, %v213
    %v230 = vpack.c.b16 %v222, %v214
    %v231 = vpack.c.b16 %v223, %v215
    %v232 = vpack.c.b16 %v224, %v216
    %v233 = vpack.c.b16 %v225, %v217
    %v234 = vpack.c.b16 %v226, %v218
    %v235 = vpack.c.b16 %v227, %v219
    %v236 = vpack.c.b16 %v228, %v220
    %vm245 = vcmask 130048
    %v247 = vsel %vm245, %v204, 0
    %249 = vmatpush.bf16.msra.mxu0 0
    %250 = vmatpush.bf16.msra.mxu0 0
    %251 = vmatpush.bf16.msra.mxu0 0
    %252 = vmatpush.bf16.msra.mxu0 0
    %253 = vmatpush.bf16.msra.mxu0 0
    %254 = vmatpush.bf16.msra.mxu0 0
    %255 = vmatpush.bf16.msra.mxu0 0
    %256 = vmatpush.bf16.msra.mxu0 %v229
    %257 = vmatmul.bf16.gmra.mxu0 %v247
    %v258 = vpop.f32.mrf.mxu0
    %v259 = vadd.f32 0.0, %v258
    %v260 = vpop.f32.mrf.mxu0
    %261 = vdwg.mxu0
    %262 = vmatpush.bf16.msra.mxu0 0
    %263 = vmatpush.bf16.msra.mxu0 0
    %264 = vmatpush.bf16.msra.mxu0 0
    %265 = vmatpush.bf16.msra.mxu0 0
    %266 = vmatpush.bf16.msra.mxu0 0
    %267 = vmatpush.bf16.msra.mxu0 0
    %268 = vmatpush.bf16.msra.mxu0 0
    %269 = vmatpush.bf16.msra.mxu0 %v230
    %270 = vmatmul.bf16.gmra.mxu0 %v247
    %v271 = vpop.f32.mrf.mxu0
    %v272 = vadd.f32 0.0, %v271
    %v273 = vpop.f32.mrf.mxu0
    %274 = vdwg.mxu0
    %275 = vmatpush.bf16.msra.mxu0 0
    %276 = vmatpush.bf16.msra.mxu0 0
    %277 = vmatpush.bf16.msra.mxu0 0
    %278 = vmatpush.bf16.msra.mxu0 0
    %279 = vmatpush.bf16.msra.mxu0 0
    %280 = vmatpush.bf16.msra.mxu0 0
    %281 = vmatpush.bf16.msra.mxu0 0
    %282 = vmatpush.bf16.msra.mxu0 %v231
    %283 = vmatmul.bf16.gmra.mxu0 %v247
    %v284 = vpop.f32.mrf.mxu0
    %v285 = vadd.f32 0.0, %v284
    %v286 = vpop.f32.mrf.mxu0
    %287 = vdwg.mxu0
    %288 = vmatpush.bf16.msra.mxu0 0
    %289 = vmatpush.bf16.msra.mxu0 0
    %290 = vmatpush.bf16.msra.mxu0 0
    %291 = vmatpush.bf16.msra.mxu0 0
    %292 = vmatpush.bf16.msra.mxu0 0
    %293 = vmatpush.bf16.msra.mxu0 0
    %294 = vmatpush.bf16.msra.mxu0 0
    %295 = vmatpush.bf16.msra.mxu0 %v232
    %296 = vmatmul.bf16.gmra.mxu0 %v247
    %v297 = vpop.f32.mrf.mxu0
    %v298 = vadd.f32 0.0, %v297
    %v299 = vpop.f32.mrf.mxu0
    %300 = vdwg.mxu0
    %301 = vmatpush.bf16.msra.mxu0 0
    %302 = vmatpush.bf16.msra.mxu0 0
    %303 = vmatpush.bf16.msra.mxu0 0
    %304 = vmatpush.bf16.msra.mxu0 0
    %305 = vmatpush.bf16.msra.mxu0 0
    %306 = vmatpush.bf16.msra.mxu0 0
    %307 = vmatpush.bf16.msra.mxu0 0
    %308 = vmatpush.bf16.msra.mxu0 %v233
    %309 = vmatmul.bf16.gmra.mxu0 %v247
    %v310 = vpop.f32.mrf.mxu0
    %v311 = vadd.f32 0.0, %v310
    %v312 = vpop.f32.mrf.mxu0
    %313 = vdwg.mxu0
    %314 = vmatpush.bf16.msra.mxu0 0
    %315 = vmatpush.bf16.msra.mxu0 0
    %316 = vmatpush.bf16.msra.mxu0 0
    %317 = vmatpush.bf16.msra.mxu0 0
    %318 = vmatpush.bf16.msra.mxu0 0
    %319 = vmatpush.bf16.msra.mxu0 0
    %320 = vmatpush.bf16.msra.mxu0 0
    %321 = vmatpush.bf16.msra.mxu0 %v234
    %322 = vmatmul.bf16.gmra.mxu0 %v247
    %v323 = vpop.f32.mrf.mxu0
    %v324 = vadd.f32 0.0, %v323
    %v325 = vpop.f32.mrf.mxu0
    %326 = vdwg.mxu0
    %327 = vmatpush.bf16.msra.mxu0 0
    %328 = vmatpush.bf16.msra.mxu0 0
    %329 = vmatpush.bf16.msra.mxu0 0
    %330 = vmatpush.bf16.msra.mxu0 0
    %331 = vmatpush.bf16.msra.mxu0 0
    %332 = vmatpush.bf16.msra.mxu0 0
    %333 = vmatpush.bf16.msra.mxu0 0
    %334 = vmatpush.bf16.msra.mxu0 %v235
    %335 = vmatmul.bf16.gmra.mxu0 %v247
    %v336 = vpop.f32.mrf.mxu0
    %v337 = vadd.f32 0.0, %v336
    %v338 = vpop.f32.mrf.mxu0
    %339 = vdwg.mxu0
    %340 = vmatpush.bf16.msra.mxu0 0
    %341 = vmatpush.bf16.msra.mxu0 0
    %342 = vmatpush.bf16.msra.mxu0 0
    %343 = vmatpush.bf16.msra.mxu0 0
    %344 = vmatpush.bf16.msra.mxu0 0
    %345 = vmatpush.bf16.msra.mxu0 0
    %346 = vmatpush.bf16.msra.mxu0 0
    %347 = vmatpush.bf16.msra.mxu0 %v236
    %348 = vmatmul.bf16.gmra.mxu0 %v247
    %v349 = vpop.f32.mrf.mxu0
    %v350 = vadd.f32 0.0, %v349
    %v351 = vpop.f32.mrf.mxu0
    %352 = vdwg.mxu0
    %v353 = vrot.slane %v259, 4
    %v354 = vadd.f32 %v259, %v353
    %v355 = vrot.slane %v354, 2
    %v356 = vadd.f32 %v354, %v355
    %v357 = vrot.slane %v356, 1
    %v358 = vadd.f32 %v356, %v357
    %v359 = vrot.slane %v272, 4
    %v360 = vadd.f32 %v272, %v359
    %v361 = vrot.slane %v360, 2
    %v362 = vadd.f32 %v360, %v361
    %v363 = vrot.slane %v362, 1
    %v364 = vadd.f32 %v362, %v363
    %v365 = vrot.slane %v285, 4
    %v366 = vadd.f32 %v285, %v365
    %v367 = vrot.slane %v366, 2
    %v368 = vadd.f32 %v366, %v367
    %v369 = vrot.slane %v368, 1
    %v370 = vadd.f32 %v368, %v369
    %v371 = vrot.slane %v298, 4
    %v372 = vadd.f32 %v298, %v371
    %v373 = vrot.slane %v372, 2
    %v374 = vadd.f32 %v372, %v373
    %v375 = vrot.slane %v374, 1
    %v376 = vadd.f32 %v374, %v375
    %v377 = vrot.slane %v311, 4
    %v378 = vadd.f32 %v311, %v377
    %v379 = vrot.slane %v378, 2
    %v380 = vadd.f32 %v378, %v379
    %v381 = vrot.slane %v380, 1
    %v382 = vadd.f32 %v380, %v381
    %v383 = vrot.slane %v324, 4
    %v384 = vadd.f32 %v324, %v383
    %v385 = vrot.slane %v384, 2
    %v386 = vadd.f32 %v384, %v385
    %v387 = vrot.slane %v386, 1
    %v388 = vadd.f32 %v386, %v387
    %v389 = vrot.slane %v337, 4
    %v390 = vadd.f32 %v337, %v389
    %v391 = vrot.slane %v390, 2
    %v392 = vadd.f32 %v390, %v391
    %v393 = vrot.slane %v392, 1
    %v394 = vadd.f32 %v392, %v393
    %v395 = vrot.slane %v350, 4
    %v396 = vadd.f32 %v350, %v395
    %v397 = vrot.slane %v396, 2
    %v398 = vadd.f32 %v396, %v397
    %v399 = vrot.slane %v398, 1
    %v400 = vadd.f32 %v398, %v399
    %v401 = vrcp.pop 8.0
    %v402 = vmul.f32 8.0, %v401
    %v403 = vsub.f32 1.0, %v402
    %v404 = vmul.f32 %v401, %v403
    %v405 = vadd.f32 %v401, %v404
    %vm406 = vweird.f32 %v401
    %v407 = vsel %vm406, %v401, %v405
    %v408 = vmul.f32 %v358, %v407
    %v409 = vmul.f32 %v364, %v407
    %v410 = vmul.f32 %v370, %v407
    %v411 = vmul.f32 %v376, %v407
    %v412 = vmul.f32 %v382, %v407
    %v413 = vmul.f32 %v388, %v407
    %v414 = vmul.f32 %v394, %v407
    %v415 = vmul.f32 %v400, %v407
    %v416 = vsub.f32 %v259, %v408
    %v417 = vsub.f32 %v272, %v409
    %v418 = vsub.f32 %v285, %v410
    %v419 = vsub.f32 %v298, %v411
    %v420 = vsub.f32 %v311, %v412
    %v421 = vsub.f32 %v324, %v413
    %v422 = vsub.f32 %v337, %v414
    %v423 = vsub.f32 %v350, %v415
    %v424 = vmul.f32 %v416, %v416
    %v425 = vmul.f32 %v417, %v417
    %v426 = vmul.f32 %v418, %v418
    %v427 = vmul.f32 %v419, %v419
    %v428 = vmul.f32 %v420, %v420
    %v429 = vmul.f32 %v421, %v421
    %v430 = vmul.f32 %v422, %v422
    %v431 = vmul.f32 %v423, %v423
    %v432 = vrot.slane %v424, 4
    %v433 = vadd.f32 %v424, %v432
    %v434 = vrot.slane %v433, 2
    %v435 = vadd.f32 %v433, %v434
    %v436 = vrot.slane %v435, 1
    %v437 = vadd.f32 %v435, %v436
    %v438 = vrot.slane %v425, 4
    %v439 = vadd.f32 %v425, %v438
    %v440 = vrot.slane %v439, 2
    %v441 = vadd.f32 %v439, %v440
    %v442 = vrot.slane %v441, 1
    %v443 = vadd.f32 %v441, %v442
    %v444 = vrot.slane %v426, 4
    %v445 = vadd.f32 %v426, %v444
    %v446 = vrot.slane %v445, 2
    %v447 = vadd.f32 %v445, %v446
    %v448 = vrot.slane %v447, 1
    %v449 = vadd.f32 %v447, %v448
    %v450 = vrot.slane %v427, 4
    %v451 = vadd.f32 %v427, %v450
    %v452 = vrot.slane %v451, 2
    %v453 = vadd.f32 %v451, %v452
    %v454 = vrot.slane %v453, 1
    %v455 = vadd.f32 %v453, %v454
    %v456 = vrot.slane %v428, 4
    %v457 = vadd.f32 %v428, %v456
    %v458 = vrot.slane %v457, 2
    %v459 = vadd.f32 %v457, %v458
    %v460 = vrot.slane %v459, 1
    %v461 = vadd.f32 %v459, %v460
    %v462 = vrot.slane %v429, 4
    %v463 = vadd.f32 %v429, %v462
    %v464 = vrot.slane %v463, 2
    %v465 = vadd.f32 %v463, %v464
    %v466 = vrot.slane %v465, 1
    %v467 = vadd.f32 %v465, %v466
    %v468 = vrot.slane %v430, 4
    %v469 = vadd.f32 %v430, %v468
    %v470 = vrot.slane %v469, 2
    %v471 = vadd.f32 %v469, %v470
    %v472 = vrot.slane %v471, 1
    %v473 = vadd.f32 %v471, %v472
    %v474 = vrot.slane %v431, 4
    %v475 = vadd.f32 %v431, %v474
    %v476 = vrot.slane %v475, 2
    %v477 = vadd.f32 %v475, %v476
    %v478 = vrot.slane %v477, 1
    %v479 = vadd.f32 %v477, %v478
    %v480 = vmul.f32 %v437, %v407
    %v481 = vmul.f32 %v443, %v407
    %v482 = vmul.f32 %v449, %v407
    %v483 = vmul.f32 %v455, %v407
    %v484 = vmul.f32 %v461, %v407
    %v485 = vmul.f32 %v467, %v407
    %v486 = vmul.f32 %v473, %v407
    %v487 = vmul.f32 %v479, %v407
    %v488 = vld [vmem:[#allocation11] sm:$0xff]
    %v489 = vadd.f32 %v480, 1e-05
    %v490 = vadd.f32 %v481, 1e-05
    %v491 = vadd.f32 %v482, 1e-05
    %v492 = vadd.f32 %v483, 1e-05
    %v493 = vadd.f32 %v484, 1e-05
    %v494 = vadd.f32 %v485, 1e-05
    %v495 = vadd.f32 %v486, 1e-05
    %v496 = vadd.f32 %v487, 1e-05
    %v497 = vrsqrt.pop %v489
    %v498 = vmul.f32 %v497, %v489
    %v499 = vmul.f32 %v498, %v497
    %v500 = vmul.f32 0.5, %v499
    %v501 = vsub.f32 1.5, %v500
    %v502 = vmul.f32 %v497, %v501
    %vm503 = vweird.f32 %v489
    %vm504 = vweird.f32 %v497
    %vm505 = vmor %vm503, %vm504
    %v506 = vsel %vm505, %v497, %v502
    %v507 = vrsqrt.pop %v490
    %v508 = vmul.f32 %v507, %v490
    %v509 = vmul.f32 %v508, %v507
    %v510 = vmul.f32 0.5, %v509
    %v511 = vsub.f32 1.5, %v510
    %v512 = vmul.f32 %v507, %v511
    %vm513 = vweird.f32 %v490
    %vm514 = vweird.f32 %v507
    %vm515 = vmor %vm513, %vm514
    %v516 = vsel %vm515, %v507, %v512
    %v517 = vrsqrt.pop %v491
    %v518 = vmul.f32 %v517, %v491
    %v519 = vmul.f32 %v518, %v517
    %v520 = vmul.f32 0.5, %v519
    %v521 = vsub.f32 1.5, %v520
    %v522 = vmul.f32 %v517, %v521
    %vm523 = vweird.f32 %v491
    %vm524 = vweird.f32 %v517
    %vm525 = vmor %vm523, %vm524
    %v526 = vsel %vm525, %v517, %v522
    %v527 = vrsqrt.pop %v492
    %v528 = vmul.f32 %v527, %v492
    %v529 = vmul.f32 %v528, %v527
    %v530 = vmul.f32 0.5, %v529
    %v531 = vsub.f32 1.5, %v530
    %v532 = vmul.f32 %v527, %v531
    %vm533 = vweird.f32 %v492
    %vm534 = vweird.f32 %v527
    %vm535 = vmor %vm533, %vm534
    %v536 = vsel %vm535, %v527, %v532
    %v537 = vrsqrt.pop %v493
    %v538 = vmul.f32 %v537, %v493
    %v539 = vmul.f32 %v538, %v537
    %v540 = vmul.f32 0.5, %v539
    %v541 = vsub.f32 1.5, %v540
    %v542 = vmul.f32 %v537, %v541
    %vm543 = vweird.f32 %v493
    %vm544 = vweird.f32 %v537
    %vm545 = vmor %vm543, %vm544
    %v546 = vsel %vm545, %v537, %v542
    %v547 = vrsqrt.pop %v494
    %v548 = vmul.f32 %v547, %v494
    %v549 = vmul.f32 %v548, %v547
    %v550 = vmul.f32 0.5, %v549
    %v551 = vsub.f32 1.5, %v550
    %v552 = vmul.f32 %v547, %v551
    %vm553 = vweird.f32 %v494
    %vm554 = vweird.f32 %v547
    %vm555 = vmor %vm553, %vm554
    %v556 = vsel %vm555, %v547, %v552
    %v557 = vrsqrt.pop %v495
    %v558 = vmul.f32 %v557, %v495
    %v559 = vmul.f32 %v558, %v557
    %v560 = vmul.f32 0.5, %v559
    %v561 = vsub.f32 1.5, %v560
    %v562 = vmul.f32 %v557, %v561
    %vm563 = vweird.f32 %v495
    %vm564 = vweird.f32 %v557
    %vm565 = vmor %vm563, %vm564
    %v566 = vsel %vm565, %v557, %v562
    %v567 = vrsqrt.pop %v496
    %v568 = vmul.f32 %v567, %v496
    %v569 = vmul.f32 %v568, %v567
    %v570 = vmul.f32 0.5, %v569
    %v571 = vsub.f32 1.5, %v570
    %v572 = vmul.f32 %v567, %v571
    %vm573 = vweird.f32 %v496
    %vm574 = vweird.f32 %v567
    %vm575 = vmor %vm573, %vm574
    %v576 = vsel %vm575, %v567, %v572
    %v585 = vrot.slane %v516, 7
    %v586 = vrot.slane %v526, 6
    %v587 = vrot.slane %v536, 5
    %v588 = vrot.slane %v546, 4
    %v589 = vrot.slane %v556, 3
    %v590 = vrot.slane %v566, 2
    %v591 = vrot.slane %v576, 1
    %vm592 = vcmask 1040384
    %v593 = vsel %vm592, %v506, %v585
    %vm594 = vcmask 1042434
    %v595 = vsel %vm594, %v586, %v587
    %vm596 = vcmask 1041408
    %v597 = vsel %vm596, %v593, %v595
    %vm598 = vcmask 1044484
    %v599 = vsel %vm598, %v588, %v589
    %vm600 = vcmask 1046534
    %v601 = vsel %vm600, %v590, %v591
    %vm602 = vcmask 1045508
    %v603 = vsel %vm602, %v599, %v601
    %vm604 = vcmask 1043456
    %v605 = vsel %vm604, %v597, %v603
    %v607 = vmul.f32 %v488, %v605
    %v608 = vld [vmem:[#allocation12] sm:$0xff]
    %v610 = vperm.slane %v607, 0
    %v611 = vperm.slane %v607, 1
    %v612 = vperm.slane %v607, 2
    %v613 = vperm.slane %v607, 3
    %v614 = vperm.slane %v607, 4
    %v615 = vperm.slane %v607, 5
    %v616 = vperm.slane %v607, 6
    %v617 = vperm.slane %v607, 7
    %v626 = vmul.f32 %v408, %v610
    %v627 = vmul.f32 %v409, %v611
    %v628 = vmul.f32 %v410, %v612
    %v629 = vmul.f32 %v411, %v613
    %v630 = vmul.f32 %v412, %v614
    %v631 = vmul.f32 %v413, %v615
    %v632 = vmul.f32 %v414, %v616
    %v633 = vmul.f32 %v415, %v617
    %v642 = vrot.slane %v627, 7
    %v643 = vrot.slane %v628, 6
    %v644 = vrot.slane %v629, 5
    %v645 = vrot.slane %v630, 4
    %v646 = vrot.slane %v631, 3
    %v647 = vrot.slane %v632, 2
    %v648 = vrot.slane %v633, 1
    %v649 = vsel %vm592, %v626, %v642
    %v650 = vsel %vm594, %v643, %v644
    %v651 = vsel %vm596, %v649, %v650
    %v652 = vsel %vm598, %v645, %v646
    %v653 = vsel %vm600, %v647, %v648
    %v654 = vsel %vm602, %v652, %v653
    %v655 = vsel %vm604, %v651, %v654
    %v657 = vsub.f32 %v608, %v655
    %v658 = vmul.f32 %v259, %v610
    %v659 = vmul.f32 %v272, %v611
    %v660 = vmul.f32 %v285, %v612
    %v661 = vmul.f32 %v298, %v613
    %v662 = vmul.f32 %v311, %v614
    %v663 = vmul.f32 %v324, %v615
    %v664 = vmul.f32 %v337, %v616
    %v665 = vmul.f32 %v350, %v617
    %v667 = vperm.slane %v657, 0
    %v668 = vperm.slane %v657, 1
    %v669 = vperm.slane %v657, 2
    %v670 = vperm.slane %v657, 3
    %v671 = vperm.slane %v657, 4
    %v672 = vperm.slane %v657, 5
    %v673 = vperm.slane %v657, 6
    %v674 = vperm.slane %v657, 7
    %v683 = vadd.f32 %v658, %v667
    %v684 = vadd.f32 %v659, %v668
    %v685 = vadd.f32 %v660, %v669
    %v686 = vadd.f32 %v661, %v670
    %v687 = vadd.f32 %v662, %v671
    %v688 = vadd.f32 %v663, %v672
    %v689 = vadd.f32 %v664, %v673
    %v690 = vadd.f32 %v665, %v674
    %v691 = vmax.f32 %v683, 0.0
    %v692 = vmax.f32 %v684, 0.0
    %v693 = vmax.f32 %v685, 0.0
    %v694 = vmax.f32 %v686, 0.0
    %v695 = vmax.f32 %v687, 0.0
    %v696 = vmax.f32 %v688, 0.0
    %v697 = vmax.f32 %v689, 0.0
    %v698 = vmax.f32 %v690, 0.0
    %s699 = smul.u32 2, 128
    %s700 = smul.u32 %s699, 8
    %s701 = sshll.u32 %s700, 4
    %702 = dma.done [#allocation5], %s701
    %v703 = vld [vmem:[#allocation2] sm:$0xff]
    %v704 = vld [vmem:[#allocation2 + $0x8] sm:$0xff]
    %v705 = vld [vmem:[#allocation2 + $0x10] sm:$0xff]
    %v706 = vld [vmem:[#allocation2 + $0x18] sm:$0xff]
    %v707 = vld [vmem:[#allocation2 + $0x20] sm:$0xff]
    %v708 = vld [vmem:[#allocation2 + $0x28] sm:$0xff]
    %v709 = vld [vmem:[#allocation2 + $0x30] sm:$0xff]
    %v710 = vld [vmem:[#allocation2 + $0x38] sm:$0xff]
    %v711 = vld [vmem:[#allocation2 + $0x40] sm:$0xff]
    %v712 = vld [vmem:[#allocation2 + $0x48] sm:$0xff]
    %v713 = vld [vmem:[#allocation2 + $0x50] sm:$0xff]
    %v714 = vld [vmem:[#allocation2 + $0x58] sm:$0xff]
    %v715 = vld [vmem:[#allocation2 + $0x60] sm:$0xff]
    %v716 = vld [vmem:[#allocation2 + $0x68] sm:$0xff]
    %v717 = vld [vmem:[#allocation2 + $0x70] sm:$0xff]
    %v718 = vld [vmem:[#allocation2 + $0x78] sm:$0xff]
    %v719 = vld [vmem:[#allocation2 + $0x80] sm:$0xff]
    %v720 = vld [vmem:[#allocation2 + $0x88] sm:$0xff]
    %v721 = vld [vmem:[#allocation2 + $0x90] sm:$0xff]
    %v722 = vld [vmem:[#allocation2 + $0x98] sm:$0xff]
    %v723 = vld [vmem:[#allocation2 + $0xa0] sm:$0xff]
    %v724 = vld [vmem:[#allocation2 + $0xa8] sm:$0xff]
    %v725 = vld [vmem:[#allocation2 + $0xb0] sm:$0xff]
    %v726 = vld [vmem:[#allocation2 + $0xb8] sm:$0xff]
    %v727 = vld [vmem:[#allocation2 + $0xc0] sm:$0xff]
    %v728 = vld [vmem:[#allocation2 + $0xc8] sm:$0xff]
    %v729 = vld [vmem:[#allocation2 + $0xd0] sm:$0xff]
    %v730 = vld [vmem:[#allocation2 + $0xd8] sm:$0xff]
    %v731 = vld [vmem:[#allocation2 + $0xe0] sm:$0xff]
    %v732 = vld [vmem:[#allocation2 + $0xe8] sm:$0xff]
    %v733 = vld [vmem:[#allocation2 + $0xf0] sm:$0xff]
    %v734 = vld [vmem:[#allocation2 + $0xf8] sm:$0xff]
    %v735 = vld [vmem:[#allocation2 + $0x100] sm:$0xff]
    %v736 = vld [vmem:[#allocation2 + $0x108] sm:$0xff]
    %v737 = vld [vmem:[#allocation2 + $0x110] sm:$0xff]
    %v738 = vld [vmem:[#allocation2 + $0x118] sm:$0xff]
    %v739 = vld [vmem:[#allocation2 + $0x120] sm:$0xff]
    %v740 = vld [vmem:[#allocation2 + $0x128] sm:$0xff]
    %v741 = vld [vmem:[#allocation2 + $0x130] sm:$0xff]
    %v742 = vld [vmem:[#allocation2 + $0x138] sm:$0xff]
    %v743 = vld [vmem:[#allocation2 + $0x140] sm:$0xff]
    %v744 = vld [vmem:[#allocation2 + $0x148] sm:$0xff]
    %v745 = vld [vmem:[#allocation2 + $0x150] sm:$0xff]
    %v746 = vld [vmem:[#allocation2 + $0x158] sm:$0xff]
    %v747 = vld [vmem:[#allocation2 + $0x160] sm:$0xff]
    %v748 = vld [vmem:[#allocation2 + $0x168] sm:$0xff]
    %v749 = vld [vmem:[#allocation2 + $0x170] sm:$0xff]
    %v750 = vld [vmem:[#allocation2 + $0x178] sm:$0xff]
    %v751 = vld [vmem:[#allocation2 + $0x180] sm:$0xff]
    %v752 = vld [vmem:[#allocation2 + $0x188] sm:$0xff]
    %v753 = vld [vmem:[#allocation2 + $0x190] sm:$0xff]
    %v754 = vld [vmem:[#allocation2 + $0x198] sm:$0xff]
    %v755 = vld [vmem:[#allocation2 + $0x1a0] sm:$0xff]
    %v756 = vld [vmem:[#allocation2 + $0x1a8] sm:$0xff]
    %v757 = vld [vmem:[#allocation2 + $0x1b0] sm:$0xff]
    %v758 = vld [vmem:[#allocation2 + $0x1b8] sm:$0xff]
    %v759 = vld [vmem:[#allocation2 + $0x1c0] sm:$0xff]
    %v760 = vld [vmem:[#allocation2 + $0x1c8] sm:$0xff]
    %v761 = vld [vmem:[#allocation2 + $0x1d0] sm:$0xff]
    %v762 = vld [vmem:[#allocation2 + $0x1d8] sm:$0xff]
    %v763 = vld [vmem:[#allocation2 + $0x1e0] sm:$0xff]
    %v764 = vld [vmem:[#allocation2 + $0x1e8] sm:$0xff]
    %v765 = vld [vmem:[#allocation2 + $0x1f0] sm:$0xff]
    %v766 = vld [vmem:[#allocation2 + $0x1f8] sm:$0xff]
    %v767 = vld [vmem:[#allocation2 + $0x200] sm:$0xff]
    %v768 = vld [vmem:[#allocation2 + $0x208] sm:$0xff]
    %v769 = vld [vmem:[#allocation2 + $0x210] sm:$0xff]
    %v770 = vld [vmem:[#allocation2 + $0x218] sm:$0xff]
    %v771 = vld [vmem:[#allocation2 + $0x220] sm:$0xff]
    %v772 = vld [vmem:[#allocation2 + $0x228] sm:$0xff]
    %v773 = vld [vmem:[#allocation2 + $0x230] sm:$0xff]
    %v774 = vld [vmem:[#allocation2 + $0x238] sm:$0xff]
    %v775 = vld [vmem:[#allocation2 + $0x240] sm:$0xff]
    %v776 = vld [vmem:[#allocation2 + $0x248] sm:$0xff]
    %v777 = vld [vmem:[#allocation2 + $0x250] sm:$0xff]
    %v778 = vld [vmem:[#allocation2 + $0x258] sm:$0xff]
    %v779 = vld [vmem:[#allocation2 + $0x260] sm:$0xff]
    %v780 = vld [vmem:[#allocation2 + $0x268] sm:$0xff]
    %v781 = vld [vmem:[#allocation2 + $0x270] sm:$0xff]
    %v782 = vld [vmem:[#allocation2 + $0x278] sm:$0xff]
    %v783 = vld [vmem:[#allocation2 + $0x280] sm:$0xff]
    %v784 = vld [vmem:[#allocation2 + $0x288] sm:$0xff]
    %v785 = vld [vmem:[#allocation2 + $0x290] sm:$0xff]
    %v786 = vld [vmem:[#allocation2 + $0x298] sm:$0xff]
    %v787 = vld [vmem:[#allocation2 + $0x2a0] sm:$0xff]
    %v788 = vld [vmem:[#allocation2 + $0x2a8] sm:$0xff]
    %v789 = vld [vmem:[#allocation2 + $0x2b0] sm:$0xff]
    %v790 = vld [vmem:[#allocation2 + $0x2b8] sm:$0xff]
    %v791 = vld [vmem:[#allocation2 + $0x2c0] sm:$0xff]
    %v792 = vld [vmem:[#allocation2 + $0x2c8] sm:$0xff]
    %v793 = vld [vmem:[#allocation2 + $0x2d0] sm:$0xff]
    %v794 = vld [vmem:[#allocation2 + $0x2d8] sm:$0xff]
    %v795 = vld [vmem:[#allocation2 + $0x2e0] sm:$0xff]
    %v796 = vld [vmem:[#allocation2 + $0x2e8] sm:$0xff]
    %v797 = vld [vmem:[#allocation2 + $0x2f0] sm:$0xff]
    %v798 = vld [vmem:[#allocation2 + $0x2f8] sm:$0xff]
    %v799 = vld [vmem:[#allocation2 + $0x300] sm:$0xff]
    %v800 = vld [vmem:[#allocation2 + $0x308] sm:$0xff]
    %v801 = vld [vmem:[#allocation2 + $0x310] sm:$0xff]
    %v802 = vld [vmem:[#allocation2 + $0x318] sm:$0xff]
    %v803 = vld [vmem:[#allocation2 + $0x320] sm:$0xff]
    %v804 = vld [vmem:[#allocation2 + $0x328] sm:$0xff]
    %v805 = vld [vmem:[#allocation2 + $0x330] sm:$0xff]
    %v806 = vld [vmem:[#allocation2 + $0x338] sm:$0xff]
    %v807 = vld [vmem:[#allocation2 + $0x340] sm:$0xff]
    %v808 = vld [vmem:[#allocation2 + $0x348] sm:$0xff]
    %v809 = vld [vmem:[#allocation2 + $0x350] sm:$0xff]
    %v810 = vld [vmem:[#allocation2 + $0x358] sm:$0xff]
    %v811 = vld [vmem:[#allocation2 + $0x360] sm:$0xff]
    %v812 = vld [vmem:[#allocation2 + $0x368] sm:$0xff]
    %v813 = vld [vmem:[#allocation2 + $0x370] sm:$0xff]
    %v814 = vld [vmem:[#allocation2 + $0x378] sm:$0xff]
    %v815 = vld [vmem:[#allocation2 + $0x380] sm:$0xff]
    %v816 = vld [vmem:[#allocation2 + $0x388] sm:$0xff]
    %v817 = vld [vmem:[#allocation2 + $0x390] sm:$0xff]
    %v818 = vld [vmem:[#allocation2 + $0x398] sm:$0xff]
    %v819 = vld [vmem:[#allocation2 + $0x3a0] sm:$0xff]
    %v820 = vld [vmem:[#allocation2 + $0x3a8] sm:$0xff]
    %v821 = vld [vmem:[#allocation2 + $0x3b0] sm:$0xff]
    %v822 = vld [vmem:[#allocation2 + $0x3b8] sm:$0xff]
    %v823 = vld [vmem:[#allocation2 + $0x3c0] sm:$0xff]
    %v824 = vld [vmem:[#allocation2 + $0x3c8] sm:$0xff]
    %v825 = vld [vmem:[#allocation2 + $0x3d0] sm:$0xff]
    %v826 = vld [vmem:[#allocation2 + $0x3d8] sm:$0xff]
    %v827 = vld [vmem:[#allocation2 + $0x3e0] sm:$0xff]
    %v828 = vld [vmem:[#allocation2 + $0x3e8] sm:$0xff]
    %v829 = vld [vmem:[#allocation2 + $0x3f0] sm:$0xff]
    %v830 = vld [vmem:[#allocation2 + $0x3f8] sm:$0xff]
    %v831 = vld [vmem:[#allocation2 + $0x400] sm:$0xff]
    %v832 = vld [vmem:[#allocation2 + $0x408] sm:$0xff]
    %v833 = vld [vmem:[#allocation2 + $0x410] sm:$0xff]
    %v834 = vld [vmem:[#allocation2 + $0x418] sm:$0xff]
    %v835 = vld [vmem:[#allocation2 + $0x420] sm:$0xff]
    %v836 = vld [vmem:[#allocation2 + $0x428] sm:$0xff]
    %v837 = vld [vmem:[#allocation2 + $0x430] sm:$0xff]
    %v838 = vld [vmem:[#allocation2 + $0x438] sm:$0xff]
    %v839 = vld [vmem:[#allocation2 + $0x440] sm:$0xff]
    %v840 = vld [vmem:[#allocation2 + $0x448] sm:$0xff]
    %v841 = vld [vmem:[#allocation2 + $0x450] sm:$0xff]
    %v842 = vld [vmem:[#allocation2 + $0x458] sm:$0xff]
    %v843 = vld [vmem:[#allocation2 + $0x460] sm:$0xff]
    %v844 = vld [vmem:[#allocation2 + $0x468] sm:$0xff]
    %v845 = vld [vmem:[#allocation2 + $0x470] sm:$0xff]
    %v846 = vld [vmem:[#allocation2 + $0x478] sm:$0xff]
    %v847 = vld [vmem:[#allocation2 + $0x480] sm:$0xff]
    %v848 = vld [vmem:[#allocation2 + $0x488] sm:$0xff]
    %v849 = vld [vmem:[#allocation2 + $0x490] sm:$0xff]
    %v850 = vld [vmem:[#allocation2 + $0x498] sm:$0xff]
    %v851 = vld [vmem:[#allocation2 + $0x4a0] sm:$0xff]
    %v852 = vld [vmem:[#allocation2 + $0x4a8] sm:$0xff]
    %v853 = vld [vmem:[#allocation2 + $0x4b0] sm:$0xff]
    %v854 = vld [vmem:[#allocation2 + $0x4b8] sm:$0xff]
    %v855 = vld [vmem:[#allocation2 + $0x4c0] sm:$0xff]
    %v856 = vld [vmem:[#allocation2 + $0x4c8] sm:$0xff]
    %v857 = vld [vmem:[#allocation2 + $0x4d0] sm:$0xff]
    %v858 = vld [vmem:[#allocation2 + $0x4d8] sm:$0xff]
    %v859 = vld [vmem:[#allocation2 + $0x4e0] sm:$0xff]
    %v860 = vld [vmem:[#allocation2 + $0x4e8] sm:$0xff]
    %v861 = vld [vmem:[#allocation2 + $0x4f0] sm:$0xff]
    %v862 = vld [vmem:[#allocation2 + $0x4f8] sm:$0xff]
    %v863 = vld [vmem:[#allocation2 + $0x500] sm:$0xff]
    %v864 = vld [vmem:[#allocation2 + $0x508] sm:$0xff]
    %v865 = vld [vmem:[#allocation2 + $0x510] sm:$0xff]
    %v866 = vld [vmem:[#allocation2 + $0x518] sm:$0xff]
    %v867 = vld [vmem:[#allocation2 + $0x520] sm:$0xff]
    %v868 = vld [vmem:[#allocation2 + $0x528] sm:$0xff]
    %v869 = vld [vmem:[#allocation2 + $0x530] sm:$0xff]
    %v870 = vld [vmem:[#allocation2 + $0x538] sm:$0xff]
    %v871 = vld [vmem:[#allocation2 + $0x540] sm:$0xff]
    %v872 = vld [vmem:[#allocation2 + $0x548] sm:$0xff]
    %v873 = vld [vmem:[#allocation2 + $0x550] sm:$0xff]
    %v874 = vld [vmem:[#allocation2 + $0x558] sm:$0xff]
    %v875 = vld [vmem:[#allocation2 + $0x560] sm:$0xff]
    %v876 = vld [vmem:[#allocation2 + $0x568] sm:$0xff]
    %v877 = vld [vmem:[#allocation2 + $0x570] sm:$0xff]
    %v878 = vld [vmem:[#allocation2 + $0x578] sm:$0xff]
    %v879 = vld [vmem:[#allocation2 + $0x580] sm:$0xff]
    %v880 = vld [vmem:[#allocation2 + $0x588] sm:$0xff]
    %v881 = vld [vmem:[#allocation2 + $0x590] sm:$0xff]
    %v882 = vld [vmem:[#allocation2 + $0x598] sm:$0xff]
    %v883 = vld [vmem:[#allocation2 + $0x5a0] sm:$0xff]
    %v884 = vld [vmem:[#allocation2 + $0x5a8] sm:$0xff]
    %v885 = vld [vmem:[#allocation2 + $0x5b0] sm:$0xff]
    %v886 = vld [vmem:[#allocation2 + $0x5b8] sm:$0xff]
    %v887 = vld [vmem:[#allocation2 + $0x5c0] sm:$0xff]
    %v888 = vld [vmem:[#allocation2 + $0x5c8] sm:$0xff]
    %v889 = vld [vmem:[#allocation2 + $0x5d0] sm:$0xff]
    %v890 = vld [vmem:[#allocation2 + $0x5d8] sm:$0xff]
    %v891 = vld [vmem:[#allocation2 + $0x5e0] sm:$0xff]
    %v892 = vld [vmem:[#allocation2 + $0x5e8] sm:$0xff]
    %v893 = vld [vmem:[#allocation2 + $0x5f0] sm:$0xff]
    %v894 = vld [vmem:[#allocation2 + $0x5f8] sm:$0xff]
    %v895 = vld [vmem:[#allocation2 + $0x600] sm:$0xff]
    %v896 = vld [vmem:[#allocation2 + $0x608] sm:$0xff]
    %v897 = vld [vmem:[#allocation2 + $0x610] sm:$0xff]
    %v898 = vld [vmem:[#allocation2 + $0x618] sm:$0xff]
    %v899 = vld [vmem:[#allocation2 + $0x620] sm:$0xff]
    %v900 = vld [vmem:[#allocation2 + $0x628] sm:$0xff]
    %v901 = vld [vmem:[#allocation2 + $0x630] sm:$0xff]
    %v902 = vld [vmem:[#allocation2 + $0x638] sm:$0xff]
    %v903 = vld [vmem:[#allocation2 + $0x640] sm:$0xff]
    %v904 = vld [vmem:[#allocation2 + $0x648] sm:$0xff]
    %v905 = vld [vmem:[#allocation2 + $0x650] sm:$0xff]
    %v906 = vld [vmem:[#allocation2 + $0x658] sm:$0xff]
    %v907 = vld [vmem:[#allocation2 + $0x660] sm:$0xff]
    %v908 = vld [vmem:[#allocation2 + $0x668] sm:$0xff]
    %v909 = vld [vmem:[#allocation2 + $0x670] sm:$0xff]
    %v910 = vld [vmem:[#allocation2 + $0x678] sm:$0xff]
    %v911 = vld [vmem:[#allocation2 + $0x680] sm:$0xff]
    %v912 = vld [vmem:[#allocation2 + $0x688] sm:$0xff]
    %v913 = vld [vmem:[#allocation2 + $0x690] sm:$0xff]
    %v914 = vld [vmem:[#allocation2 + $0x698] sm:$0xff]
    %v915 = vld [vmem:[#allocation2 + $0x6a0] sm:$0xff]
    %v916 = vld [vmem:[#allocation2 + $0x6a8] sm:$0xff]
    %v917 = vld [vmem:[#allocation2 + $0x6b0] sm:$0xff]
    %v918 = vld [vmem:[#allocation2 + $0x6b8] sm:$0xff]
    %v919 = vld [vmem:[#allocation2 + $0x6c0] sm:$0xff]
    %v920 = vld [vmem:[#allocation2 + $0x6c8] sm:$0xff]
    %v921 = vld [vmem:[#allocation2 + $0x6d0] sm:$0xff]
    %v922 = vld [vmem:[#allocation2 + $0x6d8] sm:$0xff]
    %v923 = vld [vmem:[#allocation2 + $0x6e0] sm:$0xff]
    %v924 = vld [vmem:[#allocation2 + $0x6e8] sm:$0xff]
    %v925 = vld [vmem:[#allocation2 + $0x6f0] sm:$0xff]
    %v926 = vld [vmem:[#allocation2 + $0x6f8] sm:$0xff]
    %v927 = vld [vmem:[#allocation2 + $0x700] sm:$0xff]
    %v928 = vld [vmem:[#allocation2 + $0x708] sm:$0xff]
    %v929 = vld [vmem:[#allocation2 + $0x710] sm:$0xff]
    %v930 = vld [vmem:[#allocation2 + $0x718] sm:$0xff]
    %v931 = vld [vmem:[#allocation2 + $0x720] sm:$0xff]
    %v932 = vld [vmem:[#allocation2 + $0x728] sm:$0xff]
    %v933 = vld [vmem:[#allocation2 + $0x730] sm:$0xff]
    %v934 = vld [vmem:[#allocation2 + $0x738] sm:$0xff]
    %v935 = vld [vmem:[#allocation2 + $0x740] sm:$0xff]
    %v936 = vld [vmem:[#allocation2 + $0x748] sm:$0xff]
    %v937 = vld [vmem:[#allocation2 + $0x750] sm:$0xff]
    %v938 = vld [vmem:[#allocation2 + $0x758] sm:$0xff]
    %v939 = vld [vmem:[#allocation2 + $0x760] sm:$0xff]
    %v940 = vld [vmem:[#allocation2 + $0x768] sm:$0xff]
    %v941 = vld [vmem:[#allocation2 + $0x770] sm:$0xff]
    %v942 = vld [vmem:[#allocation2 + $0x778] sm:$0xff]
    %v943 = vld [vmem:[#allocation2 + $0x780] sm:$0xff]
    %v944 = vld [vmem:[#allocation2 + $0x788] sm:$0xff]
    %v945 = vld [vmem:[#allocation2 + $0x790] sm:$0xff]
    %v946 = vld [vmem:[#allocation2 + $0x798] sm:$0xff]
    %v947 = vld [vmem:[#allocation2 + $0x7a0] sm:$0xff]
    %v948 = vld [vmem:[#allocation2 + $0x7a8] sm:$0xff]
    %v949 = vld [vmem:[#allocation2 + $0x7b0] sm:$0xff]
    %v950 = vld [vmem:[#allocation2 + $0x7b8] sm:$0xff]
    %v951 = vld [vmem:[#allocation2 + $0x7c0] sm:$0xff]
    %v952 = vld [vmem:[#allocation2 + $0x7c8] sm:$0xff]
    %v953 = vld [vmem:[#allocation2 + $0x7d0] sm:$0xff]
    %v954 = vld [vmem:[#allocation2 + $0x7d8] sm:$0xff]
    %v955 = vld [vmem:[#allocation2 + $0x7e0] sm:$0xff]
    %v956 = vld [vmem:[#allocation2 + $0x7e8] sm:$0xff]
    %v957 = vld [vmem:[#allocation2 + $0x7f0] sm:$0xff]
    %v958 = vld [vmem:[#allocation2 + $0x7f8] sm:$0xff]
    %v959 = vpack.c.bf16 %v691, %v691
    %v960 = vpack.c.bf16 %v692, %v692
    %v961 = vpack.c.bf16 %v693, %v693
    %v962 = vpack.c.bf16 %v694, %v694
    %v963 = vpack.c.bf16 %v695, %v695
    %v964 = vpack.c.bf16 %v696, %v696
    %v965 = vpack.c.bf16 %v697, %v697
    %v966 = vpack.c.bf16 %v698, %v698
    %v967 = vunpack.c.0.s8 %v703
    %v968 = vunpack.c.0.s8 %v704
    %v969 = vunpack.c.0.s8 %v705
    %v970 = vunpack.c.0.s8 %v706
    %v971 = vunpack.c.0.s8 %v707
    %v972 = vunpack.c.0.s8 %v708
    %v973 = vunpack.c.0.s8 %v709
    %v974 = vunpack.c.0.s8 %v710
    %v975 = vunpack.c.1.s8 %v703
    %v976 = vunpack.c.1.s8 %v704
    %v977 = vunpack.c.1.s8 %v705
    %v978 = vunpack.c.1.s8 %v706
    %v979 = vunpack.c.1.s8 %v707
    %v980 = vunpack.c.1.s8 %v708
    %v981 = vunpack.c.1.s8 %v709
    %v982 = vunpack.c.1.s8 %v710
    %v983 = vunpack.c.2.s8 %v703
    %v984 = vunpack.c.2.s8 %v704
    %v985 = vunpack.c.2.s8 %v705
    %v986 = vunpack.c.2.s8 %v706
    %v987 = vunpack.c.2.s8 %v707
    %v988 = vunpack.c.2.s8 %v708
    %v989 = vunpack.c.2.s8 %v709
    %v990 = vunpack.c.2.s8 %v710
    %v991 = vunpack.c.3.s8 %v703
    %v992 = vunpack.c.3.s8 %v704
    %v993 = vunpack.c.3.s8 %v705
    %v994 = vunpack.c.3.s8 %v706
    %v995 = vunpack.c.3.s8 %v707
    %v996 = vunpack.c.3.s8 %v708
    %v997 = vunpack.c.3.s8 %v709
    %v998 = vunpack.c.3.s8 %v710
    %v999 = vunpack.c.0.s8 %v711
    %v1000 = vunpack.c.0.s8 %v712
    %v1001 = vunpack.c.0.s8 %v713
    %v1002 = vunpack.c.0.s8 %v714
    %v1003 = vunpack.c.0.s8 %v715
    %v1004 = vunpack.c.0.s8 %v716
    %v1005 = vunpack.c.0.s8 %v717
    %v1006 = vunpack.c.0.s8 %v718
    %v1007 = vunpack.c.1.s8 %v711
    %v1008 = vunpack.c.1.s8 %v712
    %v1009 = vunpack.c.1.s8 %v713
    %v1010 = vunpack.c.1.s8 %v714
    %v1011 = vunpack.c.1.s8 %v715
    %v1012 = vunpack.c.1.s8 %v716
    %v1013 = vunpack.c.1.s8 %v717
    %v1014 = vunpack.c.1.s8 %v718
    %v1015 = vunpack.c.2.s8 %v711
    %v1016 = vunpack.c.2.s8 %v712
    %v1017 = vunpack.c.2.s8 %v713
    %v1018 = vunpack.c.2.s8 %v714
    %v1019 = vunpack.c.2.s8 %v715
    %v1020 = vunpack.c.2.s8 %v716
    %v1021 = vunpack.c.2.s8 %v717
    %v1022 = vunpack.c.2.s8 %v718
    %v1023 = vunpack.c.3.s8 %v711
    %v1024 = vunpack.c.3.s8 %v712
    %v1025 = vunpack.c.3.s8 %v713
    %v1026 = vunpack.c.3.s8 %v714
    %v1027 = vunpack.c.3.s8 %v715
    %v1028 = vunpack.c.3.s8 %v716
    %v1029 = vunpack.c.3.s8 %v717
    %v1030 = vunpack.c.3.s8 %v718
    %v1031 = vunpack.c.0.s8 %v719
    %v1032 = vunpack.c.0.s8 %v720
    %v1033 = vunpack.c.0.s8 %v721
    %v1034 = vunpack.c.0.s8 %v722
    %v1035 = vunpack.c.0.s8 %v723
    %v1036 = vunpack.c.0.s8 %v724
    %v1037 = vunpack.c.0.s8 %v725
    %v1038 = vunpack.c.0.s8 %v726
    %v1039 = vunpack.c.1.s8 %v719
    %v1040 = vunpack.c.1.s8 %v720
    %v1041 = vunpack.c.1.s8 %v721
    %v1042 = vunpack.c.1.s8 %v722
    %v1043 = vunpack.c.1.s8 %v723
    %v1044 = vunpack.c.1.s8 %v724
    %v1045 = vunpack.c.1.s8 %v725
    %v1046 = vunpack.c.1.s8 %v726
    %v1047 = vunpack.c.2.s8 %v719
    %v1048 = vunpack.c.2.s8 %v720
    %v1049 = vunpack.c.2.s8 %v721
    %v1050 = vunpack.c.2.s8 %v722
    %v1051 = vunpack.c.2.s8 %v723
    %v1052 = vunpack.c.2.s8 %v724
    %v1053 = vunpack.c.2.s8 %v725
    %v1054 = vunpack.c.2.s8 %v726
    %v1055 = vunpack.c.3.s8 %v719
    %v1056 = vunpack.c.3.s8 %v720
    %v1057 = vunpack.c.3.s8 %v721
    %v1058 = vunpack.c.3.s8 %v722
    %v1059 = vunpack.c.3.s8 %v723
    %v1060 = vunpack.c.3.s8 %v724
    %v1061 = vunpack.c.3.s8 %v725
    %v1062 = vunpack.c.3.s8 %v726
    %v1063 = vunpack.c.0.s8 %v727
    %v1064 = vunpack.c.0.s8 %v728
    %v1065 = vunpack.c.0.s8 %v729
    %v1066 = vunpack.c.0.s8 %v730
    %v1067 = vunpack.c.0.s8 %v731
    %v1068 = vunpack.c.0.s8 %v732
    %v1069 = vunpack.c.0.s8 %v733
    %v1070 = vunpack.c.0.s8 %v734
    %v1071 = vunpack.c.1.s8 %v727
    %v1072 = vunpack.c.1.s8 %v728
    %v1073 = vunpack.c.1.s8 %v729
    %v1074 = vunpack.c.1.s8 %v730
    %v1075 = vunpack.c.1.s8 %v731
    %v1076 = vunpack.c.1.s8 %v732
    %v1077 = vunpack.c.1.s8 %v733
    %v1078 = vunpack.c.1.s8 %v734
    %v1079 = vunpack.c.2.s8 %v727
    %v1080 = vunpack.c.2.s8 %v728
    %v1081 = vunpack.c.2.s8 %v729
    %v1082 = vunpack.c.2.s8 %v730
    %v1083 = vunpack.c.2.s8 %v731
    %v1084 = vunpack.c.2.s8 %v732
    %v1085 = vunpack.c.2.s8 %v733
    %v1086 = vunpack.c.2.s8 %v734
    %v1087 = vunpack.c.3.s8 %v727
    %v1088 = vunpack.c.3.s8 %v728
    %v1089 = vunpack.c.3.s8 %v729
    %v1090 = vunpack.c.3.s8 %v730
    %v1091 = vunpack.c.3.s8 %v731
    %v1092 = vunpack.c.3.s8 %v732
    %v1093 = vunpack.c.3.s8 %v733
    %v1094 = vunpack.c.3.s8 %v734
    %v1095 = vunpack.c.0.s8 %v735
    %v1096 = vunpack.c.0.s8 %v736
    %v1097 = vunpack.c.0.s8 %v737
    %v1098 = vunpack.c.0.s8 %v738
    %v1099 = vunpack.c.0.s8 %v739
    %v1100 = vunpack.c.0.s8 %v740
    %v1101 = vunpack.c.0.s8 %v741
    %v1102 = vunpack.c.0.s8 %v742
    %v1103 = vunpack.c.1.s8 %v735
    %v1104 = vunpack.c.1.s8 %v736
    %v1105 = vunpack.c.1.s8 %v737
    %v1106 = vunpack.c.1.s8 %v738
    %v1107 = vunpack.c.1.s8 %v739
    %v1108 = vunpack.c.1.s8 %v740
    %v1109 = vunpack.c.1.s8 %v741
    %v1110 = vunpack.c.1.s8 %v742
    %v1111 = vunpack.c.2.s8 %v735
    %v1112 = vunpack.c.2.s8 %v736
    %v1113 = vunpack.c.2.s8 %v737
    %v1114 = vunpack.c.2.s8 %v738
    %v1115 = vunpack.c.2.s8 %v739
    %v1116 = vunpack.c.2.s8 %v740
    %v1117 = vunpack.c.2.s8 %v741
    %v1118 = vunpack.c.2.s8 %v742
    %v1119 = vunpack.c.3.s8 %v735
    %v1120 = vunpack.c.3.s8 %v736
    %v1121 = vunpack.c.3.s8 %v737
    %v1122 = vunpack.c.3.s8 %v738
    %v1123 = vunpack.c.3.s8 %v739
    %v1124 = vunpack.c.3.s8 %v740
    %v1125 = vunpack.c.3.s8 %v741
    %v1126 = vunpack.c.3.s8 %v742
    %v1127 = vunpack.c.0.s8 %v743
    %v1128 = vunpack.c.0.s8 %v744
    %v1129 = vunpack.c.0.s8 %v745
    %v1130 = vunpack.c.0.s8 %v746
    %v1131 = vunpack.c.0.s8 %v747
    %v1132 = vunpack.c.0.s8 %v748
    %v1133 = vunpack.c.0.s8 %v749
    %v1134 = vunpack.c.0.s8 %v750
    %v1135 = vunpack.c.1.s8 %v743
    %v1136 = vunpack.c.1.s8 %v744
    %v1137 = vunpack.c.1.s8 %v745
    %v1138 = vunpack.c.1.s8 %v746
    %v1139 = vunpack.c.1.s8 %v747
    %v1140 = vunpack.c.1.s8 %v748
    %v1141 = vunpack.c.1.s8 %v749
    %v1142 = vunpack.c.1.s8 %v750
    %v1143 = vunpack.c.2.s8 %v743
    %v1144 = vunpack.c.2.s8 %v744
    %v1145 = vunpack.c.2.s8 %v745
    %v1146 = vunpack.c.2.s8 %v746
    %v1147 = vunpack.c.2.s8 %v747
    %v1148 = vunpack.c.2.s8 %v748
    %v1149 = vunpack.c.2.s8 %v749
    %v1150 = vunpack.c.2.s8 %v750
    %v1151 = vunpack.c.3.s8 %v743
    %v1152 = vunpack.c.3.s8 %v744
    %v1153 = vunpack.c.3.s8 %v745
    %v1154 = vunpack.c.3.s8 %v746
    %v1155 = vunpack.c.3.s8 %v747
    %v1156 = vunpack.c.3.s8 %v748
    %v1157 = vunpack.c.3.s8 %v749
    %v1158 = vunpack.c.3.s8 %v750
    %v1159 = vunpack.c.0.s8 %v751
    %v1160 = vunpack.c.0.s8 %v752
    %v1161 = vunpack.c.0.s8 %v753
    %v1162 = vunpack.c.0.s8 %v754
    %v1163 = vunpack.c.0.s8 %v755
    %v1164 = vunpack.c.0.s8 %v756
    %v1165 = vunpack.c.0.s8 %v757
    %v1166 = vunpack.c.0.s8 %v758
    %v1167 = vunpack.c.1.s8 %v751
    %v1168 = vunpack.c.1.s8 %v752
    %v1169 = vunpack.c.1.s8 %v753
    %v1170 = vunpack.c.1.s8 %v754
    %v1171 = vunpack.c.1.s8 %v755
    %v1172 = vunpack.c.1.s8 %v756
    %v1173 = vunpack.c.1.s8 %v757
    %v1174 = vunpack.c.1.s8 %v758
    %v1175 = vunpack.c.2.s8 %v751
    %v1176 = vunpack.c.2.s8 %v752
    %v1177 = vunpack.c.2.s8 %v753
    %v1178 = vunpack.c.2.s8 %v754
    %v1179 = vunpack.c.2.s8 %v755
    %v1180 = vunpack.c.2.s8 %v756
    %v1181 = vunpack.c.2.s8 %v757
    %v1182 = vunpack.c.2.s8 %v758
    %v1183 = vunpack.c.3.s8 %v751
    %v1184 = vunpack.c.3.s8 %v752
    %v1185 = vunpack.c.3.s8 %v753
    %v1186 = vunpack.c.3.s8 %v754
    %v1187 = vunpack.c.3.s8 %v755
    %v1188 = vunpack.c.3.s8 %v756
    %v1189 = vunpack.c.3.s8 %v757
    %v1190 = vunpack.c.3.s8 %v758
    %v1191 = vunpack.c.0.s8 %v759
    %v1192 = vunpack.c.0.s8 %v760
    %v1193 = vunpack.c.0.s8 %v761
    %v1194 = vunpack.c.0.s8 %v762
    %v1195 = vunpack.c.0.s8 %v763
    %v1196 = vunpack.c.0.s8 %v764
    %v1197 = vunpack.c.0.s8 %v765
    %v1198 = vunpack.c.0.s8 %v766
    %v1199 = vunpack.c.1.s8 %v759
    %v1200 = vunpack.c.1.s8 %v760
    %v1201 = vunpack.c.1.s8 %v761
    %v1202 = vunpack.c.1.s8 %v762
    %v1203 = vunpack.c.1.s8 %v763
    %v1204 = vunpack.c.1.s8 %v764
    %v1205 = vunpack.c.1.s8 %v765
    %v1206 = vunpack.c.1.s8 %v766
    %v1207 = vunpack.c.2.s8 %v759
    %v1208 = vunpack.c.2.s8 %v760
    %v1209 = vunpack.c.2.s8 %v761
    %v1210 = vunpack.c.2.s8 %v762
    %v1211 = vunpack.c.2.s8 %v763
    %v1212 = vunpack.c.2.s8 %v764
    %v1213 = vunpack.c.2.s8 %v765
    %v1214 = vunpack.c.2.s8 %v766
    %v1215 = vunpack.c.3.s8 %v759
    %v1216 = vunpack.c.3.s8 %v760
    %v1217 = vunpack.c.3.s8 %v761
    %v1218 = vunpack.c.3.s8 %v762
    %v1219 = vunpack.c.3.s8 %v763
    %v1220 = vunpack.c.3.s8 %v764
    %v1221 = vunpack.c.3.s8 %v765
    %v1222 = vunpack.c.3.s8 %v766
    %v1223 = vunpack.c.0.s8 %v767
    %v1224 = vunpack.c.0.s8 %v768
    %v1225 = vunpack.c.0.s8 %v769
    %v1226 = vunpack.c.0.s8 %v770
    %v1227 = vunpack.c.0.s8 %v771
    %v1228 = vunpack.c.0.s8 %v772
    %v1229 = vunpack.c.0.s8 %v773
    %v1230 = vunpack.c.0.s8 %v774
    %v1231 = vunpack.c.1.s8 %v767
    %v1232 = vunpack.c.1.s8 %v768
    %v1233 = vunpack.c.1.s8 %v769
    %v1234 = vunpack.c.1.s8 %v770
    %v1235 = vunpack.c.1.s8 %v771
    %v1236 = vunpack.c.1.s8 %v772
    %v1237 = vunpack.c.1.s8 %v773
    %v1238 = vunpack.c.1.s8 %v774
    %v1239 = vunpack.c.2.s8 %v767
    %v1240 = vunpack.c.2.s8 %v768
    %v1241 = vunpack.c.2.s8 %v769
    %v1242 = vunpack.c.2.s8 %v770
    %v1243 = vunpack.c.2.s8 %v771
    %v1244 = vunpack.c.2.s8 %v772
    %v1245 = vunpack.c.2.s8 %v773
    %v1246 = vunpack.c.2.s8 %v774
    %v1247 = vunpack.c.3.s8 %v767
    %v1248 = vunpack.c.3.s8 %v768
    %v1249 = vunpack.c.3.s8 %v769
    %v1250 = vunpack.c.3.s8 %v770
    %v1251 = vunpack.c.3.s8 %v771
    %v1252 = vunpack.c.3.s8 %v772
    %v1253 = vunpack.c.3.s8 %v773
    %v1254 = vunpack.c.3.s8 %v774
    %v1255 = vunpack.c.0.s8 %v775
    %v1256 = vunpack.c.0.s8 %v776
    %v1257 = vunpack.c.0.s8 %v777
    %v1258 = vunpack.c.0.s8 %v778
    %v1259 = vunpack.c.0.s8 %v779
    %v1260 = vunpack.c.0.s8 %v780
    %v1261 = vunpack.c.0.s8 %v781
    %v1262 = vunpack.c.0.s8 %v782
    %v1263 = vunpack.c.1.s8 %v775
    %v1264 = vunpack.c.1.s8 %v776
    %v1265 = vunpack.c.1.s8 %v777
    %v1266 = vunpack.c.1.s8 %v778
    %v1267 = vunpack.c.1.s8 %v779
    %v1268 = vunpack.c.1.s8 %v780
    %v1269 = vunpack.c.1.s8 %v781
    %v1270 = vunpack.c.1.s8 %v782
    %v1271 = vunpack.c.2.s8 %v775
    %v1272 = vunpack.c.2.s8 %v776
    %v1273 = vunpack.c.2.s8 %v777
    %v1274 = vunpack.c.2.s8 %v778
    %v1275 = vunpack.c.2.s8 %v779
    %v1276 = vunpack.c.2.s8 %v780
    %v1277 = vunpack.c.2.s8 %v781
    %v1278 = vunpack.c.2.s8 %v782
    %v1279 = vunpack.c.3.s8 %v775
    %v1280 = vunpack.c.3.s8 %v776
    %v1281 = vunpack.c.3.s8 %v777
    %v1282 = vunpack.c.3.s8 %v778
    %v1283 = vunpack.c.3.s8 %v779
    %v1284 = vunpack.c.3.s8 %v780
    %v1285 = vunpack.c.3.s8 %v781
    %v1286 = vunpack.c.3.s8 %v782
    %v1287 = vunpack.c.0.s8 %v783
    %v1288 = vunpack.c.0.s8 %v784
    %v1289 = vunpack.c.0.s8 %v785
    %v1290 = vunpack.c.0.s8 %v786
    %v1291 = vunpack.c.0.s8 %v787
    %v1292 = vunpack.c.0.s8 %v788
    %v1293 = vunpack.c.0.s8 %v789
    %v1294 = vunpack.c.0.s8 %v790
    %v1295 = vunpack.c.1.s8 %v783
    %v1296 = vunpack.c.1.s8 %v784
    %v1297 = vunpack.c.1.s8 %v785
    %v1298 = vunpack.c.1.s8 %v786
    %v1299 = vunpack.c.1.s8 %v787
    %v1300 = vunpack.c.1.s8 %v788
    %v1301 = vunpack.c.1.s8 %v789
    %v1302 = vunpack.c.1.s8 %v790
    %v1303 = vunpack.c.2.s8 %v783
    %v1304 = vunpack.c.2.s8 %v784
    %v1305 = vunpack.c.2.s8 %v785
    %v1306 = vunpack.c.2.s8 %v786
    %v1307 = vunpack.c.2.s8 %v787
    %v1308 = vunpack.c.2.s8 %v788
    %v1309 = vunpack.c.2.s8 %v789
    %v1310 = vunpack.c.2.s8 %v790
    %v1311 = vunpack.c.3.s8 %v783
    %v1312 = vunpack.c.3.s8 %v784
    %v1313 = vunpack.c.3.s8 %v785
    %v1314 = vunpack.c.3.s8 %v786
    %v1315 = vunpack.c.3.s8 %v787
    %v1316 = vunpack.c.3.s8 %v788
    %v1317 = vunpack.c.3.s8 %v789
    %v1318 = vunpack.c.3.s8 %v790
    %v1319 = vunpack.c.0.s8 %v791
    %v1320 = vunpack.c.0.s8 %v792
    %v1321 = vunpack.c.0.s8 %v793
    %v1322 = vunpack.c.0.s8 %v794
    %v1323 = vunpack.c.0.s8 %v795
    %v1324 = vunpack.c.0.s8 %v796
    %v1325 = vunpack.c.0.s8 %v797
    %v1326 = vunpack.c.0.s8 %v798
    %v1327 = vunpack.c.1.s8 %v791
    %v1328 = vunpack.c.1.s8 %v792
    %v1329 = vunpack.c.1.s8 %v793
    %v1330 = vunpack.c.1.s8 %v794
    %v1331 = vunpack.c.1.s8 %v795
    %v1332 = vunpack.c.1.s8 %v796
    %v1333 = vunpack.c.1.s8 %v797
    %v1334 = vunpack.c.1.s8 %v798
    %v1335 = vunpack.c.2.s8 %v791
    %v1336 = vunpack.c.2.s8 %v792
    %v1337 = vunpack.c.2.s8 %v793
    %v1338 = vunpack.c.2.s8 %v794
    %v1339 = vunpack.c.2.s8 %v795
    %v1340 = vunpack.c.2.s8 %v796
    %v1341 = vunpack.c.2.s8 %v797
    %v1342 = vunpack.c.2.s8 %v798
    %v1343 = vunpack.c.3.s8 %v791
    %v1344 = vunpack.c.3.s8 %v792
    %v1345 = vunpack.c.3.s8 %v793
    %v1346 = vunpack.c.3.s8 %v794
    %v1347 = vunpack.c.3.s8 %v795
    %v1348 = vunpack.c.3.s8 %v796
    %v1349 = vunpack.c.3.s8 %v797
    %v1350 = vunpack.c.3.s8 %v798
    %v1351 = vunpack.c.0.s8 %v799
    %v1352 = vunpack.c.0.s8 %v800
    %v1353 = vunpack.c.0.s8 %v801
    %v1354 = vunpack.c.0.s8 %v802
    %v1355 = vunpack.c.0.s8 %v803
    %v1356 = vunpack.c.0.s8 %v804
    %v1357 = vunpack.c.0.s8 %v805
    %v1358 = vunpack.c.0.s8 %v806
    %v1359 = vunpack.c.1.s8 %v799
    %v1360 = vunpack.c.1.s8 %v800
    %v1361 = vunpack.c.1.s8 %v801
    %v1362 = vunpack.c.1.s8 %v802
    %v1363 = vunpack.c.1.s8 %v803
    %v1364 = vunpack.c.1.s8 %v804
    %v1365 = vunpack.c.1.s8 %v805
    %v1366 = vunpack.c.1.s8 %v806
    %v1367 = vunpack.c.2.s8 %v799
    %v1368 = vunpack.c.2.s8 %v800
    %v1369 = vunpack.c.2.s8 %v801
    %v1370 = vunpack.c.2.s8 %v802
    %v1371 = vunpack.c.2.s8 %v803
    %v1372 = vunpack.c.2.s8 %v804
    %v1373 = vunpack.c.2.s8 %v805
    %v1374 = vunpack.c.2.s8 %v806
    %v1375 = vunpack.c.3.s8 %v799
    %v1376 = vunpack.c.3.s8 %v800
    %v1377 = vunpack.c.3.s8 %v801
    %v1378 = vunpack.c.3.s8 %v802
    %v1379 = vunpack.c.3.s8 %v803
    %v1380 = vunpack.c.3.s8 %v804
    %v1381 = vunpack.c.3.s8 %v805
    %v1382 = vunpack.c.3.s8 %v806
    %v1383 = vunpack.c.0.s8 %v807
    %v1384 = vunpack.c.0.s8 %v808
    %v1385 = vunpack.c.0.s8 %v809
    %v1386 = vunpack.c.0.s8 %v810
    %v1387 = vunpack.c.0.s8 %v811
    %v1388 = vunpack.c.0.s8 %v812
    %v1389 = vunpack.c.0.s8 %v813
    %v1390 = vunpack.c.0.s8 %v814
    %v1391 = vunpack.c.1.s8 %v807
    %v1392 = vunpack.c.1.s8 %v808
    %v1393 = vunpack.c.1.s8 %v809
    %v1394 = vunpack.c.1.s8 %v810
    %v1395 = vunpack.c.1.s8 %v811
    %v1396 = vunpack.c.1.s8 %v812
    %v1397 = vunpack.c.1.s8 %v813
    %v1398 = vunpack.c.1.s8 %v814
    %v1399 = vunpack.c.2.s8 %v807
    %v1400 = vunpack.c.2.s8 %v808
    %v1401 = vunpack.c.2.s8 %v809
    %v1402 = vunpack.c.2.s8 %v810
    %v1403 = vunpack.c.2.s8 %v811
    %v1404 = vunpack.c.2.s8 %v812
    %v1405 = vunpack.c.2.s8 %v813
    %v1406 = vunpack.c.2.s8 %v814
    %v1407 = vunpack.c.3.s8 %v807
    %v1408 = vunpack.c.3.s8 %v808
    %v1409 = vunpack.c.3.s8 %v809
    %v1410 = vunpack.c.3.s8 %v810
    %v1411 = vunpack.c.3.s8 %v811
    %v1412 = vunpack.c.3.s8 %v812
    %v1413 = vunpack.c.3.s8 %v813
    %v1414 = vunpack.c.3.s8 %v814
    %v1415 = vunpack.c.0.s8 %v815
    %v1416 = vunpack.c.0.s8 %v816
    %v1417 = vunpack.c.0.s8 %v817
    %v1418 = vunpack.c.0.s8 %v818
    %v1419 = vunpack.c.0.s8 %v819
    %v1420 = vunpack.c.0.s8 %v820
    %v1421 = vunpack.c.0.s8 %v821
    %v1422 = vunpack.c.0.s8 %v822
    %v1423 = vunpack.c.1.s8 %v815
    %v1424 = vunpack.c.1.s8 %v816
    %v1425 = vunpack.c.1.s8 %v817
    %v1426 = vunpack.c.1.s8 %v818
    %v1427 = vunpack.c.1.s8 %v819
    %v1428 = vunpack.c.1.s8 %v820
    %v1429 = vunpack.c.1.s8 %v821
    %v1430 = vunpack.c.1.s8 %v822
    %v1431 = vunpack.c.2.s8 %v815
    %v1432 = vunpack.c.2.s8 %v816
    %v1433 = vunpack.c.2.s8 %v817
    %v1434 = vunpack.c.2.s8 %v818
    %v1435 = vunpack.c.2.s8 %v819
    %v1436 = vunpack.c.2.s8 %v820
    %v1437 = vunpack.c.2.s8 %v821
    %v1438 = vunpack.c.2.s8 %v822
    %v1439 = vunpack.c.3.s8 %v815
    %v1440 = vunpack.c.3.s8 %v816
    %v1441 = vunpack.c.3.s8 %v817
    %v1442 = vunpack.c.3.s8 %v818
    %v1443 = vunpack.c.3.s8 %v819
    %v1444 = vunpack.c.3.s8 %v820
    %v1445 = vunpack.c.3.s8 %v821
    %v1446 = vunpack.c.3.s8 %v822
    %v1447 = vunpack.c.0.s8 %v823
    %v1448 = vunpack.c.0.s8 %v824
    %v1449 = vunpack.c.0.s8 %v825
    %v1450 = vunpack.c.0.s8 %v826
    %v1451 = vunpack.c.0.s8 %v827
    %v1452 = vunpack.c.0.s8 %v828
    %v1453 = vunpack.c.0.s8 %v829
    %v1454 = vunpack.c.0.s8 %v830
    %v1455 = vunpack.c.1.s8 %v823
    %v1456 = vunpack.c.1.s8 %v824
    %v1457 = vunpack.c.1.s8 %v825
    %v1458 = vunpack.c.1.s8 %v826
    %v1459 = vunpack.c.1.s8 %v827
    %v1460 = vunpack.c.1.s8 %v828
    %v1461 = vunpack.c.1.s8 %v829
    %v1462 = vunpack.c.1.s8 %v830
    %v1463 = vunpack.c.2.s8 %v823
    %v1464 = vunpack.c.2.s8 %v824
    %v1465 = vunpack.c.2.s8 %v825
    %v1466 = vunpack.c.2.s8 %v826
    %v1467 = vunpack.c.2.s8 %v827
    %v1468 = vunpack.c.2.s8 %v828
    %v1469 = vunpack.c.2.s8 %v829
    %v1470 = vunpack.c.2.s8 %v830
    %v1471 = vunpack.c.3.s8 %v823
    %v1472 = vunpack.c.3.s8 %v824
    %v1473 = vunpack.c.3.s8 %v825
    %v1474 = vunpack.c.3.s8 %v826
    %v1475 = vunpack.c.3.s8 %v827
    %v1476 = vunpack.c.3.s8 %v828
    %v1477 = vunpack.c.3.s8 %v829
    %v1478 = vunpack.c.3.s8 %v830
    %v1479 = vunpack.c.0.s8 %v831
    %v1480 = vunpack.c.0.s8 %v832
    %v1481 = vunpack.c.0.s8 %v833
    %v1482 = vunpack.c.0.s8 %v834
    %v1483 = vunpack.c.0.s8 %v835
    %v1484 = vunpack.c.0.s8 %v836
    %v1485 = vunpack.c.0.s8 %v837
    %v1486 = vunpack.c.0.s8 %v838
    %v1487 = vunpack.c.1.s8 %v831
    %v1488 = vunpack.c.1.s8 %v832
    %v1489 = vunpack.c.1.s8 %v833
    %v1490 = vunpack.c.1.s8 %v834
    %v1491 = vunpack.c.1.s8 %v835
    %v1492 = vunpack.c.1.s8 %v836
    %v1493 = vunpack.c.1.s8 %v837
    %v1494 = vunpack.c.1.s8 %v838
    %v1495 = vunpack.c.2.s8 %v831
    %v1496 = vunpack.c.2.s8 %v832
    %v1497 = vunpack.c.2.s8 %v833
    %v1498 = vunpack.c.2.s8 %v834
    %v1499 = vunpack.c.2.s8 %v835
    %v1500 = vunpack.c.2.s8 %v836
    %v1501 = vunpack.c.2.s8 %v837
    %v1502 = vunpack.c.2.s8 %v838
    %v1503 = vunpack.c.3.s8 %v831
    %v1504 = vunpack.c.3.s8 %v832
    %v1505 = vunpack.c.3.s8 %v833
    %v1506 = vunpack.c.3.s8 %v834
    %v1507 = vunpack.c.3.s8 %v835
    %v1508 = vunpack.c.3.s8 %v836
    %v1509 = vunpack.c.3.s8 %v837
    %v1510 = vunpack.c.3.s8 %v838
    %v1511 = vunpack.c.0.s8 %v839
    %v1512 = vunpack.c.0.s8 %v840
    %v1513 = vunpack.c.0.s8 %v841
    %v1514 = vunpack.c.0.s8 %v842
    %v1515 = vunpack.c.0.s8 %v843
    %v1516 = vunpack.c.0.s8 %v844
    %v1517 = vunpack.c.0.s8 %v845
    %v1518 = vunpack.c.0.s8 %v846
    %v1519 = vunpack.c.1.s8 %v839
    %v1520 = vunpack.c.1.s8 %v840
    %v1521 = vunpack.c.1.s8 %v841
    %v1522 = vunpack.c.1.s8 %v842
    %v1523 = vunpack.c.1.s8 %v843
    %v1524 = vunpack.c.1.s8 %v844
    %v1525 = vunpack.c.1.s8 %v845
    %v1526 = vunpack.c.1.s8 %v846
    %v1527 = vunpack.c.2.s8 %v839
    %v1528 = vunpack.c.2.s8 %v840
    %v1529 = vunpack.c.2.s8 %v841
    %v1530 = vunpack.c.2.s8 %v842
    %v1531 = vunpack.c.2.s8 %v843
    %v1532 = vunpack.c.2.s8 %v844
    %v1533 = vunpack.c.2.s8 %v845
    %v1534 = vunpack.c.2.s8 %v846
    %v1535 = vunpack.c.3.s8 %v839
    %v1536 = vunpack.c.3.s8 %v840
    %v1537 = vunpack.c.3.s8 %v841
    %v1538 = vunpack.c.3.s8 %v842
    %v1539 = vunpack.c.3.s8 %v843
    %v1540 = vunpack.c.3.s8 %v844
    %v1541 = vunpack.c.3.s8 %v845
    %v1542 = vunpack.c.3.s8 %v846
    %v1543 = vunpack.c.0.s8 %v847
    %v1544 = vunpack.c.0.s8 %v848
    %v1545 = vunpack.c.0.s8 %v849
    %v1546 = vunpack.c.0.s8 %v850
    %v1547 = vunpack.c.0.s8 %v851
    %v1548 = vunpack.c.0.s8 %v852
    %v1549 = vunpack.c.0.s8 %v853
    %v1550 = vunpack.c.0.s8 %v854
    %v1551 = vunpack.c.1.s8 %v847
    %v1552 = vunpack.c.1.s8 %v848
    %v1553 = vunpack.c.1.s8 %v849
    %v1554 = vunpack.c.1.s8 %v850
    %v1555 = vunpack.c.1.s8 %v851
    %v1556 = vunpack.c.1.s8 %v852
    %v1557 = vunpack.c.1.s8 %v853
    %v1558 = vunpack.c.1.s8 %v854
    %v1559 = vunpack.c.2.s8 %v847
    %v1560 = vunpack.c.2.s8 %v848
    %v1561 = vunpack.c.2.s8 %v849
    %v1562 = vunpack.c.2.s8 %v850
    %v1563 = vunpack.c.2.s8 %v851
    %v1564 = vunpack.c.2.s8 %v852
    %v1565 = vunpack.c.2.s8 %v853
    %v1566 = vunpack.c.2.s8 %v854
    %v1567 = vunpack.c.3.s8 %v847
    %v1568 = vunpack.c.3.s8 %v848
    %v1569 = vunpack.c.3.s8 %v849
    %v1570 = vunpack.c.3.s8 %v850
    %v1571 = vunpack.c.3.s8 %v851
    %v1572 = vunpack.c.3.s8 %v852
    %v1573 = vunpack.c.3.s8 %v853
    %v1574 = vunpack.c.3.s8 %v854
    %v1575 = vunpack.c.0.s8 %v855
    %v1576 = vunpack.c.0.s8 %v856
    %v1577 = vunpack.c.0.s8 %v857
    %v1578 = vunpack.c.0.s8 %v858
    %v1579 = vunpack.c.0.s8 %v859
    %v1580 = vunpack.c.0.s8 %v860
    %v1581 = vunpack.c.0.s8 %v861
    %v1582 = vunpack.c.0.s8 %v862
    %v1583 = vunpack.c.1.s8 %v855
    %v1584 = vunpack.c.1.s8 %v856
    %v1585 = vunpack.c.1.s8 %v857
    %v1586 = vunpack.c.1.s8 %v858
    %v1587 = vunpack.c.1.s8 %v859
    %v1588 = vunpack.c.1.s8 %v860
    %v1589 = vunpack.c.1.s8 %v861
    %v1590 = vunpack.c.1.s8 %v862
    %v1591 = vunpack.c.2.s8 %v855
    %v1592 = vunpack.c.2.s8 %v856
    %v1593 = vunpack.c.2.s8 %v857
    %v1594 = vunpack.c.2.s8 %v858
    %v1595 = vunpack.c.2.s8 %v859
    %v1596 = vunpack.c.2.s8 %v860
    %v1597 = vunpack.c.2.s8 %v861
    %v1598 = vunpack.c.2.s8 %v862
    %v1599 = vunpack.c.3.s8 %v855
    %v1600 = vunpack.c.3.s8 %v856
    %v1601 = vunpack.c.3.s8 %v857
    %v1602 = vunpack.c.3.s8 %v858
    %v1603 = vunpack.c.3.s8 %v859
    %v1604 = vunpack.c.3.s8 %v860
    %v1605 = vunpack.c.3.s8 %v861
    %v1606 = vunpack.c.3.s8 %v862
    %v1607 = vunpack.c.0.s8 %v863
    %v1608 = vunpack.c.0.s8 %v864
    %v1609 = vunpack.c.0.s8 %v865
    %v1610 = vunpack.c.0.s8 %v866
    %v1611 = vunpack.c.0.s8 %v867
    %v1612 = vunpack.c.0.s8 %v868
    %v1613 = vunpack.c.0.s8 %v869
    %v1614 = vunpack.c.0.s8 %v870
    %v1615 = vunpack.c.1.s8 %v863
    %v1616 = vunpack.c.1.s8 %v864
    %v1617 = vunpack.c.1.s8 %v865
    %v1618 = vunpack.c.1.s8 %v866
    %v1619 = vunpack.c.1.s8 %v867
    %v1620 = vunpack.c.1.s8 %v868
    %v1621 = vunpack.c.1.s8 %v869
    %v1622 = vunpack.c.1.s8 %v870
    %v1623 = vunpack.c.2.s8 %v863
    %v1624 = vunpack.c.2.s8 %v864
    %v1625 = vunpack.c.2.s8 %v865
    %v1626 = vunpack.c.2.s8 %v866
    %v1627 = vunpack.c.2.s8 %v867
    %v1628 = vunpack.c.2.s8 %v868
    %v1629 = vunpack.c.2.s8 %v869
    %v1630 = vunpack.c.2.s8 %v870
    %v1631 = vunpack.c.3.s8 %v863
    %v1632 = vunpack.c.3.s8 %v864
    %v1633 = vunpack.c.3.s8 %v865
    %v1634 = vunpack.c.3.s8 %v866
    %v1635 = vunpack.c.3.s8 %v867
    %v1636 = vunpack.c.3.s8 %v868
    %v1637 = vunpack.c.3.s8 %v869
    %v1638 = vunpack.c.3.s8 %v870
    %v1639 = vunpack.c.0.s8 %v871
    %v1640 = vunpack.c.0.s8 %v872
    %v1641 = vunpack.c.0.s8 %v873
    %v1642 = vunpack.c.0.s8 %v874
    %v1643 = vunpack.c.0.s8 %v875
    %v1644 = vunpack.c.0.s8 %v876
    %v1645 = vunpack.c.0.s8 %v877
    %v1646 = vunpack.c.0.s8 %v878
    %v1647 = vunpack.c.1.s8 %v871
    %v1648 = vunpack.c.1.s8 %v872
    %v1649 = vunpack.c.1.s8 %v873
    %v1650 = vunpack.c.1.s8 %v874
    %v1651 = vunpack.c.1.s8 %v875
    %v1652 = vunpack.c.1.s8 %v876
    %v1653 = vunpack.c.1.s8 %v877
    %v1654 = vunpack.c.1.s8 %v878
    %v1655 = vunpack.c.2.s8 %v871
    %v1656 = vunpack.c.2.s8 %v872
    %v1657 = vunpack.c.2.s8 %v873
    %v1658 = vunpack.c.2.s8 %v874
    %v1659 = vunpack.c.2.s8 %v875
    %v1660 = vunpack.c.2.s8 %v876
    %v1661 = vunpack.c.2.s8 %v877
    %v1662 = vunpack.c.2.s8 %v878
    %v1663 = vunpack.c.3.s8 %v871
    %v1664 = vunpack.c.3.s8 %v872
    %v1665 = vunpack.c.3.s8 %v873
    %v1666 = vunpack.c.3.s8 %v874
    %v1667 = vunpack.c.3.s8 %v875
    %v1668 = vunpack.c.3.s8 %v876
    %v1669 = vunpack.c.3.s8 %v877
    %v1670 = vunpack.c.3.s8 %v878
    %v1671 = vunpack.c.0.s8 %v879
    %v1672 = vunpack.c.0.s8 %v880
    %v1673 = vunpack.c.0.s8 %v881
    %v1674 = vunpack.c.0.s8 %v882
    %v1675 = vunpack.c.0.s8 %v883
    %v1676 = vunpack.c.0.s8 %v884
    %v1677 = vunpack.c.0.s8 %v885
    %v1678 = vunpack.c.0.s8 %v886
    %v1679 = vunpack.c.1.s8 %v879
    %v1680 = vunpack.c.1.s8 %v880
    %v1681 = vunpack.c.1.s8 %v881
    %v1682 = vunpack.c.1.s8 %v882
    %v1683 = vunpack.c.1.s8 %v883
    %v1684 = vunpack.c.1.s8 %v884
    %v1685 = vunpack.c.1.s8 %v885
    %v1686 = vunpack.c.1.s8 %v886
    %v1687 = vunpack.c.2.s8 %v879
    %v1688 = vunpack.c.2.s8 %v880
    %v1689 = vunpack.c.2.s8 %v881
    %v1690 = vunpack.c.2.s8 %v882
    %v1691 = vunpack.c.2.s8 %v883
    %v1692 = vunpack.c.2.s8 %v884
    %v1693 = vunpack.c.2.s8 %v885
    %v1694 = vunpack.c.2.s8 %v886
    %v1695 = vunpack.c.3.s8 %v879
    %v1696 = vunpack.c.3.s8 %v880
    %v1697 = vunpack.c.3.s8 %v881
    %v1698 = vunpack.c.3.s8 %v882
    %v1699 = vunpack.c.3.s8 %v883
    %v1700 = vunpack.c.3.s8 %v884
    %v1701 = vunpack.c.3.s8 %v885
    %v1702 = vunpack.c.3.s8 %v886
    %v1703 = vunpack.c.0.s8 %v887
    %v1704 = vunpack.c.0.s8 %v888
    %v1705 = vunpack.c.0.s8 %v889
    %v1706 = vunpack.c.0.s8 %v890
    %v1707 = vunpack.c.0.s8 %v891
    %v1708 = vunpack.c.0.s8 %v892
    %v1709 = vunpack.c.0.s8 %v893
    %v1710 = vunpack.c.0.s8 %v894
    %v1711 = vunpack.c.1.s8 %v887
    %v1712 = vunpack.c.1.s8 %v888
    %v1713 = vunpack.c.1.s8 %v889
    %v1714 = vunpack.c.1.s8 %v890
    %v1715 = vunpack.c.1.s8 %v891
    %v1716 = vunpack.c.1.s8 %v892
    %v1717 = vunpack.c.1.s8 %v893
    %v1718 = vunpack.c.1.s8 %v894
    %v1719 = vunpack.c.2.s8 %v887
    %v1720 = vunpack.c.2.s8 %v888
    %v1721 = vunpack.c.2.s8 %v889
    %v1722 = vunpack.c.2.s8 %v890
    %v1723 = vunpack.c.2.s8 %v891
    %v1724 = vunpack.c.2.s8 %v892
    %v1725 = vunpack.c.2.s8 %v893
    %v1726 = vunpack.c.2.s8 %v894
    %v1727 = vunpack.c.3.s8 %v887
    %v1728 = vunpack.c.3.s8 %v888
    %v1729 = vunpack.c.3.s8 %v889
    %v1730 = vunpack.c.3.s8 %v890
    %v1731 = vunpack.c.3.s8 %v891
    %v1732 = vunpack.c.3.s8 %v892
    %v1733 = vunpack.c.3.s8 %v893
    %v1734 = vunpack.c.3.s8 %v894
    %v1735 = vunpack.c.0.s8 %v895
    %v1736 = vunpack.c.0.s8 %v896
    %v1737 = vunpack.c.0.s8 %v897
    %v1738 = vunpack.c.0.s8 %v898
    %v1739 = vunpack.c.0.s8 %v899
    %v1740 = vunpack.c.0.s8 %v900
    %v1741 = vunpack.c.0.s8 %v901
    %v1742 = vunpack.c.0.s8 %v902
    %v1743 = vunpack.c.1.s8 %v895
    %v1744 = vunpack.c.1.s8 %v896
    %v1745 = vunpack.c.1.s8 %v897
    %v1746 = vunpack.c.1.s8 %v898
    %v1747 = vunpack.c.1.s8 %v899
    %v1748 = vunpack.c.1.s8 %v900
    %v1749 = vunpack.c.1.s8 %v901
    %v1750 = vunpack.c.1.s8 %v902
    %v1751 = vunpack.c.2.s8 %v895
    %v1752 = vunpack.c.2.s8 %v896
    %v1753 = vunpack.c.2.s8 %v897
    %v1754 = vunpack.c.2.s8 %v898
    %v1755 = vunpack.c.2.s8 %v899
    %v1756 = vunpack.c.2.s8 %v900
    %v1757 = vunpack.c.2.s8 %v901
    %v1758 = vunpack.c.2.s8 %v902
    %v1759 = vunpack.c.3.s8 %v895
    %v1760 = vunpack.c.3.s8 %v896
    %v1761 = vunpack.c.3.s8 %v897
    %v1762 = vunpack.c.3.s8 %v898
    %v1763 = vunpack.c.3.s8 %v899
    %v1764 = vunpack.c.3.s8 %v900
    %v1765 = vunpack.c.3.s8 %v901
    %v1766 = vunpack.c.3.s8 %v902
    %v1767 = vunpack.c.0.s8 %v903
    %v1768 = vunpack.c.0.s8 %v904
    %v1769 = vunpack.c.0.s8 %v905
    %v1770 = vunpack.c.0.s8 %v906
    %v1771 = vunpack.c.0.s8 %v907
    %v1772 = vunpack.c.0.s8 %v908
    %v1773 = vunpack.c.0.s8 %v909
    %v1774 = vunpack.c.0.s8 %v910
    %v1775 = vunpack.c.1.s8 %v903
    %v1776 = vunpack.c.1.s8 %v904
    %v1777 = vunpack.c.1.s8 %v905
    %v1778 = vunpack.c.1.s8 %v906
    %v1779 = vunpack.c.1.s8 %v907
    %v1780 = vunpack.c.1.s8 %v908
    %v1781 = vunpack.c.1.s8 %v909
    %v1782 = vunpack.c.1.s8 %v910
    %v1783 = vunpack.c.2.s8 %v903
    %v1784 = vunpack.c.2.s8 %v904
    %v1785 = vunpack.c.2.s8 %v905
    %v1786 = vunpack.c.2.s8 %v906
    %v1787 = vunpack.c.2.s8 %v907
    %v1788 = vunpack.c.2.s8 %v908
    %v1789 = vunpack.c.2.s8 %v909
    %v1790 = vunpack.c.2.s8 %v910
    %v1791 = vunpack.c.3.s8 %v903
    %v1792 = vunpack.c.3.s8 %v904
    %v1793 = vunpack.c.3.s8 %v905
    %v1794 = vunpack.c.3.s8 %v906
    %v1795 = vunpack.c.3.s8 %v907
    %v1796 = vunpack.c.3.s8 %v908
    %v1797 = vunpack.c.3.s8 %v909
    %v1798 = vunpack.c.3.s8 %v910
    %v1799 = vunpack.c.0.s8 %v911
    %v1800 = vunpack.c.0.s8 %v912
    %v1801 = vunpack.c.0.s8 %v913
    %v1802 = vunpack.c.0.s8 %v914
    %v1803 = vunpack.c.0.s8 %v915
    %v1804 = vunpack.c.0.s8 %v916
    %v1805 = vunpack.c.0.s8 %v917
    %v1806 = vunpack.c.0.s8 %v918
    %v1807 = vunpack.c.1.s8 %v911
    %v1808 = vunpack.c.1.s8 %v912
    %v1809 = vunpack.c.1.s8 %v913
    %v1810 = vunpack.c.1.s8 %v914
    %v1811 = vunpack.c.1.s8 %v915
    %v1812 = vunpack.c.1.s8 %v916
    %v1813 = vunpack.c.1.s8 %v917
    %v1814 = vunpack.c.1.s8 %v918
    %v1815 = vunpack.c.2.s8 %v911
    %v1816 = vunpack.c.2.s8 %v912
    %v1817 = vunpack.c.2.s8 %v913
    %v1818 = vunpack.c.2.s8 %v914
    %v1819 = vunpack.c.2.s8 %v915
    %v1820 = vunpack.c.2.s8 %v916
    %v1821 = vunpack.c.2.s8 %v917
    %v1822 = vunpack.c.2.s8 %v918
    %v1823 = vunpack.c.3.s8 %v911
    %v1824 = vunpack.c.3.s8 %v912
    %v1825 = vunpack.c.3.s8 %v913
    %v1826 = vunpack.c.3.s8 %v914
    %v1827 = vunpack.c.3.s8 %v915
    %v1828 = vunpack.c.3.s8 %v916
    %v1829 = vunpack.c.3.s8 %v917
    %v1830 = vunpack.c.3.s8 %v918
    %v1831 = vunpack.c.0.s8 %v919
    %v1832 = vunpack.c.0.s8 %v920
    %v1833 = vunpack.c.0.s8 %v921
    %v1834 = vunpack.c.0.s8 %v922
    %v1835 = vunpack.c.0.s8 %v923
    %v1836 = vunpack.c.0.s8 %v924
    %v1837 = vunpack.c.0.s8 %v925
    %v1838 = vunpack.c.0.s8 %v926
    %v1839 = vunpack.c.1.s8 %v919
    %v1840 = vunpack.c.1.s8 %v920
    %v1841 = vunpack.c.1.s8 %v921
    %v1842 = vunpack.c.1.s8 %v922
    %v1843 = vunpack.c.1.s8 %v923
    %v1844 = vunpack.c.1.s8 %v924
    %v1845 = vunpack.c.1.s8 %v925
    %v1846 = vunpack.c.1.s8 %v926
    %v1847 = vunpack.c.2.s8 %v919
    %v1848 = vunpack.c.2.s8 %v920
    %v1849 = vunpack.c.2.s8 %v921
    %v1850 = vunpack.c.2.s8 %v922
    %v1851 = vunpack.c.2.s8 %v923
    %v1852 = vunpack.c.2.s8 %v924
    %v1853 = vunpack.c.2.s8 %v925
    %v1854 = vunpack.c.2.s8 %v926
    %v1855 = vunpack.c.3.s8 %v919
    %v1856 = vunpack.c.3.s8 %v920
    %v1857 = vunpack.c.3.s8 %v921
    %v1858 = vunpack.c.3.s8 %v922
    %v1859 = vunpack.c.3.s8 %v923
    %v1860 = vunpack.c.3.s8 %v924
    %v1861 = vunpack.c.3.s8 %v925
    %v1862 = vunpack.c.3.s8 %v926
    %v1863 = vunpack.c.0.s8 %v927
    %v1864 = vunpack.c.0.s8 %v928
    %v1865 = vunpack.c.0.s8 %v929
    %v1866 = vunpack.c.0.s8 %v930
    %v1867 = vunpack.c.0.s8 %v931
    %v1868 = vunpack.c.0.s8 %v932
    %v1869 = vunpack.c.0.s8 %v933
    %v1870 = vunpack.c.0.s8 %v934
    %v1871 = vunpack.c.1.s8 %v927
    %v1872 = vunpack.c.1.s8 %v928
    %v1873 = vunpack.c.1.s8 %v929
    %v1874 = vunpack.c.1.s8 %v930
    %v1875 = vunpack.c.1.s8 %v931
    %v1876 = vunpack.c.1.s8 %v932
    %v1877 = vunpack.c.1.s8 %v933
    %v1878 = vunpack.c.1.s8 %v934
    %v1879 = vunpack.c.2.s8 %v927
    %v1880 = vunpack.c.2.s8 %v928
    %v1881 = vunpack.c.2.s8 %v929
    %v1882 = vunpack.c.2.s8 %v930
    %v1883 = vunpack.c.2.s8 %v931
    %v1884 = vunpack.c.2.s8 %v932
    %v1885 = vunpack.c.2.s8 %v933
    %v1886 = vunpack.c.2.s8 %v934
    %v1887 = vunpack.c.3.s8 %v927
    %v1888 = vunpack.c.3.s8 %v928
    %v1889 = vunpack.c.3.s8 %v929
    %v1890 = vunpack.c.3.s8 %v930
    %v1891 = vunpack.c.3.s8 %v931
    %v1892 = vunpack.c.3.s8 %v932
    %v1893 = vunpack.c.3.s8 %v933
    %v1894 = vunpack.c.3.s8 %v934
    %v1895 = vunpack.c.0.s8 %v935
    %v1896 = vunpack.c.0.s8 %v936
    %v1897 = vunpack.c.0.s8 %v937
    %v1898 = vunpack.c.0.s8 %v938
    %v1899 = vunpack.c.0.s8 %v939
    %v1900 = vunpack.c.0.s8 %v940
    %v1901 = vunpack.c.0.s8 %v941
    %v1902 = vunpack.c.0.s8 %v942
    %v1903 = vunpack.c.1.s8 %v935
    %v1904 = vunpack.c.1.s8 %v936
    %v1905 = vunpack.c.1.s8 %v937
    %v1906 = vunpack.c.1.s8 %v938
    %v1907 = vunpack.c.1.s8 %v939
    %v1908 = vunpack.c.1.s8 %v940
    %v1909 = vunpack.c.1.s8 %v941
    %v1910 = vunpack.c.1.s8 %v942
    %v1911 = vunpack.c.2.s8 %v935
    %v1912 = vunpack.c.2.s8 %v936
    %v1913 = vunpack.c.2.s8 %v937
    %v1914 = vunpack.c.2.s8 %v938
    %v1915 = vunpack.c.2.s8 %v939
    %v1916 = vunpack.c.2.s8 %v940
    %v1917 = vunpack.c.2.s8 %v941
    %v1918 = vunpack.c.2.s8 %v942
    %v1919 = vunpack.c.3.s8 %v935
    %v1920 = vunpack.c.3.s8 %v936
    %v1921 = vunpack.c.3.s8 %v937
    %v1922 = vunpack.c.3.s8 %v938
    %v1923 = vunpack.c.3.s8 %v939
    %v1924 = vunpack.c.3.s8 %v940
    %v1925 = vunpack.c.3.s8 %v941
    %v1926 = vunpack.c.3.s8 %v942
    %v1927 = vunpack.c.0.s8 %v943
    %v1928 = vunpack.c.0.s8 %v944
    %v1929 = vunpack.c.0.s8 %v945
    %v1930 = vunpack.c.0.s8 %v946
    %v1931 = vunpack.c.0.s8 %v947
    %v1932 = vunpack.c.0.s8 %v948
    %v1933 = vunpack.c.0.s8 %v949
    %v1934 = vunpack.c.0.s8 %v950
    %v1935 = vunpack.c.1.s8 %v943
    %v1936 = vunpack.c.1.s8 %v944
    %v1937 = vunpack.c.1.s8 %v945
    %v1938 = vunpack.c.1.s8 %v946
    %v1939 = vunpack.c.1.s8 %v947
    %v1940 = vunpack.c.1.s8 %v948
    %v1941 = vunpack.c.1.s8 %v949
    %v1942 = vunpack.c.1.s8 %v950
    %v1943 = vunpack.c.2.s8 %v943
    %v1944 = vunpack.c.2.s8 %v944
    %v1945 = vunpack.c.2.s8 %v945
    %v1946 = vunpack.c.2.s8 %v946
    %v1947 = vunpack.c.2.s8 %v947
    %v1948 = vunpack.c.2.s8 %v948
    %v1949 = vunpack.c.2.s8 %v949
    %v1950 = vunpack.c.2.s8 %v950
    %v1951 = vunpack.c.3.s8 %v943
    %v1952 = vunpack.c.3.s8 %v944
    %v1953 = vunpack.c.3.s8 %v945
    %v1954 = vunpack.c.3.s8 %v946
    %v1955 = vunpack.c.3.s8 %v947
    %v1956 = vunpack.c.3.s8 %v948
    %v1957 = vunpack.c.3.s8 %v949
    %v1958 = vunpack.c.3.s8 %v950
    %v1959 = vunpack.c.0.s8 %v951
    %v1960 = vunpack.c.0.s8 %v952
    %v1961 = vunpack.c.0.s8 %v953
    %v1962 = vunpack.c.0.s8 %v954
    %v1963 = vunpack.c.0.s8 %v955
    %v1964 = vunpack.c.0.s8 %v956
    %v1965 = vunpack.c.0.s8 %v957
    %v1966 = vunpack.c.0.s8 %v958
    %v1967 = vunpack.c.1.s8 %v951
    %v1968 = vunpack.c.1.s8 %v952
    %v1969 = vunpack.c.1.s8 %v953
    %v1970 = vunpack.c.1.s8 %v954
    %v1971 = vunpack.c.1.s8 %v955
    %v1972 = vunpack.c.1.s8 %v956
    %v1973 = vunpack.c.1.s8 %v957
    %v1974 = vunpack.c.1.s8 %v958
    %v1975 = vunpack.c.2.s8 %v951
    %v1976 = vunpack.c.2.s8 %v952
    %v1977 = vunpack.c.2.s8 %v953
    %v1978 = vunpack.c.2.s8 %v954
    %v1979 = vunpack.c.2.s8 %v955
    %v1980 = vunpack.c.2.s8 %v956
    %v1981 = vunpack.c.2.s8 %v957
    %v1982 = vunpack.c.2.s8 %v958
    %v1983 = vunpack.c.3.s8 %v951
    %v1984 = vunpack.c.3.s8 %v952
    %v1985 = vunpack.c.3.s8 %v953
    %v1986 = vunpack.c.3.s8 %v954
    %v1987 = vunpack.c.3.s8 %v955
    %v1988 = vunpack.c.3.s8 %v956
    %v1989 = vunpack.c.3.s8 %v957
    %v1990 = vunpack.c.3.s8 %v958
    %v1991 = vcvt.s32.f32 %v967
    %v1992 = vcvt.s32.f32 %v968
    %v1993 = vcvt.s32.f32 %v969
    %v1994 = vcvt.s32.f32 %v970
    %v1995 = vcvt.s32.f32 %v971
    %v1996 = vcvt.s32.f32 %v972
    %v1997 = vcvt.s32.f32 %v973
    %v1998 = vcvt.s32.f32 %v974
    %v1999 = vcvt.s32.f32 %v975
    %v2000 = vcvt.s32.f32 %v976
    %v2001 = vcvt.s32.f32 %v977
    %v2002 = vcvt.s32.f32 %v978
    %v2003 = vcvt.s32.f32 %v979
    %v2004 = vcvt.s32.f32 %v980
    %v2005 = vcvt.s32.f32 %v981
    %v2006 = vcvt.s32.f32 %v982
    %v2007 = vcvt.s32.f32 %v983
    %v2008 = vcvt.s32.f32 %v984
    %v2009 = vcvt.s32.f32 %v985
    %v2010 = vcvt.s32.f32 %v986
    %v2011 = vcvt.s32.f32 %v987
    %v2012 = vcvt.s32.f32 %v988
    %v2013 = vcvt.s32.f32 %v989
    %v2014 = vcvt.s32.f32 %v990
    %v2015 = vcvt.s32.f32 %v991
    %v2016 = vcvt.s32.f32 %v992
    %v2017 = vcvt.s32.f32 %v993
    %v2018 = vcvt.s32.f32 %v994
    %v2019 = vcvt.s32.f32 %v995
    %v2020 = vcvt.s32.f32 %v996
    %v2021 = vcvt.s32.f32 %v997
    %v2022 = vcvt.s32.f32 %v998
    %v2023 = vcvt.s32.f32 %v999
    %v2024 = vcvt.s32.f32 %v1000
    %v2025 = vcvt.s32.f32 %v1001
    %v2026 = vcvt.s32.f32 %v1002
    %v2027 = vcvt.s32.f32 %v1003
    %v2028 = vcvt.s32.f32 %v1004
    %v2029 = vcvt.s32.f32 %v1005
    %v2030 = vcvt.s32.f32 %v1006
    %v2031 = vcvt.s32.f32 %v1007
    %v2032 = vcvt.s32.f32 %v1008
    %v2033 = vcvt.s32.f32 %v1009
    %v2034 = vcvt.s32.f32 %v1010
    %v2035 = vcvt.s32.f32 %v1011
    %v2036 = vcvt.s32.f32 %v1012
    %v2037 = vcvt.s32.f32 %v1013
    %v2038 = vcvt.s32.f32 %v1014
    %v2039 = vcvt.s32.f32 %v1015
    %v2040 = vcvt.s32.f32 %v1016
    %v2041 = vcvt.s32.f32 %v1017
    %v2042 = vcvt.s32.f32 %v1018
    %v2043 = vcvt.s32.f32 %v1019
    %v2044 = vcvt.s32.f32 %v1020
    %v2045 = vcvt.s32.f32 %v1021
    %v2046 = vcvt.s32.f32 %v1022
    %v2047 = vcvt.s32.f32 %v1023
    %v2048 = vcvt.s32.f32 %v1024
    %v2049 = vcvt.s32.f32 %v1025
    %v2050 = vcvt.s32.f32 %v1026
    %v2051 = vcvt.s32.f32 %v1027
    %v2052 = vcvt.s32.f32 %v1028
    %v2053 = vcvt.s32.f32 %v1029
    %v2054 = vcvt.s32.f32 %v1030
    %v2055 = vcvt.s32.f32 %v1031
    %v2056 = vcvt.s32.f32 %v1032
    %v2057 = vcvt.s32.f32 %v1033
    %v2058 = vcvt.s32.f32 %v1034
    %v2059 = vcvt.s32.f32 %v1035
    %v2060 = vcvt.s32.f32 %v1036
    %v2061 = vcvt.s32.f32 %v1037
    %v2062 = vcvt.s32.f32 %v1038
    %v2063 = vcvt.s32.f32 %v1039
    %v2064 = vcvt.s32.f32 %v1040
    %v2065 = vcvt.s32.f32 %v1041
    %v2066 = vcvt.s32.f32 %v1042
    %v2067 = vcvt.s32.f32 %v1043
    %v2068 = vcvt.s32.f32 %v1044
    %v2069 = vcvt.s32.f32 %v1045
    %v2070 = vcvt.s32.f32 %v1046
    %v2071 = vcvt.s32.f32 %v1047
    %v2072 = vcvt.s32.f32 %v1048
    %v2073 = vcvt.s32.f32 %v1049
    %v2074 = vcvt.s32.f32 %v1050
    %v2075 = vcvt.s32.f32 %v1051
    %v2076 = vcvt.s32.f32 %v1052
    %v2077 = vcvt.s32.f32 %v1053
    %v2078 = vcvt.s32.f32 %v1054
    %v2079 = vcvt.s32.f32 %v1055
    %v2080 = vcvt.s32.f32 %v1056
    %v2081 = vcvt.s32.f32 %v1057
    %v2082 = vcvt.s32.f32 %v1058
    %v2083 = vcvt.s32.f32 %v1059
    %v2084 = vcvt.s32.f32 %v1060
    %v2085 = vcvt.s32.f32 %v1061
    %v2086 = vcvt.s32.f32 %v1062
    %v2087 = vcvt.s32.f32 %v1063
    %v2088 = vcvt.s32.f32 %v1064
    %v2089 = vcvt.s32.f32 %v1065
    %v2090 = vcvt.s32.f32 %v1066
    %v2091 = vcvt.s32.f32 %v1067
    %v2092 = vcvt.s32.f32 %v1068
    %v2093 = vcvt.s32.f32 %v1069
    %v2094 = vcvt.s32.f32 %v1070
    %v2095 = vcvt.s32.f32 %v1071
    %v2096 = vcvt.s32.f32 %v1072
    %v2097 = vcvt.s32.f32 %v1073
    %v2098 = vcvt.s32.f32 %v1074
    %v2099 = vcvt.s32.f32 %v1075
    %v2100 = vcvt.s32.f32 %v1076
    %v2101 = vcvt.s32.f32 %v1077
    %v2102 = vcvt.s32.f32 %v1078
    %v2103 = vcvt.s32.f32 %v1079
    %v2104 = vcvt.s32.f32 %v1080
    %v2105 = vcvt.s32.f32 %v1081
    %v2106 = vcvt.s32.f32 %v1082
    %v2107 = vcvt.s32.f32 %v1083
    %v2108 = vcvt.s32.f32 %v1084
    %v2109 = vcvt.s32.f32 %v1085
    %v2110 = vcvt.s32.f32 %v1086
    %v2111 = vcvt.s32.f32 %v1087
    %v2112 = vcvt.s32.f32 %v1088
    %v2113 = vcvt.s32.f32 %v1089
    %v2114 = vcvt.s32.f32 %v1090
    %v2115 = vcvt.s32.f32 %v1091
    %v2116 = vcvt.s32.f32 %v1092
    %v2117 = vcvt.s32.f32 %v1093
    %v2118 = vcvt.s32.f32 %v1094
    %v2119 = vcvt.s32.f32 %v1095
    %v2120 = vcvt.s32.f32 %v1096
    %v2121 = vcvt.s32.f32 %v1097
    %v2122 = vcvt.s32.f32 %v1098
    %v2123 = vcvt.s32.f32 %v1099
    %v2124 = vcvt.s32.f32 %v1100
    %v2125 = vcvt.s32.f32 %v1101
    %v2126 = vcvt.s32.f32 %v1102
    %v2127 = vcvt.s32.f32 %v1103
    %v2128 = vcvt.s32.f32 %v1104
    %v2129 = vcvt.s32.f32 %v1105
    %v2130 = vcvt.s32.f32 %v1106
    %v2131 = vcvt.s32.f32 %v1107
    %v2132 = vcvt.s32.f32 %v1108
    %v2133 = vcvt.s32.f32 %v1109
    %v2134 = vcvt.s32.f32 %v1110
    %v2135 = vcvt.s32.f32 %v1111
    %v2136 = vcvt.s32.f32 %v1112
    %v2137 = vcvt.s32.f32 %v1113
    %v2138 = vcvt.s32.f32 %v1114
    %v2139 = vcvt.s32.f32 %v1115
    %v2140 = vcvt.s32.f32 %v1116
    %v2141 = vcvt.s32.f32 %v1117
    %v2142 = vcvt.s32.f32 %v1118
    %v2143 = vcvt.s32.f32 %v1119
    %v2144 = vcvt.s32.f32 %v1120
    %v2145 = vcvt.s32.f32 %v1121
    %v2146 = vcvt.s32.f32 %v1122
    %v2147 = vcvt.s32.f32 %v1123
    %v2148 = vcvt.s32.f32 %v1124
    %v2149 = vcvt.s32.f32 %v1125
    %v2150 = vcvt.s32.f32 %v1126
    %v2151 = vcvt.s32.f32 %v1127
    %v2152 = vcvt.s32.f32 %v1128
    %v2153 = vcvt.s32.f32 %v1129
    %v2154 = vcvt.s32.f32 %v1130
    %v2155 = vcvt.s32.f32 %v1131
    %v2156 = vcvt.s32.f32 %v1132
    %v2157 = vcvt.s32.f32 %v1133
    %v2158 = vcvt.s32.f32 %v1134
    %v2159 = vcvt.s32.f32 %v1135
    %v2160 = vcvt.s32.f32 %v1136
    %v2161 = vcvt.s32.f32 %v1137
    %v2162 = vcvt.s32.f32 %v1138
    %v2163 = vcvt.s32.f32 %v1139
    %v2164 = vcvt.s32.f32 %v1140
    %v2165 = vcvt.s32.f32 %v1141
    %v2166 = vcvt.s32.f32 %v1142
    %v2167 = vcvt.s32.f32 %v1143
    %v2168 = vcvt.s32.f32 %v1144
    %v2169 = vcvt.s32.f32 %v1145
    %v2170 = vcvt.s32.f32 %v1146
    %v2171 = vcvt.s32.f32 %v1147
    %v2172 = vcvt.s32.f32 %v1148
    %v2173 = vcvt.s32.f32 %v1149
    %v2174 = vcvt.s32.f32 %v1150
    %v2175 = vcvt.s32.f32 %v1151
    %v2176 = vcvt.s32.f32 %v1152
    %v2177 = vcvt.s32.f32 %v1153
    %v2178 = vcvt.s32.f32 %v1154
    %v2179 = vcvt.s32.f32 %v1155
    %v2180 = vcvt.s32.f32 %v1156
    %v2181 = vcvt.s32.f32 %v1157
    %v2182 = vcvt.s32.f32 %v1158
    %v2183 = vcvt.s32.f32 %v1159
    %v2184 = vcvt.s32.f32 %v1160
    %v2185 = vcvt.s32.f32 %v1161
    %v2186 = vcvt.s32.f32 %v1162
    %v2187 = vcvt.s32.f32 %v1163
    %v2188 = vcvt.s32.f32 %v1164
    %v2189 = vcvt.s32.f32 %v1165
    %v2190 = vcvt.s32.f32 %v1166
    %v2191 = vcvt.s32.f32 %v1167
    %v2192 = vcvt.s32.f32 %v1168
    %v2193 = vcvt.s32.f32 %v1169
    %v2194 = vcvt.s32.f32 %v1170
    %v2195 = vcvt.s32.f32 %v1171
    %v2196 = vcvt.s32.f32 %v1172
    %v2197 = vcvt.s32.f32 %v1173
    %v2198 = vcvt.s32.f32 %v1174
    %v2199 = vcvt.s32.f32 %v1175
    %v2200 = vcvt.s32.f32 %v1176
    %v2201 = vcvt.s32.f32 %v1177
    %v2202 = vcvt.s32.f32 %v1178
    %v2203 = vcvt.s32.f32 %v1179
    %v2204 = vcvt.s32.f32 %v1180
    %v2205 = vcvt.s32.f32 %v1181
    %v2206 = vcvt.s32.f32 %v1182
    %v2207 = vcvt.s32.f32 %v1183
    %v2208 = vcvt.s32.f32 %v1184
    %v2209 = vcvt.s32.f32 %v1185
    %v2210 = vcvt.s32.f32 %v1186
    %v2211 = vcvt.s32.f32 %v1187
    %v2212 = vcvt.s32.f32 %v1188
    %v2213 = vcvt.s32.f32 %v1189
    %v2214 = vcvt.s32.f32 %v1190
    %v2215 = vcvt.s32.f32 %v1191
    %v2216 = vcvt.s32.f32 %v1192
    %v2217 = vcvt.s32.f32 %v1193
    %v2218 = vcvt.s32.f32 %v1194
    %v2219 = vcvt.s32.f32 %v1195
    %v2220 = vcvt.s32.f32 %v1196
    %v2221 = vcvt.s32.f32 %v1197
    %v2222 = vcvt.s32.f32 %v1198
    %v2223 = vcvt.s32.f32 %v1199
    %v2224 = vcvt.s32.f32 %v1200
    %v2225 = vcvt.s32.f32 %v1201
    %v2226 = vcvt.s32.f32 %v1202
    %v2227 = vcvt.s32.f32 %v1203
    %v2228 = vcvt.s32.f32 %v1204
    %v2229 = vcvt.s32.f32 %v1205
    %v2230 = vcvt.s32.f32 %v1206
    %v2231 = vcvt.s32.f32 %v1207
    %v2232 = vcvt.s32.f32 %v1208
    %v2233 = vcvt.s32.f32 %v1209
    %v2234 = vcvt.s32.f32 %v1210
    %v2235 = vcvt.s32.f32 %v1211
    %v2236 = vcvt.s32.f32 %v1212
    %v2237 = vcvt.s32.f32 %v1213
    %v2238 = vcvt.s32.f32 %v1214
    %v2239 = vcvt.s32.f32 %v1215
    %v2240 = vcvt.s32.f32 %v1216
    %v2241 = vcvt.s32.f32 %v1217
    %v2242 = vcvt.s32.f32 %v1218
    %v2243 = vcvt.s32.f32 %v1219
    %v2244 = vcvt.s32.f32 %v1220
    %v2245 = vcvt.s32.f32 %v1221
    %v2246 = vcvt.s32.f32 %v1222
    %v2247 = vcvt.s32.f32 %v1223
    %v2248 = vcvt.s32.f32 %v1224
    %v2249 = vcvt.s32.f32 %v1225
    %v2250 = vcvt.s32.f32 %v1226
    %v2251 = vcvt.s32.f32 %v1227
    %v2252 = vcvt.s32.f32 %v1228
    %v2253 = vcvt.s32.f32 %v1229
    %v2254 = vcvt.s32.f32 %v1230
    %v2255 = vcvt.s32.f32 %v1231
    %v2256 = vcvt.s32.f32 %v1232
    %v2257 = vcvt.s32.f32 %v1233
    %v2258 = vcvt.s32.f32 %v1234
    %v2259 = vcvt.s32.f32 %v1235
    %v2260 = vcvt.s32.f32 %v1236
    %v2261 = vcvt.s32.f32 %v1237
    %v2262 = vcvt.s32.f32 %v1238
    %v2263 = vcvt.s32.f32 %v1239
    %v2264 = vcvt.s32.f32 %v1240
    %v2265 = vcvt.s32.f32 %v1241
    %v2266 = vcvt.s32.f32 %v1242
    %v2267 = vcvt.s32.f32 %v1243
    %v2268 = vcvt.s32.f32 %v1244
    %v2269 = vcvt.s32.f32 %v1245
    %v2270 = vcvt.s32.f32 %v1246
    %v2271 = vcvt.s32.f32 %v1247
    %v2272 = vcvt.s32.f32 %v1248
    %v2273 = vcvt.s32.f32 %v1249
    %v2274 = vcvt.s32.f32 %v1250
    %v2275 = vcvt.s32.f32 %v1251
    %v2276 = vcvt.s32.f32 %v1252
    %v2277 = vcvt.s32.f32 %v1253
    %v2278 = vcvt.s32.f32 %v1254
    %v2279 = vcvt.s32.f32 %v1255
    %v2280 = vcvt.s32.f32 %v1256
    %v2281 = vcvt.s32.f32 %v1257
    %v2282 = vcvt.s32.f32 %v1258
    %v2283 = vcvt.s32.f32 %v1259
    %v2284 = vcvt.s32.f32 %v1260
    %v2285 = vcvt.s32.f32 %v1261
    %v2286 = vcvt.s32.f32 %v1262
    %v2287 = vcvt.s32.f32 %v1263
    %v2288 = vcvt.s32.f32 %v1264
    %v2289 = vcvt.s32.f32 %v1265
    %v2290 = vcvt.s32.f32 %v1266
    %v2291 = vcvt.s32.f32 %v1267
    %v2292 = vcvt.s32.f32 %v1268
    %v2293 = vcvt.s32.f32 %v1269
    %v2294 = vcvt.s32.f32 %v1270
    %v2295 = vcvt.s32.f32 %v1271
    %v2296 = vcvt.s32.f32 %v1272
    %v2297 = vcvt.s32.f32 %v1273
    %v2298 = vcvt.s32.f32 %v1274
    %v2299 = vcvt.s32.f32 %v1275
    %v2300 = vcvt.s32.f32 %v1276
    %v2301 = vcvt.s32.f32 %v1277
    %v2302 = vcvt.s32.f32 %v1278
    %v2303 = vcvt.s32.f32 %v1279
    %v2304 = vcvt.s32.f32 %v1280
    %v2305 = vcvt.s32.f32 %v1281
    %v2306 = vcvt.s32.f32 %v1282
    %v2307 = vcvt.s32.f32 %v1283
    %v2308 = vcvt.s32.f32 %v1284
    %v2309 = vcvt.s32.f32 %v1285
    %v2310 = vcvt.s32.f32 %v1286
    %v2311 = vcvt.s32.f32 %v1287
    %v2312 = vcvt.s32.f32 %v1288
    %v2313 = vcvt.s32.f32 %v1289
    %v2314 = vcvt.s32.f32 %v1290
    %v2315 = vcvt.s32.f32 %v1291
    %v2316 = vcvt.s32.f32 %v1292
    %v2317 = vcvt.s32.f32 %v1293
    %v2318 = vcvt.s32.f32 %v1294
    %v2319 = vcvt.s32.f32 %v1295
    %v2320 = vcvt.s32.f32 %v1296
    %v2321 = vcvt.s32.f32 %v1297
    %v2322 = vcvt.s32.f32 %v1298
    %v2323 = vcvt.s32.f32 %v1299
    %v2324 = vcvt.s32.f32 %v1300
    %v2325 = vcvt.s32.f32 %v1301
    %v2326 = vcvt.s32.f32 %v1302
    %v2327 = vcvt.s32.f32 %v1303
    %v2328 = vcvt.s32.f32 %v1304
    %v2329 = vcvt.s32.f32 %v1305
    %v2330 = vcvt.s32.f32 %v1306
    %v2331 = vcvt.s32.f32 %v1307
    %v2332 = vcvt.s32.f32 %v1308
    %v2333 = vcvt.s32.f32 %v1309
    %v2334 = vcvt.s32.f32 %v1310
    %v2335 = vcvt.s32.f32 %v1311
    %v2336 = vcvt.s32.f32 %v1312
    %v2337 = vcvt.s32.f32 %v1313
    %v2338 = vcvt.s32.f32 %v1314
    %v2339 = vcvt.s32.f32 %v1315
    %v2340 = vcvt.s32.f32 %v1316
    %v2341 = vcvt.s32.f32 %v1317
    %v2342 = vcvt.s32.f32 %v1318
    %v2343 = vcvt.s32.f32 %v1319
    %v2344 = vcvt.s32.f32 %v1320
    %v2345 = vcvt.s32.f32 %v1321
    %v2346 = vcvt.s32.f32 %v1322
    %v2347 = vcvt.s32.f32 %v1323
    %v2348 = vcvt.s32.f32 %v1324
    %v2349 = vcvt.s32.f32 %v1325
    %v2350 = vcvt.s32.f32 %v1326
    %v2351 = vcvt.s32.f32 %v1327
    %v2352 = vcvt.s32.f32 %v1328
    %v2353 = vcvt.s32.f32 %v1329
    %v2354 = vcvt.s32.f32 %v1330
    %v2355 = vcvt.s32.f32 %v1331
    %v2356 = vcvt.s32.f32 %v1332
    %v2357 = vcvt.s32.f32 %v1333
    %v2358 = vcvt.s32.f32 %v1334
    %v2359 = vcvt.s32.f32 %v1335
    %v2360 = vcvt.s32.f32 %v1336
    %v2361 = vcvt.s32.f32 %v1337
    %v2362 = vcvt.s32.f32 %v1338
    %v2363 = vcvt.s32.f32 %v1339
    %v2364 = vcvt.s32.f32 %v1340
    %v2365 = vcvt.s32.f32 %v1341
    %v2366 = vcvt.s32.f32 %v1342
    %v2367 = vcvt.s32.f32 %v1343
    %v2368 = vcvt.s32.f32 %v1344
    %v2369 = vcvt.s32.f32 %v1345
    %v2370 = vcvt.s32.f32 %v1346
    %v2371 = vcvt.s32.f32 %v1347
    %v2372 = vcvt.s32.f32 %v1348
    %v2373 = vcvt.s32.f32 %v1349
    %v2374 = vcvt.s32.f32 %v1350
    %v2375 = vcvt.s32.f32 %v1351
    %v2376 = vcvt.s32.f32 %v1352
    %v2377 = vcvt.s32.f32 %v1353
    %v2378 = vcvt.s32.f32 %v1354
    %v2379 = vcvt.s32.f32 %v1355
    %v2380 = vcvt.s32.f32 %v1356
    %v2381 = vcvt.s32.f32 %v1357
    %v2382 = vcvt.s32.f32 %v1358
    %v2383 = vcvt.s32.f32 %v1359
    %v2384 = vcvt.s32.f32 %v1360
    %v2385 = vcvt.s32.f32 %v1361
    %v2386 = vcvt.s32.f32 %v1362
    %v2387 = vcvt.s32.f32 %v1363
    %v2388 = vcvt.s32.f32 %v1364
    %v2389 = vcvt.s32.f32 %v1365
    %v2390 = vcvt.s32.f32 %v1366
    %v2391 = vcvt.s32.f32 %v1367
    %v2392 = vcvt.s32.f32 %v1368
    %v2393 = vcvt.s32.f32 %v1369
    %v2394 = vcvt.s32.f32 %v1370
    %v2395 = vcvt.s32.f32 %v1371
    %v2396 = vcvt.s32.f32 %v1372
    %v2397 = vcvt.s32.f32 %v1373
    %v2398 = vcvt.s32.f32 %v1374
    %v2399 = vcvt.s32.f32 %v1375
    %v2400 = vcvt.s32.f32 %v1376
    %v2401 = vcvt.s32.f32 %v1377
    %v2402 = vcvt.s32.f32 %v1378
    %v2403 = vcvt.s32.f32 %v1379
    %v2404 = vcvt.s32.f32 %v1380
    %v2405 = vcvt.s32.f32 %v1381
    %v2406 = vcvt.s32.f32 %v1382
    %v2407 = vcvt.s32.f32 %v1383
    %v2408 = vcvt.s32.f32 %v1384
    %v2409 = vcvt.s32.f32 %v1385
    %v2410 = vcvt.s32.f32 %v1386
    %v2411 = vcvt.s32.f32 %v1387
    %v2412 = vcvt.s32.f32 %v1388
    %v2413 = vcvt.s32.f32 %v1389
    %v2414 = vcvt.s32.f32 %v1390
    %v2415 = vcvt.s32.f32 %v1391
    %v2416 = vcvt.s32.f32 %v1392
    %v2417 = vcvt.s32.f32 %v1393
    %v2418 = vcvt.s32.f32 %v1394
    %v2419 = vcvt.s32.f32 %v1395
    %v2420 = vcvt.s32.f32 %v1396
    %v2421 = vcvt.s32.f32 %v1397
    %v2422 = vcvt.s32.f32 %v1398
    %v2423 = vcvt.s32.f32 %v1399
    %v2424 = vcvt.s32.f32 %v1400
    %v2425 = vcvt.s32.f32 %v1401
    %v2426 = vcvt.s32.f32 %v1402
    %v2427 = vcvt.s32.f32 %v1403
    %v2428 = vcvt.s32.f32 %v1404
    %v2429 = vcvt.s32.f32 %v1405
    %v2430 = vcvt.s32.f32 %v1406
    %v2431 = vcvt.s32.f32 %v1407
    %v2432 = vcvt.s32.f32 %v1408
    %v2433 = vcvt.s32.f32 %v1409
    %v2434 = vcvt.s32.f32 %v1410
    %v2435 = vcvt.s32.f32 %v1411
    %v2436 = vcvt.s32.f32 %v1412
    %v2437 = vcvt.s32.f32 %v1413
    %v2438 = vcvt.s32.f32 %v1414
    %v2439 = vcvt.s32.f32 %v1415
    %v2440 = vcvt.s32.f32 %v1416
    %v2441 = vcvt.s32.f32 %v1417
    %v2442 = vcvt.s32.f32 %v1418
    %v2443 = vcvt.s32.f32 %v1419
    %v2444 = vcvt.s32.f32 %v1420
    %v2445 = vcvt.s32.f32 %v1421
    %v2446 = vcvt.s32.f32 %v1422
    %v2447 = vcvt.s32.f32 %v1423
    %v2448 = vcvt.s32.f32 %v1424
    %v2449 = vcvt.s32.f32 %v1425
    %v2450 = vcvt.s32.f32 %v1426
    %v2451 = vcvt.s32.f32 %v1427
    %v2452 = vcvt.s32.f32 %v1428
    %v2453 = vcvt.s32.f32 %v1429
    %v2454 = vcvt.s32.f32 %v1430
    %v2455 = vcvt.s32.f32 %v1431
    %v2456 = vcvt.s32.f32 %v1432
    %v2457 = vcvt.s32.f32 %v1433
    %v2458 = vcvt.s32.f32 %v1434
    %v2459 = vcvt.s32.f32 %v1435
    %v2460 = vcvt.s32.f32 %v1436
    %v2461 = vcvt.s32.f32 %v1437
    %v2462 = vcvt.s32.f32 %v1438
    %v2463 = vcvt.s32.f32 %v1439
    %v2464 = vcvt.s32.f32 %v1440
    %v2465 = vcvt.s32.f32 %v1441
    %v2466 = vcvt.s32.f32 %v1442
    %v2467 = vcvt.s32.f32 %v1443
    %v2468 = vcvt.s32.f32 %v1444
    %v2469 = vcvt.s32.f32 %v1445
    %v2470 = vcvt.s32.f32 %v1446
    %v2471 = vcvt.s32.f32 %v1447
    %v2472 = vcvt.s32.f32 %v1448
    %v2473 = vcvt.s32.f32 %v1449
    %v2474 = vcvt.s32.f32 %v1450
    %v2475 = vcvt.s32.f32 %v1451
    %v2476 = vcvt.s32.f32 %v1452
    %v2477 = vcvt.s32.f32 %v1453
    %v2478 = vcvt.s32.f32 %v1454
    %v2479 = vcvt.s32.f32 %v1455
    %v2480 = vcvt.s32.f32 %v1456
    %v2481 = vcvt.s32.f32 %v1457
    %v2482 = vcvt.s32.f32 %v1458
    %v2483 = vcvt.s32.f32 %v1459
    %v2484 = vcvt.s32.f32 %v1460
    %v2485 = vcvt.s32.f32 %v1461
    %v2486 = vcvt.s32.f32 %v1462
    %v2487 = vcvt.s32.f32 %v1463
    %v2488 = vcvt.s32.f32 %v1464
    %v2489 = vcvt.s32.f32 %v1465
    %v2490 = vcvt.s32.f32 %v1466
    %v2491 = vcvt.s32.f32 %v1467
    %v2492 = vcvt.s32.f32 %v1468
    %v2493 = vcvt.s32.f32 %v1469
    %v2494 = vcvt.s32.f32 %v1470
    %v2495 = vcvt.s32.f32 %v1471
    %v2496 = vcvt.s32.f32 %v1472
    %v2497 = vcvt.s32.f32 %v1473
    %v2498 = vcvt.s32.f32 %v1474
    %v2499 = vcvt.s32.f32 %v1475
    %v2500 = vcvt.s32.f32 %v1476
    %v2501 = vcvt.s32.f32 %v1477
    %v2502 = vcvt.s32.f32 %v1478
    %v2503 = vcvt.s32.f32 %v1479
    %v2504 = vcvt.s32.f32 %v1480
    %v2505 = vcvt.s32.f32 %v1481
    %v2506 = vcvt.s32.f32 %v1482
    %v2507 = vcvt.s32.f32 %v1483
    %v2508 = vcvt.s32.f32 %v1484
    %v2509 = vcvt.s32.f32 %v1485
    %v2510 = vcvt.s32.f32 %v1486
    %v2511 = vcvt.s32.f32 %v1487
    %v2512 = vcvt.s32.f32 %v1488
    %v2513 = vcvt.s32.f32 %v1489
    %v2514 = vcvt.s32.f32 %v1490
    %v2515 = vcvt.s32.f32 %v1491
    %v2516 = vcvt.s32.f32 %v1492
    %v2517 = vcvt.s32.f32 %v1493
    %v2518 = vcvt.s32.f32 %v1494
    %v2519 = vcvt.s32.f32 %v1495
    %v2520 = vcvt.s32.f32 %v1496
    %v2521 = vcvt.s32.f32 %v1497
    %v2522 = vcvt.s32.f32 %v1498
    %v2523 = vcvt.s32.f32 %v1499
    %v2524 = vcvt.s32.f32 %v1500
    %v2525 = vcvt.s32.f32 %v1501
    %v2526 = vcvt.s32.f32 %v1502
    %v2527 = vcvt.s32.f32 %v1503
    %v2528 = vcvt.s32.f32 %v1504
    %v2529 = vcvt.s32.f32 %v1505
    %v2530 = vcvt.s32.f32 %v1506
    %v2531 = vcvt.s32.f32 %v1507
    %v2532 = vcvt.s32.f32 %v1508
    %v2533 = vcvt.s32.f32 %v1509
    %v2534 = vcvt.s32.f32 %v1510
    %v2535 = vcvt.s32.f32 %v1511
    %v2536 = vcvt.s32.f32 %v1512
    %v2537 = vcvt.s32.f32 %v1513
    %v2538 = vcvt.s32.f32 %v1514
    %v2539 = vcvt.s32.f32 %v1515
    %v2540 = vcvt.s32.f32 %v1516
    %v2541 = vcvt.s32.f32 %v1517
    %v2542 = vcvt.s32.f32 %v1518
    %v2543 = vcvt.s32.f32 %v1519
    %v2544 = vcvt.s32.f32 %v1520
    %v2545 = vcvt.s32.f32 %v1521
    %v2546 = vcvt.s32.f32 %v1522
    %v2547 = vcvt.s32.f32 %v1523
    %v2548 = vcvt.s32.f32 %v1524
    %v2549 = vcvt.s32.f32 %v1525
    %v2550 = vcvt.s32.f32 %v1526
    %v2551 = vcvt.s32.f32 %v1527
    %v2552 = vcvt.s32.f32 %v1528
    %v2553 = vcvt.s32.f32 %v1529
    %v2554 = vcvt.s32.f32 %v1530
    %v2555 = vcvt.s32.f32 %v1531
    %v2556 = vcvt.s32.f32 %v1532
    %v2557 = vcvt.s32.f32 %v1533
    %v2558 = vcvt.s32.f32 %v1534
    %v2559 = vcvt.s32.f32 %v1535
    %v2560 = vcvt.s32.f32 %v1536
    %v2561 = vcvt.s32.f32 %v1537
    %v2562 = vcvt.s32.f32 %v1538
    %v2563 = vcvt.s32.f32 %v1539
    %v2564 = vcvt.s32.f32 %v1540
    %v2565 = vcvt.s32.f32 %v1541
    %v2566 = vcvt.s32.f32 %v1542
    %v2567 = vcvt.s32.f32 %v1543
    %v2568 = vcvt.s32.f32 %v1544
    %v2569 = vcvt.s32.f32 %v1545
    %v2570 = vcvt.s32.f32 %v1546
    %v2571 = vcvt.s32.f32 %v1547
    %v2572 = vcvt.s32.f32 %v1548
    %v2573 = vcvt.s32.f32 %v1549
    %v2574 = vcvt.s32.f32 %v1550
    %v2575 = vcvt.s32.f32 %v1551
    %v2576 = vcvt.s32.f32 %v1552
    %v2577 = vcvt.s32.f32 %v1553
    %v2578 = vcvt.s32.f32 %v1554
    %v2579 = vcvt.s32.f32 %v1555
    %v2580 = vcvt.s32.f32 %v1556
    %v2581 = vcvt.s32.f32 %v1557
    %v2582 = vcvt.s32.f32 %v1558
    %v2583 = vcvt.s32.f32 %v1559
    %v2584 = vcvt.s32.f32 %v1560
    %v2585 = vcvt.s32.f32 %v1561
    %v2586 = vcvt.s32.f32 %v1562
    %v2587 = vcvt.s32.f32 %v1563
    %v2588 = vcvt.s32.f32 %v1564
    %v2589 = vcvt.s32.f32 %v1565
    %v2590 = vcvt.s32.f32 %v1566
    %v2591 = vcvt.s32.f32 %v1567
    %v2592 = vcvt.s32.f32 %v1568
    %v2593 = vcvt.s32.f32 %v1569
    %v2594 = vcvt.s32.f32 %v1570
    %v2595 = vcvt.s32.f32 %v1571
    %v2596 = vcvt.s32.f32 %v1572
    %v2597 = vcvt.s32.f32 %v1573
    %v2598 = vcvt.s32.f32 %v1574
    %v2599 = vcvt.s32.f32 %v1575
    %v2600 = vcvt.s32.f32 %v1576
    %v2601 = vcvt.s32.f32 %v1577
    %v2602 = vcvt.s32.f32 %v1578
    %v2603 = vcvt.s32.f32 %v1579
    %v2604 = vcvt.s32.f32 %v1580
    %v2605 = vcvt.s32.f32 %v1581
    %v2606 = vcvt.s32.f32 %v1582
    %v2607 = vcvt.s32.f32 %v1583
    %v2608 = vcvt.s32.f32 %v1584
    %v2609 = vcvt.s32.f32 %v1585
    %v2610 = vcvt.s32.f32 %v1586
    %v2611 = vcvt.s32.f32 %v1587
    %v2612 = vcvt.s32.f32 %v1588
    %v2613 = vcvt.s32.f32 %v1589
    %v2614 = vcvt.s32.f32 %v1590
    %v2615 = vcvt.s32.f32 %v1591
    %v2616 = vcvt.s32.f32 %v1592
    %v2617 = vcvt.s32.f32 %v1593
    %v2618 = vcvt.s32.f32 %v1594
    %v2619 = vcvt.s32.f32 %v1595
    %v2620 = vcvt.s32.f32 %v1596
    %v2621 = vcvt.s32.f32 %v1597
    %v2622 = vcvt.s32.f32 %v1598
    %v2623 = vcvt.s32.f32 %v1599
    %v2624 = vcvt.s32.f32 %v1600
    %v2625 = vcvt.s32.f32 %v1601
    %v2626 = vcvt.s32.f32 %v1602
    %v2627 = vcvt.s32.f32 %v1603
    %v2628 = vcvt.s32.f32 %v1604
    %v2629 = vcvt.s32.f32 %v1605
    %v2630 = vcvt.s32.f32 %v1606
    %v2631 = vcvt.s32.f32 %v1607
    %v2632 = vcvt.s32.f32 %v1608
    %v2633 = vcvt.s32.f32 %v1609
    %v2634 = vcvt.s32.f32 %v1610
    %v2635 = vcvt.s32.f32 %v1611
    %v2636 = vcvt.s32.f32 %v1612
    %v2637 = vcvt.s32.f32 %v1613
    %v2638 = vcvt.s32.f32 %v1614
    %v2639 = vcvt.s32.f32 %v1615
    %v2640 = vcvt.s32.f32 %v1616
    %v2641 = vcvt.s32.f32 %v1617
    %v2642 = vcvt.s32.f32 %v1618
    %v2643 = vcvt.s32.f32 %v1619
    %v2644 = vcvt.s32.f32 %v1620
    %v2645 = vcvt.s32.f32 %v1621
    %v2646 = vcvt.s32.f32 %v1622
    %v2647 = vcvt.s32.f32 %v1623
    %v2648 = vcvt.s32.f32 %v1624
    %v2649 = vcvt.s32.f32 %v1625
    %v2650 = vcvt.s32.f32 %v1626
    %v2651 = vcvt.s32.f32 %v1627
    %v2652 = vcvt.s32.f32 %v1628
    %v2653 = vcvt.s32.f32 %v1629
    %v2654 = vcvt.s32.f32 %v1630
    %v2655 = vcvt.s32.f32 %v1631
    %v2656 = vcvt.s32.f32 %v1632
    %v2657 = vcvt.s32.f32 %v1633
    %v2658 = vcvt.s32.f32 %v1634
    %v2659 = vcvt.s32.f32 %v1635
    %v2660 = vcvt.s32.f32 %v1636
    %v2661 = vcvt.s32.f32 %v1637
    %v2662 = vcvt.s32.f32 %v1638
    %v2663 = vcvt.s32.f32 %v1639
    %v2664 = vcvt.s32.f32 %v1640
    %v2665 = vcvt.s32.f32 %v1641
    %v2666 = vcvt.s32.f32 %v1642
    %v2667 = vcvt.s32.f32 %v1643
    %v2668 = vcvt.s32.f32 %v1644
    %v2669 = vcvt.s32.f32 %v1645
    %v2670 = vcvt.s32.f32 %v1646
    %v2671 = vcvt.s32.f32 %v1647
    %v2672 = vcvt.s32.f32 %v1648
    %v2673 = vcvt.s32.f32 %v1649
    %v2674 = vcvt.s32.f32 %v1650
    %v2675 = vcvt.s32.f32 %v1651
    %v2676 = vcvt.s32.f32 %v1652
    %v2677 = vcvt.s32.f32 %v1653
    %v2678 = vcvt.s32.f32 %v1654
    %v2679 = vcvt.s32.f32 %v1655
    %v2680 = vcvt.s32.f32 %v1656
    %v2681 = vcvt.s32.f32 %v1657
    %v2682 = vcvt.s32.f32 %v1658
    %v2683 = vcvt.s32.f32 %v1659
    %v2684 = vcvt.s32.f32 %v1660
    %v2685 = vcvt.s32.f32 %v1661
    %v2686 = vcvt.s32.f32 %v1662
    %v2687 = vcvt.s32.f32 %v1663
    %v2688 = vcvt.s32.f32 %v1664
    %v2689 = vcvt.s32.f32 %v1665
    %v2690 = vcvt.s32.f32 %v1666
    %v2691 = vcvt.s32.f32 %v1667
    %v2692 = vcvt.s32.f32 %v1668
    %v2693 = vcvt.s32.f32 %v1669
    %v2694 = vcvt.s32.f32 %v1670
    %v2695 = vcvt.s32.f32 %v1671
    %v2696 = vcvt.s32.f32 %v1672
    %v2697 = vcvt.s32.f32 %v1673
    %v2698 = vcvt.s32.f32 %v1674
    %v2699 = vcvt.s32.f32 %v1675
    %v2700 = vcvt.s32.f32 %v1676
    %v2701 = vcvt.s32.f32 %v1677
    %v2702 = vcvt.s32.f32 %v1678
    %v2703 = vcvt.s32.f32 %v1679
    %v2704 = vcvt.s32.f32 %v1680
    %v2705 = vcvt.s32.f32 %v1681
    %v2706 = vcvt.s32.f32 %v1682
    %v2707 = vcvt.s32.f32 %v1683
    %v2708 = vcvt.s32.f32 %v1684
    %v2709 = vcvt.s32.f32 %v1685
    %v2710 = vcvt.s32.f32 %v1686
    %v2711 = vcvt.s32.f32 %v1687
    %v2712 = vcvt.s32.f32 %v1688
    %v2713 = vcvt.s32.f32 %v1689
    %v2714 = vcvt.s32.f32 %v1690
    %v2715 = vcvt.s32.f32 %v1691
    %v2716 = vcvt.s32.f32 %v1692
    %v2717 = vcvt.s32.f32 %v1693
    %v2718 = vcvt.s32.f32 %v1694
    %v2719 = vcvt.s32.f32 %v1695
    %v2720 = vcvt.s32.f32 %v1696
    %v2721 = vcvt.s32.f32 %v1697
    %v2722 = vcvt.s32.f32 %v1698
    %v2723 = vcvt.s32.f32 %v1699
    %v2724 = vcvt.s32.f32 %v1700
    %v2725 = vcvt.s32.f32 %v1701
    %v2726 = vcvt.s32.f32 %v1702
    %v2727 = vcvt.s32.f32 %v1703
    %v2728 = vcvt.s32.f32 %v1704
    %v2729 = vcvt.s32.f32 %v1705
    %v2730 = vcvt.s32.f32 %v1706
    %v2731 = vcvt.s32.f32 %v1707
    %v2732 = vcvt.s32.f32 %v1708
    %v2733 = vcvt.s32.f32 %v1709
    %v2734 = vcvt.s32.f32 %v1710
    %v2735 = vcvt.s32.f32 %v1711
    %v2736 = vcvt.s32.f32 %v1712
    %v2737 = vcvt.s32.f32 %v1713
    %v2738 = vcvt.s32.f32 %v1714
    %v2739 = vcvt.s32.f32 %v1715
    %v2740 = vcvt.s32.f32 %v1716
    %v2741 = vcvt.s32.f32 %v1717
    %v2742 = vcvt.s32.f32 %v1718
    %v2743 = vcvt.s32.f32 %v1719
    %v2744 = vcvt.s32.f32 %v1720
    %v2745 = vcvt.s32.f32 %v1721
    %v2746 = vcvt.s32.f32 %v1722
    %v2747 = vcvt.s32.f32 %v1723
    %v2748 = vcvt.s32.f32 %v1724
    %v2749 = vcvt.s32.f32 %v1725
    %v2750 = vcvt.s32.f32 %v1726
    %v2751 = vcvt.s32.f32 %v1727
    %v2752 = vcvt.s32.f32 %v1728
    %v2753 = vcvt.s32.f32 %v1729
    %v2754 = vcvt.s32.f32 %v1730
    %v2755 = vcvt.s32.f32 %v1731
    %v2756 = vcvt.s32.f32 %v1732
    %v2757 = vcvt.s32.f32 %v1733
    %v2758 = vcvt.s32.f32 %v1734
    %v2759 = vcvt.s32.f32 %v1735
    %v2760 = vcvt.s32.f32 %v1736
    %v2761 = vcvt.s32.f32 %v1737
    %v2762 = vcvt.s32.f32 %v1738
    %v2763 = vcvt.s32.f32 %v1739
    %v2764 = vcvt.s32.f32 %v1740
    %v2765 = vcvt.s32.f32 %v1741
    %v2766 = vcvt.s32.f32 %v1742
    %v2767 = vcvt.s32.f32 %v1743
    %v2768 = vcvt.s32.f32 %v1744
    %v2769 = vcvt.s32.f32 %v1745
    %v2770 = vcvt.s32.f32 %v1746
    %v2771 = vcvt.s32.f32 %v1747
    %v2772 = vcvt.s32.f32 %v1748
    %v2773 = vcvt.s32.f32 %v1749
    %v2774 = vcvt.s32.f32 %v1750
    %v2775 = vcvt.s32.f32 %v1751
    %v2776 = vcvt.s32.f32 %v1752
    %v2777 = vcvt.s32.f32 %v1753
    %v2778 = vcvt.s32.f32 %v1754
    %v2779 = vcvt.s32.f32 %v1755
    %v2780 = vcvt.s32.f32 %v1756
    %v2781 = vcvt.s32.f32 %v1757
    %v2782 = vcvt.s32.f32 %v1758
    %v2783 = vcvt.s32.f32 %v1759
    %v2784 = vcvt.s32.f32 %v1760
    %v2785 = vcvt.s32.f32 %v1761
    %v2786 = vcvt.s32.f32 %v1762
    %v2787 = vcvt.s32.f32 %v1763
    %v2788 = vcvt.s32.f32 %v1764
    %v2789 = vcvt.s32.f32 %v1765
    %v2790 = vcvt.s32.f32 %v1766
    %v2791 = vcvt.s32.f32 %v1767
    %v2792 = vcvt.s32.f32 %v1768
    %v2793 = vcvt.s32.f32 %v1769
    %v2794 = vcvt.s32.f32 %v1770
    %v2795 = vcvt.s32.f32 %v1771
    %v2796 = vcvt.s32.f32 %v1772
    %v2797 = vcvt.s32.f32 %v1773
    %v2798 = vcvt.s32.f32 %v1774
    %v2799 = vcvt.s32.f32 %v1775
    %v2800 = vcvt.s32.f32 %v1776
    %v2801 = vcvt.s32.f32 %v1777
    %v2802 = vcvt.s32.f32 %v1778
    %v2803 = vcvt.s32.f32 %v1779
    %v2804 = vcvt.s32.f32 %v1780
    %v2805 = vcvt.s32.f32 %v1781
    %v2806 = vcvt.s32.f32 %v1782
    %v2807 = vcvt.s32.f32 %v1783
    %v2808 = vcvt.s32.f32 %v1784
    %v2809 = vcvt.s32.f32 %v1785
    %v2810 = vcvt.s32.f32 %v1786
    %v2811 = vcvt.s32.f32 %v1787
    %v2812 = vcvt.s32.f32 %v1788
    %v2813 = vcvt.s32.f32 %v1789
    %v2814 = vcvt.s32.f32 %v1790
    %v2815 = vcvt.s32.f32 %v1791
    %v2816 = vcvt.s32.f32 %v1792
    %v2817 = vcvt.s32.f32 %v1793
    %v2818 = vcvt.s32.f32 %v1794
    %v2819 = vcvt.s32.f32 %v1795
    %v2820 = vcvt.s32.f32 %v1796
    %v2821 = vcvt.s32.f32 %v1797
    %v2822 = vcvt.s32.f32 %v1798
    %v2823 = vcvt.s32.f32 %v1799
    %v2824 = vcvt.s32.f32 %v1800
    %v2825 = vcvt.s32.f32 %v1801
    %v2826 = vcvt.s32.f32 %v1802
    %v2827 = vcvt.s32.f32 %v1803
    %v2828 = vcvt.s32.f32 %v1804
    %v2829 = vcvt.s32.f32 %v1805
    %v2830 = vcvt.s32.f32 %v1806
    %v2831 = vcvt.s32.f32 %v1807
    %v2832 = vcvt.s32.f32 %v1808
    %v2833 = vcvt.s32.f32 %v1809
    %v2834 = vcvt.s32.f32 %v1810
    %v2835 = vcvt.s32.f32 %v1811
    %v2836 = vcvt.s32.f32 %v1812
    %v2837 = vcvt.s32.f32 %v1813
    %v2838 = vcvt.s32.f32 %v1814
    %v2839 = vcvt.s32.f32 %v1815
    %v2840 = vcvt.s32.f32 %v1816
    %v2841 = vcvt.s32.f32 %v1817
    %v2842 = vcvt.s32.f32 %v1818
    %v2843 = vcvt.s32.f32 %v1819
    %v2844 = vcvt.s32.f32 %v1820
    %v2845 = vcvt.s32.f32 %v1821
    %v2846 = vcvt.s32.f32 %v1822
    %v2847 = vcvt.s32.f32 %v1823
    %v2848 = vcvt.s32.f32 %v1824
    %v2849 = vcvt.s32.f32 %v1825
    %v2850 = vcvt.s32.f32 %v1826
    %v2851 = vcvt.s32.f32 %v1827
    %v2852 = vcvt.s32.f32 %v1828
    %v2853 = vcvt.s32.f32 %v1829
    %v2854 = vcvt.s32.f32 %v1830
    %v2855 = vcvt.s32.f32 %v1831
    %v2856 = vcvt.s32.f32 %v1832
    %v2857 = vcvt.s32.f32 %v1833
    %v2858 = vcvt.s32.f32 %v1834
    %v2859 = vcvt.s32.f32 %v1835
    %v2860 = vcvt.s32.f32 %v1836
    %v2861 = vcvt.s32.f32 %v1837
    %v2862 = vcvt.s32.f32 %v1838
    %v2863 = vcvt.s32.f32 %v1839
    %v2864 = vcvt.s32.f32 %v1840
    %v2865 = vcvt.s32.f32 %v1841
    %v2866 = vcvt.s32.f32 %v1842
    %v2867 = vcvt.s32.f32 %v1843
    %v2868 = vcvt.s32.f32 %v1844
    %v2869 = vcvt.s32.f32 %v1845
    %v2870 = vcvt.s32.f32 %v1846
    %v2871 = vcvt.s32.f32 %v1847
    %v2872 = vcvt.s32.f32 %v1848
    %v2873 = vcvt.s32.f32 %v1849
    %v2874 = vcvt.s32.f32 %v1850
    %v2875 = vcvt.s32.f32 %v1851
    %v2876 = vcvt.s32.f32 %v1852
    %v2877 = vcvt.s32.f32 %v1853
    %v2878 = vcvt.s32.f32 %v1854
    %v2879 = vcvt.s32.f32 %v1855
    %v2880 = vcvt.s32.f32 %v1856
    %v2881 = vcvt.s32.f32 %v1857
    %v2882 = vcvt.s32.f32 %v1858
    %v2883 = vcvt.s32.f32 %v1859
    %v2884 = vcvt.s32.f32 %v1860
    %v2885 = vcvt.s32.f32 %v1861
    %v2886 = vcvt.s32.f32 %v1862
    %v2887 = vcvt.s32.f32 %v1863
    %v2888 = vcvt.s32.f32 %v1864
    %v2889 = vcvt.s32.f32 %v1865
    %v2890 = vcvt.s32.f32 %v1866
    %v2891 = vcvt.s32.f32 %v1867
    %v2892 = vcvt.s32.f32 %v1868
    %v2893 = vcvt.s32.f32 %v1869
    %v2894 = vcvt.s32.f32 %v1870
    %v2895 = vcvt.s32.f32 %v1871
    %v2896 = vcvt.s32.f32 %v1872
    %v2897 = vcvt.s32.f32 %v1873
    %v2898 = vcvt.s32.f32 %v1874
    %v2899 = vcvt.s32.f32 %v1875
    %v2900 = vcvt.s32.f32 %v1876
    %v2901 = vcvt.s32.f32 %v1877
    %v2902 = vcvt.s32.f32 %v1878
    %v2903 = vcvt.s32.f32 %v1879
    %v2904 = vcvt.s32.f32 %v1880
    %v2905 = vcvt.s32.f32 %v1881
    %v2906 = vcvt.s32.f32 %v1882
    %v2907 = vcvt.s32.f32 %v1883
    %v2908 = vcvt.s32.f32 %v1884
    %v2909 = vcvt.s32.f32 %v1885
    %v2910 = vcvt.s32.f32 %v1886
    %v2911 = vcvt.s32.f32 %v1887
    %v2912 = vcvt.s32.f32 %v1888
    %v2913 = vcvt.s32.f32 %v1889
    %v2914 = vcvt.s32.f32 %v1890
    %v2915 = vcvt.s32.f32 %v1891
    %v2916 = vcvt.s32.f32 %v1892
    %v2917 = vcvt.s32.f32 %v1893
    %v2918 = vcvt.s32.f32 %v1894
    %v2919 = vcvt.s32.f32 %v1895
    %v2920 = vcvt.s32.f32 %v1896
    %v2921 = vcvt.s32.f32 %v1897
    %v2922 = vcvt.s32.f32 %v1898
    %v2923 = vcvt.s32.f32 %v1899
    %v2924 = vcvt.s32.f32 %v1900
    %v2925 = vcvt.s32.f32 %v1901
    %v2926 = vcvt.s32.f32 %v1902
    %v2927 = vcvt.s32.f32 %v1903
    %v2928 = vcvt.s32.f32 %v1904
    %v2929 = vcvt.s32.f32 %v1905
    %v2930 = vcvt.s32.f32 %v1906
    %v2931 = vcvt.s32.f32 %v1907
    %v2932 = vcvt.s32.f32 %v1908
    %v2933 = vcvt.s32.f32 %v1909
    %v2934 = vcvt.s32.f32 %v1910
    %v2935 = vcvt.s32.f32 %v1911
    %v2936 = vcvt.s32.f32 %v1912
    %v2937 = vcvt.s32.f32 %v1913
    %v2938 = vcvt.s32.f32 %v1914
    %v2939 = vcvt.s32.f32 %v1915
    %v2940 = vcvt.s32.f32 %v1916
    %v2941 = vcvt.s32.f32 %v1917
    %v2942 = vcvt.s32.f32 %v1918
    %v2943 = vcvt.s32.f32 %v1919
    %v2944 = vcvt.s32.f32 %v1920
    %v2945 = vcvt.s32.f32 %v1921
    %v2946 = vcvt.s32.f32 %v1922
    %v2947 = vcvt.s32.f32 %v1923
    %v2948 = vcvt.s32.f32 %v1924
    %v2949 = vcvt.s32.f32 %v1925
    %v2950 = vcvt.s32.f32 %v1926
    %v2951 = vcvt.s32.f32 %v1927
    %v2952 = vcvt.s32.f32 %v1928
    %v2953 = vcvt.s32.f32 %v1929
    %v2954 = vcvt.s32.f32 %v1930
    %v2955 = vcvt.s32.f32 %v1931
    %v2956 = vcvt.s32.f32 %v1932
    %v2957 = vcvt.s32.f32 %v1933
    %v2958 = vcvt.s32.f32 %v1934
    %v2959 = vcvt.s32.f32 %v1935
    %v2960 = vcvt.s32.f32 %v1936
    %v2961 = vcvt.s32.f32 %v1937
    %v2962 = vcvt.s32.f32 %v1938
    %v2963 = vcvt.s32.f32 %v1939
    %v2964 = vcvt.s32.f32 %v1940
    %v2965 = vcvt.s32.f32 %v1941
    %v2966 = vcvt.s32.f32 %v1942
    %v2967 = vcvt.s32.f32 %v1943
    %v2968 = vcvt.s32.f32 %v1944
    %v2969 = vcvt.s32.f32 %v1945
    %v2970 = vcvt.s32.f32 %v1946
    %v2971 = vcvt.s32.f32 %v1947
    %v2972 = vcvt.s32.f32 %v1948
    %v2973 = vcvt.s32.f32 %v1949
    %v2974 = vcvt.s32.f32 %v1950
    %v2975 = vcvt.s32.f32 %v1951
    %v2976 = vcvt.s32.f32 %v1952
    %v2977 = vcvt.s32.f32 %v1953
    %v2978 = vcvt.s32.f32 %v1954
    %v2979 = vcvt.s32.f32 %v1955
    %v2980 = vcvt.s32.f32 %v1956
    %v2981 = vcvt.s32.f32 %v1957
    %v2982 = vcvt.s32.f32 %v1958
    %v2983 = vcvt.s32.f32 %v1959
    %v2984 = vcvt.s32.f32 %v1960
    %v2985 = vcvt.s32.f32 %v1961
    %v2986 = vcvt.s32.f32 %v1962
    %v2987 = vcvt.s32.f32 %v1963
    %v2988 = vcvt.s32.f32 %v1964
    %v2989 = vcvt.s32.f32 %v1965
    %v2990 = vcvt.s32.f32 %v1966
    %v2991 = vcvt.s32.f32 %v1967
    %v2992 = vcvt.s32.f32 %v1968
    %v2993 = vcvt.s32.f32 %v1969
    %v2994 = vcvt.s32.f32 %v1970
    %v2995 = vcvt.s32.f32 %v1971
    %v2996 = vcvt.s32.f32 %v1972
    %v2997 = vcvt.s32.f32 %v1973
    %v2998 = vcvt.s32.f32 %v1974
    %v2999 = vcvt.s32.f32 %v1975
    %v3000 = vcvt.s32.f32 %v1976
    %v3001 = vcvt.s32.f32 %v1977
    %v3002 = vcvt.s32.f32 %v1978
    %v3003 = vcvt.s32.f32 %v1979
    %v3004 = vcvt.s32.f32 %v1980
    %v3005 = vcvt.s32.f32 %v1981
    %v3006 = vcvt.s32.f32 %v1982
    %v3007 = vcvt.s32.f32 %v1983
    %v3008 = vcvt.s32.f32 %v1984
    %v3009 = vcvt.s32.f32 %v1985
    %v3010 = vcvt.s32.f32 %v1986
    %v3011 = vcvt.s32.f32 %v1987
    %v3012 = vcvt.s32.f32 %v1988
    %v3013 = vcvt.s32.f32 %v1989
    %v3014 = vcvt.s32.f32 %v1990
    %v3015 = vpack.c.bf16 %v1999, %v1991
    %v3016 = vpack.c.bf16 %v2000, %v1992
    %v3017 = vpack.c.bf16 %v2001, %v1993
    %v3018 = vpack.c.bf16 %v2002, %v1994
    %v3019 = vpack.c.bf16 %v2003, %v1995
    %v3020 = vpack.c.bf16 %v2004, %v1996
    %v3021 = vpack.c.bf16 %v2005, %v1997
    %v3022 = vpack.c.bf16 %v2006, %v1998
    %v3023 = vpack.c.bf16 %v2015, %v2007
    %v3024 = vpack.c.bf16 %v2016, %v2008
    %v3025 = vpack.c.bf16 %v2017, %v2009
    %v3026 = vpack.c.bf16 %v2018, %v2010
    %v3027 = vpack.c.bf16 %v2019, %v2011
    %v3028 = vpack.c.bf16 %v2020, %v2012
    %v3029 = vpack.c.bf16 %v2021, %v2013
    %v3030 = vpack.c.bf16 %v2022, %v2014
    %v3031 = vpack.c.bf16 %v2031, %v2023
    %v3032 = vpack.c.bf16 %v2032, %v2024
    %v3033 = vpack.c.bf16 %v2033, %v2025
    %v3034 = vpack.c.bf16 %v2034, %v2026
    %v3035 = vpack.c.bf16 %v2035, %v2027
    %v3036 = vpack.c.bf16 %v2036, %v2028
    %v3037 = vpack.c.bf16 %v2037, %v2029
    %v3038 = vpack.c.bf16 %v2038, %v2030
    %v3039 = vpack.c.bf16 %v2047, %v2039
    %v3040 = vpack.c.bf16 %v2048, %v2040
    %v3041 = vpack.c.bf16 %v2049, %v2041
    %v3042 = vpack.c.bf16 %v2050, %v2042
    %v3043 = vpack.c.bf16 %v2051, %v2043
    %v3044 = vpack.c.bf16 %v2052, %v2044
    %v3045 = vpack.c.bf16 %v2053, %v2045
    %v3046 = vpack.c.bf16 %v2054, %v2046
    %v3047 = vpack.c.bf16 %v2063, %v2055
    %v3048 = vpack.c.bf16 %v2064, %v2056
    %v3049 = vpack.c.bf16 %v2065, %v2057
    %v3050 = vpack.c.bf16 %v2066, %v2058
    %v3051 = vpack.c.bf16 %v2067, %v2059
    %v3052 = vpack.c.bf16 %v2068, %v2060
    %v3053 = vpack.c.bf16 %v2069, %v2061
    %v3054 = vpack.c.bf16 %v2070, %v2062
    %v3055 = vpack.c.bf16 %v2079, %v2071
    %v3056 = vpack.c.bf16 %v2080, %v2072
    %v3057 = vpack.c.bf16 %v2081, %v2073
    %v3058 = vpack.c.bf16 %v2082, %v2074
    %v3059 = vpack.c.bf16 %v2083, %v2075
    %v3060 = vpack.c.bf16 %v2084, %v2076
    %v3061 = vpack.c.bf16 %v2085, %v2077
    %v3062 = vpack.c.bf16 %v2086, %v2078
    %v3063 = vpack.c.bf16 %v2095, %v2087
    %v3064 = vpack.c.bf16 %v2096, %v2088
    %v3065 = vpack.c.bf16 %v2097, %v2089
    %v3066 = vpack.c.bf16 %v2098, %v2090
    %v3067 = vpack.c.bf16 %v2099, %v2091
    %v3068 = vpack.c.bf16 %v2100, %v2092
    %v3069 = vpack.c.bf16 %v2101, %v2093
    %v3070 = vpack.c.bf16 %v2102, %v2094
    %v3071 = vpack.c.bf16 %v2111, %v2103
    %v3072 = vpack.c.bf16 %v2112, %v2104
    %v3073 = vpack.c.bf16 %v2113, %v2105
    %v3074 = vpack.c.bf16 %v2114, %v2106
    %v3075 = vpack.c.bf16 %v2115, %v2107
    %v3076 = vpack.c.bf16 %v2116, %v2108
    %v3077 = vpack.c.bf16 %v2117, %v2109
    %v3078 = vpack.c.bf16 %v2118, %v2110
    %v3079 = vpack.c.bf16 %v2127, %v2119
    %v3080 = vpack.c.bf16 %v2128, %v2120
    %v3081 = vpack.c.bf16 %v2129, %v2121
    %v3082 = vpack.c.bf16 %v2130, %v2122
    %v3083 = vpack.c.bf16 %v2131, %v2123
    %v3084 = vpack.c.bf16 %v2132, %v2124
    %v3085 = vpack.c.bf16 %v2133, %v2125
    %v3086 = vpack.c.bf16 %v2134, %v2126
    %v3087 = vpack.c.bf16 %v2143, %v2135
    %v3088 = vpack.c.bf16 %v2144, %v2136
    %v3089 = vpack.c.bf16 %v2145, %v2137
    %v3090 = vpack.c.bf16 %v2146, %v2138
    %v3091 = vpack.c.bf16 %v2147, %v2139
    %v3092 = vpack.c.bf16 %v2148, %v2140
    %v3093 = vpack.c.bf16 %v2149, %v2141
    %v3094 = vpack.c.bf16 %v2150, %v2142
    %v3095 = vpack.c.bf16 %v2159, %v2151
    %v3096 = vpack.c.bf16 %v2160, %v2152
    %v3097 = vpack.c.bf16 %v2161, %v2153
    %v3098 = vpack.c.bf16 %v2162, %v2154
    %v3099 = vpack.c.bf16 %v2163, %v2155
    %v3100 = vpack.c.bf16 %v2164, %v2156
    %v3101 = vpack.c.bf16 %v2165, %v2157
    %v3102 = vpack.c.bf16 %v2166, %v2158
    %v3103 = vpack.c.bf16 %v2175, %v2167
    %v3104 = vpack.c.bf16 %v2176, %v2168
    %v3105 = vpack.c.bf16 %v2177, %v2169
    %v3106 = vpack.c.bf16 %v2178, %v2170
    %v3107 = vpack.c.bf16 %v2179, %v2171
    %v3108 = vpack.c.bf16 %v2180, %v2172
    %v3109 = vpack.c.bf16 %v2181, %v2173
    %v3110 = vpack.c.bf16 %v2182, %v2174
    %v3111 = vpack.c.bf16 %v2191, %v2183
    %v3112 = vpack.c.bf16 %v2192, %v2184
    %v3113 = vpack.c.bf16 %v2193, %v2185
    %v3114 = vpack.c.bf16 %v2194, %v2186
    %v3115 = vpack.c.bf16 %v2195, %v2187
    %v3116 = vpack.c.bf16 %v2196, %v2188
    %v3117 = vpack.c.bf16 %v2197, %v2189
    %v3118 = vpack.c.bf16 %v2198, %v2190
    %v3119 = vpack.c.bf16 %v2207, %v2199
    %v3120 = vpack.c.bf16 %v2208, %v2200
    %v3121 = vpack.c.bf16 %v2209, %v2201
    %v3122 = vpack.c.bf16 %v2210, %v2202
    %v3123 = vpack.c.bf16 %v2211, %v2203
    %v3124 = vpack.c.bf16 %v2212, %v2204
    %v3125 = vpack.c.bf16 %v2213, %v2205
    %v3126 = vpack.c.bf16 %v2214, %v2206
    %v3127 = vpack.c.bf16 %v2223, %v2215
    %v3128 = vpack.c.bf16 %v2224, %v2216
    %v3129 = vpack.c.bf16 %v2225, %v2217
    %v3130 = vpack.c.bf16 %v2226, %v2218
    %v3131 = vpack.c.bf16 %v2227, %v2219
    %v3132 = vpack.c.bf16 %v2228, %v2220
    %v3133 = vpack.c.bf16 %v2229, %v2221
    %v3134 = vpack.c.bf16 %v2230, %v2222
    %v3135 = vpack.c.bf16 %v2239, %v2231
    %v3136 = vpack.c.bf16 %v2240, %v2232
    %v3137 = vpack.c.bf16 %v2241, %v2233
    %v3138 = vpack.c.bf16 %v2242, %v2234
    %v3139 = vpack.c.bf16 %v2243, %v2235
    %v3140 = vpack.c.bf16 %v2244, %v2236
    %v3141 = vpack.c.bf16 %v2245, %v2237
    %v3142 = vpack.c.bf16 %v2246, %v2238
    %v3143 = vpack.c.bf16 %v2255, %v2247
    %v3144 = vpack.c.bf16 %v2256, %v2248
    %v3145 = vpack.c.bf16 %v2257, %v2249
    %v3146 = vpack.c.bf16 %v2258, %v2250
    %v3147 = vpack.c.bf16 %v2259, %v2251
    %v3148 = vpack.c.bf16 %v2260, %v2252
    %v3149 = vpack.c.bf16 %v2261, %v2253
    %v3150 = vpack.c.bf16 %v2262, %v2254
    %v3151 = vpack.c.bf16 %v2271, %v2263
    %v3152 = vpack.c.bf16 %v2272, %v2264
    %v3153 = vpack.c.bf16 %v2273, %v2265
    %v3154 = vpack.c.bf16 %v2274, %v2266
    %v3155 = vpack.c.bf16 %v2275, %v2267
    %v3156 = vpack.c.bf16 %v2276, %v2268
    %v3157 = vpack.c.bf16 %v2277, %v2269
    %v3158 = vpack.c.bf16 %v2278, %v2270
    %v3159 = vpack.c.bf16 %v2287, %v2279
    %v3160 = vpack.c.bf16 %v2288, %v2280
    %v3161 = vpack.c.bf16 %v2289, %v2281
    %v3162 = vpack.c.bf16 %v2290, %v2282
    %v3163 = vpack.c.bf16 %v2291, %v2283
    %v3164 = vpack.c.bf16 %v2292, %v2284
    %v3165 = vpack.c.bf16 %v2293, %v2285
    %v3166 = vpack.c.bf16 %v2294, %v2286
    %v3167 = vpack.c.bf16 %v2303, %v2295
    %v3168 = vpack.c.bf16 %v2304, %v2296
    %v3169 = vpack.c.bf16 %v2305, %v2297
    %v3170 = vpack.c.bf16 %v2306, %v2298
    %v3171 = vpack.c.bf16 %v2307, %v2299
    %v3172 = vpack.c.bf16 %v2308, %v2300
    %v3173 = vpack.c.bf16 %v2309, %v2301
    %v3174 = vpack.c.bf16 %v2310, %v2302
    %v3175 = vpack.c.bf16 %v2319, %v2311
    %v3176 = vpack.c.bf16 %v2320, %v2312
    %v3177 = vpack.c.bf16 %v2321, %v2313
    %v3178 = vpack.c.bf16 %v2322, %v2314
    %v3179 = vpack.c.bf16 %v2323, %v2315
    %v3180 = vpack.c.bf16 %v2324, %v2316
    %v3181 = vpack.c.bf16 %v2325, %v2317
    %v3182 = vpack.c.bf16 %v2326, %v2318
    %v3183 = vpack.c.bf16 %v2335, %v2327
    %v3184 = vpack.c.bf16 %v2336, %v2328
    %v3185 = vpack.c.bf16 %v2337, %v2329
    %v3186 = vpack.c.bf16 %v2338, %v2330
    %v3187 = vpack.c.bf16 %v2339, %v2331
    %v3188 = vpack.c.bf16 %v2340, %v2332
    %v3189 = vpack.c.bf16 %v2341, %v2333
    %v3190 = vpack.c.bf16 %v2342, %v2334
    %v3191 = vpack.c.bf16 %v2351, %v2343
    %v3192 = vpack.c.bf16 %v2352, %v2344
    %v3193 = vpack.c.bf16 %v2353, %v2345
    %v3194 = vpack.c.bf16 %v2354, %v2346
    %v3195 = vpack.c.bf16 %v2355, %v2347
    %v3196 = vpack.c.bf16 %v2356, %v2348
    %v3197 = vpack.c.bf16 %v2357, %v2349
    %v3198 = vpack.c.bf16 %v2358, %v2350
    %v3199 = vpack.c.bf16 %v2367, %v2359
    %v3200 = vpack.c.bf16 %v2368, %v2360
    %v3201 = vpack.c.bf16 %v2369, %v2361
    %v3202 = vpack.c.bf16 %v2370, %v2362
    %v3203 = vpack.c.bf16 %v2371, %v2363
    %v3204 = vpack.c.bf16 %v2372, %v2364
    %v3205 = vpack.c.bf16 %v2373, %v2365
    %v3206 = vpack.c.bf16 %v2374, %v2366
    %v3207 = vpack.c.bf16 %v2383, %v2375
    %v3208 = vpack.c.bf16 %v2384, %v2376
    %v3209 = vpack.c.bf16 %v2385, %v2377
    %v3210 = vpack.c.bf16 %v2386, %v2378
    %v3211 = vpack.c.bf16 %v2387, %v2379
    %v3212 = vpack.c.bf16 %v2388, %v2380
    %v3213 = vpack.c.bf16 %v2389, %v2381
    %v3214 = vpack.c.bf16 %v2390, %v2382
    %v3215 = vpack.c.bf16 %v2399, %v2391
    %v3216 = vpack.c.bf16 %v2400, %v2392
    %v3217 = vpack.c.bf16 %v2401, %v2393
    %v3218 = vpack.c.bf16 %v2402, %v2394
    %v3219 = vpack.c.bf16 %v2403, %v2395
    %v3220 = vpack.c.bf16 %v2404, %v2396
    %v3221 = vpack.c.bf16 %v2405, %v2397
    %v3222 = vpack.c.bf16 %v2406, %v2398
    %v3223 = vpack.c.bf16 %v2415, %v2407
    %v3224 = vpack.c.bf16 %v2416, %v2408
    %v3225 = vpack.c.bf16 %v2417, %v2409
    %v3226 = vpack.c.bf16 %v2418, %v2410
    %v3227 = vpack.c.bf16 %v2419, %v2411
    %v3228 = vpack.c.bf16 %v2420, %v2412
    %v3229 = vpack.c.bf16 %v2421, %v2413
    %v3230 = vpack.c.bf16 %v2422, %v2414
    %v3231 = vpack.c.bf16 %v2431, %v2423
    %v3232 = vpack.c.bf16 %v2432, %v2424
    %v3233 = vpack.c.bf16 %v2433, %v2425
    %v3234 = vpack.c.bf16 %v2434, %v2426
    %v3235 = vpack.c.bf16 %v2435, %v2427
    %v3236 = vpack.c.bf16 %v2436, %v2428
    %v3237 = vpack.c.bf16 %v2437, %v2429
    %v3238 = vpack.c.bf16 %v2438, %v2430
    %v3239 = vpack.c.bf16 %v2447, %v2439
    %v3240 = vpack.c.bf16 %v2448, %v2440
    %v3241 = vpack.c.bf16 %v2449, %v2441
    %v3242 = vpack.c.bf16 %v2450, %v2442
    %v3243 = vpack.c.bf16 %v2451, %v2443
    %v3244 = vpack.c.bf16 %v2452, %v2444
    %v3245 = vpack.c.bf16 %v2453, %v2445
    %v3246 = vpack.c.bf16 %v2454, %v2446
    %v3247 = vpack.c.bf16 %v2463, %v2455
    %v3248 = vpack.c.bf16 %v2464, %v2456
    %v3249 = vpack.c.bf16 %v2465, %v2457
    %v3250 = vpack.c.bf16 %v2466, %v2458
    %v3251 = vpack.c.bf16 %v2467, %v2459
    %v3252 = vpack.c.bf16 %v2468, %v2460
    %v3253 = vpack.c.bf16 %v2469, %v2461
    %v3254 = vpack.c.bf16 %v2470, %v2462
    %v3255 = vpack.c.bf16 %v2479, %v2471
    %v3256 = vpack.c.bf16 %v2480, %v2472
    %v3257 = vpack.c.bf16 %v2481, %v2473
    %v3258 = vpack.c.bf16 %v2482, %v2474
    %v3259 = vpack.c.bf16 %v2483, %v2475
    %v3260 = vpack.c.bf16 %v2484, %v2476
    %v3261 = vpack.c.bf16 %v2485, %v2477
    %v3262 = vpack.c.bf16 %v2486, %v2478
    %v3263 = vpack.c.bf16 %v2495, %v2487
    %v3264 = vpack.c.bf16 %v2496, %v2488
    %v3265 = vpack.c.bf16 %v2497, %v2489
    %v3266 = vpack.c.bf16 %v2498, %v2490
    %v3267 = vpack.c.bf16 %v2499, %v2491
    %v3268 = vpack.c.bf16 %v2500, %v2492
    %v3269 = vpack.c.bf16 %v2501, %v2493
    %v3270 = vpack.c.bf16 %v2502, %v2494
    %v3271 = vpack.c.bf16 %v2511, %v2503
    %v3272 = vpack.c.bf16 %v2512, %v2504
    %v3273 = vpack.c.bf16 %v2513, %v2505
    %v3274 = vpack.c.bf16 %v2514, %v2506
    %v3275 = vpack.c.bf16 %v2515, %v2507
    %v3276 = vpack.c.bf16 %v2516, %v2508
    %v3277 = vpack.c.bf16 %v2517, %v2509
    %v3278 = vpack.c.bf16 %v2518, %v2510
    %v3279 = vpack.c.bf16 %v2527, %v2519
    %v3280 = vpack.c.bf16 %v2528, %v2520
    %v3281 = vpack.c.bf16 %v2529, %v2521
    %v3282 = vpack.c.bf16 %v2530, %v2522
    %v3283 = vpack.c.bf16 %v2531, %v2523
    %v3284 = vpack.c.bf16 %v2532, %v2524
    %v3285 = vpack.c.bf16 %v2533, %v2525
    %v3286 = vpack.c.bf16 %v2534, %v2526
    %v3287 = vpack.c.bf16 %v2543, %v2535
    %v3288 = vpack.c.bf16 %v2544, %v2536
    %v3289 = vpack.c.bf16 %v2545, %v2537
    %v3290 = vpack.c.bf16 %v2546, %v2538
    %v3291 = vpack.c.bf16 %v2547, %v2539
    %v3292 = vpack.c.bf16 %v2548, %v2540
    %v3293 = vpack.c.bf16 %v2549, %v2541
    %v3294 = vpack.c.bf16 %v2550, %v2542
    %v3295 = vpack.c.bf16 %v2559, %v2551
    %v3296 = vpack.c.bf16 %v2560, %v2552
    %v3297 = vpack.c.bf16 %v2561, %v2553
    %v3298 = vpack.c.bf16 %v2562, %v2554
    %v3299 = vpack.c.bf16 %v2563, %v2555
    %v3300 = vpack.c.bf16 %v2564, %v2556
    %v3301 = vpack.c.bf16 %v2565, %v2557
    %v3302 = vpack.c.bf16 %v2566, %v2558
    %v3303 = vpack.c.bf16 %v2575, %v2567
    %v3304 = vpack.c.bf16 %v2576, %v2568
    %v3305 = vpack.c.bf16 %v2577, %v2569
    %v3306 = vpack.c.bf16 %v2578, %v2570
    %v3307 = vpack.c.bf16 %v2579, %v2571
    %v3308 = vpack.c.bf16 %v2580, %v2572
    %v3309 = vpack.c.bf16 %v2581, %v2573
    %v3310 = vpack.c.bf16 %v2582, %v2574
    %v3311 = vpack.c.bf16 %v2591, %v2583
    %v3312 = vpack.c.bf16 %v2592, %v2584
    %v3313 = vpack.c.bf16 %v2593, %v2585
    %v3314 = vpack.c.bf16 %v2594, %v2586
    %v3315 = vpack.c.bf16 %v2595, %v2587
    %v3316 = vpack.c.bf16 %v2596, %v2588
    %v3317 = vpack.c.bf16 %v2597, %v2589
    %v3318 = vpack.c.bf16 %v2598, %v2590
    %v3319 = vpack.c.bf16 %v2607, %v2599
    %v3320 = vpack.c.bf16 %v2608, %v2600
    %v3321 = vpack.c.bf16 %v2609, %v2601
    %v3322 = vpack.c.bf16 %v2610, %v2602
    %v3323 = vpack.c.bf16 %v2611, %v2603
    %v3324 = vpack.c.bf16 %v2612, %v2604
    %v3325 = vpack.c.bf16 %v2613, %v2605
    %v3326 = vpack.c.bf16 %v2614, %v2606
    %v3327 = vpack.c.bf16 %v2623, %v2615
    %v3328 = vpack.c.bf16 %v2624, %v2616
    %v3329 = vpack.c.bf16 %v2625, %v2617
    %v3330 = vpack.c.bf16 %v2626, %v2618
    %v3331 = vpack.c.bf16 %v2627, %v2619
    %v3332 = vpack.c.bf16 %v2628, %v2620
    %v3333 = vpack.c.bf16 %v2629, %v2621
    %v3334 = vpack.c.bf16 %v2630, %v2622
    %v3335 = vpack.c.bf16 %v2639, %v2631
    %v3336 = vpack.c.bf16 %v2640, %v2632
    %v3337 = vpack.c.bf16 %v2641, %v2633
    %v3338 = vpack.c.bf16 %v2642, %v2634
    %v3339 = vpack.c.bf16 %v2643, %v2635
    %v3340 = vpack.c.bf16 %v2644, %v2636
    %v3341 = vpack.c.bf16 %v2645, %v2637
    %v3342 = vpack.c.bf16 %v2646, %v2638
    %v3343 = vpack.c.bf16 %v2655, %v2647
    %v3344 = vpack.c.bf16 %v2656, %v2648
    %v3345 = vpack.c.bf16 %v2657, %v2649
    %v3346 = vpack.c.bf16 %v2658, %v2650
    %v3347 = vpack.c.bf16 %v2659, %v2651
    %v3348 = vpack.c.bf16 %v2660, %v2652
    %v3349 = vpack.c.bf16 %v2661, %v2653
    %v3350 = vpack.c.bf16 %v2662, %v2654
    %v3351 = vpack.c.bf16 %v2671, %v2663
    %v3352 = vpack.c.bf16 %v2672, %v2664
    %v3353 = vpack.c.bf16 %v2673, %v2665
    %v3354 = vpack.c.bf16 %v2674, %v2666
    %v3355 = vpack.c.bf16 %v2675, %v2667
    %v3356 = vpack.c.bf16 %v2676, %v2668
    %v3357 = vpack.c.bf16 %v2677, %v2669
    %v3358 = vpack.c.bf16 %v2678, %v2670
    %v3359 = vpack.c.bf16 %v2687, %v2679
    %v3360 = vpack.c.bf16 %v2688, %v2680
    %v3361 = vpack.c.bf16 %v2689, %v2681
    %v3362 = vpack.c.bf16 %v2690, %v2682
    %v3363 = vpack.c.bf16 %v2691, %v2683
    %v3364 = vpack.c.bf16 %v2692, %v2684
    %v3365 = vpack.c.bf16 %v2693, %v2685
    %v3366 = vpack.c.bf16 %v2694, %v2686
    %v3367 = vpack.c.bf16 %v2703, %v2695
    %v3368 = vpack.c.bf16 %v2704, %v2696
    %v3369 = vpack.c.bf16 %v2705, %v2697
    %v3370 = vpack.c.bf16 %v2706, %v2698
    %v3371 = vpack.c.bf16 %v2707, %v2699
    %v3372 = vpack.c.bf16 %v2708, %v2700
    %v3373 = vpack.c.bf16 %v2709, %v2701
    %v3374 = vpack.c.bf16 %v2710, %v2702
    %v3375 = vpack.c.bf16 %v2719, %v2711
    %v3376 = vpack.c.bf16 %v2720, %v2712
    %v3377 = vpack.c.bf16 %v2721, %v2713
    %v3378 = vpack.c.bf16 %v2722, %v2714
    %v3379 = vpack.c.bf16 %v2723, %v2715
    %v3380 = vpack.c.bf16 %v2724, %v2716
    %v3381 = vpack.c.bf16 %v2725, %v2717
    %v3382 = vpack.c.bf16 %v2726, %v2718
    %v3383 = vpack.c.bf16 %v2735, %v2727
    %v3384 = vpack.c.bf16 %v2736, %v2728
    %v3385 = vpack.c.bf16 %v2737, %v2729
    %v3386 = vpack.c.bf16 %v2738, %v2730
    %v3387 = vpack.c.bf16 %v2739, %v2731
    %v3388 = vpack.c.bf16 %v2740, %v2732
    %v3389 = vpack.c.bf16 %v2741, %v2733
    %v3390 = vpack.c.bf16 %v2742, %v2734
    %v3391 = vpack.c.bf16 %v2751, %v2743
    %v3392 = vpack.c.bf16 %v2752, %v2744
    %v3393 = vpack.c.bf16 %v2753, %v2745
    %v3394 = vpack.c.bf16 %v2754, %v2746
    %v3395 = vpack.c.bf16 %v2755, %v2747
    %v3396 = vpack.c.bf16 %v2756, %v2748
    %v3397 = vpack.c.bf16 %v2757, %v2749
    %v3398 = vpack.c.bf16 %v2758, %v2750
    %v3399 = vpack.c.bf16 %v2767, %v2759
    %v3400 = vpack.c.bf16 %v2768, %v2760
    %v3401 = vpack.c.bf16 %v2769, %v2761
    %v3402 = vpack.c.bf16 %v2770, %v2762
    %v3403 = vpack.c.bf16 %v2771, %v2763
    %v3404 = vpack.c.bf16 %v2772, %v2764
    %v3405 = vpack.c.bf16 %v2773, %v2765
    %v3406 = vpack.c.bf16 %v2774, %v2766
    %v3407 = vpack.c.bf16 %v2783, %v2775
    %v3408 = vpack.c.bf16 %v2784, %v2776
    %v3409 = vpack.c.bf16 %v2785, %v2777
    %v3410 = vpack.c.bf16 %v2786, %v2778
    %v3411 = vpack.c.bf16 %v2787, %v2779
    %v3412 = vpack.c.bf16 %v2788, %v2780
    %v3413 = vpack.c.bf16 %v2789, %v2781
    %v3414 = vpack.c.bf16 %v2790, %v2782
    %v3415 = vpack.c.bf16 %v2799, %v2791
    %v3416 = vpack.c.bf16 %v2800, %v2792
    %v3417 = vpack.c.bf16 %v2801, %v2793
    %v3418 = vpack.c.bf16 %v2802, %v2794
    %v3419 = vpack.c.bf16 %v2803, %v2795
    %v3420 = vpack.c.bf16 %v2804, %v2796
    %v3421 = vpack.c.bf16 %v2805, %v2797
    %v3422 = vpack.c.bf16 %v2806, %v2798
    %v3423 = vpack.c.bf16 %v2815, %v2807
    %v3424 = vpack.c.bf16 %v2816, %v2808
    %v3425 = vpack.c.bf16 %v2817, %v2809
    %v3426 = vpack.c.bf16 %v2818, %v2810
    %v3427 = vpack.c.bf16 %v2819, %v2811
    %v3428 = vpack.c.bf16 %v2820, %v2812
    %v3429 = vpack.c.bf16 %v2821, %v2813
    %v3430 = vpack.c.bf16 %v2822, %v2814
    %v3431 = vpack.c.bf16 %v2831, %v2823
    %v3432 = vpack.c.bf16 %v2832, %v2824
    %v3433 = vpack.c.bf16 %v2833, %v2825
    %v3434 = vpack.c.bf16 %v2834, %v2826
    %v3435 = vpack.c.bf16 %v2835, %v2827
    %v3436 = vpack.c.bf16 %v2836, %v2828
    %v3437 = vpack.c.bf16 %v2837, %v2829
    %v3438 = vpack.c.bf16 %v2838, %v2830
    %v3439 = vpack.c.bf16 %v2847, %v2839
    %v3440 = vpack.c.bf16 %v2848, %v2840
    %v3441 = vpack.c.bf16 %v2849, %v2841
    %v3442 = vpack.c.bf16 %v2850, %v2842
    %v3443 = vpack.c.bf16 %v2851, %v2843
    %v3444 = vpack.c.bf16 %v2852, %v2844
    %v3445 = vpack.c.bf16 %v2853, %v2845
    %v3446 = vpack.c.bf16 %v2854, %v2846
    %v3447 = vpack.c.bf16 %v2863, %v2855
    %v3448 = vpack.c.bf16 %v2864, %v2856
    %v3449 = vpack.c.bf16 %v2865, %v2857
    %v3450 = vpack.c.bf16 %v2866, %v2858
    %v3451 = vpack.c.bf16 %v2867, %v2859
    %v3452 = vpack.c.bf16 %v2868, %v2860
    %v3453 = vpack.c.bf16 %v2869, %v2861
    %v3454 = vpack.c.bf16 %v2870, %v2862
    %v3455 = vpack.c.bf16 %v2879, %v2871
    %v3456 = vpack.c.bf16 %v2880, %v2872
    %v3457 = vpack.c.bf16 %v2881, %v2873
    %v3458 = vpack.c.bf16 %v2882, %v2874
    %v3459 = vpack.c.bf16 %v2883, %v2875
    %v3460 = vpack.c.bf16 %v2884, %v2876
    %v3461 = vpack.c.bf16 %v2885, %v2877
    %v3462 = vpack.c.bf16 %v2886, %v2878
    %v3463 = vpack.c.bf16 %v2895, %v2887
    %v3464 = vpack.c.bf16 %v2896, %v2888
    %v3465 = vpack.c.bf16 %v2897, %v2889
    %v3466 = vpack.c.bf16 %v2898, %v2890
    %v3467 = vpack.c.bf16 %v2899, %v2891
    %v3468 = vpack.c.bf16 %v2900, %v2892
    %v3469 = vpack.c.bf16 %v2901, %v2893
    %v3470 = vpack.c.bf16 %v2902, %v2894
    %v3471 = vpack.c.bf16 %v2911, %v2903
    %v3472 = vpack.c.bf16 %v2912, %v2904
    %v3473 = vpack.c.bf16 %v2913, %v2905
    %v3474 = vpack.c.bf16 %v2914, %v2906
    %v3475 = vpack.c.bf16 %v2915, %v2907
    %v3476 = vpack.c.bf16 %v2916, %v2908
    %v3477 = vpack.c.bf16 %v2917, %v2909
    %v3478 = vpack.c.bf16 %v2918, %v2910
    %v3479 = vpack.c.bf16 %v2927, %v2919
    %v3480 = vpack.c.bf16 %v2928, %v2920
    %v3481 = vpack.c.bf16 %v2929, %v2921
    %v3482 = vpack.c.bf16 %v2930, %v2922
    %v3483 = vpack.c.bf16 %v2931, %v2923
    %v3484 = vpack.c.bf16 %v2932, %v2924
    %v3485 = vpack.c.bf16 %v2933, %v2925
    %v3486 = vpack.c.bf16 %v2934, %v2926
    %v3487 = vpack.c.bf16 %v2943, %v2935
    %v3488 = vpack.c.bf16 %v2944, %v2936
    %v3489 = vpack.c.bf16 %v2945, %v2937
    %v3490 = vpack.c.bf16 %v2946, %v2938
    %v3491 = vpack.c.bf16 %v2947, %v2939
    %v3492 = vpack.c.bf16 %v2948, %v2940
    %v3493 = vpack.c.bf16 %v2949, %v2941
    %v3494 = vpack.c.bf16 %v2950, %v2942
    %v3495 = vpack.c.bf16 %v2959, %v2951
    %v3496 = vpack.c.bf16 %v2960, %v2952
    %v3497 = vpack.c.bf16 %v2961, %v2953
    %v3498 = vpack.c.bf16 %v2962, %v2954
    %v3499 = vpack.c.bf16 %v2963, %v2955
    %v3500 = vpack.c.bf16 %v2964, %v2956
    %v3501 = vpack.c.bf16 %v2965, %v2957
    %v3502 = vpack.c.bf16 %v2966, %v2958
    %v3503 = vpack.c.bf16 %v2975, %v2967
    %v3504 = vpack.c.bf16 %v2976, %v2968
    %v3505 = vpack.c.bf16 %v2977, %v2969
    %v3506 = vpack.c.bf16 %v2978, %v2970
    %v3507 = vpack.c.bf16 %v2979, %v2971
    %v3508 = vpack.c.bf16 %v2980, %v2972
    %v3509 = vpack.c.bf16 %v2981, %v2973
    %v3510 = vpack.c.bf16 %v2982, %v2974
    %v3511 = vpack.c.bf16 %v2991, %v2983
    %v3512 = vpack.c.bf16 %v2992, %v2984
    %v3513 = vpack.c.bf16 %v2993, %v2985
    %v3514 = vpack.c.bf16 %v2994, %v2986
    %v3515 = vpack.c.bf16 %v2995, %v2987
    %v3516 = vpack.c.bf16 %v2996, %v2988
    %v3517 = vpack.c.bf16 %v2997, %v2989
    %v3518 = vpack.c.bf16 %v2998, %v2990
    %v3519 = vpack.c.bf16 %v3007, %v2999
    %v3520 = vpack.c.bf16 %v3008, %v3000
    %v3521 = vpack.c.bf16 %v3009, %v3001
    %v3522 = vpack.c.bf16 %v3010, %v3002
    %v3523 = vpack.c.bf16 %v3011, %v3003
    %v3524 = vpack.c.bf16 %v3012, %v3004
    %v3525 = vpack.c.bf16 %v3013, %v3005
    %v3526 = vpack.c.bf16 %v3014, %v3006
    %3527 = vmatpush.bf16.msra.mxu0 %v3071
    %3528 = vmatpush.bf16.msra.mxu0 %v3063
    %3529 = vmatpush.bf16.msra.mxu0 %v3055
    %3530 = vmatpush.bf16.msra.mxu0 %v3047
    %3531 = vmatpush.bf16.msra.mxu0 %v3039
    %3532 = vmatpush.bf16.msra.mxu0 %v3031
    %3533 = vmatpush.bf16.msra.mxu0 %v3023
    %3534 = vmatpush.bf16.msra.mxu0 %v3015
    %3535 = vmatmul.bf16.gmra.mxu0 %v959
    %v3536 = vpop.f32.mrf.mxu0
    %v3537 = vadd.f32 0.0, %v3536
    %v3538 = vpop.f32.mrf.mxu0
    %3539 = vdwg.mxu0
    %3540 = vmatpush.bf16.msra.mxu0 %v3135
    %3541 = vmatpush.bf16.msra.mxu0 %v3127
    %3542 = vmatpush.bf16.msra.mxu0 %v3119
    %3543 = vmatpush.bf16.msra.mxu0 %v3111
    %3544 = vmatpush.bf16.msra.mxu0 %v3103
    %3545 = vmatpush.bf16.msra.mxu0 %v3095
    %3546 = vmatpush.bf16.msra.mxu0 %v3087
    %3547 = vmatpush.bf16.msra.mxu0 %v3079
    %3548 = vmatmul.bf16.gmra.mxu0 %v960
    %v3549 = vpop.f32.mrf.mxu0
    %v3550 = vadd.f32 %v3537, %v3549
    %v3551 = vpop.f32.mrf.mxu0
    %3552 = vdwg.mxu0
    %3553 = vmatpush.bf16.msra.mxu0 %v3199
    %3554 = vmatpush.bf16.msra.mxu0 %v3191
    %3555 = vmatpush.bf16.msra.mxu0 %v3183
    %3556 = vmatpush.bf16.msra.mxu0 %v3175
    %3557 = vmatpush.bf16.msra.mxu0 %v3167
    %3558 = vmatpush.bf16.msra.mxu0 %v3159
    %3559 = vmatpush.bf16.msra.mxu0 %v3151
    %3560 = vmatpush.bf16.msra.mxu0 %v3143
    %3561 = vmatmul.bf16.gmra.mxu0 %v961
    %v3562 = vpop.f32.mrf.mxu0
    %v3563 = vadd.f32 %v3550, %v3562
    %v3564 = vpop.f32.mrf.mxu0
    %3565 = vdwg.mxu0
    %3566 = vmatpush.bf16.msra.mxu0 %v3263
    %3567 = vmatpush.bf16.msra.mxu0 %v3255
    %3568 = vmatpush.bf16.msra.mxu0 %v3247
    %3569 = vmatpush.bf16.msra.mxu0 %v3239
    %3570 = vmatpush.bf16.msra.mxu0 %v3231
    %3571 = vmatpush.bf16.msra.mxu0 %v3223
    %3572 = vmatpush.bf16.msra.mxu0 %v3215
    %3573 = vmatpush.bf16.msra.mxu0 %v3207
    %3574 = vmatmul.bf16.gmra.mxu0 %v962
    %v3575 = vpop.f32.mrf.mxu0
    %v3576 = vadd.f32 %v3563, %v3575
    %v3577 = vpop.f32.mrf.mxu0
    %3578 = vdwg.mxu0
    %3579 = vmatpush.bf16.msra.mxu0 %v3327
    %3580 = vmatpush.bf16.msra.mxu0 %v3319
    %3581 = vmatpush.bf16.msra.mxu0 %v3311
    %3582 = vmatpush.bf16.msra.mxu0 %v3303
    %3583 = vmatpush.bf16.msra.mxu0 %v3295
    %3584 = vmatpush.bf16.msra.mxu0 %v3287
    %3585 = vmatpush.bf16.msra.mxu0 %v3279
    %3586 = vmatpush.bf16.msra.mxu0 %v3271
    %3587 = vmatmul.bf16.gmra.mxu0 %v963
    %v3588 = vpop.f32.mrf.mxu0
    %v3589 = vadd.f32 %v3576, %v3588
    %v3590 = vpop.f32.mrf.mxu0
    %3591 = vdwg.mxu0
    %3592 = vmatpush.bf16.msra.mxu0 %v3391
    %3593 = vmatpush.bf16.msra.mxu0 %v3383
    %3594 = vmatpush.bf16.msra.mxu0 %v3375
    %3595 = vmatpush.bf16.msra.mxu0 %v3367
    %3596 = vmatpush.bf16.msra.mxu0 %v3359
    %3597 = vmatpush.bf16.msra.mxu0 %v3351
    %3598 = vmatpush.bf16.msra.mxu0 %v3343
    %3599 = vmatpush.bf16.msra.mxu0 %v3335
    %3600 = vmatmul.bf16.gmra.mxu0 %v964
    %v3601 = vpop.f32.mrf.mxu0
    %v3602 = vadd.f32 %v3589, %v3601
    %v3603 = vpop.f32.mrf.mxu0
    %3604 = vdwg.mxu0
    %3605 = vmatpush.bf16.msra.mxu0 %v3455
    %3606 = vmatpush.bf16.msra.mxu0 %v3447
    %3607 = vmatpush.bf16.msra.mxu0 %v3439
    %3608 = vmatpush.bf16.msra.mxu0 %v3431
    %3609 = vmatpush.bf16.msra.mxu0 %v3423
    %3610 = vmatpush.bf16.msra.mxu0 %v3415
    %3611 = vmatpush.bf16.msra.mxu0 %v3407
    %3612 = vmatpush.bf16.msra.mxu0 %v3399
    %3613 = vmatmul.bf16.gmra.mxu0 %v965
    %v3614 = vpop.f32.mrf.mxu0
    %v3615 = vadd.f32 %v3602, %v3614
    %v3616 = vpop.f32.mrf.mxu0
    %3617 = vdwg.mxu0
    %3618 = vmatpush.bf16.msra.mxu0 %v3519
    %3619 = vmatpush.bf16.msra.mxu0 %v3511
    %3620 = vmatpush.bf16.msra.mxu0 %v3503
    %3621 = vmatpush.bf16.msra.mxu0 %v3495
    %3622 = vmatpush.bf16.msra.mxu0 %v3487
    %3623 = vmatpush.bf16.msra.mxu0 %v3479
    %3624 = vmatpush.bf16.msra.mxu0 %v3471
    %3625 = vmatpush.bf16.msra.mxu0 %v3463
    %3626 = vmatmul.bf16.gmra.mxu0 %v966
    %v3627 = vpop.f32.mrf.mxu0
    %v3628 = vadd.f32 %v3615, %v3627
    %v3629 = vpop.f32.mrf.mxu0
    %3630 = vdwg.mxu0
    %3631 = vmatpush.bf16.msra.mxu0 %v3072
    %3632 = vmatpush.bf16.msra.mxu0 %v3064
    %3633 = vmatpush.bf16.msra.mxu0 %v3056
    %3634 = vmatpush.bf16.msra.mxu0 %v3048
    %3635 = vmatpush.bf16.msra.mxu0 %v3040
    %3636 = vmatpush.bf16.msra.mxu0 %v3032
    %3637 = vmatpush.bf16.msra.mxu0 %v3024
    %3638 = vmatpush.bf16.msra.mxu0 %v3016
    %3639 = vmatmul.bf16.gmra.mxu0 %v959
    %v3640 = vpop.f32.mrf.mxu0
    %v3641 = vadd.f32 0.0, %v3640
    %v3642 = vpop.f32.mrf.mxu0
    %3643 = vdwg.mxu0
    %3644 = vmatpush.bf16.msra.mxu0 %v3136
    %3645 = vmatpush.bf16.msra.mxu0 %v3128
    %3646 = vmatpush.bf16.msra.mxu0 %v3120
    %3647 = vmatpush.bf16.msra.mxu0 %v3112
    %3648 = vmatpush.bf16.msra.mxu0 %v3104
    %3649 = vmatpush.bf16.msra.mxu0 %v3096
    %3650 = vmatpush.bf16.msra.mxu0 %v3088
    %3651 = vmatpush.bf16.msra.mxu0 %v3080
    %3652 = vmatmul.bf16.gmra.mxu0 %v960
    %v3653 = vpop.f32.mrf.mxu0
    %v3654 = vadd.f32 %v3641, %v3653
    %v3655 = vpop.f32.mrf.mxu0
    %3656 = vdwg.mxu0
    %3657 = vmatpush.bf16.msra.mxu0 %v3200
    %3658 = vmatpush.bf16.msra.mxu0 %v3192
    %3659 = vmatpush.bf16.msra.mxu0 %v3184
    %3660 = vmatpush.bf16.msra.mxu0 %v3176
    %3661 = vmatpush.bf16.msra.mxu0 %v3168
    %3662 = vmatpush.bf16.msra.mxu0 %v3160
    %3663 = vmatpush.bf16.msra.mxu0 %v3152
    %3664 = vmatpush.bf16.msra.mxu0 %v3144
    %3665 = vmatmul.bf16.gmra.mxu0 %v961
    %v3666 = vpop.f32.mrf.mxu0
    %v3667 = vadd.f32 %v3654, %v3666
    %v3668 = vpop.f32.mrf.mxu0
    %3669 = vdwg.mxu0
    %3670 = vmatpush.bf16.msra.mxu0 %v3264
    %3671 = vmatpush.bf16.msra.mxu0 %v3256
    %3672 = vmatpush.bf16.msra.mxu0 %v3248
    %3673 = vmatpush.bf16.msra.mxu0 %v3240
    %3674 = vmatpush.bf16.msra.mxu0 %v3232
    %3675 = vmatpush.bf16.msra.mxu0 %v3224
    %3676 = vmatpush.bf16.msra.mxu0 %v3216
    %3677 = vmatpush.bf16.msra.mxu0 %v3208
    %3678 = vmatmul.bf16.gmra.mxu0 %v962
    %v3679 = vpop.f32.mrf.mxu0
    %v3680 = vadd.f32 %v3667, %v3679
    %v3681 = vpop.f32.mrf.mxu0
    %3682 = vdwg.mxu0
    %3683 = vmatpush.bf16.msra.mxu0 %v3328
    %3684 = vmatpush.bf16.msra.mxu0 %v3320
    %3685 = vmatpush.bf16.msra.mxu0 %v3312
    %3686 = vmatpush.bf16.msra.mxu0 %v3304
    %3687 = vmatpush.bf16.msra.mxu0 %v3296
    %3688 = vmatpush.bf16.msra.mxu0 %v3288
    %3689 = vmatpush.bf16.msra.mxu0 %v3280
    %3690 = vmatpush.bf16.msra.mxu0 %v3272
    %3691 = vmatmul.bf16.gmra.mxu0 %v963
    %v3692 = vpop.f32.mrf.mxu0
    %v3693 = vadd.f32 %v3680, %v3692
    %v3694 = vpop.f32.mrf.mxu0
    %3695 = vdwg.mxu0
    %3696 = vmatpush.bf16.msra.mxu0 %v3392
    %3697 = vmatpush.bf16.msra.mxu0 %v3384
    %3698 = vmatpush.bf16.msra.mxu0 %v3376
    %3699 = vmatpush.bf16.msra.mxu0 %v3368
    %3700 = vmatpush.bf16.msra.mxu0 %v3360
    %3701 = vmatpush.bf16.msra.mxu0 %v3352
    %3702 = vmatpush.bf16.msra.mxu0 %v3344
    %3703 = vmatpush.bf16.msra.mxu0 %v3336
    %3704 = vmatmul.bf16.gmra.mxu0 %v964
    %v3705 = vpop.f32.mrf.mxu0
    %v3706 = vadd.f32 %v3693, %v3705
    %v3707 = vpop.f32.mrf.mxu0
    %3708 = vdwg.mxu0
    %3709 = vmatpush.bf16.msra.mxu0 %v3456
    %3710 = vmatpush.bf16.msra.mxu0 %v3448
    %3711 = vmatpush.bf16.msra.mxu0 %v3440
    %3712 = vmatpush.bf16.msra.mxu0 %v3432
    %3713 = vmatpush.bf16.msra.mxu0 %v3424
    %3714 = vmatpush.bf16.msra.mxu0 %v3416
    %3715 = vmatpush.bf16.msra.mxu0 %v3408
    %3716 = vmatpush.bf16.msra.mxu0 %v3400
    %3717 = vmatmul.bf16.gmra.mxu0 %v965
    %v3718 = vpop.f32.mrf.mxu0
    %v3719 = vadd.f32 %v3706, %v3718
    %v3720 = vpop.f32.mrf.mxu0
    %3721 = vdwg.mxu0
    %3722 = vmatpush.bf16.msra.mxu0 %v3520
    %3723 = vmatpush.bf16.msra.mxu0 %v3512
    %3724 = vmatpush.bf16.msra.mxu0 %v3504
    %3725 = vmatpush.bf16.msra.mxu0 %v3496
    %3726 = vmatpush.bf16.msra.mxu0 %v3488
    %3727 = vmatpush.bf16.msra.mxu0 %v3480
    %3728 = vmatpush.bf16.msra.mxu0 %v3472
    %3729 = vmatpush.bf16.msra.mxu0 %v3464
    %3730 = vmatmul.bf16.gmra.mxu0 %v966
    %v3731 = vpop.f32.mrf.mxu0
    %v3732 = vadd.f32 %v3719, %v3731
    %v3733 = vpop.f32.mrf.mxu0
    %3734 = vdwg.mxu0
    %3735 = vmatpush.bf16.msra.mxu0 %v3073
    %3736 = vmatpush.bf16.msra.mxu0 %v3065
    %3737 = vmatpush.bf16.msra.mxu0 %v3057
    %3738 = vmatpush.bf16.msra.mxu0 %v3049
    %3739 = vmatpush.bf16.msra.mxu0 %v3041
    %3740 = vmatpush.bf16.msra.mxu0 %v3033
    %3741 = vmatpush.bf16.msra.mxu0 %v3025
    %3742 = vmatpush.bf16.msra.mxu0 %v3017
    %3743 = vmatmul.bf16.gmra.mxu0 %v959
    %v3744 = vpop.f32.mrf.mxu0
    %v3745 = vadd.f32 0.0, %v3744
    %v3746 = vpop.f32.mrf.mxu0
    %3747 = vdwg.mxu0
    %3748 = vmatpush.bf16.msra.mxu0 %v3137
    %3749 = vmatpush.bf16.msra.mxu0 %v3129
    %3750 = vmatpush.bf16.msra.mxu0 %v3121
    %3751 = vmatpush.bf16.msra.mxu0 %v3113
    %3752 = vmatpush.bf16.msra.mxu0 %v3105
    %3753 = vmatpush.bf16.msra.mxu0 %v3097
    %3754 = vmatpush.bf16.msra.mxu0 %v3089
    %3755 = vmatpush.bf16.msra.mxu0 %v3081
    %3756 = vmatmul.bf16.gmra.mxu0 %v960
    %v3757 = vpop.f32.mrf.mxu0
    %v3758 = vadd.f32 %v3745, %v3757
    %v3759 = vpop.f32.mrf.mxu0
    %3760 = vdwg.mxu0
    %3761 = vmatpush.bf16.msra.mxu0 %v3201
    %3762 = vmatpush.bf16.msra.mxu0 %v3193
    %3763 = vmatpush.bf16.msra.mxu0 %v3185
    %3764 = vmatpush.bf16.msra.mxu0 %v3177
    %3765 = vmatpush.bf16.msra.mxu0 %v3169
    %3766 = vmatpush.bf16.msra.mxu0 %v3161
    %3767 = vmatpush.bf16.msra.mxu0 %v3153
    %3768 = vmatpush.bf16.msra.mxu0 %v3145
    %3769 = vmatmul.bf16.gmra.mxu0 %v961
    %v3770 = vpop.f32.mrf.mxu0
    %v3771 = vadd.f32 %v3758, %v3770
    %v3772 = vpop.f32.mrf.mxu0
    %3773 = vdwg.mxu0
    %3774 = vmatpush.bf16.msra.mxu0 %v3265
    %3775 = vmatpush.bf16.msra.mxu0 %v3257
    %3776 = vmatpush.bf16.msra.mxu0 %v3249
    %3777 = vmatpush.bf16.msra.mxu0 %v3241
    %3778 = vmatpush.bf16.msra.mxu0 %v3233
    %3779 = vmatpush.bf16.msra.mxu0 %v3225
    %3780 = vmatpush.bf16.msra.mxu0 %v3217
    %3781 = vmatpush.bf16.msra.mxu0 %v3209
    %3782 = vmatmul.bf16.gmra.mxu0 %v962
    %v3783 = vpop.f32.mrf.mxu0
    %v3784 = vadd.f32 %v3771, %v3783
    %v3785 = vpop.f32.mrf.mxu0
    %3786 = vdwg.mxu0
    %3787 = vmatpush.bf16.msra.mxu0 %v3329
    %3788 = vmatpush.bf16.msra.mxu0 %v3321
    %3789 = vmatpush.bf16.msra.mxu0 %v3313
    %3790 = vmatpush.bf16.msra.mxu0 %v3305
    %3791 = vmatpush.bf16.msra.mxu0 %v3297
    %3792 = vmatpush.bf16.msra.mxu0 %v3289
    %3793 = vmatpush.bf16.msra.mxu0 %v3281
    %3794 = vmatpush.bf16.msra.mxu0 %v3273
    %3795 = vmatmul.bf16.gmra.mxu0 %v963
    %v3796 = vpop.f32.mrf.mxu0
    %v3797 = vadd.f32 %v3784, %v3796
    %v3798 = vpop.f32.mrf.mxu0
    %3799 = vdwg.mxu0
    %3800 = vmatpush.bf16.msra.mxu0 %v3393
    %3801 = vmatpush.bf16.msra.mxu0 %v3385
    %3802 = vmatpush.bf16.msra.mxu0 %v3377
    %3803 = vmatpush.bf16.msra.mxu0 %v3369
    %3804 = vmatpush.bf16.msra.mxu0 %v3361
    %3805 = vmatpush.bf16.msra.mxu0 %v3353
    %3806 = vmatpush.bf16.msra.mxu0 %v3345
    %3807 = vmatpush.bf16.msra.mxu0 %v3337
    %3808 = vmatmul.bf16.gmra.mxu0 %v964
    %v3809 = vpop.f32.mrf.mxu0
    %v3810 = vadd.f32 %v3797, %v3809
    %v3811 = vpop.f32.mrf.mxu0
    %3812 = vdwg.mxu0
    %3813 = vmatpush.bf16.msra.mxu0 %v3457
    %3814 = vmatpush.bf16.msra.mxu0 %v3449
    %3815 = vmatpush.bf16.msra.mxu0 %v3441
    %3816 = vmatpush.bf16.msra.mxu0 %v3433
    %3817 = vmatpush.bf16.msra.mxu0 %v3425
    %3818 = vmatpush.bf16.msra.mxu0 %v3417
    %3819 = vmatpush.bf16.msra.mxu0 %v3409
    %3820 = vmatpush.bf16.msra.mxu0 %v3401
    %3821 = vmatmul.bf16.gmra.mxu0 %v965
    %v3822 = vpop.f32.mrf.mxu0
    %v3823 = vadd.f32 %v3810, %v3822
    %v3824 = vpop.f32.mrf.mxu0
    %3825 = vdwg.mxu0
    %3826 = vmatpush.bf16.msra.mxu0 %v3521
    %3827 = vmatpush.bf16.msra.mxu0 %v3513
    %3828 = vmatpush.bf16.msra.mxu0 %v3505
    %3829 = vmatpush.bf16.msra.mxu0 %v3497
    %3830 = vmatpush.bf16.msra.mxu0 %v3489
    %3831 = vmatpush.bf16.msra.mxu0 %v3481
    %3832 = vmatpush.bf16.msra.mxu0 %v3473
    %3833 = vmatpush.bf16.msra.mxu0 %v3465
    %3834 = vmatmul.bf16.gmra.mxu0 %v966
    %v3835 = vpop.f32.mrf.mxu0
    %v3836 = vadd.f32 %v3823, %v3835
    %v3837 = vpop.f32.mrf.mxu0
    %3838 = vdwg.mxu0
    %3839 = vmatpush.bf16.msra.mxu0 %v3074
    %3840 = vmatpush.bf16.msra.mxu0 %v3066
    %3841 = vmatpush.bf16.msra.mxu0 %v3058
    %3842 = vmatpush.bf16.msra.mxu0 %v3050
    %3843 = vmatpush.bf16.msra.mxu0 %v3042
    %3844 = vmatpush.bf16.msra.mxu0 %v3034
    %3845 = vmatpush.bf16.msra.mxu0 %v3026
    %3846 = vmatpush.bf16.msra.mxu0 %v3018
    %3847 = vmatmul.bf16.gmra.mxu0 %v959
    %v3848 = vpop.f32.mrf.mxu0
    %v3849 = vadd.f32 0.0, %v3848
    %v3850 = vpop.f32.mrf.mxu0
    %3851 = vdwg.mxu0
    %3852 = vmatpush.bf16.msra.mxu0 %v3138
    %3853 = vmatpush.bf16.msra.mxu0 %v3130
    %3854 = vmatpush.bf16.msra.mxu0 %v3122
    %3855 = vmatpush.bf16.msra.mxu0 %v3114
    %3856 = vmatpush.bf16.msra.mxu0 %v3106
    %3857 = vmatpush.bf16.msra.mxu0 %v3098
    %3858 = vmatpush.bf16.msra.mxu0 %v3090
    %3859 = vmatpush.bf16.msra.mxu0 %v3082
    %3860 = vmatmul.bf16.gmra.mxu0 %v960
    %v3861 = vpop.f32.mrf.mxu0
    %v3862 = vadd.f32 %v3849, %v3861
    %v3863 = vpop.f32.mrf.mxu0
    %3864 = vdwg.mxu0
    %3865 = vmatpush.bf16.msra.mxu0 %v3202
    %3866 = vmatpush.bf16.msra.mxu0 %v3194
    %3867 = vmatpush.bf16.msra.mxu0 %v3186
    %3868 = vmatpush.bf16.msra.mxu0 %v3178
    %3869 = vmatpush.bf16.msra.mxu0 %v3170
    %3870 = vmatpush.bf16.msra.mxu0 %v3162
    %3871 = vmatpush.bf16.msra.mxu0 %v3154
    %3872 = vmatpush.bf16.msra.mxu0 %v3146
    %3873 = vmatmul.bf16.gmra.mxu0 %v961
    %v3874 = vpop.f32.mrf.mxu0
    %v3875 = vadd.f32 %v3862, %v3874
    %v3876 = vpop.f32.mrf.mxu0
    %3877 = vdwg.mxu0
    %3878 = vmatpush.bf16.msra.mxu0 %v3266
    %3879 = vmatpush.bf16.msra.mxu0 %v3258
    %3880 = vmatpush.bf16.msra.mxu0 %v3250
    %3881 = vmatpush.bf16.msra.mxu0 %v3242
    %3882 = vmatpush.bf16.msra.mxu0 %v3234
    %3883 = vmatpush.bf16.msra.mxu0 %v3226
    %3884 = vmatpush.bf16.msra.mxu0 %v3218
    %3885 = vmatpush.bf16.msra.mxu0 %v3210
    %3886 = vmatmul.bf16.gmra.mxu0 %v962
    %v3887 = vpop.f32.mrf.mxu0
    %v3888 = vadd.f32 %v3875, %v3887
    %v3889 = vpop.f32.mrf.mxu0
    %3890 = vdwg.mxu0
    %3891 = vmatpush.bf16.msra.mxu0 %v3330
    %3892 = vmatpush.bf16.msra.mxu0 %v3322
    %3893 = vmatpush.bf16.msra.mxu0 %v3314
    %3894 = vmatpush.bf16.msra.mxu0 %v3306
    %3895 = vmatpush.bf16.msra.mxu0 %v3298
    %3896 = vmatpush.bf16.msra.mxu0 %v3290
    %3897 = vmatpush.bf16.msra.mxu0 %v3282
    %3898 = vmatpush.bf16.msra.mxu0 %v3274
    %3899 = vmatmul.bf16.gmra.mxu0 %v963
    %v3900 = vpop.f32.mrf.mxu0
    %v3901 = vadd.f32 %v3888, %v3900
    %v3902 = vpop.f32.mrf.mxu0
    %3903 = vdwg.mxu0
    %3904 = vmatpush.bf16.msra.mxu0 %v3394
    %3905 = vmatpush.bf16.msra.mxu0 %v3386
    %3906 = vmatpush.bf16.msra.mxu0 %v3378
    %3907 = vmatpush.bf16.msra.mxu0 %v3370
    %3908 = vmatpush.bf16.msra.mxu0 %v3362
    %3909 = vmatpush.bf16.msra.mxu0 %v3354
    %3910 = vmatpush.bf16.msra.mxu0 %v3346
    %3911 = vmatpush.bf16.msra.mxu0 %v3338
    %3912 = vmatmul.bf16.gmra.mxu0 %v964
    %v3913 = vpop.f32.mrf.mxu0
    %v3914 = vadd.f32 %v3901, %v3913
    %v3915 = vpop.f32.mrf.mxu0
    %3916 = vdwg.mxu0
    %3917 = vmatpush.bf16.msra.mxu0 %v3458
    %3918 = vmatpush.bf16.msra.mxu0 %v3450
    %3919 = vmatpush.bf16.msra.mxu0 %v3442
    %3920 = vmatpush.bf16.msra.mxu0 %v3434
    %3921 = vmatpush.bf16.msra.mxu0 %v3426
    %3922 = vmatpush.bf16.msra.mxu0 %v3418
    %3923 = vmatpush.bf16.msra.mxu0 %v3410
    %3924 = vmatpush.bf16.msra.mxu0 %v3402
    %3925 = vmatmul.bf16.gmra.mxu0 %v965
    %v3926 = vpop.f32.mrf.mxu0
    %v3927 = vadd.f32 %v3914, %v3926
    %v3928 = vpop.f32.mrf.mxu0
    %3929 = vdwg.mxu0
    %3930 = vmatpush.bf16.msra.mxu0 %v3522
    %3931 = vmatpush.bf16.msra.mxu0 %v3514
    %3932 = vmatpush.bf16.msra.mxu0 %v3506
    %3933 = vmatpush.bf16.msra.mxu0 %v3498
    %3934 = vmatpush.bf16.msra.mxu0 %v3490
    %3935 = vmatpush.bf16.msra.mxu0 %v3482
    %3936 = vmatpush.bf16.msra.mxu0 %v3474
    %3937 = vmatpush.bf16.msra.mxu0 %v3466
    %3938 = vmatmul.bf16.gmra.mxu0 %v966
    %v3939 = vpop.f32.mrf.mxu0
    %v3940 = vadd.f32 %v3927, %v3939
    %v3941 = vpop.f32.mrf.mxu0
    %3942 = vdwg.mxu0
    %3943 = vmatpush.bf16.msra.mxu0 %v3075
    %3944 = vmatpush.bf16.msra.mxu0 %v3067
    %3945 = vmatpush.bf16.msra.mxu0 %v3059
    %3946 = vmatpush.bf16.msra.mxu0 %v3051
    %3947 = vmatpush.bf16.msra.mxu0 %v3043
    %3948 = vmatpush.bf16.msra.mxu0 %v3035
    %3949 = vmatpush.bf16.msra.mxu0 %v3027
    %3950 = vmatpush.bf16.msra.mxu0 %v3019
    %3951 = vmatmul.bf16.gmra.mxu0 %v959
    %v3952 = vpop.f32.mrf.mxu0
    %v3953 = vadd.f32 0.0, %v3952
    %v3954 = vpop.f32.mrf.mxu0
    %3955 = vdwg.mxu0
    %3956 = vmatpush.bf16.msra.mxu0 %v3139
    %3957 = vmatpush.bf16.msra.mxu0 %v3131
    %3958 = vmatpush.bf16.msra.mxu0 %v3123
    %3959 = vmatpush.bf16.msra.mxu0 %v3115
    %3960 = vmatpush.bf16.msra.mxu0 %v3107
    %3961 = vmatpush.bf16.msra.mxu0 %v3099
    %3962 = vmatpush.bf16.msra.mxu0 %v3091
    %3963 = vmatpush.bf16.msra.mxu0 %v3083
    %3964 = vmatmul.bf16.gmra.mxu0 %v960
    %v3965 = vpop.f32.mrf.mxu0
    %v3966 = vadd.f32 %v3953, %v3965
    %v3967 = vpop.f32.mrf.mxu0
    %3968 = vdwg.mxu0
    %3969 = vmatpush.bf16.msra.mxu0 %v3203
    %3970 = vmatpush.bf16.msra.mxu0 %v3195
    %3971 = vmatpush.bf16.msra.mxu0 %v3187
    %3972 = vmatpush.bf16.msra.mxu0 %v3179
    %3973 = vmatpush.bf16.msra.mxu0 %v3171
    %3974 = vmatpush.bf16.msra.mxu0 %v3163
    %3975 = vmatpush.bf16.msra.mxu0 %v3155
    %3976 = vmatpush.bf16.msra.mxu0 %v3147
    %3977 = vmatmul.bf16.gmra.mxu0 %v961
    %v3978 = vpop.f32.mrf.mxu0
    %v3979 = vadd.f32 %v3966, %v3978
    %v3980 = vpop.f32.mrf.mxu0
    %3981 = vdwg.mxu0
    %3982 = vmatpush.bf16.msra.mxu0 %v3267
    %3983 = vmatpush.bf16.msra.mxu0 %v3259
    %3984 = vmatpush.bf16.msra.mxu0 %v3251
    %3985 = vmatpush.bf16.msra.mxu0 %v3243
    %3986 = vmatpush.bf16.msra.mxu0 %v3235
    %3987 = vmatpush.bf16.msra.mxu0 %v3227
    %3988 = vmatpush.bf16.msra.mxu0 %v3219
    %3989 = vmatpush.bf16.msra.mxu0 %v3211
    %3990 = vmatmul.bf16.gmra.mxu0 %v962
    %v3991 = vpop.f32.mrf.mxu0
    %v3992 = vadd.f32 %v3979, %v3991
    %v3993 = vpop.f32.mrf.mxu0
    %3994 = vdwg.mxu0
    %3995 = vmatpush.bf16.msra.mxu0 %v3331
    %3996 = vmatpush.bf16.msra.mxu0 %v3323
    %3997 = vmatpush.bf16.msra.mxu0 %v3315
    %3998 = vmatpush.bf16.msra.mxu0 %v3307
    %3999 = vmatpush.bf16.msra.mxu0 %v3299
    %4000 = vmatpush.bf16.msra.mxu0 %v3291
    %4001 = vmatpush.bf16.msra.mxu0 %v3283
    %4002 = vmatpush.bf16.msra.mxu0 %v3275
    %4003 = vmatmul.bf16.gmra.mxu0 %v963
    %v4004 = vpop.f32.mrf.mxu0
    %v4005 = vadd.f32 %v3992, %v4004
    %v4006 = vpop.f32.mrf.mxu0
    %4007 = vdwg.mxu0
    %4008 = vmatpush.bf16.msra.mxu0 %v3395
    %4009 = vmatpush.bf16.msra.mxu0 %v3387
    %4010 = vmatpush.bf16.msra.mxu0 %v3379
    %4011 = vmatpush.bf16.msra.mxu0 %v3371
    %4012 = vmatpush.bf16.msra.mxu0 %v3363
    %4013 = vmatpush.bf16.msra.mxu0 %v3355
    %4014 = vmatpush.bf16.msra.mxu0 %v3347
    %4015 = vmatpush.bf16.msra.mxu0 %v3339
    %4016 = vmatmul.bf16.gmra.mxu0 %v964
    %v4017 = vpop.f32.mrf.mxu0
    %v4018 = vadd.f32 %v4005, %v4017
    %v4019 = vpop.f32.mrf.mxu0
    %4020 = vdwg.mxu0
    %4021 = vmatpush.bf16.msra.mxu0 %v3459
    %4022 = vmatpush.bf16.msra.mxu0 %v3451
    %4023 = vmatpush.bf16.msra.mxu0 %v3443
    %4024 = vmatpush.bf16.msra.mxu0 %v3435
    %4025 = vmatpush.bf16.msra.mxu0 %v3427
    %4026 = vmatpush.bf16.msra.mxu0 %v3419
    %4027 = vmatpush.bf16.msra.mxu0 %v3411
    %4028 = vmatpush.bf16.msra.mxu0 %v3403
    %4029 = vmatmul.bf16.gmra.mxu0 %v965
    %v4030 = vpop.f32.mrf.mxu0
    %v4031 = vadd.f32 %v4018, %v4030
    %v4032 = vpop.f32.mrf.mxu0
    %4033 = vdwg.mxu0
    %4034 = vmatpush.bf16.msra.mxu0 %v3523
    %4035 = vmatpush.bf16.msra.mxu0 %v3515
    %4036 = vmatpush.bf16.msra.mxu0 %v3507
    %4037 = vmatpush.bf16.msra.mxu0 %v3499
    %4038 = vmatpush.bf16.msra.mxu0 %v3491
    %4039 = vmatpush.bf16.msra.mxu0 %v3483
    %4040 = vmatpush.bf16.msra.mxu0 %v3475
    %4041 = vmatpush.bf16.msra.mxu0 %v3467
    %4042 = vmatmul.bf16.gmra.mxu0 %v966
    %v4043 = vpop.f32.mrf.mxu0
    %v4044 = vadd.f32 %v4031, %v4043
    %v4045 = vpop.f32.mrf.mxu0
    %4046 = vdwg.mxu0
    %4047 = vmatpush.bf16.msra.mxu0 %v3076
    %4048 = vmatpush.bf16.msra.mxu0 %v3068
    %4049 = vmatpush.bf16.msra.mxu0 %v3060
    %4050 = vmatpush.bf16.msra.mxu0 %v3052
    %4051 = vmatpush.bf16.msra.mxu0 %v3044
    %4052 = vmatpush.bf16.msra.mxu0 %v3036
    %4053 = vmatpush.bf16.msra.mxu0 %v3028
    %4054 = vmatpush.bf16.msra.mxu0 %v3020
    %4055 = vmatmul.bf16.gmra.mxu0 %v959
    %v4056 = vpop.f32.mrf.mxu0
    %v4057 = vadd.f32 0.0, %v4056
    %v4058 = vpop.f32.mrf.mxu0
    %4059 = vdwg.mxu0
    %4060 = vmatpush.bf16.msra.mxu0 %v3140
    %4061 = vmatpush.bf16.msra.mxu0 %v3132
    %4062 = vmatpush.bf16.msra.mxu0 %v3124
    %4063 = vmatpush.bf16.msra.mxu0 %v3116
    %4064 = vmatpush.bf16.msra.mxu0 %v3108
    %4065 = vmatpush.bf16.msra.mxu0 %v3100
    %4066 = vmatpush.bf16.msra.mxu0 %v3092
    %4067 = vmatpush.bf16.msra.mxu0 %v3084
    %4068 = vmatmul.bf16.gmra.mxu0 %v960
    %v4069 = vpop.f32.mrf.mxu0
    %v4070 = vadd.f32 %v4057, %v4069
    %v4071 = vpop.f32.mrf.mxu0
    %4072 = vdwg.mxu0
    %4073 = vmatpush.bf16.msra.mxu0 %v3204
    %4074 = vmatpush.bf16.msra.mxu0 %v3196
    %4075 = vmatpush.bf16.msra.mxu0 %v3188
    %4076 = vmatpush.bf16.msra.mxu0 %v3180
    %4077 = vmatpush.bf16.msra.mxu0 %v3172
    %4078 = vmatpush.bf16.msra.mxu0 %v3164
    %4079 = vmatpush.bf16.msra.mxu0 %v3156
    %4080 = vmatpush.bf16.msra.mxu0 %v3148
    %4081 = vmatmul.bf16.gmra.mxu0 %v961
    %v4082 = vpop.f32.mrf.mxu0
    %v4083 = vadd.f32 %v4070, %v4082
    %v4084 = vpop.f32.mrf.mxu0
    %4085 = vdwg.mxu0
    %4086 = vmatpush.bf16.msra.mxu0 %v3268
    %4087 = vmatpush.bf16.msra.mxu0 %v3260
    %4088 = vmatpush.bf16.msra.mxu0 %v3252
    %4089 = vmatpush.bf16.msra.mxu0 %v3244
    %4090 = vmatpush.bf16.msra.mxu0 %v3236
    %4091 = vmatpush.bf16.msra.mxu0 %v3228
    %4092 = vmatpush.bf16.msra.mxu0 %v3220
    %4093 = vmatpush.bf16.msra.mxu0 %v3212
    %4094 = vmatmul.bf16.gmra.mxu0 %v962
    %v4095 = vpop.f32.mrf.mxu0
    %v4096 = vadd.f32 %v4083, %v4095
    %v4097 = vpop.f32.mrf.mxu0
    %4098 = vdwg.mxu0
    %4099 = vmatpush.bf16.msra.mxu0 %v3332
    %4100 = vmatpush.bf16.msra.mxu0 %v3324
    %4101 = vmatpush.bf16.msra.mxu0 %v3316
    %4102 = vmatpush.bf16.msra.mxu0 %v3308
    %4103 = vmatpush.bf16.msra.mxu0 %v3300
    %4104 = vmatpush.bf16.msra.mxu0 %v3292
    %4105 = vmatpush.bf16.msra.mxu0 %v3284
    %4106 = vmatpush.bf16.msra.mxu0 %v3276
    %4107 = vmatmul.bf16.gmra.mxu0 %v963
    %v4108 = vpop.f32.mrf.mxu0
    %v4109 = vadd.f32 %v4096, %v4108
    %v4110 = vpop.f32.mrf.mxu0
    %4111 = vdwg.mxu0
    %4112 = vmatpush.bf16.msra.mxu0 %v3396
    %4113 = vmatpush.bf16.msra.mxu0 %v3388
    %4114 = vmatpush.bf16.msra.mxu0 %v3380
    %4115 = vmatpush.bf16.msra.mxu0 %v3372
    %4116 = vmatpush.bf16.msra.mxu0 %v3364
    %4117 = vmatpush.bf16.msra.mxu0 %v3356
    %4118 = vmatpush.bf16.msra.mxu0 %v3348
    %4119 = vmatpush.bf16.msra.mxu0 %v3340
    %4120 = vmatmul.bf16.gmra.mxu0 %v964
    %v4121 = vpop.f32.mrf.mxu0
    %v4122 = vadd.f32 %v4109, %v4121
    %v4123 = vpop.f32.mrf.mxu0
    %4124 = vdwg.mxu0
    %4125 = vmatpush.bf16.msra.mxu0 %v3460
    %4126 = vmatpush.bf16.msra.mxu0 %v3452
    %4127 = vmatpush.bf16.msra.mxu0 %v3444
    %4128 = vmatpush.bf16.msra.mxu0 %v3436
    %4129 = vmatpush.bf16.msra.mxu0 %v3428
    %4130 = vmatpush.bf16.msra.mxu0 %v3420
    %4131 = vmatpush.bf16.msra.mxu0 %v3412
    %4132 = vmatpush.bf16.msra.mxu0 %v3404
    %4133 = vmatmul.bf16.gmra.mxu0 %v965
    %v4134 = vpop.f32.mrf.mxu0
    %v4135 = vadd.f32 %v4122, %v4134
    %v4136 = vpop.f32.mrf.mxu0
    %4137 = vdwg.mxu0
    %4138 = vmatpush.bf16.msra.mxu0 %v3524
    %4139 = vmatpush.bf16.msra.mxu0 %v3516
    %4140 = vmatpush.bf16.msra.mxu0 %v3508
    %4141 = vmatpush.bf16.msra.mxu0 %v3500
    %4142 = vmatpush.bf16.msra.mxu0 %v3492
    %4143 = vmatpush.bf16.msra.mxu0 %v3484
    %4144 = vmatpush.bf16.msra.mxu0 %v3476
    %4145 = vmatpush.bf16.msra.mxu0 %v3468
    %4146 = vmatmul.bf16.gmra.mxu0 %v966
    %v4147 = vpop.f32.mrf.mxu0
    %v4148 = vadd.f32 %v4135, %v4147
    %v4149 = vpop.f32.mrf.mxu0
    %4150 = vdwg.mxu0
    %4151 = vmatpush.bf16.msra.mxu0 %v3077
    %4152 = vmatpush.bf16.msra.mxu0 %v3069
    %4153 = vmatpush.bf16.msra.mxu0 %v3061
    %4154 = vmatpush.bf16.msra.mxu0 %v3053
    %4155 = vmatpush.bf16.msra.mxu0 %v3045
    %4156 = vmatpush.bf16.msra.mxu0 %v3037
    %4157 = vmatpush.bf16.msra.mxu0 %v3029
    %4158 = vmatpush.bf16.msra.mxu0 %v3021
    %4159 = vmatmul.bf16.gmra.mxu0 %v959
    %v4160 = vpop.f32.mrf.mxu0
    %v4161 = vadd.f32 0.0, %v4160
    %v4162 = vpop.f32.mrf.mxu0
    %4163 = vdwg.mxu0
    %4164 = vmatpush.bf16.msra.mxu0 %v3141
    %4165 = vmatpush.bf16.msra.mxu0 %v3133
    %4166 = vmatpush.bf16.msra.mxu0 %v3125
    %4167 = vmatpush.bf16.msra.mxu0 %v3117
    %4168 = vmatpush.bf16.msra.mxu0 %v3109
    %4169 = vmatpush.bf16.msra.mxu0 %v3101
    %4170 = vmatpush.bf16.msra.mxu0 %v3093
    %4171 = vmatpush.bf16.msra.mxu0 %v3085
    %4172 = vmatmul.bf16.gmra.mxu0 %v960
    %v4173 = vpop.f32.mrf.mxu0
    %v4174 = vadd.f32 %v4161, %v4173
    %v4175 = vpop.f32.mrf.mxu0
    %4176 = vdwg.mxu0
    %4177 = vmatpush.bf16.msra.mxu0 %v3205
    %4178 = vmatpush.bf16.msra.mxu0 %v3197
    %4179 = vmatpush.bf16.msra.mxu0 %v3189
    %4180 = vmatpush.bf16.msra.mxu0 %v3181
    %4181 = vmatpush.bf16.msra.mxu0 %v3173
    %4182 = vmatpush.bf16.msra.mxu0 %v3165
    %4183 = vmatpush.bf16.msra.mxu0 %v3157
    %4184 = vmatpush.bf16.msra.mxu0 %v3149
    %4185 = vmatmul.bf16.gmra.mxu0 %v961
    %v4186 = vpop.f32.mrf.mxu0
    %v4187 = vadd.f32 %v4174, %v4186
    %v4188 = vpop.f32.mrf.mxu0
    %4189 = vdwg.mxu0
    %4190 = vmatpush.bf16.msra.mxu0 %v3269
    %4191 = vmatpush.bf16.msra.mxu0 %v3261
    %4192 = vmatpush.bf16.msra.mxu0 %v3253
    %4193 = vmatpush.bf16.msra.mxu0 %v3245
    %4194 = vmatpush.bf16.msra.mxu0 %v3237
    %4195 = vmatpush.bf16.msra.mxu0 %v3229
    %4196 = vmatpush.bf16.msra.mxu0 %v3221
    %4197 = vmatpush.bf16.msra.mxu0 %v3213
    %4198 = vmatmul.bf16.gmra.mxu0 %v962
    %v4199 = vpop.f32.mrf.mxu0
    %v4200 = vadd.f32 %v4187, %v4199
    %v4201 = vpop.f32.mrf.mxu0
    %4202 = vdwg.mxu0
    %4203 = vmatpush.bf16.msra.mxu0 %v3333
    %4204 = vmatpush.bf16.msra.mxu0 %v3325
    %4205 = vmatpush.bf16.msra.mxu0 %v3317
    %4206 = vmatpush.bf16.msra.mxu0 %v3309
    %4207 = vmatpush.bf16.msra.mxu0 %v3301
    %4208 = vmatpush.bf16.msra.mxu0 %v3293
    %4209 = vmatpush.bf16.msra.mxu0 %v3285
    %4210 = vmatpush.bf16.msra.mxu0 %v3277
    %4211 = vmatmul.bf16.gmra.mxu0 %v963
    %v4212 = vpop.f32.mrf.mxu0
    %v4213 = vadd.f32 %v4200, %v4212
    %v4214 = vpop.f32.mrf.mxu0
    %4215 = vdwg.mxu0
    %4216 = vmatpush.bf16.msra.mxu0 %v3397
    %4217 = vmatpush.bf16.msra.mxu0 %v3389
    %4218 = vmatpush.bf16.msra.mxu0 %v3381
    %4219 = vmatpush.bf16.msra.mxu0 %v3373
    %4220 = vmatpush.bf16.msra.mxu0 %v3365
    %4221 = vmatpush.bf16.msra.mxu0 %v3357
    %4222 = vmatpush.bf16.msra.mxu0 %v3349
    %4223 = vmatpush.bf16.msra.mxu0 %v3341
    %4224 = vmatmul.bf16.gmra.mxu0 %v964
    %v4225 = vpop.f32.mrf.mxu0
    %v4226 = vadd.f32 %v4213, %v4225
    %v4227 = vpop.f32.mrf.mxu0
    %4228 = vdwg.mxu0
    %4229 = vmatpush.bf16.msra.mxu0 %v3461
    %4230 = vmatpush.bf16.msra.mxu0 %v3453
    %4231 = vmatpush.bf16.msra.mxu0 %v3445
    %4232 = vmatpush.bf16.msra.mxu0 %v3437
    %4233 = vmatpush.bf16.msra.mxu0 %v3429
    %4234 = vmatpush.bf16.msra.mxu0 %v3421
    %4235 = vmatpush.bf16.msra.mxu0 %v3413
    %4236 = vmatpush.bf16.msra.mxu0 %v3405
    %4237 = vmatmul.bf16.gmra.mxu0 %v965
    %v4238 = vpop.f32.mrf.mxu0
    %v4239 = vadd.f32 %v4226, %v4238
    %v4240 = vpop.f32.mrf.mxu0
    %4241 = vdwg.mxu0
    %4242 = vmatpush.bf16.msra.mxu0 %v3525
    %4243 = vmatpush.bf16.msra.mxu0 %v3517
    %4244 = vmatpush.bf16.msra.mxu0 %v3509
    %4245 = vmatpush.bf16.msra.mxu0 %v3501
    %4246 = vmatpush.bf16.msra.mxu0 %v3493
    %4247 = vmatpush.bf16.msra.mxu0 %v3485
    %4248 = vmatpush.bf16.msra.mxu0 %v3477
    %4249 = vmatpush.bf16.msra.mxu0 %v3469
    %4250 = vmatmul.bf16.gmra.mxu0 %v966
    %v4251 = vpop.f32.mrf.mxu0
    %v4252 = vadd.f32 %v4239, %v4251
    %v4253 = vpop.f32.mrf.mxu0
    %4254 = vdwg.mxu0
    %4255 = vmatpush.bf16.msra.mxu0 %v3078
    %4256 = vmatpush.bf16.msra.mxu0 %v3070
    %4257 = vmatpush.bf16.msra.mxu0 %v3062
    %4258 = vmatpush.bf16.msra.mxu0 %v3054
    %4259 = vmatpush.bf16.msra.mxu0 %v3046
    %4260 = vmatpush.bf16.msra.mxu0 %v3038
    %4261 = vmatpush.bf16.msra.mxu0 %v3030
    %4262 = vmatpush.bf16.msra.mxu0 %v3022
    %4263 = vmatmul.bf16.gmra.mxu0 %v959
    %v4264 = vpop.f32.mrf.mxu0
    %v4265 = vadd.f32 0.0, %v4264
    %v4266 = vpop.f32.mrf.mxu0
    %4267 = vdwg.mxu0
    %4268 = vmatpush.bf16.msra.mxu0 %v3142
    %4269 = vmatpush.bf16.msra.mxu0 %v3134
    %4270 = vmatpush.bf16.msra.mxu0 %v3126
    %4271 = vmatpush.bf16.msra.mxu0 %v3118
    %4272 = vmatpush.bf16.msra.mxu0 %v3110
    %4273 = vmatpush.bf16.msra.mxu0 %v3102
    %4274 = vmatpush.bf16.msra.mxu0 %v3094
    %4275 = vmatpush.bf16.msra.mxu0 %v3086
    %4276 = vmatmul.bf16.gmra.mxu0 %v960
    %v4277 = vpop.f32.mrf.mxu0
    %v4278 = vadd.f32 %v4265, %v4277
    %v4279 = vpop.f32.mrf.mxu0
    %4280 = vdwg.mxu0
    %4281 = vmatpush.bf16.msra.mxu0 %v3206
    %4282 = vmatpush.bf16.msra.mxu0 %v3198
    %4283 = vmatpush.bf16.msra.mxu0 %v3190
    %4284 = vmatpush.bf16.msra.mxu0 %v3182
    %4285 = vmatpush.bf16.msra.mxu0 %v3174
    %4286 = vmatpush.bf16.msra.mxu0 %v3166
    %4287 = vmatpush.bf16.msra.mxu0 %v3158
    %4288 = vmatpush.bf16.msra.mxu0 %v3150
    %4289 = vmatmul.bf16.gmra.mxu0 %v961
    %v4290 = vpop.f32.mrf.mxu0
    %v4291 = vadd.f32 %v4278, %v4290
    %v4292 = vpop.f32.mrf.mxu0
    %4293 = vdwg.mxu0
    %4294 = vmatpush.bf16.msra.mxu0 %v3270
    %4295 = vmatpush.bf16.msra.mxu0 %v3262
    %4296 = vmatpush.bf16.msra.mxu0 %v3254
    %4297 = vmatpush.bf16.msra.mxu0 %v3246
    %4298 = vmatpush.bf16.msra.mxu0 %v3238
    %4299 = vmatpush.bf16.msra.mxu0 %v3230
    %4300 = vmatpush.bf16.msra.mxu0 %v3222
    %4301 = vmatpush.bf16.msra.mxu0 %v3214
    %4302 = vmatmul.bf16.gmra.mxu0 %v962
    %v4303 = vpop.f32.mrf.mxu0
    %v4304 = vadd.f32 %v4291, %v4303
    %v4305 = vpop.f32.mrf.mxu0
    %4306 = vdwg.mxu0
    %4307 = vmatpush.bf16.msra.mxu0 %v3334
    %4308 = vmatpush.bf16.msra.mxu0 %v3326
    %4309 = vmatpush.bf16.msra.mxu0 %v3318
    %4310 = vmatpush.bf16.msra.mxu0 %v3310
    %4311 = vmatpush.bf16.msra.mxu0 %v3302
    %4312 = vmatpush.bf16.msra.mxu0 %v3294
    %4313 = vmatpush.bf16.msra.mxu0 %v3286
    %4314 = vmatpush.bf16.msra.mxu0 %v3278
    %4315 = vmatmul.bf16.gmra.mxu0 %v963
    %v4316 = vpop.f32.mrf.mxu0
    %v4317 = vadd.f32 %v4304, %v4316
    %v4318 = vpop.f32.mrf.mxu0
    %4319 = vdwg.mxu0
    %4320 = vmatpush.bf16.msra.mxu0 %v3398
    %4321 = vmatpush.bf16.msra.mxu0 %v3390
    %4322 = vmatpush.bf16.msra.mxu0 %v3382
    %4323 = vmatpush.bf16.msra.mxu0 %v3374
    %4324 = vmatpush.bf16.msra.mxu0 %v3366
    %4325 = vmatpush.bf16.msra.mxu0 %v3358
    %4326 = vmatpush.bf16.msra.mxu0 %v3350
    %4327 = vmatpush.bf16.msra.mxu0 %v3342
    %4328 = vmatmul.bf16.gmra.mxu0 %v964
    %v4329 = vpop.f32.mrf.mxu0
    %v4330 = vadd.f32 %v4317, %v4329
    %v4331 = vpop.f32.mrf.mxu0
    %4332 = vdwg.mxu0
    %4333 = vmatpush.bf16.msra.mxu0 %v3462
    %4334 = vmatpush.bf16.msra.mxu0 %v3454
    %4335 = vmatpush.bf16.msra.mxu0 %v3446
    %4336 = vmatpush.bf16.msra.mxu0 %v3438
    %4337 = vmatpush.bf16.msra.mxu0 %v3430
    %4338 = vmatpush.bf16.msra.mxu0 %v3422
    %4339 = vmatpush.bf16.msra.mxu0 %v3414
    %4340 = vmatpush.bf16.msra.mxu0 %v3406
    %4341 = vmatmul.bf16.gmra.mxu0 %v965
    %v4342 = vpop.f32.mrf.mxu0
    %v4343 = vadd.f32 %v4330, %v4342
    %v4344 = vpop.f32.mrf.mxu0
    %4345 = vdwg.mxu0
    %4346 = vmatpush.bf16.msra.mxu0 %v3526
    %4347 = vmatpush.bf16.msra.mxu0 %v3518
    %4348 = vmatpush.bf16.msra.mxu0 %v3510
    %4349 = vmatpush.bf16.msra.mxu0 %v3502
    %4350 = vmatpush.bf16.msra.mxu0 %v3494
    %4351 = vmatpush.bf16.msra.mxu0 %v3486
    %4352 = vmatpush.bf16.msra.mxu0 %v3478
    %4353 = vmatpush.bf16.msra.mxu0 %v3470
    %4354 = vmatmul.bf16.gmra.mxu0 %v966
    %v4355 = vpop.f32.mrf.mxu0
    %v4356 = vadd.f32 %v4343, %v4355
    %v4357 = vpop.f32.mrf.mxu0
    %4358 = vdwg.mxu0
    %v4359 = vld [vmem:[#allocation14] sm:$0xff]
    %v4361 = vperm.slane %v4359, 0
    %v4362 = vperm.slane %v4359, 1
    %v4363 = vperm.slane %v4359, 2
    %v4364 = vperm.slane %v4359, 3
    %v4365 = vperm.slane %v4359, 4
    %v4366 = vperm.slane %v4359, 5
    %v4367 = vperm.slane %v4359, 6
    %v4368 = vperm.slane %v4359, 7
    %v4377 = vmul.f32 %v3628, %v4361
    %v4378 = vmul.f32 %v3732, %v4362
    %v4379 = vmul.f32 %v3836, %v4363
    %v4380 = vmul.f32 %v3940, %v4364
    %v4381 = vmul.f32 %v4044, %v4365
    %v4382 = vmul.f32 %v4148, %v4366
    %v4383 = vmul.f32 %v4252, %v4367
    %v4384 = vmul.f32 %v4356, %v4368
    %v4385 = vrot.slane %v4377, 4
    %v4386 = vadd.f32 %v4377, %v4385
    %v4387 = vrot.slane %v4386, 2
    %v4388 = vadd.f32 %v4386, %v4387
    %v4389 = vrot.slane %v4388, 1
    %v4390 = vadd.f32 %v4388, %v4389
    %v4391 = vrot.slane %v4378, 4
    %v4392 = vadd.f32 %v4378, %v4391
    %v4393 = vrot.slane %v4392, 2
    %v4394 = vadd.f32 %v4392, %v4393
    %v4395 = vrot.slane %v4394, 1
    %v4396 = vadd.f32 %v4394, %v4395
    %v4397 = vrot.slane %v4379, 4
    %v4398 = vadd.f32 %v4379, %v4397
    %v4399 = vrot.slane %v4398, 2
    %v4400 = vadd.f32 %v4398, %v4399
    %v4401 = vrot.slane %v4400, 1
    %v4402 = vadd.f32 %v4400, %v4401
    %v4403 = vrot.slane %v4380, 4
    %v4404 = vadd.f32 %v4380, %v4403
    %v4405 = vrot.slane %v4404, 2
    %v4406 = vadd.f32 %v4404, %v4405
    %v4407 = vrot.slane %v4406, 1
    %v4408 = vadd.f32 %v4406, %v4407
    %v4409 = vrot.slane %v4381, 4
    %v4410 = vadd.f32 %v4381, %v4409
    %v4411 = vrot.slane %v4410, 2
    %v4412 = vadd.f32 %v4410, %v4411
    %v4413 = vrot.slane %v4412, 1
    %v4414 = vadd.f32 %v4412, %v4413
    %v4415 = vrot.slane %v4382, 4
    %v4416 = vadd.f32 %v4382, %v4415
    %v4417 = vrot.slane %v4416, 2
    %v4418 = vadd.f32 %v4416, %v4417
    %v4419 = vrot.slane %v4418, 1
    %v4420 = vadd.f32 %v4418, %v4419
    %v4421 = vrot.slane %v4383, 4
    %v4422 = vadd.f32 %v4383, %v4421
    %v4423 = vrot.slane %v4422, 2
    %v4424 = vadd.f32 %v4422, %v4423
    %v4425 = vrot.slane %v4424, 1
    %v4426 = vadd.f32 %v4424, %v4425
    %v4427 = vrot.slane %v4384, 4
    %v4428 = vadd.f32 %v4384, %v4427
    %v4429 = vrot.slane %v4428, 2
    %v4430 = vadd.f32 %v4428, %v4429
    %v4431 = vrot.slane %v4430, 1
    %v4432 = vadd.f32 %v4430, %v4431
    %v4433 = vmul.f32 %v4390, %v407
    %v4434 = vmul.f32 %v4396, %v407
    %v4435 = vmul.f32 %v4402, %v407
    %v4436 = vmul.f32 %v4408, %v407
    %v4437 = vmul.f32 %v4414, %v407
    %v4438 = vmul.f32 %v4420, %v407
    %v4439 = vmul.f32 %v4426, %v407
    %v4440 = vmul.f32 %v4432, %v407
    %v4441 = vsub.f32 %v4377, %v4433
    %v4442 = vsub.f32 %v4378, %v4434
    %v4443 = vsub.f32 %v4379, %v4435
    %v4444 = vsub.f32 %v4380, %v4436
    %v4445 = vsub.f32 %v4381, %v4437
    %v4446 = vsub.f32 %v4382, %v4438
    %v4447 = vsub.f32 %v4383, %v4439
    %v4448 = vsub.f32 %v4384, %v4440
    %v4449 = vmul.f32 %v4441, %v4441
    %v4450 = vmul.f32 %v4442, %v4442
    %v4451 = vmul.f32 %v4443, %v4443
    %v4452 = vmul.f32 %v4444, %v4444
    %v4453 = vmul.f32 %v4445, %v4445
    %v4454 = vmul.f32 %v4446, %v4446
    %v4455 = vmul.f32 %v4447, %v4447
    %v4456 = vmul.f32 %v4448, %v4448
    %v4457 = vrot.slane %v4449, 4
    %v4458 = vadd.f32 %v4449, %v4457
    %v4459 = vrot.slane %v4458, 2
    %v4460 = vadd.f32 %v4458, %v4459
    %v4461 = vrot.slane %v4460, 1
    %v4462 = vadd.f32 %v4460, %v4461
    %v4463 = vrot.slane %v4450, 4
    %v4464 = vadd.f32 %v4450, %v4463
    %v4465 = vrot.slane %v4464, 2
    %v4466 = vadd.f32 %v4464, %v4465
    %v4467 = vrot.slane %v4466, 1
    %v4468 = vadd.f32 %v4466, %v4467
    %v4469 = vrot.slane %v4451, 4
    %v4470 = vadd.f32 %v4451, %v4469
    %v4471 = vrot.slane %v4470, 2
    %v4472 = vadd.f32 %v4470, %v4471
    %v4473 = vrot.slane %v4472, 1
    %v4474 = vadd.f32 %v4472, %v4473
    %v4475 = vrot.slane %v4452, 4
    %v4476 = vadd.f32 %v4452, %v4475
    %v4477 = vrot.slane %v4476, 2
    %v4478 = vadd.f32 %v4476, %v4477
    %v4479 = vrot.slane %v4478, 1
    %v4480 = vadd.f32 %v4478, %v4479
    %v4481 = vrot.slane %v4453, 4
    %v4482 = vadd.f32 %v4453, %v4481
    %v4483 = vrot.slane %v4482, 2
    %v4484 = vadd.f32 %v4482, %v4483
    %v4485 = vrot.slane %v4484, 1
    %v4486 = vadd.f32 %v4484, %v4485
    %v4487 = vrot.slane %v4454, 4
    %v4488 = vadd.f32 %v4454, %v4487
    %v4489 = vrot.slane %v4488, 2
    %v4490 = vadd.f32 %v4488, %v4489
    %v4491 = vrot.slane %v4490, 1
    %v4492 = vadd.f32 %v4490, %v4491
    %v4493 = vrot.slane %v4455, 4
    %v4494 = vadd.f32 %v4455, %v4493
    %v4495 = vrot.slane %v4494, 2
    %v4496 = vadd.f32 %v4494, %v4495
    %v4497 = vrot.slane %v4496, 1
    %v4498 = vadd.f32 %v4496, %v4497
    %v4499 = vrot.slane %v4456, 4
    %v4500 = vadd.f32 %v4456, %v4499
    %v4501 = vrot.slane %v4500, 2
    %v4502 = vadd.f32 %v4500, %v4501
    %v4503 = vrot.slane %v4502, 1
    %v4504 = vadd.f32 %v4502, %v4503
    %v4505 = vmul.f32 %v4462, %v407
    %v4506 = vmul.f32 %v4468, %v407
    %v4507 = vmul.f32 %v4474, %v407
    %v4508 = vmul.f32 %v4480, %v407
    %v4509 = vmul.f32 %v4486, %v407
    %v4510 = vmul.f32 %v4492, %v407
    %v4511 = vmul.f32 %v4498, %v407
    %v4512 = vmul.f32 %v4504, %v407
    %v4513 = vld [vmem:[#allocation15] sm:$0xff]
    %v4514 = vadd.f32 %v4505, 1e-05
    %v4515 = vadd.f32 %v4506, 1e-05
    %v4516 = vadd.f32 %v4507, 1e-05
    %v4517 = vadd.f32 %v4508, 1e-05
    %v4518 = vadd.f32 %v4509, 1e-05
    %v4519 = vadd.f32 %v4510, 1e-05
    %v4520 = vadd.f32 %v4511, 1e-05
    %v4521 = vadd.f32 %v4512, 1e-05
    %v4522 = vrsqrt.pop %v4514
    %v4523 = vmul.f32 %v4522, %v4514
    %v4524 = vmul.f32 %v4523, %v4522
    %v4525 = vmul.f32 0.5, %v4524
    %v4526 = vsub.f32 1.5, %v4525
    %v4527 = vmul.f32 %v4522, %v4526
    %vm4528 = vweird.f32 %v4514
    %vm4529 = vweird.f32 %v4522
    %vm4530 = vmor %vm4528, %vm4529
    %v4531 = vsel %vm4530, %v4522, %v4527
    %v4532 = vrsqrt.pop %v4515
    %v4533 = vmul.f32 %v4532, %v4515
    %v4534 = vmul.f32 %v4533, %v4532
    %v4535 = vmul.f32 0.5, %v4534
    %v4536 = vsub.f32 1.5, %v4535
    %v4537 = vmul.f32 %v4532, %v4536
    %vm4538 = vweird.f32 %v4515
    %vm4539 = vweird.f32 %v4532
    %vm4540 = vmor %vm4538, %vm4539
    %v4541 = vsel %vm4540, %v4532, %v4537
    %v4542 = vrsqrt.pop %v4516
    %v4543 = vmul.f32 %v4542, %v4516
    %v4544 = vmul.f32 %v4543, %v4542
    %v4545 = vmul.f32 0.5, %v4544
    %v4546 = vsub.f32 1.5, %v4545
    %v4547 = vmul.f32 %v4542, %v4546
    %vm4548 = vweird.f32 %v4516
    %vm4549 = vweird.f32 %v4542
    %vm4550 = vmor %vm4548, %vm4549
    %v4551 = vsel %vm4550, %v4542, %v4547
    %v4552 = vrsqrt.pop %v4517
    %v4553 = vmul.f32 %v4552, %v4517
    %v4554 = vmul.f32 %v4553, %v4552
    %v4555 = vmul.f32 0.5, %v4554
    %v4556 = vsub.f32 1.5, %v4555
    %v4557 = vmul.f32 %v4552, %v4556
    %vm4558 = vweird.f32 %v4517
    %vm4559 = vweird.f32 %v4552
    %vm4560 = vmor %vm4558, %vm4559
    %v4561 = vsel %vm4560, %v4552, %v4557
    %v4562 = vrsqrt.pop %v4518
    %v4563 = vmul.f32 %v4562, %v4518
    %v4564 = vmul.f32 %v4563, %v4562
    %v4565 = vmul.f32 0.5, %v4564
    %v4566 = vsub.f32 1.5, %v4565
    %v4567 = vmul.f32 %v4562, %v4566
    %vm4568 = vweird.f32 %v4518
    %vm4569 = vweird.f32 %v4562
    %vm4570 = vmor %vm4568, %vm4569
    %v4571 = vsel %vm4570, %v4562, %v4567
    %v4572 = vrsqrt.pop %v4519
    %v4573 = vmul.f32 %v4572, %v4519
    %v4574 = vmul.f32 %v4573, %v4572
    %v4575 = vmul.f32 0.5, %v4574
    %v4576 = vsub.f32 1.5, %v4575
    %v4577 = vmul.f32 %v4572, %v4576
    %vm4578 = vweird.f32 %v4519
    %vm4579 = vweird.f32 %v4572
    %vm4580 = vmor %vm4578, %vm4579
    %v4581 = vsel %vm4580, %v4572, %v4577
    %v4582 = vrsqrt.pop %v4520
    %v4583 = vmul.f32 %v4582, %v4520
    %v4584 = vmul.f32 %v4583, %v4582
    %v4585 = vmul.f32 0.5, %v4584
    %v4586 = vsub.f32 1.5, %v4585
    %v4587 = vmul.f32 %v4582, %v4586
    %vm4588 = vweird.f32 %v4520
    %vm4589 = vweird.f32 %v4582
    %vm4590 = vmor %vm4588, %vm4589
    %v4591 = vsel %vm4590, %v4582, %v4587
    %v4592 = vrsqrt.pop %v4521
    %v4593 = vmul.f32 %v4592, %v4521
    %v4594 = vmul.f32 %v4593, %v4592
    %v4595 = vmul.f32 0.5, %v4594
    %v4596 = vsub.f32 1.5, %v4595
    %v4597 = vmul.f32 %v4592, %v4596
    %vm4598 = vweird.f32 %v4521
    %vm4599 = vweird.f32 %v4592
    %vm4600 = vmor %vm4598, %vm4599
    %v4601 = vsel %vm4600, %v4592, %v4597
    %v4610 = vrot.slane %v4541, 7
    %v4611 = vrot.slane %v4551, 6
    %v4612 = vrot.slane %v4561, 5
    %v4613 = vrot.slane %v4571, 4
    %v4614 = vrot.slane %v4581, 3
    %v4615 = vrot.slane %v4591, 2
    %v4616 = vrot.slane %v4601, 1
    %v4617 = vsel %vm592, %v4531, %v4610
    %v4618 = vsel %vm594, %v4611, %v4612
    %v4619 = vsel %vm596, %v4617, %v4618
    %v4620 = vsel %vm598, %v4613, %v4614
    %v4621 = vsel %vm600, %v4615, %v4616
    %v4622 = vsel %vm602, %v4620, %v4621
    %v4623 = vsel %vm604, %v4619, %v4622
    %v4625 = vmul.f32 %v4513, %v4623
    %v4626 = vld [vmem:[#allocation17] sm:$0xff]
    %v4628 = vperm.slane %v4625, 0
    %v4629 = vperm.slane %v4625, 1
    %v4630 = vperm.slane %v4625, 2
    %v4631 = vperm.slane %v4625, 3
    %v4632 = vperm.slane %v4625, 4
    %v4633 = vperm.slane %v4625, 5
    %v4634 = vperm.slane %v4625, 6
    %v4635 = vperm.slane %v4625, 7
    %v4644 = vmul.f32 %v4433, %v4628
    %v4645 = vmul.f32 %v4434, %v4629
    %v4646 = vmul.f32 %v4435, %v4630
    %v4647 = vmul.f32 %v4436, %v4631
    %v4648 = vmul.f32 %v4437, %v4632
    %v4649 = vmul.f32 %v4438, %v4633
    %v4650 = vmul.f32 %v4439, %v4634
    %v4651 = vmul.f32 %v4440, %v4635
    %v4660 = vrot.slane %v4645, 7
    %v4661 = vrot.slane %v4646, 6
    %v4662 = vrot.slane %v4647, 5
    %v4663 = vrot.slane %v4648, 4
    %v4664 = vrot.slane %v4649, 3
    %v4665 = vrot.slane %v4650, 2
    %v4666 = vrot.slane %v4651, 1
    %v4667 = vsel %vm592, %v4644, %v4660
    %v4668 = vsel %vm594, %v4661, %v4662
    %v4669 = vsel %vm596, %v4667, %v4668
    %v4670 = vsel %vm598, %v4663, %v4664
    %v4671 = vsel %vm600, %v4665, %v4666
    %v4672 = vsel %vm602, %v4670, %v4671
    %v4673 = vsel %vm604, %v4669, %v4672
    %v4675 = vsub.f32 %v4626, %v4673
    %v4676 = vmul.f32 %v4377, %v4628
    %v4677 = vmul.f32 %v4378, %v4629
    %v4678 = vmul.f32 %v4379, %v4630
    %v4679 = vmul.f32 %v4380, %v4631
    %v4680 = vmul.f32 %v4381, %v4632
    %v4681 = vmul.f32 %v4382, %v4633
    %v4682 = vmul.f32 %v4383, %v4634
    %v4683 = vmul.f32 %v4384, %v4635
    %v4685 = vperm.slane %v4675, 0
    %v4686 = vperm.slane %v4675, 1
    %v4687 = vperm.slane %v4675, 2
    %v4688 = vperm.slane %v4675, 3
    %v4689 = vperm.slane %v4675, 4
    %v4690 = vperm.slane %v4675, 5
    %v4691 = vperm.slane %v4675, 6
    %v4692 = vperm.slane %v4675, 7
    %v4701 = vadd.f32 %v4676, %v4685
    %v4702 = vadd.f32 %v4677, %v4686
    %v4703 = vadd.f32 %v4678, %v4687
    %v4704 = vadd.f32 %v4679, %v4688
    %v4705 = vadd.f32 %v4680, %v4689
    %v4706 = vadd.f32 %v4681, %v4690
    %v4707 = vadd.f32 %v4682, %v4691
    %v4708 = vadd.f32 %v4683, %v4692
    %v4709 = vmax.f32 %v4701, 0.0
    %v4710 = vmax.f32 %v4702, 0.0
    %v4711 = vmax.f32 %v4703, 0.0
    %v4712 = vmax.f32 %v4704, 0.0
    %v4713 = vmax.f32 %v4705, 0.0
    %v4714 = vmax.f32 %v4706, 0.0
    %v4715 = vmax.f32 %v4707, 0.0
    %v4716 = vmax.f32 %v4708, 0.0
    %s4717 = smul.u32 %s699, 4
    %s4718 = sshll.u32 %s4717, 4
    %4719 = dma.done %s167, %s4718
    %v4720 = vld [vmem:[#allocation3] sm:$0xff]
    %v4721 = vld [vmem:[#allocation3 + $0x8] sm:$0xff]
    %v4722 = vld [vmem:[#allocation3 + $0x10] sm:$0xff]
    %v4723 = vld [vmem:[#allocation3 + $0x18] sm:$0xff]
    %v4724 = vld [vmem:[#allocation3 + $0x20] sm:$0xff]
    %v4725 = vld [vmem:[#allocation3 + $0x28] sm:$0xff]
    %v4726 = vld [vmem:[#allocation3 + $0x30] sm:$0xff]
    %v4727 = vld [vmem:[#allocation3 + $0x38] sm:$0xff]
    %v4728 = vld [vmem:[#allocation3 + $0x40] sm:$0xff]
    %v4729 = vld [vmem:[#allocation3 + $0x48] sm:$0xff]
    %v4730 = vld [vmem:[#allocation3 + $0x50] sm:$0xff]
    %v4731 = vld [vmem:[#allocation3 + $0x58] sm:$0xff]
    %v4732 = vld [vmem:[#allocation3 + $0x60] sm:$0xff]
    %v4733 = vld [vmem:[#allocation3 + $0x68] sm:$0xff]
    %v4734 = vld [vmem:[#allocation3 + $0x70] sm:$0xff]
    %v4735 = vld [vmem:[#allocation3 + $0x78] sm:$0xff]
    %v4736 = vld [vmem:[#allocation3 + $0x80] sm:$0xff]
    %v4737 = vld [vmem:[#allocation3 + $0x88] sm:$0xff]
    %v4738 = vld [vmem:[#allocation3 + $0x90] sm:$0xff]
    %v4739 = vld [vmem:[#allocation3 + $0x98] sm:$0xff]
    %v4740 = vld [vmem:[#allocation3 + $0xa0] sm:$0xff]
    %v4741 = vld [vmem:[#allocation3 + $0xa8] sm:$0xff]
    %v4742 = vld [vmem:[#allocation3 + $0xb0] sm:$0xff]
    %v4743 = vld [vmem:[#allocation3 + $0xb8] sm:$0xff]
    %v4744 = vld [vmem:[#allocation3 + $0xc0] sm:$0xff]
    %v4745 = vld [vmem:[#allocation3 + $0xc8] sm:$0xff]
    %v4746 = vld [vmem:[#allocation3 + $0xd0] sm:$0xff]
    %v4747 = vld [vmem:[#allocation3 + $0xd8] sm:$0xff]
    %v4748 = vld [vmem:[#allocation3 + $0xe0] sm:$0xff]
    %v4749 = vld [vmem:[#allocation3 + $0xe8] sm:$0xff]
    %v4750 = vld [vmem:[#allocation3 + $0xf0] sm:$0xff]
    %v4751 = vld [vmem:[#allocation3 + $0xf8] sm:$0xff]
    %v4752 = vld [vmem:[#allocation3 + $0x100] sm:$0xff]
    %v4753 = vld [vmem:[#allocation3 + $0x108] sm:$0xff]
    %v4754 = vld [vmem:[#allocation3 + $0x110] sm:$0xff]
    %v4755 = vld [vmem:[#allocation3 + $0x118] sm:$0xff]
    %v4756 = vld [vmem:[#allocation3 + $0x120] sm:$0xff]
    %v4757 = vld [vmem:[#allocation3 + $0x128] sm:$0xff]
    %v4758 = vld [vmem:[#allocation3 + $0x130] sm:$0xff]
    %v4759 = vld [vmem:[#allocation3 + $0x138] sm:$0xff]
    %v4760 = vld [vmem:[#allocation3 + $0x140] sm:$0xff]
    %v4761 = vld [vmem:[#allocation3 + $0x148] sm:$0xff]
    %v4762 = vld [vmem:[#allocation3 + $0x150] sm:$0xff]
    %v4763 = vld [vmem:[#allocation3 + $0x158] sm:$0xff]
    %v4764 = vld [vmem:[#allocation3 + $0x160] sm:$0xff]
    %v4765 = vld [vmem:[#allocation3 + $0x168] sm:$0xff]
    %v4766 = vld [vmem:[#allocation3 + $0x170] sm:$0xff]
    %v4767 = vld [vmem:[#allocation3 + $0x178] sm:$0xff]
    %v4768 = vld [vmem:[#allocation3 + $0x180] sm:$0xff]
    %v4769 = vld [vmem:[#allocation3 + $0x188] sm:$0xff]
    %v4770 = vld [vmem:[#allocation3 + $0x190] sm:$0xff]
    %v4771 = vld [vmem:[#allocation3 + $0x198] sm:$0xff]
    %v4772 = vld [vmem:[#allocation3 + $0x1a0] sm:$0xff]
    %v4773 = vld [vmem:[#allocation3 + $0x1a8] sm:$0xff]
    %v4774 = vld [vmem:[#allocation3 + $0x1b0] sm:$0xff]
    %v4775 = vld [vmem:[#allocation3 + $0x1b8] sm:$0xff]
    %v4776 = vld [vmem:[#allocation3 + $0x1c0] sm:$0xff]
    %v4777 = vld [vmem:[#allocation3 + $0x1c8] sm:$0xff]
    %v4778 = vld [vmem:[#allocation3 + $0x1d0] sm:$0xff]
    %v4779 = vld [vmem:[#allocation3 + $0x1d8] sm:$0xff]
    %v4780 = vld [vmem:[#allocation3 + $0x1e0] sm:$0xff]
    %v4781 = vld [vmem:[#allocation3 + $0x1e8] sm:$0xff]
    %v4782 = vld [vmem:[#allocation3 + $0x1f0] sm:$0xff]
    %v4783 = vld [vmem:[#allocation3 + $0x1f8] sm:$0xff]
    %v4784 = vld [vmem:[#allocation3 + $0x200] sm:$0xff]
    %v4785 = vld [vmem:[#allocation3 + $0x208] sm:$0xff]
    %v4786 = vld [vmem:[#allocation3 + $0x210] sm:$0xff]
    %v4787 = vld [vmem:[#allocation3 + $0x218] sm:$0xff]
    %v4788 = vld [vmem:[#allocation3 + $0x220] sm:$0xff]
    %v4789 = vld [vmem:[#allocation3 + $0x228] sm:$0xff]
    %v4790 = vld [vmem:[#allocation3 + $0x230] sm:$0xff]
    %v4791 = vld [vmem:[#allocation3 + $0x238] sm:$0xff]
    %v4792 = vld [vmem:[#allocation3 + $0x240] sm:$0xff]
    %v4793 = vld [vmem:[#allocation3 + $0x248] sm:$0xff]
    %v4794 = vld [vmem:[#allocation3 + $0x250] sm:$0xff]
    %v4795 = vld [vmem:[#allocation3 + $0x258] sm:$0xff]
    %v4796 = vld [vmem:[#allocation3 + $0x260] sm:$0xff]
    %v4797 = vld [vmem:[#allocation3 + $0x268] sm:$0xff]
    %v4798 = vld [vmem:[#allocation3 + $0x270] sm:$0xff]
    %v4799 = vld [vmem:[#allocation3 + $0x278] sm:$0xff]
    %v4800 = vld [vmem:[#allocation3 + $0x280] sm:$0xff]
    %v4801 = vld [vmem:[#allocation3 + $0x288] sm:$0xff]
    %v4802 = vld [vmem:[#allocation3 + $0x290] sm:$0xff]
    %v4803 = vld [vmem:[#allocation3 + $0x298] sm:$0xff]
    %v4804 = vld [vmem:[#allocation3 + $0x2a0] sm:$0xff]
    %v4805 = vld [vmem:[#allocation3 + $0x2a8] sm:$0xff]
    %v4806 = vld [vmem:[#allocation3 + $0x2b0] sm:$0xff]
    %v4807 = vld [vmem:[#allocation3 + $0x2b8] sm:$0xff]
    %v4808 = vld [vmem:[#allocation3 + $0x2c0] sm:$0xff]
    %v4809 = vld [vmem:[#allocation3 + $0x2c8] sm:$0xff]
    %v4810 = vld [vmem:[#allocation3 + $0x2d0] sm:$0xff]
    %v4811 = vld [vmem:[#allocation3 + $0x2d8] sm:$0xff]
    %v4812 = vld [vmem:[#allocation3 + $0x2e0] sm:$0xff]
    %v4813 = vld [vmem:[#allocation3 + $0x2e8] sm:$0xff]
    %v4814 = vld [vmem:[#allocation3 + $0x2f0] sm:$0xff]
    %v4815 = vld [vmem:[#allocation3 + $0x2f8] sm:$0xff]
    %v4816 = vld [vmem:[#allocation3 + $0x300] sm:$0xff]
    %v4817 = vld [vmem:[#allocation3 + $0x308] sm:$0xff]
    %v4818 = vld [vmem:[#allocation3 + $0x310] sm:$0xff]
    %v4819 = vld [vmem:[#allocation3 + $0x318] sm:$0xff]
    %v4820 = vld [vmem:[#allocation3 + $0x320] sm:$0xff]
    %v4821 = vld [vmem:[#allocation3 + $0x328] sm:$0xff]
    %v4822 = vld [vmem:[#allocation3 + $0x330] sm:$0xff]
    %v4823 = vld [vmem:[#allocation3 + $0x338] sm:$0xff]
    %v4824 = vld [vmem:[#allocation3 + $0x340] sm:$0xff]
    %v4825 = vld [vmem:[#allocation3 + $0x348] sm:$0xff]
    %v4826 = vld [vmem:[#allocation3 + $0x350] sm:$0xff]
    %v4827 = vld [vmem:[#allocation3 + $0x358] sm:$0xff]
    %v4828 = vld [vmem:[#allocation3 + $0x360] sm:$0xff]
    %v4829 = vld [vmem:[#allocation3 + $0x368] sm:$0xff]
    %v4830 = vld [vmem:[#allocation3 + $0x370] sm:$0xff]
    %v4831 = vld [vmem:[#allocation3 + $0x378] sm:$0xff]
    %v4832 = vld [vmem:[#allocation3 + $0x380] sm:$0xff]
    %v4833 = vld [vmem:[#allocation3 + $0x388] sm:$0xff]
    %v4834 = vld [vmem:[#allocation3 + $0x390] sm:$0xff]
    %v4835 = vld [vmem:[#allocation3 + $0x398] sm:$0xff]
    %v4836 = vld [vmem:[#allocation3 + $0x3a0] sm:$0xff]
    %v4837 = vld [vmem:[#allocation3 + $0x3a8] sm:$0xff]
    %v4838 = vld [vmem:[#allocation3 + $0x3b0] sm:$0xff]
    %v4839 = vld [vmem:[#allocation3 + $0x3b8] sm:$0xff]
    %v4840 = vld [vmem:[#allocation3 + $0x3c0] sm:$0xff]
    %v4841 = vld [vmem:[#allocation3 + $0x3c8] sm:$0xff]
    %v4842 = vld [vmem:[#allocation3 + $0x3d0] sm:$0xff]
    %v4843 = vld [vmem:[#allocation3 + $0x3d8] sm:$0xff]
    %v4844 = vld [vmem:[#allocation3 + $0x3e0] sm:$0xff]
    %v4845 = vld [vmem:[#allocation3 + $0x3e8] sm:$0xff]
    %v4846 = vld [vmem:[#allocation3 + $0x3f0] sm:$0xff]
    %v4847 = vld [vmem:[#allocation3 + $0x3f8] sm:$0xff]
    %v4848 = vpack.c.bf16 %v4709, %v4709
    %v4849 = vpack.c.bf16 %v4710, %v4710
    %v4850 = vpack.c.bf16 %v4711, %v4711
    %v4851 = vpack.c.bf16 %v4712, %v4712
    %v4852 = vpack.c.bf16 %v4713, %v4713
    %v4853 = vpack.c.bf16 %v4714, %v4714
    %v4854 = vpack.c.bf16 %v4715, %v4715
    %v4855 = vpack.c.bf16 %v4716, %v4716
    %v4856 = vunpack.c.0.s8 %v4720
    %v4857 = vunpack.c.0.s8 %v4721
    %v4858 = vunpack.c.0.s8 %v4722
    %v4859 = vunpack.c.0.s8 %v4723
    %v4860 = vunpack.c.1.s8 %v4720
    %v4861 = vunpack.c.1.s8 %v4721
    %v4862 = vunpack.c.1.s8 %v4722
    %v4863 = vunpack.c.1.s8 %v4723
    %v4864 = vunpack.c.2.s8 %v4720
    %v4865 = vunpack.c.2.s8 %v4721
    %v4866 = vunpack.c.2.s8 %v4722
    %v4867 = vunpack.c.2.s8 %v4723
    %v4868 = vunpack.c.3.s8 %v4720
    %v4869 = vunpack.c.3.s8 %v4721
    %v4870 = vunpack.c.3.s8 %v4722
    %v4871 = vunpack.c.3.s8 %v4723
    %v4872 = vunpack.c.0.s8 %v4724
    %v4873 = vunpack.c.0.s8 %v4725
    %v4874 = vunpack.c.0.s8 %v4726
    %v4875 = vunpack.c.0.s8 %v4727
    %v4876 = vunpack.c.1.s8 %v4724
    %v4877 = vunpack.c.1.s8 %v4725
    %v4878 = vunpack.c.1.s8 %v4726
    %v4879 = vunpack.c.1.s8 %v4727
    %v4880 = vunpack.c.2.s8 %v4724
    %v4881 = vunpack.c.2.s8 %v4725
    %v4882 = vunpack.c.2.s8 %v4726
    %v4883 = vunpack.c.2.s8 %v4727
    %v4884 = vunpack.c.3.s8 %v4724
    %v4885 = vunpack.c.3.s8 %v4725
    %v4886 = vunpack.c.3.s8 %v4726
    %v4887 = vunpack.c.3.s8 %v4727
    %v4888 = vunpack.c.0.s8 %v4728
    %v4889 = vunpack.c.0.s8 %v4729
    %v4890 = vunpack.c.0.s8 %v4730
    %v4891 = vunpack.c.0.s8 %v4731
    %v4892 = vunpack.c.1.s8 %v4728
    %v4893 = vunpack.c.1.s8 %v4729
    %v4894 = vunpack.c.1.s8 %v4730
    %v4895 = vunpack.c.1.s8 %v4731
    %v4896 = vunpack.c.2.s8 %v4728
    %v4897 = vunpack.c.2.s8 %v4729
    %v4898 = vunpack.c.2.s8 %v4730
    %v4899 = vunpack.c.2.s8 %v4731
    %v4900 = vunpack.c.3.s8 %v4728
    %v4901 = vunpack.c.3.s8 %v4729
    %v4902 = vunpack.c.3.s8 %v4730
    %v4903 = vunpack.c.3.s8 %v4731
    %v4904 = vunpack.c.0.s8 %v4732
    %v4905 = vunpack.c.0.s8 %v4733
    %v4906 = vunpack.c.0.s8 %v4734
    %v4907 = vunpack.c.0.s8 %v4735
    %v4908 = vunpack.c.1.s8 %v4732
    %v4909 = vunpack.c.1.s8 %v4733
    %v4910 = vunpack.c.1.s8 %v4734
    %v4911 = vunpack.c.1.s8 %v4735
    %v4912 = vunpack.c.2.s8 %v4732
    %v4913 = vunpack.c.2.s8 %v4733
    %v4914 = vunpack.c.2.s8 %v4734
    %v4915 = vunpack.c.2.s8 %v4735
    %v4916 = vunpack.c.3.s8 %v4732
    %v4917 = vunpack.c.3.s8 %v4733
    %v4918 = vunpack.c.3.s8 %v4734
    %v4919 = vunpack.c.3.s8 %v4735
    %v4920 = vunpack.c.0.s8 %v4736
    %v4921 = vunpack.c.0.s8 %v4737
    %v4922 = vunpack.c.0.s8 %v4738
    %v4923 = vunpack.c.0.s8 %v4739
    %v4924 = vunpack.c.1.s8 %v4736
    %v4925 = vunpack.c.1.s8 %v4737
    %v4926 = vunpack.c.1.s8 %v4738
    %v4927 = vunpack.c.1.s8 %v4739
    %v4928 = vunpack.c.2.s8 %v4736
    %v4929 = vunpack.c.2.s8 %v4737
    %v4930 = vunpack.c.2.s8 %v4738
    %v4931 = vunpack.c.2.s8 %v4739
    %v4932 = vunpack.c.3.s8 %v4736
    %v4933 = vunpack.c.3.s8 %v4737
    %v4934 = vunpack.c.3.s8 %v4738
    %v4935 = vunpack.c.3.s8 %v4739
    %v4936 = vunpack.c.0.s8 %v4740
    %v4937 = vunpack.c.0.s8 %v4741
    %v4938 = vunpack.c.0.s8 %v4742
    %v4939 = vunpack.c.0.s8 %v4743
    %v4940 = vunpack.c.1.s8 %v4740
    %v4941 = vunpack.c.1.s8 %v4741
    %v4942 = vunpack.c.1.s8 %v4742
    %v4943 = vunpack.c.1.s8 %v4743
    %v4944 = vunpack.c.2.s8 %v4740
    %v4945 = vunpack.c.2.s8 %v4741
    %v4946 = vunpack.c.2.s8 %v4742
    %v4947 = vunpack.c.2.s8 %v4743
    %v4948 = vunpack.c.3.s8 %v4740
    %v4949 = vunpack.c.3.s8 %v4741
    %v4950 = vunpack.c.3.s8 %v4742
    %v4951 = vunpack.c.3.s8 %v4743
    %v4952 = vunpack.c.0.s8 %v4744
    %v4953 = vunpack.c.0.s8 %v4745
    %v4954 = vunpack.c.0.s8 %v4746
    %v4955 = vunpack.c.0.s8 %v4747
    %v4956 = vunpack.c.1.s8 %v4744
    %v4957 = vunpack.c.1.s8 %v4745
    %v4958 = vunpack.c.1.s8 %v4746
    %v4959 = vunpack.c.1.s8 %v4747
    %v4960 = vunpack.c.2.s8 %v4744
    %v4961 = vunpack.c.2.s8 %v4745
    %v4962 = vunpack.c.2.s8 %v4746
    %v4963 = vunpack.c.2.s8 %v4747
    %v4964 = vunpack.c.3.s8 %v4744
    %v4965 = vunpack.c.3.s8 %v4745
    %v4966 = vunpack.c.3.s8 %v4746
    %v4967 = vunpack.c.3.s8 %v4747
    %v4968 = vunpack.c.0.s8 %v4748
    %v4969 = vunpack.c.0.s8 %v4749
    %v4970 = vunpack.c.0.s8 %v4750
    %v4971 = vunpack.c.0.s8 %v4751
    %v4972 = vunpack.c.1.s8 %v4748
    %v4973 = vunpack.c.1.s8 %v4749
    %v4974 = vunpack.c.1.s8 %v4750
    %v4975 = vunpack.c.1.s8 %v4751
    %v4976 = vunpack.c.2.s8 %v4748
    %v4977 = vunpack.c.2.s8 %v4749
    %v4978 = vunpack.c.2.s8 %v4750
    %v4979 = vunpack.c.2.s8 %v4751
    %v4980 = vunpack.c.3.s8 %v4748
    %v4981 = vunpack.c.3.s8 %v4749
    %v4982 = vunpack.c.3.s8 %v4750
    %v4983 = vunpack.c.3.s8 %v4751
    %v4984 = vunpack.c.0.s8 %v4752
    %v4985 = vunpack.c.0.s8 %v4753
    %v4986 = vunpack.c.0.s8 %v4754
    %v4987 = vunpack.c.0.s8 %v4755
    %v4988 = vunpack.c.1.s8 %v4752
    %v4989 = vunpack.c.1.s8 %v4753
    %v4990 = vunpack.c.1.s8 %v4754
    %v4991 = vunpack.c.1.s8 %v4755
    %v4992 = vunpack.c.2.s8 %v4752
    %v4993 = vunpack.c.2.s8 %v4753
    %v4994 = vunpack.c.2.s8 %v4754
    %v4995 = vunpack.c.2.s8 %v4755
    %v4996 = vunpack.c.3.s8 %v4752
    %v4997 = vunpack.c.3.s8 %v4753
    %v4998 = vunpack.c.3.s8 %v4754
    %v4999 = vunpack.c.3.s8 %v4755
    %v5000 = vunpack.c.0.s8 %v4756
    %v5001 = vunpack.c.0.s8 %v4757
    %v5002 = vunpack.c.0.s8 %v4758
    %v5003 = vunpack.c.0.s8 %v4759
    %v5004 = vunpack.c.1.s8 %v4756
    %v5005 = vunpack.c.1.s8 %v4757
    %v5006 = vunpack.c.1.s8 %v4758
    %v5007 = vunpack.c.1.s8 %v4759
    %v5008 = vunpack.c.2.s8 %v4756
    %v5009 = vunpack.c.2.s8 %v4757
    %v5010 = vunpack.c.2.s8 %v4758
    %v5011 = vunpack.c.2.s8 %v4759
    %v5012 = vunpack.c.3.s8 %v4756
    %v5013 = vunpack.c.3.s8 %v4757
    %v5014 = vunpack.c.3.s8 %v4758
    %v5015 = vunpack.c.3.s8 %v4759
    %v5016 = vunpack.c.0.s8 %v4760
    %v5017 = vunpack.c.0.s8 %v4761
    %v5018 = vunpack.c.0.s8 %v4762
    %v5019 = vunpack.c.0.s8 %v4763
    %v5020 = vunpack.c.1.s8 %v4760
    %v5021 = vunpack.c.1.s8 %v4761
    %v5022 = vunpack.c.1.s8 %v4762
    %v5023 = vunpack.c.1.s8 %v4763
    %v5024 = vunpack.c.2.s8 %v4760
    %v5025 = vunpack.c.2.s8 %v4761
    %v5026 = vunpack.c.2.s8 %v4762
    %v5027 = vunpack.c.2.s8 %v4763
    %v5028 = vunpack.c.3.s8 %v4760
    %v5029 = vunpack.c.3.s8 %v4761
    %v5030 = vunpack.c.3.s8 %v4762
    %v5031 = vunpack.c.3.s8 %v4763
    %v5032 = vunpack.c.0.s8 %v4764
    %v5033 = vunpack.c.0.s8 %v4765
    %v5034 = vunpack.c.0.s8 %v4766
    %v5035 = vunpack.c.0.s8 %v4767
    %v5036 = vunpack.c.1.s8 %v4764
    %v5037 = vunpack.c.1.s8 %v4765
    %v5038 = vunpack.c.1.s8 %v4766
    %v5039 = vunpack.c.1.s8 %v4767
    %v5040 = vunpack.c.2.s8 %v4764
    %v5041 = vunpack.c.2.s8 %v4765
    %v5042 = vunpack.c.2.s8 %v4766
    %v5043 = vunpack.c.2.s8 %v4767
    %v5044 = vunpack.c.3.s8 %v4764
    %v5045 = vunpack.c.3.s8 %v4765
    %v5046 = vunpack.c.3.s8 %v4766
    %v5047 = vunpack.c.3.s8 %v4767
    %v5048 = vunpack.c.0.s8 %v4768
    %v5049 = vunpack.c.0.s8 %v4769
    %v5050 = vunpack.c.0.s8 %v4770
    %v5051 = vunpack.c.0.s8 %v4771
    %v5052 = vunpack.c.1.s8 %v4768
    %v5053 = vunpack.c.1.s8 %v4769
    %v5054 = vunpack.c.1.s8 %v4770
    %v5055 = vunpack.c.1.s8 %v4771
    %v5056 = vunpack.c.2.s8 %v4768
    %v5057 = vunpack.c.2.s8 %v4769
    %v5058 = vunpack.c.2.s8 %v4770
    %v5059 = vunpack.c.2.s8 %v4771
    %v5060 = vunpack.c.3.s8 %v4768
    %v5061 = vunpack.c.3.s8 %v4769
    %v5062 = vunpack.c.3.s8 %v4770
    %v5063 = vunpack.c.3.s8 %v4771
    %v5064 = vunpack.c.0.s8 %v4772
    %v5065 = vunpack.c.0.s8 %v4773
    %v5066 = vunpack.c.0.s8 %v4774
    %v5067 = vunpack.c.0.s8 %v4775
    %v5068 = vunpack.c.1.s8 %v4772
    %v5069 = vunpack.c.1.s8 %v4773
    %v5070 = vunpack.c.1.s8 %v4774
    %v5071 = vunpack.c.1.s8 %v4775
    %v5072 = vunpack.c.2.s8 %v4772
    %v5073 = vunpack.c.2.s8 %v4773
    %v5074 = vunpack.c.2.s8 %v4774
    %v5075 = vunpack.c.2.s8 %v4775
    %v5076 = vunpack.c.3.s8 %v4772
    %v5077 = vunpack.c.3.s8 %v4773
    %v5078 = vunpack.c.3.s8 %v4774
    %v5079 = vunpack.c.3.s8 %v4775
    %v5080 = vunpack.c.0.s8 %v4776
    %v5081 = vunpack.c.0.s8 %v4777
    %v5082 = vunpack.c.0.s8 %v4778
    %v5083 = vunpack.c.0.s8 %v4779
    %v5084 = vunpack.c.1.s8 %v4776
    %v5085 = vunpack.c.1.s8 %v4777
    %v5086 = vunpack.c.1.s8 %v4778
    %v5087 = vunpack.c.1.s8 %v4779
    %v5088 = vunpack.c.2.s8 %v4776
    %v5089 = vunpack.c.2.s8 %v4777
    %v5090 = vunpack.c.2.s8 %v4778
    %v5091 = vunpack.c.2.s8 %v4779
    %v5092 = vunpack.c.3.s8 %v4776
    %v5093 = vunpack.c.3.s8 %v4777
    %v5094 = vunpack.c.3.s8 %v4778
    %v5095 = vunpack.c.3.s8 %v4779
    %v5096 = vunpack.c.0.s8 %v4780
    %v5097 = vunpack.c.0.s8 %v4781
    %v5098 = vunpack.c.0.s8 %v4782
    %v5099 = vunpack.c.0.s8 %v4783
    %v5100 = vunpack.c.1.s8 %v4780
    %v5101 = vunpack.c.1.s8 %v4781
    %v5102 = vunpack.c.1.s8 %v4782
    %v5103 = vunpack.c.1.s8 %v4783
    %v5104 = vunpack.c.2.s8 %v4780
    %v5105 = vunpack.c.2.s8 %v4781
    %v5106 = vunpack.c.2.s8 %v4782
    %v5107 = vunpack.c.2.s8 %v4783
    %v5108 = vunpack.c.3.s8 %v4780
    %v5109 = vunpack.c.3.s8 %v4781
    %v5110 = vunpack.c.3.s8 %v4782
    %v5111 = vunpack.c.3.s8 %v4783
    %v5112 = vunpack.c.0.s8 %v4784
    %v5113 = vunpack.c.0.s8 %v4785
    %v5114 = vunpack.c.0.s8 %v4786
    %v5115 = vunpack.c.0.s8 %v4787
    %v5116 = vunpack.c.1.s8 %v4784
    %v5117 = vunpack.c.1.s8 %v4785
    %v5118 = vunpack.c.1.s8 %v4786
    %v5119 = vunpack.c.1.s8 %v4787
    %v5120 = vunpack.c.2.s8 %v4784
    %v5121 = vunpack.c.2.s8 %v4785
    %v5122 = vunpack.c.2.s8 %v4786
    %v5123 = vunpack.c.2.s8 %v4787
    %v5124 = vunpack.c.3.s8 %v4784
    %v5125 = vunpack.c.3.s8 %v4785
    %v5126 = vunpack.c.3.s8 %v4786
    %v5127 = vunpack.c.3.s8 %v4787
    %v5128 = vunpack.c.0.s8 %v4788
    %v5129 = vunpack.c.0.s8 %v4789
    %v5130 = vunpack.c.0.s8 %v4790
    %v5131 = vunpack.c.0.s8 %v4791
    %v5132 = vunpack.c.1.s8 %v4788
    %v5133 = vunpack.c.1.s8 %v4789
    %v5134 = vunpack.c.1.s8 %v4790
    %v5135 = vunpack.c.1.s8 %v4791
    %v5136 = vunpack.c.2.s8 %v4788
    %v5137 = vunpack.c.2.s8 %v4789
    %v5138 = vunpack.c.2.s8 %v4790
    %v5139 = vunpack.c.2.s8 %v4791
    %v5140 = vunpack.c.3.s8 %v4788
    %v5141 = vunpack.c.3.s8 %v4789
    %v5142 = vunpack.c.3.s8 %v4790
    %v5143 = vunpack.c.3.s8 %v4791
    %v5144 = vunpack.c.0.s8 %v4792
    %v5145 = vunpack.c.0.s8 %v4793
    %v5146 = vunpack.c.0.s8 %v4794
    %v5147 = vunpack.c.0.s8 %v4795
    %v5148 = vunpack.c.1.s8 %v4792
    %v5149 = vunpack.c.1.s8 %v4793
    %v5150 = vunpack.c.1.s8 %v4794
    %v5151 = vunpack.c.1.s8 %v4795
    %v5152 = vunpack.c.2.s8 %v4792
    %v5153 = vunpack.c.2.s8 %v4793
    %v5154 = vunpack.c.2.s8 %v4794
    %v5155 = vunpack.c.2.s8 %v4795
    %v5156 = vunpack.c.3.s8 %v4792
    %v5157 = vunpack.c.3.s8 %v4793
    %v5158 = vunpack.c.3.s8 %v4794
    %v5159 = vunpack.c.3.s8 %v4795
    %v5160 = vunpack.c.0.s8 %v4796
    %v5161 = vunpack.c.0.s8 %v4797
    %v5162 = vunpack.c.0.s8 %v4798
    %v5163 = vunpack.c.0.s8 %v4799
    %v5164 = vunpack.c.1.s8 %v4796
    %v5165 = vunpack.c.1.s8 %v4797
    %v5166 = vunpack.c.1.s8 %v4798
    %v5167 = vunpack.c.1.s8 %v4799
    %v5168 = vunpack.c.2.s8 %v4796
    %v5169 = vunpack.c.2.s8 %v4797
    %v5170 = vunpack.c.2.s8 %v4798
    %v5171 = vunpack.c.2.s8 %v4799
    %v5172 = vunpack.c.3.s8 %v4796
    %v5173 = vunpack.c.3.s8 %v4797
    %v5174 = vunpack.c.3.s8 %v4798
    %v5175 = vunpack.c.3.s8 %v4799
    %v5176 = vunpack.c.0.s8 %v4800
    %v5177 = vunpack.c.0.s8 %v4801
    %v5178 = vunpack.c.0.s8 %v4802
    %v5179 = vunpack.c.0.s8 %v4803
    %v5180 = vunpack.c.1.s8 %v4800
    %v5181 = vunpack.c.1.s8 %v4801
    %v5182 = vunpack.c.1.s8 %v4802
    %v5183 = vunpack.c.1.s8 %v4803
    %v5184 = vunpack.c.2.s8 %v4800
    %v5185 = vunpack.c.2.s8 %v4801
    %v5186 = vunpack.c.2.s8 %v4802
    %v5187 = vunpack.c.2.s8 %v4803
    %v5188 = vunpack.c.3.s8 %v4800
    %v5189 = vunpack.c.3.s8 %v4801
    %v5190 = vunpack.c.3.s8 %v4802
    %v5191 = vunpack.c.3.s8 %v4803
    %v5192 = vunpack.c.0.s8 %v4804
    %v5193 = vunpack.c.0.s8 %v4805
    %v5194 = vunpack.c.0.s8 %v4806
    %v5195 = vunpack.c.0.s8 %v4807
    %v5196 = vunpack.c.1.s8 %v4804
    %v5197 = vunpack.c.1.s8 %v4805
    %v5198 = vunpack.c.1.s8 %v4806
    %v5199 = vunpack.c.1.s8 %v4807
    %v5200 = vunpack.c.2.s8 %v4804
    %v5201 = vunpack.c.2.s8 %v4805
    %v5202 = vunpack.c.2.s8 %v4806
    %v5203 = vunpack.c.2.s8 %v4807
    %v5204 = vunpack.c.3.s8 %v4804
    %v5205 = vunpack.c.3.s8 %v4805
    %v5206 = vunpack.c.3.s8 %v4806
    %v5207 = vunpack.c.3.s8 %v4807
    %v5208 = vunpack.c.0.s8 %v4808
    %v5209 = vunpack.c.0.s8 %v4809
    %v5210 = vunpack.c.0.s8 %v4810
    %v5211 = vunpack.c.0.s8 %v4811
    %v5212 = vunpack.c.1.s8 %v4808
    %v5213 = vunpack.c.1.s8 %v4809
    %v5214 = vunpack.c.1.s8 %v4810
    %v5215 = vunpack.c.1.s8 %v4811
    %v5216 = vunpack.c.2.s8 %v4808
    %v5217 = vunpack.c.2.s8 %v4809
    %v5218 = vunpack.c.2.s8 %v4810
    %v5219 = vunpack.c.2.s8 %v4811
    %v5220 = vunpack.c.3.s8 %v4808
    %v5221 = vunpack.c.3.s8 %v4809
    %v5222 = vunpack.c.3.s8 %v4810
    %v5223 = vunpack.c.3.s8 %v4811
    %v5224 = vunpack.c.0.s8 %v4812
    %v5225 = vunpack.c.0.s8 %v4813
    %v5226 = vunpack.c.0.s8 %v4814
    %v5227 = vunpack.c.0.s8 %v4815
    %v5228 = vunpack.c.1.s8 %v4812
    %v5229 = vunpack.c.1.s8 %v4813
    %v5230 = vunpack.c.1.s8 %v4814
    %v5231 = vunpack.c.1.s8 %v4815
    %v5232 = vunpack.c.2.s8 %v4812
    %v5233 = vunpack.c.2.s8 %v4813
    %v5234 = vunpack.c.2.s8 %v4814
    %v5235 = vunpack.c.2.s8 %v4815
    %v5236 = vunpack.c.3.s8 %v4812
    %v5237 = vunpack.c.3.s8 %v4813
    %v5238 = vunpack.c.3.s8 %v4814
    %v5239 = vunpack.c.3.s8 %v4815
    %v5240 = vunpack.c.0.s8 %v4816
    %v5241 = vunpack.c.0.s8 %v4817
    %v5242 = vunpack.c.0.s8 %v4818
    %v5243 = vunpack.c.0.s8 %v4819
    %v5244 = vunpack.c.1.s8 %v4816
    %v5245 = vunpack.c.1.s8 %v4817
    %v5246 = vunpack.c.1.s8 %v4818
    %v5247 = vunpack.c.1.s8 %v4819
    %v5248 = vunpack.c.2.s8 %v4816
    %v5249 = vunpack.c.2.s8 %v4817
    %v5250 = vunpack.c.2.s8 %v4818
    %v5251 = vunpack.c.2.s8 %v4819
    %v5252 = vunpack.c.3.s8 %v4816
    %v5253 = vunpack.c.3.s8 %v4817
    %v5254 = vunpack.c.3.s8 %v4818
    %v5255 = vunpack.c.3.s8 %v4819
    %v5256 = vunpack.c.0.s8 %v4820
    %v5257 = vunpack.c.0.s8 %v4821
    %v5258 = vunpack.c.0.s8 %v4822
    %v5259 = vunpack.c.0.s8 %v4823
    %v5260 = vunpack.c.1.s8 %v4820
    %v5261 = vunpack.c.1.s8 %v4821
    %v5262 = vunpack.c.1.s8 %v4822
    %v5263 = vunpack.c.1.s8 %v4823
    %v5264 = vunpack.c.2.s8 %v4820
    %v5265 = vunpack.c.2.s8 %v4821
    %v5266 = vunpack.c.2.s8 %v4822
    %v5267 = vunpack.c.2.s8 %v4823
    %v5268 = vunpack.c.3.s8 %v4820
    %v5269 = vunpack.c.3.s8 %v4821
    %v5270 = vunpack.c.3.s8 %v4822
    %v5271 = vunpack.c.3.s8 %v4823
    %v5272 = vunpack.c.0.s8 %v4824
    %v5273 = vunpack.c.0.s8 %v4825
    %v5274 = vunpack.c.0.s8 %v4826
    %v5275 = vunpack.c.0.s8 %v4827
    %v5276 = vunpack.c.1.s8 %v4824
    %v5277 = vunpack.c.1.s8 %v4825
    %v5278 = vunpack.c.1.s8 %v4826
    %v5279 = vunpack.c.1.s8 %v4827
    %v5280 = vunpack.c.2.s8 %v4824
    %v5281 = vunpack.c.2.s8 %v4825
    %v5282 = vunpack.c.2.s8 %v4826
    %v5283 = vunpack.c.2.s8 %v4827
    %v5284 = vunpack.c.3.s8 %v4824
    %v5285 = vunpack.c.3.s8 %v4825
    %v5286 = vunpack.c.3.s8 %v4826
    %v5287 = vunpack.c.3.s8 %v4827
    %v5288 = vunpack.c.0.s8 %v4828
    %v5289 = vunpack.c.0.s8 %v4829
    %v5290 = vunpack.c.0.s8 %v4830
    %v5291 = vunpack.c.0.s8 %v4831
    %v5292 = vunpack.c.1.s8 %v4828
    %v5293 = vunpack.c.1.s8 %v4829
    %v5294 = vunpack.c.1.s8 %v4830
    %v5295 = vunpack.c.1.s8 %v4831
    %v5296 = vunpack.c.2.s8 %v4828
    %v5297 = vunpack.c.2.s8 %v4829
    %v5298 = vunpack.c.2.s8 %v4830
    %v5299 = vunpack.c.2.s8 %v4831
    %v5300 = vunpack.c.3.s8 %v4828
    %v5301 = vunpack.c.3.s8 %v4829
    %v5302 = vunpack.c.3.s8 %v4830
    %v5303 = vunpack.c.3.s8 %v4831
    %v5304 = vunpack.c.0.s8 %v4832
    %v5305 = vunpack.c.0.s8 %v4833
    %v5306 = vunpack.c.0.s8 %v4834
    %v5307 = vunpack.c.0.s8 %v4835
    %v5308 = vunpack.c.1.s8 %v4832
    %v5309 = vunpack.c.1.s8 %v4833
    %v5310 = vunpack.c.1.s8 %v4834
    %v5311 = vunpack.c.1.s8 %v4835
    %v5312 = vunpack.c.2.s8 %v4832
    %v5313 = vunpack.c.2.s8 %v4833
    %v5314 = vunpack.c.2.s8 %v4834
    %v5315 = vunpack.c.2.s8 %v4835
    %v5316 = vunpack.c.3.s8 %v4832
    %v5317 = vunpack.c.3.s8 %v4833
    %v5318 = vunpack.c.3.s8 %v4834
    %v5319 = vunpack.c.3.s8 %v4835
    %v5320 = vunpack.c.0.s8 %v4836
    %v5321 = vunpack.c.0.s8 %v4837
    %v5322 = vunpack.c.0.s8 %v4838
    %v5323 = vunpack.c.0.s8 %v4839
    %v5324 = vunpack.c.1.s8 %v4836
    %v5325 = vunpack.c.1.s8 %v4837
    %v5326 = vunpack.c.1.s8 %v4838
    %v5327 = vunpack.c.1.s8 %v4839
    %v5328 = vunpack.c.2.s8 %v4836
    %v5329 = vunpack.c.2.s8 %v4837
    %v5330 = vunpack.c.2.s8 %v4838
    %v5331 = vunpack.c.2.s8 %v4839
    %v5332 = vunpack.c.3.s8 %v4836
    %v5333 = vunpack.c.3.s8 %v4837
    %v5334 = vunpack.c.3.s8 %v4838
    %v5335 = vunpack.c.3.s8 %v4839
    %v5336 = vunpack.c.0.s8 %v4840
    %v5337 = vunpack.c.0.s8 %v4841
    %v5338 = vunpack.c.0.s8 %v4842
    %v5339 = vunpack.c.0.s8 %v4843
    %v5340 = vunpack.c.1.s8 %v4840
    %v5341 = vunpack.c.1.s8 %v4841
    %v5342 = vunpack.c.1.s8 %v4842
    %v5343 = vunpack.c.1.s8 %v4843
    %v5344 = vunpack.c.2.s8 %v4840
    %v5345 = vunpack.c.2.s8 %v4841
    %v5346 = vunpack.c.2.s8 %v4842
    %v5347 = vunpack.c.2.s8 %v4843
    %v5348 = vunpack.c.3.s8 %v4840
    %v5349 = vunpack.c.3.s8 %v4841
    %v5350 = vunpack.c.3.s8 %v4842
    %v5351 = vunpack.c.3.s8 %v4843
    %v5352 = vunpack.c.0.s8 %v4844
    %v5353 = vunpack.c.0.s8 %v4845
    %v5354 = vunpack.c.0.s8 %v4846
    %v5355 = vunpack.c.0.s8 %v4847
    %v5356 = vunpack.c.1.s8 %v4844
    %v5357 = vunpack.c.1.s8 %v4845
    %v5358 = vunpack.c.1.s8 %v4846
    %v5359 = vunpack.c.1.s8 %v4847
    %v5360 = vunpack.c.2.s8 %v4844
    %v5361 = vunpack.c.2.s8 %v4845
    %v5362 = vunpack.c.2.s8 %v4846
    %v5363 = vunpack.c.2.s8 %v4847
    %v5364 = vunpack.c.3.s8 %v4844
    %v5365 = vunpack.c.3.s8 %v4845
    %v5366 = vunpack.c.3.s8 %v4846
    %v5367 = vunpack.c.3.s8 %v4847
    %v5368 = vcvt.s32.f32 %v4856
    %v5369 = vcvt.s32.f32 %v4857
    %v5370 = vcvt.s32.f32 %v4858
    %v5371 = vcvt.s32.f32 %v4859
    %v5372 = vcvt.s32.f32 %v4860
    %v5373 = vcvt.s32.f32 %v4861
    %v5374 = vcvt.s32.f32 %v4862
    %v5375 = vcvt.s32.f32 %v4863
    %v5376 = vcvt.s32.f32 %v4864
    %v5377 = vcvt.s32.f32 %v4865
    %v5378 = vcvt.s32.f32 %v4866
    %v5379 = vcvt.s32.f32 %v4867
    %v5380 = vcvt.s32.f32 %v4868
    %v5381 = vcvt.s32.f32 %v4869
    %v5382 = vcvt.s32.f32 %v4870
    %v5383 = vcvt.s32.f32 %v4871
    %v5384 = vcvt.s32.f32 %v4872
    %v5385 = vcvt.s32.f32 %v4873
    %v5386 = vcvt.s32.f32 %v4874
    %v5387 = vcvt.s32.f32 %v4875
    %v5388 = vcvt.s32.f32 %v4876
    %v5389 = vcvt.s32.f32 %v4877
    %v5390 = vcvt.s32.f32 %v4878
    %v5391 = vcvt.s32.f32 %v4879
    %v5392 = vcvt.s32.f32 %v4880
    %v5393 = vcvt.s32.f32 %v4881
    %v5394 = vcvt.s32.f32 %v4882
    %v5395 = vcvt.s32.f32 %v4883
    %v5396 = vcvt.s32.f32 %v4884
    %v5397 = vcvt.s32.f32 %v4885
    %v5398 = vcvt.s32.f32 %v4886
    %v5399 = vcvt.s32.f32 %v4887
    %v5400 = vcvt.s32.f32 %v4888
    %v5401 = vcvt.s32.f32 %v4889
    %v5402 = vcvt.s32.f32 %v4890
    %v5403 = vcvt.s32.f32 %v4891
    %v5404 = vcvt.s32.f32 %v4892
    %v5405 = vcvt.s32.f32 %v4893
    %v5406 = vcvt.s32.f32 %v4894
    %v5407 = vcvt.s32.f32 %v4895
    %v5408 = vcvt.s32.f32 %v4896
    %v5409 = vcvt.s32.f32 %v4897
    %v5410 = vcvt.s32.f32 %v4898
    %v5411 = vcvt.s32.f32 %v4899
    %v5412 = vcvt.s32.f32 %v4900
    %v5413 = vcvt.s32.f32 %v4901
    %v5414 = vcvt.s32.f32 %v4902
    %v5415 = vcvt.s32.f32 %v4903
    %v5416 = vcvt.s32.f32 %v4904
    %v5417 = vcvt.s32.f32 %v4905
    %v5418 = vcvt.s32.f32 %v4906
    %v5419 = vcvt.s32.f32 %v4907
    %v5420 = vcvt.s32.f32 %v4908
    %v5421 = vcvt.s32.f32 %v4909
    %v5422 = vcvt.s32.f32 %v4910
    %v5423 = vcvt.s32.f32 %v4911
    %v5424 = vcvt.s32.f32 %v4912
    %v5425 = vcvt.s32.f32 %v4913
    %v5426 = vcvt.s32.f32 %v4914
    %v5427 = vcvt.s32.f32 %v4915
    %v5428 = vcvt.s32.f32 %v4916
    %v5429 = vcvt.s32.f32 %v4917
    %v5430 = vcvt.s32.f32 %v4918
    %v5431 = vcvt.s32.f32 %v4919
    %v5432 = vcvt.s32.f32 %v4920
    %v5433 = vcvt.s32.f32 %v4921
    %v5434 = vcvt.s32.f32 %v4922
    %v5435 = vcvt.s32.f32 %v4923
    %v5436 = vcvt.s32.f32 %v4924
    %v5437 = vcvt.s32.f32 %v4925
    %v5438 = vcvt.s32.f32 %v4926
    %v5439 = vcvt.s32.f32 %v4927
    %v5440 = vcvt.s32.f32 %v4928
    %v5441 = vcvt.s32.f32 %v4929
    %v5442 = vcvt.s32.f32 %v4930
    %v5443 = vcvt.s32.f32 %v4931
    %v5444 = vcvt.s32.f32 %v4932
    %v5445 = vcvt.s32.f32 %v4933
    %v5446 = vcvt.s32.f32 %v4934
    %v5447 = vcvt.s32.f32 %v4935
    %v5448 = vcvt.s32.f32 %v4936
    %v5449 = vcvt.s32.f32 %v4937
    %v5450 = vcvt.s32.f32 %v4938
    %v5451 = vcvt.s32.f32 %v4939
    %v5452 = vcvt.s32.f32 %v4940
    %v5453 = vcvt.s32.f32 %v4941
    %v5454 = vcvt.s32.f32 %v4942
    %v5455 = vcvt.s32.f32 %v4943
    %v5456 = vcvt.s32.f32 %v4944
    %v5457 = vcvt.s32.f32 %v4945
    %v5458 = vcvt.s32.f32 %v4946
    %v5459 = vcvt.s32.f32 %v4947
    %v5460 = vcvt.s32.f32 %v4948
    %v5461 = vcvt.s32.f32 %v4949
    %v5462 = vcvt.s32.f32 %v4950
    %v5463 = vcvt.s32.f32 %v4951
    %v5464 = vcvt.s32.f32 %v4952
    %v5465 = vcvt.s32.f32 %v4953
    %v5466 = vcvt.s32.f32 %v4954
    %v5467 = vcvt.s32.f32 %v4955
    %v5468 = vcvt.s32.f32 %v4956
    %v5469 = vcvt.s32.f32 %v4957
    %v5470 = vcvt.s32.f32 %v4958
    %v5471 = vcvt.s32.f32 %v4959
    %v5472 = vcvt.s32.f32 %v4960
    %v5473 = vcvt.s32.f32 %v4961
    %v5474 = vcvt.s32.f32 %v4962
    %v5475 = vcvt.s32.f32 %v4963
    %v5476 = vcvt.s32.f32 %v4964
    %v5477 = vcvt.s32.f32 %v4965
    %v5478 = vcvt.s32.f32 %v4966
    %v5479 = vcvt.s32.f32 %v4967
    %v5480 = vcvt.s32.f32 %v4968
    %v5481 = vcvt.s32.f32 %v4969
    %v5482 = vcvt.s32.f32 %v4970
    %v5483 = vcvt.s32.f32 %v4971
    %v5484 = vcvt.s32.f32 %v4972
    %v5485 = vcvt.s32.f32 %v4973
    %v5486 = vcvt.s32.f32 %v4974
    %v5487 = vcvt.s32.f32 %v4975
    %v5488 = vcvt.s32.f32 %v4976
    %v5489 = vcvt.s32.f32 %v4977
    %v5490 = vcvt.s32.f32 %v4978
    %v5491 = vcvt.s32.f32 %v4979
    %v5492 = vcvt.s32.f32 %v4980
    %v5493 = vcvt.s32.f32 %v4981
    %v5494 = vcvt.s32.f32 %v4982
    %v5495 = vcvt.s32.f32 %v4983
    %v5496 = vcvt.s32.f32 %v4984
    %v5497 = vcvt.s32.f32 %v4985
    %v5498 = vcvt.s32.f32 %v4986
    %v5499 = vcvt.s32.f32 %v4987
    %v5500 = vcvt.s32.f32 %v4988
    %v5501 = vcvt.s32.f32 %v4989
    %v5502 = vcvt.s32.f32 %v4990
    %v5503 = vcvt.s32.f32 %v4991
    %v5504 = vcvt.s32.f32 %v4992
    %v5505 = vcvt.s32.f32 %v4993
    %v5506 = vcvt.s32.f32 %v4994
    %v5507 = vcvt.s32.f32 %v4995
    %v5508 = vcvt.s32.f32 %v4996
    %v5509 = vcvt.s32.f32 %v4997
    %v5510 = vcvt.s32.f32 %v4998
    %v5511 = vcvt.s32.f32 %v4999
    %v5512 = vcvt.s32.f32 %v5000
    %v5513 = vcvt.s32.f32 %v5001
    %v5514 = vcvt.s32.f32 %v5002
    %v5515 = vcvt.s32.f32 %v5003
    %v5516 = vcvt.s32.f32 %v5004
    %v5517 = vcvt.s32.f32 %v5005
    %v5518 = vcvt.s32.f32 %v5006
    %v5519 = vcvt.s32.f32 %v5007
    %v5520 = vcvt.s32.f32 %v5008
    %v5521 = vcvt.s32.f32 %v5009
    %v5522 = vcvt.s32.f32 %v5010
    %v5523 = vcvt.s32.f32 %v5011
    %v5524 = vcvt.s32.f32 %v5012
    %v5525 = vcvt.s32.f32 %v5013
    %v5526 = vcvt.s32.f32 %v5014
    %v5527 = vcvt.s32.f32 %v5015
    %v5528 = vcvt.s32.f32 %v5016
    %v5529 = vcvt.s32.f32 %v5017
    %v5530 = vcvt.s32.f32 %v5018
    %v5531 = vcvt.s32.f32 %v5019
    %v5532 = vcvt.s32.f32 %v5020
    %v5533 = vcvt.s32.f32 %v5021
    %v5534 = vcvt.s32.f32 %v5022
    %v5535 = vcvt.s32.f32 %v5023
    %v5536 = vcvt.s32.f32 %v5024
    %v5537 = vcvt.s32.f32 %v5025
    %v5538 = vcvt.s32.f32 %v5026
    %v5539 = vcvt.s32.f32 %v5027
    %v5540 = vcvt.s32.f32 %v5028
    %v5541 = vcvt.s32.f32 %v5029
    %v5542 = vcvt.s32.f32 %v5030
    %v5543 = vcvt.s32.f32 %v5031
    %v5544 = vcvt.s32.f32 %v5032
    %v5545 = vcvt.s32.f32 %v5033
    %v5546 = vcvt.s32.f32 %v5034
    %v5547 = vcvt.s32.f32 %v5035
    %v5548 = vcvt.s32.f32 %v5036
    %v5549 = vcvt.s32.f32 %v5037
    %v5550 = vcvt.s32.f32 %v5038
    %v5551 = vcvt.s32.f32 %v5039
    %v5552 = vcvt.s32.f32 %v5040
    %v5553 = vcvt.s32.f32 %v5041
    %v5554 = vcvt.s32.f32 %v5042
    %v5555 = vcvt.s32.f32 %v5043
    %v5556 = vcvt.s32.f32 %v5044
    %v5557 = vcvt.s32.f32 %v5045
    %v5558 = vcvt.s32.f32 %v5046
    %v5559 = vcvt.s32.f32 %v5047
    %v5560 = vcvt.s32.f32 %v5048
    %v5561 = vcvt.s32.f32 %v5049
    %v5562 = vcvt.s32.f32 %v5050
    %v5563 = vcvt.s32.f32 %v5051
    %v5564 = vcvt.s32.f32 %v5052
    %v5565 = vcvt.s32.f32 %v5053
    %v5566 = vcvt.s32.f32 %v5054
    %v5567 = vcvt.s32.f32 %v5055
    %v5568 = vcvt.s32.f32 %v5056
    %v5569 = vcvt.s32.f32 %v5057
    %v5570 = vcvt.s32.f32 %v5058
    %v5571 = vcvt.s32.f32 %v5059
    %v5572 = vcvt.s32.f32 %v5060
    %v5573 = vcvt.s32.f32 %v5061
    %v5574 = vcvt.s32.f32 %v5062
    %v5575 = vcvt.s32.f32 %v5063
    %v5576 = vcvt.s32.f32 %v5064
    %v5577 = vcvt.s32.f32 %v5065
    %v5578 = vcvt.s32.f32 %v5066
    %v5579 = vcvt.s32.f32 %v5067
    %v5580 = vcvt.s32.f32 %v5068
    %v5581 = vcvt.s32.f32 %v5069
    %v5582 = vcvt.s32.f32 %v5070
    %v5583 = vcvt.s32.f32 %v5071
    %v5584 = vcvt.s32.f32 %v5072
    %v5585 = vcvt.s32.f32 %v5073
    %v5586 = vcvt.s32.f32 %v5074
    %v5587 = vcvt.s32.f32 %v5075
    %v5588 = vcvt.s32.f32 %v5076
    %v5589 = vcvt.s32.f32 %v5077
    %v5590 = vcvt.s32.f32 %v5078
    %v5591 = vcvt.s32.f32 %v5079
    %v5592 = vcvt.s32.f32 %v5080
    %v5593 = vcvt.s32.f32 %v5081
    %v5594 = vcvt.s32.f32 %v5082
    %v5595 = vcvt.s32.f32 %v5083
    %v5596 = vcvt.s32.f32 %v5084
    %v5597 = vcvt.s32.f32 %v5085
    %v5598 = vcvt.s32.f32 %v5086
    %v5599 = vcvt.s32.f32 %v5087
    %v5600 = vcvt.s32.f32 %v5088
    %v5601 = vcvt.s32.f32 %v5089
    %v5602 = vcvt.s32.f32 %v5090
    %v5603 = vcvt.s32.f32 %v5091
    %v5604 = vcvt.s32.f32 %v5092
    %v5605 = vcvt.s32.f32 %v5093
    %v5606 = vcvt.s32.f32 %v5094
    %v5607 = vcvt.s32.f32 %v5095
    %v5608 = vcvt.s32.f32 %v5096
    %v5609 = vcvt.s32.f32 %v5097
    %v5610 = vcvt.s32.f32 %v5098
    %v5611 = vcvt.s32.f32 %v5099
    %v5612 = vcvt.s32.f32 %v5100
    %v5613 = vcvt.s32.f32 %v5101
    %v5614 = vcvt.s32.f32 %v5102
    %v5615 = vcvt.s32.f32 %v5103
    %v5616 = vcvt.s32.f32 %v5104
    %v5617 = vcvt.s32.f32 %v5105
    %v5618 = vcvt.s32.f32 %v5106
    %v5619 = vcvt.s32.f32 %v5107
    %v5620 = vcvt.s32.f32 %v5108
    %v5621 = vcvt.s32.f32 %v5109
    %v5622 = vcvt.s32.f32 %v5110
    %v5623 = vcvt.s32.f32 %v5111
    %v5624 = vcvt.s32.f32 %v5112
    %v5625 = vcvt.s32.f32 %v5113
    %v5626 = vcvt.s32.f32 %v5114
    %v5627 = vcvt.s32.f32 %v5115
    %v5628 = vcvt.s32.f32 %v5116
    %v5629 = vcvt.s32.f32 %v5117
    %v5630 = vcvt.s32.f32 %v5118
    %v5631 = vcvt.s32.f32 %v5119
    %v5632 = vcvt.s32.f32 %v5120
    %v5633 = vcvt.s32.f32 %v5121
    %v5634 = vcvt.s32.f32 %v5122
    %v5635 = vcvt.s32.f32 %v5123
    %v5636 = vcvt.s32.f32 %v5124
    %v5637 = vcvt.s32.f32 %v5125
    %v5638 = vcvt.s32.f32 %v5126
    %v5639 = vcvt.s32.f32 %v5127
    %v5640 = vcvt.s32.f32 %v5128
    %v5641 = vcvt.s32.f32 %v5129
    %v5642 = vcvt.s32.f32 %v5130
    %v5643 = vcvt.s32.f32 %v5131
    %v5644 = vcvt.s32.f32 %v5132
    %v5645 = vcvt.s32.f32 %v5133
    %v5646 = vcvt.s32.f32 %v5134
    %v5647 = vcvt.s32.f32 %v5135
    %v5648 = vcvt.s32.f32 %v5136
    %v5649 = vcvt.s32.f32 %v5137
    %v5650 = vcvt.s32.f32 %v5138
    %v5651 = vcvt.s32.f32 %v5139
    %v5652 = vcvt.s32.f32 %v5140
    %v5653 = vcvt.s32.f32 %v5141
    %v5654 = vcvt.s32.f32 %v5142
    %v5655 = vcvt.s32.f32 %v5143
    %v5656 = vcvt.s32.f32 %v5144
    %v5657 = vcvt.s32.f32 %v5145
    %v5658 = vcvt.s32.f32 %v5146
    %v5659 = vcvt.s32.f32 %v5147
    %v5660 = vcvt.s32.f32 %v5148
    %v5661 = vcvt.s32.f32 %v5149
    %v5662 = vcvt.s32.f32 %v5150
    %v5663 = vcvt.s32.f32 %v5151
    %v5664 = vcvt.s32.f32 %v5152
    %v5665 = vcvt.s32.f32 %v5153
    %v5666 = vcvt.s32.f32 %v5154
    %v5667 = vcvt.s32.f32 %v5155
    %v5668 = vcvt.s32.f32 %v5156
    %v5669 = vcvt.s32.f32 %v5157
    %v5670 = vcvt.s32.f32 %v5158
    %v5671 = vcvt.s32.f32 %v5159
    %v5672 = vcvt.s32.f32 %v5160
    %v5673 = vcvt.s32.f32 %v5161
    %v5674 = vcvt.s32.f32 %v5162
    %v5675 = vcvt.s32.f32 %v5163
    %v5676 = vcvt.s32.f32 %v5164
    %v5677 = vcvt.s32.f32 %v5165
    %v5678 = vcvt.s32.f32 %v5166
    %v5679 = vcvt.s32.f32 %v5167
    %v5680 = vcvt.s32.f32 %v5168
    %v5681 = vcvt.s32.f32 %v5169
    %v5682 = vcvt.s32.f32 %v5170
    %v5683 = vcvt.s32.f32 %v5171
    %v5684 = vcvt.s32.f32 %v5172
    %v5685 = vcvt.s32.f32 %v5173
    %v5686 = vcvt.s32.f32 %v5174
    %v5687 = vcvt.s32.f32 %v5175
    %v5688 = vcvt.s32.f32 %v5176
    %v5689 = vcvt.s32.f32 %v5177
    %v5690 = vcvt.s32.f32 %v5178
    %v5691 = vcvt.s32.f32 %v5179
    %v5692 = vcvt.s32.f32 %v5180
    %v5693 = vcvt.s32.f32 %v5181
    %v5694 = vcvt.s32.f32 %v5182
    %v5695 = vcvt.s32.f32 %v5183
    %v5696 = vcvt.s32.f32 %v5184
    %v5697 = vcvt.s32.f32 %v5185
    %v5698 = vcvt.s32.f32 %v5186
    %v5699 = vcvt.s32.f32 %v5187
    %v5700 = vcvt.s32.f32 %v5188
    %v5701 = vcvt.s32.f32 %v5189
    %v5702 = vcvt.s32.f32 %v5190
    %v5703 = vcvt.s32.f32 %v5191
    %v5704 = vcvt.s32.f32 %v5192
    %v5705 = vcvt.s32.f32 %v5193
    %v5706 = vcvt.s32.f32 %v5194
    %v5707 = vcvt.s32.f32 %v5195
    %v5708 = vcvt.s32.f32 %v5196
    %v5709 = vcvt.s32.f32 %v5197
    %v5710 = vcvt.s32.f32 %v5198
    %v5711 = vcvt.s32.f32 %v5199
    %v5712 = vcvt.s32.f32 %v5200
    %v5713 = vcvt.s32.f32 %v5201
    %v5714 = vcvt.s32.f32 %v5202
    %v5715 = vcvt.s32.f32 %v5203
    %v5716 = vcvt.s32.f32 %v5204
    %v5717 = vcvt.s32.f32 %v5205
    %v5718 = vcvt.s32.f32 %v5206
    %v5719 = vcvt.s32.f32 %v5207
    %v5720 = vcvt.s32.f32 %v5208
    %v5721 = vcvt.s32.f32 %v5209
    %v5722 = vcvt.s32.f32 %v5210
    %v5723 = vcvt.s32.f32 %v5211
    %v5724 = vcvt.s32.f32 %v5212
    %v5725 = vcvt.s32.f32 %v5213
    %v5726 = vcvt.s32.f32 %v5214
    %v5727 = vcvt.s32.f32 %v5215
    %v5728 = vcvt.s32.f32 %v5216
    %v5729 = vcvt.s32.f32 %v5217
    %v5730 = vcvt.s32.f32 %v5218
    %v5731 = vcvt.s32.f32 %v5219
    %v5732 = vcvt.s32.f32 %v5220
    %v5733 = vcvt.s32.f32 %v5221
    %v5734 = vcvt.s32.f32 %v5222
    %v5735 = vcvt.s32.f32 %v5223
    %v5736 = vcvt.s32.f32 %v5224
    %v5737 = vcvt.s32.f32 %v5225
    %v5738 = vcvt.s32.f32 %v5226
    %v5739 = vcvt.s32.f32 %v5227
    %v5740 = vcvt.s32.f32 %v5228
    %v5741 = vcvt.s32.f32 %v5229
    %v5742 = vcvt.s32.f32 %v5230
    %v5743 = vcvt.s32.f32 %v5231
    %v5744 = vcvt.s32.f32 %v5232
    %v5745 = vcvt.s32.f32 %v5233
    %v5746 = vcvt.s32.f32 %v5234
    %v5747 = vcvt.s32.f32 %v5235
    %v5748 = vcvt.s32.f32 %v5236
    %v5749 = vcvt.s32.f32 %v5237
    %v5750 = vcvt.s32.f32 %v5238
    %v5751 = vcvt.s32.f32 %v5239
    %v5752 = vcvt.s32.f32 %v5240
    %v5753 = vcvt.s32.f32 %v5241
    %v5754 = vcvt.s32.f32 %v5242
    %v5755 = vcvt.s32.f32 %v5243
    %v5756 = vcvt.s32.f32 %v5244
    %v5757 = vcvt.s32.f32 %v5245
    %v5758 = vcvt.s32.f32 %v5246
    %v5759 = vcvt.s32.f32 %v5247
    %v5760 = vcvt.s32.f32 %v5248
    %v5761 = vcvt.s32.f32 %v5249
    %v5762 = vcvt.s32.f32 %v5250
    %v5763 = vcvt.s32.f32 %v5251
    %v5764 = vcvt.s32.f32 %v5252
    %v5765 = vcvt.s32.f32 %v5253
    %v5766 = vcvt.s32.f32 %v5254
    %v5767 = vcvt.s32.f32 %v5255
    %v5768 = vcvt.s32.f32 %v5256
    %v5769 = vcvt.s32.f32 %v5257
    %v5770 = vcvt.s32.f32 %v5258
    %v5771 = vcvt.s32.f32 %v5259
    %v5772 = vcvt.s32.f32 %v5260
    %v5773 = vcvt.s32.f32 %v5261
    %v5774 = vcvt.s32.f32 %v5262
    %v5775 = vcvt.s32.f32 %v5263
    %v5776 = vcvt.s32.f32 %v5264
    %v5777 = vcvt.s32.f32 %v5265
    %v5778 = vcvt.s32.f32 %v5266
    %v5779 = vcvt.s32.f32 %v5267
    %v5780 = vcvt.s32.f32 %v5268
    %v5781 = vcvt.s32.f32 %v5269
    %v5782 = vcvt.s32.f32 %v5270
    %v5783 = vcvt.s32.f32 %v5271
    %v5784 = vcvt.s32.f32 %v5272
    %v5785 = vcvt.s32.f32 %v5273
    %v5786 = vcvt.s32.f32 %v5274
    %v5787 = vcvt.s32.f32 %v5275
    %v5788 = vcvt.s32.f32 %v5276
    %v5789 = vcvt.s32.f32 %v5277
    %v5790 = vcvt.s32.f32 %v5278
    %v5791 = vcvt.s32.f32 %v5279
    %v5792 = vcvt.s32.f32 %v5280
    %v5793 = vcvt.s32.f32 %v5281
    %v5794 = vcvt.s32.f32 %v5282
    %v5795 = vcvt.s32.f32 %v5283
    %v5796 = vcvt.s32.f32 %v5284
    %v5797 = vcvt.s32.f32 %v5285
    %v5798 = vcvt.s32.f32 %v5286
    %v5799 = vcvt.s32.f32 %v5287
    %v5800 = vcvt.s32.f32 %v5288
    %v5801 = vcvt.s32.f32 %v5289
    %v5802 = vcvt.s32.f32 %v5290
    %v5803 = vcvt.s32.f32 %v5291
    %v5804 = vcvt.s32.f32 %v5292
    %v5805 = vcvt.s32.f32 %v5293
    %v5806 = vcvt.s32.f32 %v5294
    %v5807 = vcvt.s32.f32 %v5295
    %v5808 = vcvt.s32.f32 %v5296
    %v5809 = vcvt.s32.f32 %v5297
    %v5810 = vcvt.s32.f32 %v5298
    %v5811 = vcvt.s32.f32 %v5299
    %v5812 = vcvt.s32.f32 %v5300
    %v5813 = vcvt.s32.f32 %v5301
    %v5814 = vcvt.s32.f32 %v5302
    %v5815 = vcvt.s32.f32 %v5303
    %v5816 = vcvt.s32.f32 %v5304
    %v5817 = vcvt.s32.f32 %v5305
    %v5818 = vcvt.s32.f32 %v5306
    %v5819 = vcvt.s32.f32 %v5307
    %v5820 = vcvt.s32.f32 %v5308
    %v5821 = vcvt.s32.f32 %v5309
    %v5822 = vcvt.s32.f32 %v5310
    %v5823 = vcvt.s32.f32 %v5311
    %v5824 = vcvt.s32.f32 %v5312
    %v5825 = vcvt.s32.f32 %v5313
    %v5826 = vcvt.s32.f32 %v5314
    %v5827 = vcvt.s32.f32 %v5315
    %v5828 = vcvt.s32.f32 %v5316
    %v5829 = vcvt.s32.f32 %v5317
    %v5830 = vcvt.s32.f32 %v5318
    %v5831 = vcvt.s32.f32 %v5319
    %v5832 = vcvt.s32.f32 %v5320
    %v5833 = vcvt.s32.f32 %v5321
    %v5834 = vcvt.s32.f32 %v5322
    %v5835 = vcvt.s32.f32 %v5323
    %v5836 = vcvt.s32.f32 %v5324
    %v5837 = vcvt.s32.f32 %v5325
    %v5838 = vcvt.s32.f32 %v5326
    %v5839 = vcvt.s32.f32 %v5327
    %v5840 = vcvt.s32.f32 %v5328
    %v5841 = vcvt.s32.f32 %v5329
    %v5842 = vcvt.s32.f32 %v5330
    %v5843 = vcvt.s32.f32 %v5331
    %v5844 = vcvt.s32.f32 %v5332
    %v5845 = vcvt.s32.f32 %v5333
    %v5846 = vcvt.s32.f32 %v5334
    %v5847 = vcvt.s32.f32 %v5335
    %v5848 = vcvt.s32.f32 %v5336
    %v5849 = vcvt.s32.f32 %v5337
    %v5850 = vcvt.s32.f32 %v5338
    %v5851 = vcvt.s32.f32 %v5339
    %v5852 = vcvt.s32.f32 %v5340
    %v5853 = vcvt.s32.f32 %v5341
    %v5854 = vcvt.s32.f32 %v5342
    %v5855 = vcvt.s32.f32 %v5343
    %v5856 = vcvt.s32.f32 %v5344
    %v5857 = vcvt.s32.f32 %v5345
    %v5858 = vcvt.s32.f32 %v5346
    %v5859 = vcvt.s32.f32 %v5347
    %v5860 = vcvt.s32.f32 %v5348
    %v5861 = vcvt.s32.f32 %v5349
    %v5862 = vcvt.s32.f32 %v5350
    %v5863 = vcvt.s32.f32 %v5351
    %v5864 = vcvt.s32.f32 %v5352
    %v5865 = vcvt.s32.f32 %v5353
    %v5866 = vcvt.s32.f32 %v5354
    %v5867 = vcvt.s32.f32 %v5355
    %v5868 = vcvt.s32.f32 %v5356
    %v5869 = vcvt.s32.f32 %v5357
    %v5870 = vcvt.s32.f32 %v5358
    %v5871 = vcvt.s32.f32 %v5359
    %v5872 = vcvt.s32.f32 %v5360
    %v5873 = vcvt.s32.f32 %v5361
    %v5874 = vcvt.s32.f32 %v5362
    %v5875 = vcvt.s32.f32 %v5363
    %v5876 = vcvt.s32.f32 %v5364
    %v5877 = vcvt.s32.f32 %v5365
    %v5878 = vcvt.s32.f32 %v5366
    %v5879 = vcvt.s32.f32 %v5367
    %v5880 = vpack.c.bf16 %v5372, %v5368
    %v5881 = vpack.c.bf16 %v5373, %v5369
    %v5882 = vpack.c.bf16 %v5374, %v5370
    %v5883 = vpack.c.bf16 %v5375, %v5371
    %v5884 = vpack.c.bf16 %v5380, %v5376
    %v5885 = vpack.c.bf16 %v5381, %v5377
    %v5886 = vpack.c.bf16 %v5382, %v5378
    %v5887 = vpack.c.bf16 %v5383, %v5379
    %v5888 = vpack.c.bf16 %v5388, %v5384
    %v5889 = vpack.c.bf16 %v5389, %v5385
    %v5890 = vpack.c.bf16 %v5390, %v5386
    %v5891 = vpack.c.bf16 %v5391, %v5387
    %v5892 = vpack.c.bf16 %v5396, %v5392
    %v5893 = vpack.c.bf16 %v5397, %v5393
    %v5894 = vpack.c.bf16 %v5398, %v5394
    %v5895 = vpack.c.bf16 %v5399, %v5395
    %v5896 = vpack.c.bf16 %v5404, %v5400
    %v5897 = vpack.c.bf16 %v5405, %v5401
    %v5898 = vpack.c.bf16 %v5406, %v5402
    %v5899 = vpack.c.bf16 %v5407, %v5403
    %v5900 = vpack.c.bf16 %v5412, %v5408
    %v5901 = vpack.c.bf16 %v5413, %v5409
    %v5902 = vpack.c.bf16 %v5414, %v5410
    %v5903 = vpack.c.bf16 %v5415, %v5411
    %v5904 = vpack.c.bf16 %v5420, %v5416
    %v5905 = vpack.c.bf16 %v5421, %v5417
    %v5906 = vpack.c.bf16 %v5422, %v5418
    %v5907 = vpack.c.bf16 %v5423, %v5419
    %v5908 = vpack.c.bf16 %v5428, %v5424
    %v5909 = vpack.c.bf16 %v5429, %v5425
    %v5910 = vpack.c.bf16 %v5430, %v5426
    %v5911 = vpack.c.bf16 %v5431, %v5427
    %v5912 = vpack.c.bf16 %v5436, %v5432
    %v5913 = vpack.c.bf16 %v5437, %v5433
    %v5914 = vpack.c.bf16 %v5438, %v5434
    %v5915 = vpack.c.bf16 %v5439, %v5435
    %v5916 = vpack.c.bf16 %v5444, %v5440
    %v5917 = vpack.c.bf16 %v5445, %v5441
    %v5918 = vpack.c.bf16 %v5446, %v5442
    %v5919 = vpack.c.bf16 %v5447, %v5443
    %v5920 = vpack.c.bf16 %v5452, %v5448
    %v5921 = vpack.c.bf16 %v5453, %v5449
    %v5922 = vpack.c.bf16 %v5454, %v5450
    %v5923 = vpack.c.bf16 %v5455, %v5451
    %v5924 = vpack.c.bf16 %v5460, %v5456
    %v5925 = vpack.c.bf16 %v5461, %v5457
    %v5926 = vpack.c.bf16 %v5462, %v5458
    %v5927 = vpack.c.bf16 %v5463, %v5459
    %v5928 = vpack.c.bf16 %v5468, %v5464
    %v5929 = vpack.c.bf16 %v5469, %v5465
    %v5930 = vpack.c.bf16 %v5470, %v5466
    %v5931 = vpack.c.bf16 %v5471, %v5467
    %v5932 = vpack.c.bf16 %v5476, %v5472
    %v5933 = vpack.c.bf16 %v5477, %v5473
    %v5934 = vpack.c.bf16 %v5478, %v5474
    %v5935 = vpack.c.bf16 %v5479, %v5475
    %v5936 = vpack.c.bf16 %v5484, %v5480
    %v5937 = vpack.c.bf16 %v5485, %v5481
    %v5938 = vpack.c.bf16 %v5486, %v5482
    %v5939 = vpack.c.bf16 %v5487, %v5483
    %v5940 = vpack.c.bf16 %v5492, %v5488
    %v5941 = vpack.c.bf16 %v5493, %v5489
    %v5942 = vpack.c.bf16 %v5494, %v5490
    %v5943 = vpack.c.bf16 %v5495, %v5491
    %v5944 = vpack.c.bf16 %v5500, %v5496
    %v5945 = vpack.c.bf16 %v5501, %v5497
    %v5946 = vpack.c.bf16 %v5502, %v5498
    %v5947 = vpack.c.bf16 %v5503, %v5499
    %v5948 = vpack.c.bf16 %v5508, %v5504
    %v5949 = vpack.c.bf16 %v5509, %v5505
    %v5950 = vpack.c.bf16 %v5510, %v5506
    %v5951 = vpack.c.bf16 %v5511, %v5507
    %v5952 = vpack.c.bf16 %v5516, %v5512
    %v5953 = vpack.c.bf16 %v5517, %v5513
    %v5954 = vpack.c.bf16 %v5518, %v5514
    %v5955 = vpack.c.bf16 %v5519, %v5515
    %v5956 = vpack.c.bf16 %v5524, %v5520
    %v5957 = vpack.c.bf16 %v5525, %v5521
    %v5958 = vpack.c.bf16 %v5526, %v5522
    %v5959 = vpack.c.bf16 %v5527, %v5523
    %v5960 = vpack.c.bf16 %v5532, %v5528
    %v5961 = vpack.c.bf16 %v5533, %v5529
    %v5962 = vpack.c.bf16 %v5534, %v5530
    %v5963 = vpack.c.bf16 %v5535, %v5531
    %v5964 = vpack.c.bf16 %v5540, %v5536
    %v5965 = vpack.c.bf16 %v5541, %v5537
    %v5966 = vpack.c.bf16 %v5542, %v5538
    %v5967 = vpack.c.bf16 %v5543, %v5539
    %v5968 = vpack.c.bf16 %v5548, %v5544
    %v5969 = vpack.c.bf16 %v5549, %v5545
    %v5970 = vpack.c.bf16 %v5550, %v5546
    %v5971 = vpack.c.bf16 %v5551, %v5547
    %v5972 = vpack.c.bf16 %v5556, %v5552
    %v5973 = vpack.c.bf16 %v5557, %v5553
    %v5974 = vpack.c.bf16 %v5558, %v5554
    %v5975 = vpack.c.bf16 %v5559, %v5555
    %v5976 = vpack.c.bf16 %v5564, %v5560
    %v5977 = vpack.c.bf16 %v5565, %v5561
    %v5978 = vpack.c.bf16 %v5566, %v5562
    %v5979 = vpack.c.bf16 %v5567, %v5563
    %v5980 = vpack.c.bf16 %v5572, %v5568
    %v5981 = vpack.c.bf16 %v5573, %v5569
    %v5982 = vpack.c.bf16 %v5574, %v5570
    %v5983 = vpack.c.bf16 %v5575, %v5571
    %v5984 = vpack.c.bf16 %v5580, %v5576
    %v5985 = vpack.c.bf16 %v5581, %v5577
    %v5986 = vpack.c.bf16 %v5582, %v5578
    %v5987 = vpack.c.bf16 %v5583, %v5579
    %v5988 = vpack.c.bf16 %v5588, %v5584
    %v5989 = vpack.c.bf16 %v5589, %v5585
    %v5990 = vpack.c.bf16 %v5590, %v5586
    %v5991 = vpack.c.bf16 %v5591, %v5587
    %v5992 = vpack.c.bf16 %v5596, %v5592
    %v5993 = vpack.c.bf16 %v5597, %v5593
    %v5994 = vpack.c.bf16 %v5598, %v5594
    %v5995 = vpack.c.bf16 %v5599, %v5595
    %v5996 = vpack.c.bf16 %v5604, %v5600
    %v5997 = vpack.c.bf16 %v5605, %v5601
    %v5998 = vpack.c.bf16 %v5606, %v5602
    %v5999 = vpack.c.bf16 %v5607, %v5603
    %v6000 = vpack.c.bf16 %v5612, %v5608
    %v6001 = vpack.c.bf16 %v5613, %v5609
    %v6002 = vpack.c.bf16 %v5614, %v5610
    %v6003 = vpack.c.bf16 %v5615, %v5611
    %v6004 = vpack.c.bf16 %v5620, %v5616
    %v6005 = vpack.c.bf16 %v5621, %v5617
    %v6006 = vpack.c.bf16 %v5622, %v5618
    %v6007 = vpack.c.bf16 %v5623, %v5619
    %v6008 = vpack.c.bf16 %v5628, %v5624
    %v6009 = vpack.c.bf16 %v5629, %v5625
    %v6010 = vpack.c.bf16 %v5630, %v5626
    %v6011 = vpack.c.bf16 %v5631, %v5627
    %v6012 = vpack.c.bf16 %v5636, %v5632
    %v6013 = vpack.c.bf16 %v5637, %v5633
    %v6014 = vpack.c.bf16 %v5638, %v5634
    %v6015 = vpack.c.bf16 %v5639, %v5635
    %v6016 = vpack.c.bf16 %v5644, %v5640
    %v6017 = vpack.c.bf16 %v5645, %v5641
    %v6018 = vpack.c.bf16 %v5646, %v5642
    %v6019 = vpack.c.bf16 %v5647, %v5643
    %v6020 = vpack.c.bf16 %v5652, %v5648
    %v6021 = vpack.c.bf16 %v5653, %v5649
    %v6022 = vpack.c.bf16 %v5654, %v5650
    %v6023 = vpack.c.bf16 %v5655, %v5651
    %v6024 = vpack.c.bf16 %v5660, %v5656
    %v6025 = vpack.c.bf16 %v5661, %v5657
    %v6026 = vpack.c.bf16 %v5662, %v5658
    %v6027 = vpack.c.bf16 %v5663, %v5659
    %v6028 = vpack.c.bf16 %v5668, %v5664
    %v6029 = vpack.c.bf16 %v5669, %v5665
    %v6030 = vpack.c.bf16 %v5670, %v5666
    %v6031 = vpack.c.bf16 %v5671, %v5667
    %v6032 = vpack.c.bf16 %v5676, %v5672
    %v6033 = vpack.c.bf16 %v5677, %v5673
    %v6034 = vpack.c.bf16 %v5678, %v5674
    %v6035 = vpack.c.bf16 %v5679, %v5675
    %v6036 = vpack.c.bf16 %v5684, %v5680
    %v6037 = vpack.c.bf16 %v5685, %v5681
    %v6038 = vpack.c.bf16 %v5686, %v5682
    %v6039 = vpack.c.bf16 %v5687, %v5683
    %v6040 = vpack.c.bf16 %v5692, %v5688
    %v6041 = vpack.c.bf16 %v5693, %v5689
    %v6042 = vpack.c.bf16 %v5694, %v5690
    %v6043 = vpack.c.bf16 %v5695, %v5691
    %v6044 = vpack.c.bf16 %v5700, %v5696
    %v6045 = vpack.c.bf16 %v5701, %v5697
    %v6046 = vpack.c.bf16 %v5702, %v5698
    %v6047 = vpack.c.bf16 %v5703, %v5699
    %v6048 = vpack.c.bf16 %v5708, %v5704
    %v6049 = vpack.c.bf16 %v5709, %v5705
    %v6050 = vpack.c.bf16 %v5710, %v5706
    %v6051 = vpack.c.bf16 %v5711, %v5707
    %v6052 = vpack.c.bf16 %v5716, %v5712
    %v6053 = vpack.c.bf16 %v5717, %v5713
    %v6054 = vpack.c.bf16 %v5718, %v5714
    %v6055 = vpack.c.bf16 %v5719, %v5715
    %v6056 = vpack.c.bf16 %v5724, %v5720
    %v6057 = vpack.c.bf16 %v5725, %v5721
    %v6058 = vpack.c.bf16 %v5726, %v5722
    %v6059 = vpack.c.bf16 %v5727, %v5723
    %v6060 = vpack.c.bf16 %v5732, %v5728
    %v6061 = vpack.c.bf16 %v5733, %v5729
    %v6062 = vpack.c.bf16 %v5734, %v5730
    %v6063 = vpack.c.bf16 %v5735, %v5731
    %v6064 = vpack.c.bf16 %v5740, %v5736
    %v6065 = vpack.c.bf16 %v5741, %v5737
    %v6066 = vpack.c.bf16 %v5742, %v5738
    %v6067 = vpack.c.bf16 %v5743, %v5739
    %v6068 = vpack.c.bf16 %v5748, %v5744
    %v6069 = vpack.c.bf16 %v5749, %v5745
    %v6070 = vpack.c.bf16 %v5750, %v5746
    %v6071 = vpack.c.bf16 %v5751, %v5747
    %v6072 = vpack.c.bf16 %v5756, %v5752
    %v6073 = vpack.c.bf16 %v5757, %v5753
    %v6074 = vpack.c.bf16 %v5758, %v5754
    %v6075 = vpack.c.bf16 %v5759, %v5755
    %v6076 = vpack.c.bf16 %v5764, %v5760
    %v6077 = vpack.c.bf16 %v5765, %v5761
    %v6078 = vpack.c.bf16 %v5766, %v5762
    %v6079 = vpack.c.bf16 %v5767, %v5763
    %v6080 = vpack.c.bf16 %v5772, %v5768
    %v6081 = vpack.c.bf16 %v5773, %v5769
    %v6082 = vpack.c.bf16 %v5774, %v5770
    %v6083 = vpack.c.bf16 %v5775, %v5771
    %v6084 = vpack.c.bf16 %v5780, %v5776
    %v6085 = vpack.c.bf16 %v5781, %v5777
    %v6086 = vpack.c.bf16 %v5782, %v5778
    %v6087 = vpack.c.bf16 %v5783, %v5779
    %v6088 = vpack.c.bf16 %v5788, %v5784
    %v6089 = vpack.c.bf16 %v5789, %v5785
    %v6090 = vpack.c.bf16 %v5790, %v5786
    %v6091 = vpack.c.bf16 %v5791, %v5787
    %v6092 = vpack.c.bf16 %v5796, %v5792
    %v6093 = vpack.c.bf16 %v5797, %v5793
    %v6094 = vpack.c.bf16 %v5798, %v5794
    %v6095 = vpack.c.bf16 %v5799, %v5795
    %v6096 = vpack.c.bf16 %v5804, %v5800
    %v6097 = vpack.c.bf16 %v5805, %v5801
    %v6098 = vpack.c.bf16 %v5806, %v5802
    %v6099 = vpack.c.bf16 %v5807, %v5803
    %v6100 = vpack.c.bf16 %v5812, %v5808
    %v6101 = vpack.c.bf16 %v5813, %v5809
    %v6102 = vpack.c.bf16 %v5814, %v5810
    %v6103 = vpack.c.bf16 %v5815, %v5811
    %v6104 = vpack.c.bf16 %v5820, %v5816
    %v6105 = vpack.c.bf16 %v5821, %v5817
    %v6106 = vpack.c.bf16 %v5822, %v5818
    %v6107 = vpack.c.bf16 %v5823, %v5819
    %v6108 = vpack.c.bf16 %v5828, %v5824
    %v6109 = vpack.c.bf16 %v5829, %v5825
    %v6110 = vpack.c.bf16 %v5830, %v5826
    %v6111 = vpack.c.bf16 %v5831, %v5827
    %v6112 = vpack.c.bf16 %v5836, %v5832
    %v6113 = vpack.c.bf16 %v5837, %v5833
    %v6114 = vpack.c.bf16 %v5838, %v5834
    %v6115 = vpack.c.bf16 %v5839, %v5835
    %v6116 = vpack.c.bf16 %v5844, %v5840
    %v6117 = vpack.c.bf16 %v5845, %v5841
    %v6118 = vpack.c.bf16 %v5846, %v5842
    %v6119 = vpack.c.bf16 %v5847, %v5843
    %v6120 = vpack.c.bf16 %v5852, %v5848
    %v6121 = vpack.c.bf16 %v5853, %v5849
    %v6122 = vpack.c.bf16 %v5854, %v5850
    %v6123 = vpack.c.bf16 %v5855, %v5851
    %v6124 = vpack.c.bf16 %v5860, %v5856
    %v6125 = vpack.c.bf16 %v5861, %v5857
    %v6126 = vpack.c.bf16 %v5862, %v5858
    %v6127 = vpack.c.bf16 %v5863, %v5859
    %v6128 = vpack.c.bf16 %v5868, %v5864
    %v6129 = vpack.c.bf16 %v5869, %v5865
    %v6130 = vpack.c.bf16 %v5870, %v5866
    %v6131 = vpack.c.bf16 %v5871, %v5867
    %v6132 = vpack.c.bf16 %v5876, %v5872
    %v6133 = vpack.c.bf16 %v5877, %v5873
    %v6134 = vpack.c.bf16 %v5878, %v5874
    %v6135 = vpack.c.bf16 %v5879, %v5875
    %6136 = vmatpush.bf16.msra.mxu0 %v5908
    %6137 = vmatpush.bf16.msra.mxu0 %v5904
    %6138 = vmatpush.bf16.msra.mxu0 %v5900
    %6139 = vmatpush.bf16.msra.mxu0 %v5896
    %6140 = vmatpush.bf16.msra.mxu0 %v5892
    %6141 = vmatpush.bf16.msra.mxu0 %v5888
    %6142 = vmatpush.bf16.msra.mxu0 %v5884
    %6143 = vmatpush.bf16.msra.mxu0 %v5880
    %6144 = vmatmul.bf16.gmra.mxu0 %v4848
    %v6145 = vpop.f32.mrf.mxu0
    %v6146 = vadd.f32 0.0, %v6145
    %v6147 = vpop.f32.mrf.mxu0
    %6148 = vdwg.mxu0
    %6149 = vmatpush.bf16.msra.mxu0 %v5940
    %6150 = vmatpush.bf16.msra.mxu0 %v5936
    %6151 = vmatpush.bf16.msra.mxu0 %v5932
    %6152 = vmatpush.bf16.msra.mxu0 %v5928
    %6153 = vmatpush.bf16.msra.mxu0 %v5924
    %6154 = vmatpush.bf16.msra.mxu0 %v5920
    %6155 = vmatpush.bf16.msra.mxu0 %v5916
    %6156 = vmatpush.bf16.msra.mxu0 %v5912
    %6157 = vmatmul.bf16.gmra.mxu0 %v4849
    %v6158 = vpop.f32.mrf.mxu0
    %v6159 = vadd.f32 %v6146, %v6158
    %v6160 = vpop.f32.mrf.mxu0
    %6161 = vdwg.mxu0
    %6162 = vmatpush.bf16.msra.mxu0 %v5972
    %6163 = vmatpush.bf16.msra.mxu0 %v5968
    %6164 = vmatpush.bf16.msra.mxu0 %v5964
    %6165 = vmatpush.bf16.msra.mxu0 %v5960
    %6166 = vmatpush.bf16.msra.mxu0 %v5956
    %6167 = vmatpush.bf16.msra.mxu0 %v5952
    %6168 = vmatpush.bf16.msra.mxu0 %v5948
    %6169 = vmatpush.bf16.msra.mxu0 %v5944
    %6170 = vmatmul.bf16.gmra.mxu0 %v4850
    %v6171 = vpop.f32.mrf.mxu0
    %v6172 = vadd.f32 %v6159, %v6171
    %v6173 = vpop.f32.mrf.mxu0
    %6174 = vdwg.mxu0
    %6175 = vmatpush.bf16.msra.mxu0 %v6004
    %6176 = vmatpush.bf16.msra.mxu0 %v6000
    %6177 = vmatpush.bf16.msra.mxu0 %v5996
    %6178 = vmatpush.bf16.msra.mxu0 %v5992
    %6179 = vmatpush.bf16.msra.mxu0 %v5988
    %6180 = vmatpush.bf16.msra.mxu0 %v5984
    %6181 = vmatpush.bf16.msra.mxu0 %v5980
    %6182 = vmatpush.bf16.msra.mxu0 %v5976
    %6183 = vmatmul.bf16.gmra.mxu0 %v4851
    %v6184 = vpop.f32.mrf.mxu0
    %v6185 = vadd.f32 %v6172, %v6184
    %v6186 = vpop.f32.mrf.mxu0
    %6187 = vdwg.mxu0
    %6188 = vmatpush.bf16.msra.mxu0 %v6036
    %6189 = vmatpush.bf16.msra.mxu0 %v6032
    %6190 = vmatpush.bf16.msra.mxu0 %v6028
    %6191 = vmatpush.bf16.msra.mxu0 %v6024
    %6192 = vmatpush.bf16.msra.mxu0 %v6020
    %6193 = vmatpush.bf16.msra.mxu0 %v6016
    %6194 = vmatpush.bf16.msra.mxu0 %v6012
    %6195 = vmatpush.bf16.msra.mxu0 %v6008
    %6196 = vmatmul.bf16.gmra.mxu0 %v4852
    %v6197 = vpop.f32.mrf.mxu0
    %v6198 = vadd.f32 %v6185, %v6197
    %v6199 = vpop.f32.mrf.mxu0
    %6200 = vdwg.mxu0
    %6201 = vmatpush.bf16.msra.mxu0 %v6068
    %6202 = vmatpush.bf16.msra.mxu0 %v6064
    %6203 = vmatpush.bf16.msra.mxu0 %v6060
    %6204 = vmatpush.bf16.msra.mxu0 %v6056
    %6205 = vmatpush.bf16.msra.mxu0 %v6052
    %6206 = vmatpush.bf16.msra.mxu0 %v6048
    %6207 = vmatpush.bf16.msra.mxu0 %v6044
    %6208 = vmatpush.bf16.msra.mxu0 %v6040
    %6209 = vmatmul.bf16.gmra.mxu0 %v4853
    %v6210 = vpop.f32.mrf.mxu0
    %v6211 = vadd.f32 %v6198, %v6210
    %v6212 = vpop.f32.mrf.mxu0
    %6213 = vdwg.mxu0
    %6214 = vmatpush.bf16.msra.mxu0 %v6100
    %6215 = vmatpush.bf16.msra.mxu0 %v6096
    %6216 = vmatpush.bf16.msra.mxu0 %v6092
    %6217 = vmatpush.bf16.msra.mxu0 %v6088
    %6218 = vmatpush.bf16.msra.mxu0 %v6084
    %6219 = vmatpush.bf16.msra.mxu0 %v6080
    %6220 = vmatpush.bf16.msra.mxu0 %v6076
    %6221 = vmatpush.bf16.msra.mxu0 %v6072
    %6222 = vmatmul.bf16.gmra.mxu0 %v4854
    %v6223 = vpop.f32.mrf.mxu0
    %v6224 = vadd.f32 %v6211, %v6223
    %v6225 = vpop.f32.mrf.mxu0
    %6226 = vdwg.mxu0
    %6227 = vmatpush.bf16.msra.mxu0 %v6132
    %6228 = vmatpush.bf16.msra.mxu0 %v6128
    %6229 = vmatpush.bf16.msra.mxu0 %v6124
    %6230 = vmatpush.bf16.msra.mxu0 %v6120
    %6231 = vmatpush.bf16.msra.mxu0 %v6116
    %6232 = vmatpush.bf16.msra.mxu0 %v6112
    %6233 = vmatpush.bf16.msra.mxu0 %v6108
    %6234 = vmatpush.bf16.msra.mxu0 %v6104
    %6235 = vmatmul.bf16.gmra.mxu0 %v4855
    %v6236 = vpop.f32.mrf.mxu0
    %v6237 = vadd.f32 %v6224, %v6236
    %v6238 = vpop.f32.mrf.mxu0
    %6239 = vdwg.mxu0
    %6240 = vmatpush.bf16.msra.mxu0 %v5909
    %6241 = vmatpush.bf16.msra.mxu0 %v5905
    %6242 = vmatpush.bf16.msra.mxu0 %v5901
    %6243 = vmatpush.bf16.msra.mxu0 %v5897
    %6244 = vmatpush.bf16.msra.mxu0 %v5893
    %6245 = vmatpush.bf16.msra.mxu0 %v5889
    %6246 = vmatpush.bf16.msra.mxu0 %v5885
    %6247 = vmatpush.bf16.msra.mxu0 %v5881
    %6248 = vmatmul.bf16.gmra.mxu0 %v4848
    %v6249 = vpop.f32.mrf.mxu0
    %v6250 = vadd.f32 0.0, %v6249
    %v6251 = vpop.f32.mrf.mxu0
    %6252 = vdwg.mxu0
    %6253 = vmatpush.bf16.msra.mxu0 %v5941
    %6254 = vmatpush.bf16.msra.mxu0 %v5937
    %6255 = vmatpush.bf16.msra.mxu0 %v5933
    %6256 = vmatpush.bf16.msra.mxu0 %v5929
    %6257 = vmatpush.bf16.msra.mxu0 %v5925
    %6258 = vmatpush.bf16.msra.mxu0 %v5921
    %6259 = vmatpush.bf16.msra.mxu0 %v5917
    %6260 = vmatpush.bf16.msra.mxu0 %v5913
    %6261 = vmatmul.bf16.gmra.mxu0 %v4849
    %v6262 = vpop.f32.mrf.mxu0
    %v6263 = vadd.f32 %v6250, %v6262
    %v6264 = vpop.f32.mrf.mxu0
    %6265 = vdwg.mxu0
    %6266 = vmatpush.bf16.msra.mxu0 %v5973
    %6267 = vmatpush.bf16.msra.mxu0 %v5969
    %6268 = vmatpush.bf16.msra.mxu0 %v5965
    %6269 = vmatpush.bf16.msra.mxu0 %v5961
    %6270 = vmatpush.bf16.msra.mxu0 %v5957
    %6271 = vmatpush.bf16.msra.mxu0 %v5953
    %6272 = vmatpush.bf16.msra.mxu0 %v5949
    %6273 = vmatpush.bf16.msra.mxu0 %v5945
    %6274 = vmatmul.bf16.gmra.mxu0 %v4850
    %v6275 = vpop.f32.mrf.mxu0
    %v6276 = vadd.f32 %v6263, %v6275
    %v6277 = vpop.f32.mrf.mxu0
    %6278 = vdwg.mxu0
    %6279 = vmatpush.bf16.msra.mxu0 %v6005
    %6280 = vmatpush.bf16.msra.mxu0 %v6001
    %6281 = vmatpush.bf16.msra.mxu0 %v5997
    %6282 = vmatpush.bf16.msra.mxu0 %v5993
    %6283 = vmatpush.bf16.msra.mxu0 %v5989
    %6284 = vmatpush.bf16.msra.mxu0 %v5985
    %6285 = vmatpush.bf16.msra.mxu0 %v5981
    %6286 = vmatpush.bf16.msra.mxu0 %v5977
    %6287 = vmatmul.bf16.gmra.mxu0 %v4851
    %v6288 = vpop.f32.mrf.mxu0
    %v6289 = vadd.f32 %v6276, %v6288
    %v6290 = vpop.f32.mrf.mxu0
    %6291 = vdwg.mxu0
    %6292 = vmatpush.bf16.msra.mxu0 %v6037
    %6293 = vmatpush.bf16.msra.mxu0 %v6033
    %6294 = vmatpush.bf16.msra.mxu0 %v6029
    %6295 = vmatpush.bf16.msra.mxu0 %v6025
    %6296 = vmatpush.bf16.msra.mxu0 %v6021
    %6297 = vmatpush.bf16.msra.mxu0 %v6017
    %6298 = vmatpush.bf16.msra.mxu0 %v6013
    %6299 = vmatpush.bf16.msra.mxu0 %v6009
    %6300 = vmatmul.bf16.gmra.mxu0 %v4852
    %v6301 = vpop.f32.mrf.mxu0
    %v6302 = vadd.f32 %v6289, %v6301
    %v6303 = vpop.f32.mrf.mxu0
    %6304 = vdwg.mxu0
    %6305 = vmatpush.bf16.msra.mxu0 %v6069
    %6306 = vmatpush.bf16.msra.mxu0 %v6065
    %6307 = vmatpush.bf16.msra.mxu0 %v6061
    %6308 = vmatpush.bf16.msra.mxu0 %v6057
    %6309 = vmatpush.bf16.msra.mxu0 %v6053
    %6310 = vmatpush.bf16.msra.mxu0 %v6049
    %6311 = vmatpush.bf16.msra.mxu0 %v6045
    %6312 = vmatpush.bf16.msra.mxu0 %v6041
    %6313 = vmatmul.bf16.gmra.mxu0 %v4853
    %v6314 = vpop.f32.mrf.mxu0
    %v6315 = vadd.f32 %v6302, %v6314
    %v6316 = vpop.f32.mrf.mxu0
    %6317 = vdwg.mxu0
    %6318 = vmatpush.bf16.msra.mxu0 %v6101
    %6319 = vmatpush.bf16.msra.mxu0 %v6097
    %6320 = vmatpush.bf16.msra.mxu0 %v6093
    %6321 = vmatpush.bf16.msra.mxu0 %v6089
    %6322 = vmatpush.bf16.msra.mxu0 %v6085
    %6323 = vmatpush.bf16.msra.mxu0 %v6081
    %6324 = vmatpush.bf16.msra.mxu0 %v6077
    %6325 = vmatpush.bf16.msra.mxu0 %v6073
    %6326 = vmatmul.bf16.gmra.mxu0 %v4854
    %v6327 = vpop.f32.mrf.mxu0
    %v6328 = vadd.f32 %v6315, %v6327
    %v6329 = vpop.f32.mrf.mxu0
    %6330 = vdwg.mxu0
    %6331 = vmatpush.bf16.msra.mxu0 %v6133
    %6332 = vmatpush.bf16.msra.mxu0 %v6129
    %6333 = vmatpush.bf16.msra.mxu0 %v6125
    %6334 = vmatpush.bf16.msra.mxu0 %v6121
    %6335 = vmatpush.bf16.msra.mxu0 %v6117
    %6336 = vmatpush.bf16.msra.mxu0 %v6113
    %6337 = vmatpush.bf16.msra.mxu0 %v6109
    %6338 = vmatpush.bf16.msra.mxu0 %v6105
    %6339 = vmatmul.bf16.gmra.mxu0 %v4855
    %v6340 = vpop.f32.mrf.mxu0
    %v6341 = vadd.f32 %v6328, %v6340
    %v6342 = vpop.f32.mrf.mxu0
    %6343 = vdwg.mxu0
    %6344 = vmatpush.bf16.msra.mxu0 %v5910
    %6345 = vmatpush.bf16.msra.mxu0 %v5906
    %6346 = vmatpush.bf16.msra.mxu0 %v5902
    %6347 = vmatpush.bf16.msra.mxu0 %v5898
    %6348 = vmatpush.bf16.msra.mxu0 %v5894
    %6349 = vmatpush.bf16.msra.mxu0 %v5890
    %6350 = vmatpush.bf16.msra.mxu0 %v5886
    %6351 = vmatpush.bf16.msra.mxu0 %v5882
    %6352 = vmatmul.bf16.gmra.mxu0 %v4848
    %v6353 = vpop.f32.mrf.mxu0
    %v6354 = vadd.f32 0.0, %v6353
    %v6355 = vpop.f32.mrf.mxu0
    %6356 = vdwg.mxu0
    %6357 = vmatpush.bf16.msra.mxu0 %v5942
    %6358 = vmatpush.bf16.msra.mxu0 %v5938
    %6359 = vmatpush.bf16.msra.mxu0 %v5934
    %6360 = vmatpush.bf16.msra.mxu0 %v5930
    %6361 = vmatpush.bf16.msra.mxu0 %v5926
    %6362 = vmatpush.bf16.msra.mxu0 %v5922
    %6363 = vmatpush.bf16.msra.mxu0 %v5918
    %6364 = vmatpush.bf16.msra.mxu0 %v5914
    %6365 = vmatmul.bf16.gmra.mxu0 %v4849
    %v6366 = vpop.f32.mrf.mxu0
    %v6367 = vadd.f32 %v6354, %v6366
    %v6368 = vpop.f32.mrf.mxu0
    %6369 = vdwg.mxu0
    %6370 = vmatpush.bf16.msra.mxu0 %v5974
    %6371 = vmatpush.bf16.msra.mxu0 %v5970
    %6372 = vmatpush.bf16.msra.mxu0 %v5966
    %6373 = vmatpush.bf16.msra.mxu0 %v5962
    %6374 = vmatpush.bf16.msra.mxu0 %v5958
    %6375 = vmatpush.bf16.msra.mxu0 %v5954
    %6376 = vmatpush.bf16.msra.mxu0 %v5950
    %6377 = vmatpush.bf16.msra.mxu0 %v5946
    %6378 = vmatmul.bf16.gmra.mxu0 %v4850
    %v6379 = vpop.f32.mrf.mxu0
    %v6380 = vadd.f32 %v6367, %v6379
    %v6381 = vpop.f32.mrf.mxu0
    %6382 = vdwg.mxu0
    %6383 = vmatpush.bf16.msra.mxu0 %v6006
    %6384 = vmatpush.bf16.msra.mxu0 %v6002
    %6385 = vmatpush.bf16.msra.mxu0 %v5998
    %6386 = vmatpush.bf16.msra.mxu0 %v5994
    %6387 = vmatpush.bf16.msra.mxu0 %v5990
    %6388 = vmatpush.bf16.msra.mxu0 %v5986
    %6389 = vmatpush.bf16.msra.mxu0 %v5982
    %6390 = vmatpush.bf16.msra.mxu0 %v5978
    %6391 = vmatmul.bf16.gmra.mxu0 %v4851
    %v6392 = vpop.f32.mrf.mxu0
    %v6393 = vadd.f32 %v6380, %v6392
    %v6394 = vpop.f32.mrf.mxu0
    %6395 = vdwg.mxu0
    %6396 = vmatpush.bf16.msra.mxu0 %v6038
    %6397 = vmatpush.bf16.msra.mxu0 %v6034
    %6398 = vmatpush.bf16.msra.mxu0 %v6030
    %6399 = vmatpush.bf16.msra.mxu0 %v6026
    %6400 = vmatpush.bf16.msra.mxu0 %v6022
    %6401 = vmatpush.bf16.msra.mxu0 %v6018
    %6402 = vmatpush.bf16.msra.mxu0 %v6014
    %6403 = vmatpush.bf16.msra.mxu0 %v6010
    %6404 = vmatmul.bf16.gmra.mxu0 %v4852
    %v6405 = vpop.f32.mrf.mxu0
    %v6406 = vadd.f32 %v6393, %v6405
    %v6407 = vpop.f32.mrf.mxu0
    %6408 = vdwg.mxu0
    %6409 = vmatpush.bf16.msra.mxu0 %v6070
    %6410 = vmatpush.bf16.msra.mxu0 %v6066
    %6411 = vmatpush.bf16.msra.mxu0 %v6062
    %6412 = vmatpush.bf16.msra.mxu0 %v6058
    %6413 = vmatpush.bf16.msra.mxu0 %v6054
    %6414 = vmatpush.bf16.msra.mxu0 %v6050
    %6415 = vmatpush.bf16.msra.mxu0 %v6046
    %6416 = vmatpush.bf16.msra.mxu0 %v6042
    %6417 = vmatmul.bf16.gmra.mxu0 %v4853
    %v6418 = vpop.f32.mrf.mxu0
    %v6419 = vadd.f32 %v6406, %v6418
    %v6420 = vpop.f32.mrf.mxu0
    %6421 = vdwg.mxu0
    %6422 = vmatpush.bf16.msra.mxu0 %v6102
    %6423 = vmatpush.bf16.msra.mxu0 %v6098
    %6424 = vmatpush.bf16.msra.mxu0 %v6094
    %6425 = vmatpush.bf16.msra.mxu0 %v6090
    %6426 = vmatpush.bf16.msra.mxu0 %v6086
    %6427 = vmatpush.bf16.msra.mxu0 %v6082
    %6428 = vmatpush.bf16.msra.mxu0 %v6078
    %6429 = vmatpush.bf16.msra.mxu0 %v6074
    %6430 = vmatmul.bf16.gmra.mxu0 %v4854
    %v6431 = vpop.f32.mrf.mxu0
    %v6432 = vadd.f32 %v6419, %v6431
    %v6433 = vpop.f32.mrf.mxu0
    %6434 = vdwg.mxu0
    %6435 = vmatpush.bf16.msra.mxu0 %v6134
    %6436 = vmatpush.bf16.msra.mxu0 %v6130
    %6437 = vmatpush.bf16.msra.mxu0 %v6126
    %6438 = vmatpush.bf16.msra.mxu0 %v6122
    %6439 = vmatpush.bf16.msra.mxu0 %v6118
    %6440 = vmatpush.bf16.msra.mxu0 %v6114
    %6441 = vmatpush.bf16.msra.mxu0 %v6110
    %6442 = vmatpush.bf16.msra.mxu0 %v6106
    %6443 = vmatmul.bf16.gmra.mxu0 %v4855
    %v6444 = vpop.f32.mrf.mxu0
    %v6445 = vadd.f32 %v6432, %v6444
    %v6446 = vpop.f32.mrf.mxu0
    %6447 = vdwg.mxu0
    %6448 = vmatpush.bf16.msra.mxu0 %v5911
    %6449 = vmatpush.bf16.msra.mxu0 %v5907
    %6450 = vmatpush.bf16.msra.mxu0 %v5903
    %6451 = vmatpush.bf16.msra.mxu0 %v5899
    %6452 = vmatpush.bf16.msra.mxu0 %v5895
    %6453 = vmatpush.bf16.msra.mxu0 %v5891
    %6454 = vmatpush.bf16.msra.mxu0 %v5887
    %6455 = vmatpush.bf16.msra.mxu0 %v5883
    %6456 = vmatmul.bf16.gmra.mxu0 %v4848
    %v6457 = vpop.f32.mrf.mxu0
    %v6458 = vadd.f32 0.0, %v6457
    %v6459 = vpop.f32.mrf.mxu0
    %6460 = vdwg.mxu0
    %6461 = vmatpush.bf16.msra.mxu0 %v5943
    %6462 = vmatpush.bf16.msra.mxu0 %v5939
    %6463 = vmatpush.bf16.msra.mxu0 %v5935
    %6464 = vmatpush.bf16.msra.mxu0 %v5931
    %6465 = vmatpush.bf16.msra.mxu0 %v5927
    %6466 = vmatpush.bf16.msra.mxu0 %v5923
    %6467 = vmatpush.bf16.msra.mxu0 %v5919
    %6468 = vmatpush.bf16.msra.mxu0 %v5915
    %6469 = vmatmul.bf16.gmra.mxu0 %v4849
    %v6470 = vpop.f32.mrf.mxu0
    %v6471 = vadd.f32 %v6458, %v6470
    %v6472 = vpop.f32.mrf.mxu0
    %6473 = vdwg.mxu0
    %6474 = vmatpush.bf16.msra.mxu0 %v5975
    %6475 = vmatpush.bf16.msra.mxu0 %v5971
    %6476 = vmatpush.bf16.msra.mxu0 %v5967
    %6477 = vmatpush.bf16.msra.mxu0 %v5963
    %6478 = vmatpush.bf16.msra.mxu0 %v5959
    %6479 = vmatpush.bf16.msra.mxu0 %v5955
    %6480 = vmatpush.bf16.msra.mxu0 %v5951
    %6481 = vmatpush.bf16.msra.mxu0 %v5947
    %6482 = vmatmul.bf16.gmra.mxu0 %v4850
    %v6483 = vpop.f32.mrf.mxu0
    %v6484 = vadd.f32 %v6471, %v6483
    %v6485 = vpop.f32.mrf.mxu0
    %6486 = vdwg.mxu0
    %6487 = vmatpush.bf16.msra.mxu0 %v6007
    %6488 = vmatpush.bf16.msra.mxu0 %v6003
    %6489 = vmatpush.bf16.msra.mxu0 %v5999
    %6490 = vmatpush.bf16.msra.mxu0 %v5995
    %6491 = vmatpush.bf16.msra.mxu0 %v5991
    %6492 = vmatpush.bf16.msra.mxu0 %v5987
    %6493 = vmatpush.bf16.msra.mxu0 %v5983
    %6494 = vmatpush.bf16.msra.mxu0 %v5979
    %6495 = vmatmul.bf16.gmra.mxu0 %v4851
    %v6496 = vpop.f32.mrf.mxu0
    %v6497 = vadd.f32 %v6484, %v6496
    %v6498 = vpop.f32.mrf.mxu0
    %6499 = vdwg.mxu0
    %6500 = vmatpush.bf16.msra.mxu0 %v6039
    %6501 = vmatpush.bf16.msra.mxu0 %v6035
    %6502 = vmatpush.bf16.msra.mxu0 %v6031
    %6503 = vmatpush.bf16.msra.mxu0 %v6027
    %6504 = vmatpush.bf16.msra.mxu0 %v6023
    %6505 = vmatpush.bf16.msra.mxu0 %v6019
    %6506 = vmatpush.bf16.msra.mxu0 %v6015
    %6507 = vmatpush.bf16.msra.mxu0 %v6011
    %6508 = vmatmul.bf16.gmra.mxu0 %v4852
    %v6509 = vpop.f32.mrf.mxu0
    %v6510 = vadd.f32 %v6497, %v6509
    %v6511 = vpop.f32.mrf.mxu0
    %6512 = vdwg.mxu0
    %6513 = vmatpush.bf16.msra.mxu0 %v6071
    %6514 = vmatpush.bf16.msra.mxu0 %v6067
    %6515 = vmatpush.bf16.msra.mxu0 %v6063
    %6516 = vmatpush.bf16.msra.mxu0 %v6059
    %6517 = vmatpush.bf16.msra.mxu0 %v6055
    %6518 = vmatpush.bf16.msra.mxu0 %v6051
    %6519 = vmatpush.bf16.msra.mxu0 %v6047
    %6520 = vmatpush.bf16.msra.mxu0 %v6043
    %6521 = vmatmul.bf16.gmra.mxu0 %v4853
    %v6522 = vpop.f32.mrf.mxu0
    %v6523 = vadd.f32 %v6510, %v6522
    %v6524 = vpop.f32.mrf.mxu0
    %6525 = vdwg.mxu0
    %6526 = vmatpush.bf16.msra.mxu0 %v6103
    %6527 = vmatpush.bf16.msra.mxu0 %v6099
    %6528 = vmatpush.bf16.msra.mxu0 %v6095
    %6529 = vmatpush.bf16.msra.mxu0 %v6091
    %6530 = vmatpush.bf16.msra.mxu0 %v6087
    %6531 = vmatpush.bf16.msra.mxu0 %v6083
    %6532 = vmatpush.bf16.msra.mxu0 %v6079
    %6533 = vmatpush.bf16.msra.mxu0 %v6075
    %6534 = vmatmul.bf16.gmra.mxu0 %v4854
    %v6535 = vpop.f32.mrf.mxu0
    %v6536 = vadd.f32 %v6523, %v6535
    %v6537 = vpop.f32.mrf.mxu0
    %6538 = vdwg.mxu0
    %6539 = vmatpush.bf16.msra.mxu0 %v6135
    %6540 = vmatpush.bf16.msra.mxu0 %v6131
    %6541 = vmatpush.bf16.msra.mxu0 %v6127
    %6542 = vmatpush.bf16.msra.mxu0 %v6123
    %6543 = vmatpush.bf16.msra.mxu0 %v6119
    %6544 = vmatpush.bf16.msra.mxu0 %v6115
    %6545 = vmatpush.bf16.msra.mxu0 %v6111
    %6546 = vmatpush.bf16.msra.mxu0 %v6107
    %6547 = vmatmul.bf16.gmra.mxu0 %v4855
    %v6548 = vpop.f32.mrf.mxu0
    %v6549 = vadd.f32 %v6536, %v6548
    %v6550 = vpop.f32.mrf.mxu0
    %6551 = vdwg.mxu0
    %v6552 = vld [vmem:[%s7] sm:$0xf]
    %v6554 = vperm.slane %v6552, 0
    %v6555 = vperm.slane %v6552, 1
    %v6556 = vperm.slane %v6552, 2
    %v6557 = vperm.slane %v6552, 3
    %v6562 = vmul.f32 %v6237, %v6554
    %v6563 = vmul.f32 %v6341, %v6555
    %v6564 = vmul.f32 %v6445, %v6556
    %v6565 = vmul.f32 %v6549, %v6557
    %v6566 = vrot.slane %v6562, 4
    %v6567 = vadd.f32 %v6562, %v6566
    %v6568 = vrot.slane %v6567, 2
    %v6569 = vadd.f32 %v6567, %v6568
    %v6570 = vrot.slane %v6569, 1
    %v6571 = vadd.f32 %v6569, %v6570
    %v6572 = vrot.slane %v6563, 4
    %v6573 = vadd.f32 %v6563, %v6572
    %v6574 = vrot.slane %v6573, 2
    %v6575 = vadd.f32 %v6573, %v6574
    %v6576 = vrot.slane %v6575, 1
    %v6577 = vadd.f32 %v6575, %v6576
    %v6578 = vrot.slane %v6564, 4
    %v6579 = vadd.f32 %v6564, %v6578
    %v6580 = vrot.slane %v6579, 2
    %v6581 = vadd.f32 %v6579, %v6580
    %v6582 = vrot.slane %v6581, 1
    %v6583 = vadd.f32 %v6581, %v6582
    %v6584 = vrot.slane %v6565, 4
    %v6585 = vadd.f32 %v6565, %v6584
    %v6586 = vrot.slane %v6585, 2
    %v6587 = vadd.f32 %v6585, %v6586
    %v6588 = vrot.slane %v6587, 1
    %v6589 = vadd.f32 %v6587, %v6588
    %v6590 = vmul.f32 %v6571, %v407
    %v6591 = vmul.f32 %v6577, %v407
    %v6592 = vmul.f32 %v6583, %v407
    %v6593 = vmul.f32 %v6589, %v407
    %v6594 = vsub.f32 %v6562, %v6590
    %v6595 = vsub.f32 %v6563, %v6591
    %v6596 = vsub.f32 %v6564, %v6592
    %v6597 = vsub.f32 %v6565, %v6593
    %v6598 = vmul.f32 %v6594, %v6594
    %v6599 = vmul.f32 %v6595, %v6595
    %v6600 = vmul.f32 %v6596, %v6596
    %v6601 = vmul.f32 %v6597, %v6597
    %v6602 = vrot.slane %v6598, 4
    %v6603 = vadd.f32 %v6598, %v6602
    %v6604 = vrot.slane %v6603, 2
    %v6605 = vadd.f32 %v6603, %v6604
    %v6606 = vrot.slane %v6605, 1
    %v6607 = vadd.f32 %v6605, %v6606
    %v6608 = vrot.slane %v6599, 4
    %v6609 = vadd.f32 %v6599, %v6608
    %v6610 = vrot.slane %v6609, 2
    %v6611 = vadd.f32 %v6609, %v6610
    %v6612 = vrot.slane %v6611, 1
    %v6613 = vadd.f32 %v6611, %v6612
    %v6614 = vrot.slane %v6600, 4
    %v6615 = vadd.f32 %v6600, %v6614
    %v6616 = vrot.slane %v6615, 2
    %v6617 = vadd.f32 %v6615, %v6616
    %v6618 = vrot.slane %v6617, 1
    %v6619 = vadd.f32 %v6617, %v6618
    %v6620 = vrot.slane %v6601, 4
    %v6621 = vadd.f32 %v6601, %v6620
    %v6622 = vrot.slane %v6621, 2
    %v6623 = vadd.f32 %v6621, %v6622
    %v6624 = vrot.slane %v6623, 1
    %v6625 = vadd.f32 %v6623, %v6624
    %v6626 = vmul.f32 %v6607, %v407
    %v6627 = vmul.f32 %v6613, %v407
    %v6628 = vmul.f32 %v6619, %v407
    %v6629 = vmul.f32 %v6625, %v407
    %v6630 = vld [vmem:[#allocation18] sm:$0xf]
    %v6631 = vadd.f32 %v6626, 1e-05
    %v6632 = vadd.f32 %v6627, 1e-05
    %v6633 = vadd.f32 %v6628, 1e-05
    %v6634 = vadd.f32 %v6629, 1e-05
    %v6635 = vrsqrt.pop %v6631
    %v6636 = vmul.f32 %v6635, %v6631
    %v6637 = vmul.f32 %v6636, %v6635
    %v6638 = vmul.f32 0.5, %v6637
    %v6639 = vsub.f32 1.5, %v6638
    %v6640 = vmul.f32 %v6635, %v6639
    %vm6641 = vweird.f32 %v6631
    %vm6642 = vweird.f32 %v6635
    %vm6643 = vmor %vm6641, %vm6642
    %v6644 = vsel %vm6643, %v6635, %v6640
    %v6645 = vrsqrt.pop %v6632
    %v6646 = vmul.f32 %v6645, %v6632
    %v6647 = vmul.f32 %v6646, %v6645
    %v6648 = vmul.f32 0.5, %v6647
    %v6649 = vsub.f32 1.5, %v6648
    %v6650 = vmul.f32 %v6645, %v6649
    %vm6651 = vweird.f32 %v6632
    %vm6652 = vweird.f32 %v6645
    %vm6653 = vmor %vm6651, %vm6652
    %v6654 = vsel %vm6653, %v6645, %v6650
    %v6655 = vrsqrt.pop %v6633
    %v6656 = vmul.f32 %v6655, %v6633
    %v6657 = vmul.f32 %v6656, %v6655
    %v6658 = vmul.f32 0.5, %v6657
    %v6659 = vsub.f32 1.5, %v6658
    %v6660 = vmul.f32 %v6655, %v6659
    %vm6661 = vweird.f32 %v6633
    %vm6662 = vweird.f32 %v6655
    %vm6663 = vmor %vm6661, %vm6662
    %v6664 = vsel %vm6663, %v6655, %v6660
    %v6665 = vrsqrt.pop %v6634
    %v6666 = vmul.f32 %v6665, %v6634
    %v6667 = vmul.f32 %v6666, %v6665
    %v6668 = vmul.f32 0.5, %v6667
    %v6669 = vsub.f32 1.5, %v6668
    %v6670 = vmul.f32 %v6665, %v6669
    %vm6671 = vweird.f32 %v6634
    %vm6672 = vweird.f32 %v6665
    %vm6673 = vmor %vm6671, %vm6672
    %v6674 = vsel %vm6673, %v6665, %v6670
    %v6679 = vrot.slane %v6654, 7
    %v6680 = vrot.slane %v6664, 6
    %v6681 = vrot.slane %v6674, 5
    %v6682 = vsel %vm592, %v6644, %v6679
    %v6683 = vsel %vm594, %v6680, %v6681
    %v6684 = vsel %vm596, %v6682, %v6683
    %v6686 = vmul.f32 %v6630, %v6684
    %v6687 = vld [vmem:[%s9] sm:$0xf]
    %v6689 = vperm.slane %v6686, 0
    %v6690 = vperm.slane %v6686, 1
    %v6691 = vperm.slane %v6686, 2
    %v6692 = vperm.slane %v6686, 3
    %v6697 = vmul.f32 %v6590, %v6689
    %v6698 = vmul.f32 %v6591, %v6690
    %v6699 = vmul.f32 %v6592, %v6691
    %v6700 = vmul.f32 %v6593, %v6692
    %v6705 = vrot.slane %v6698, 7
    %v6706 = vrot.slane %v6699, 6
    %v6707 = vrot.slane %v6700, 5
    %v6708 = vsel %vm592, %v6697, %v6705
    %v6709 = vsel %vm594, %v6706, %v6707
    %v6710 = vsel %vm596, %v6708, %v6709
    %v6712 = vsub.f32 %v6687, %v6710
    %v6713 = vmul.f32 %v6562, %v6689
    %v6714 = vmul.f32 %v6563, %v6690
    %v6715 = vmul.f32 %v6564, %v6691
    %v6716 = vmul.f32 %v6565, %v6692
    %v6718 = vperm.slane %v6712, 0
    %v6719 = vperm.slane %v6712, 1
    %v6720 = vperm.slane %v6712, 2
    %v6721 = vperm.slane %v6712, 3
    %v6726 = vadd.f32 %v6713, %v6718
    %v6727 = vadd.f32 %v6714, %v6719
    %v6728 = vadd.f32 %v6715, %v6720
    %v6729 = vadd.f32 %v6716, %v6721
    %v6730 = vmax.f32 %v6726, 0.0
    %v6731 = vmax.f32 %v6727, 0.0
    %v6732 = vmax.f32 %v6728, 0.0
    %v6733 = vmax.f32 %v6729, 0.0
    %s6734 = smul.u32 4, 64
    %s6735 = smul.u32 %s6734, 1
    %s6736 = sshll.u32 %s6735, 4
    %6737 = dma.done %s181, %s6736
    %v6738 = vld [vmem:[#allocation4] sm:$0xf]
    %v6739 = vld [vmem:[#allocation4 + $0x4] sm:$0xf]
    %v6740 = vld [vmem:[#allocation4 + $0x8] sm:$0xf]
    %v6741 = vld [vmem:[#allocation4 + $0xc] sm:$0xf]
    %v6742 = vld [vmem:[#allocation4 + $0x10] sm:$0xf]
    %v6743 = vld [vmem:[#allocation4 + $0x14] sm:$0xf]
    %v6744 = vld [vmem:[#allocation4 + $0x18] sm:$0xf]
    %v6745 = vld [vmem:[#allocation4 + $0x1c] sm:$0xf]
    %v6746 = vld [vmem:[#allocation4 + $0x20] sm:$0xf]
    %v6747 = vld [vmem:[#allocation4 + $0x24] sm:$0xf]
    %v6748 = vld [vmem:[#allocation4 + $0x28] sm:$0xf]
    %v6749 = vld [vmem:[#allocation4 + $0x2c] sm:$0xf]
    %v6750 = vld [vmem:[#allocation4 + $0x30] sm:$0xf]
    %v6751 = vld [vmem:[#allocation4 + $0x34] sm:$0xf]
    %v6752 = vld [vmem:[#allocation4 + $0x38] sm:$0xf]
    %v6753 = vld [vmem:[#allocation4 + $0x3c] sm:$0xf]
    %v6754 = vld [vmem:[#allocation4 + $0x40] sm:$0xf]
    %v6755 = vld [vmem:[#allocation4 + $0x44] sm:$0xf]
    %v6756 = vld [vmem:[#allocation4 + $0x48] sm:$0xf]
    %v6757 = vld [vmem:[#allocation4 + $0x4c] sm:$0xf]
    %v6758 = vld [vmem:[#allocation4 + $0x50] sm:$0xf]
    %v6759 = vld [vmem:[#allocation4 + $0x54] sm:$0xf]
    %v6760 = vld [vmem:[#allocation4 + $0x58] sm:$0xf]
    %v6761 = vld [vmem:[#allocation4 + $0x5c] sm:$0xf]
    %v6762 = vld [vmem:[#allocation4 + $0x60] sm:$0xf]
    %v6763 = vld [vmem:[#allocation4 + $0x64] sm:$0xf]
    %v6764 = vld [vmem:[#allocation4 + $0x68] sm:$0xf]
    %v6765 = vld [vmem:[#allocation4 + $0x6c] sm:$0xf]
    %v6766 = vld [vmem:[#allocation4 + $0x70] sm:$0xf]
    %v6767 = vld [vmem:[#allocation4 + $0x74] sm:$0xf]
    %v6768 = vld [vmem:[#allocation4 + $0x78] sm:$0xf]
    %v6769 = vld [vmem:[#allocation4 + $0x7c] sm:$0xf]
    %v6770 = vld [vmem:[#allocation4 + $0x80] sm:$0xf]
    %v6771 = vld [vmem:[#allocation4 + $0x84] sm:$0xf]
    %v6772 = vld [vmem:[#allocation4 + $0x88] sm:$0xf]
    %v6773 = vld [vmem:[#allocation4 + $0x8c] sm:$0xf]
    %v6774 = vld [vmem:[#allocation4 + $0x90] sm:$0xf]
    %v6775 = vld [vmem:[#allocation4 + $0x94] sm:$0xf]
    %v6776 = vld [vmem:[#allocation4 + $0x98] sm:$0xf]
    %v6777 = vld [vmem:[#allocation4 + $0x9c] sm:$0xf]
    %v6778 = vld [vmem:[#allocation4 + $0xa0] sm:$0xf]
    %v6779 = vld [vmem:[#allocation4 + $0xa4] sm:$0xf]
    %v6780 = vld [vmem:[#allocation4 + $0xa8] sm:$0xf]
    %v6781 = vld [vmem:[#allocation4 + $0xac] sm:$0xf]
    %v6782 = vld [vmem:[#allocation4 + $0xb0] sm:$0xf]
    %v6783 = vld [vmem:[#allocation4 + $0xb4] sm:$0xf]
    %v6784 = vld [vmem:[#allocation4 + $0xb8] sm:$0xf]
    %v6785 = vld [vmem:[#allocation4 + $0xbc] sm:$0xf]
    %v6786 = vld [vmem:[#allocation4 + $0xc0] sm:$0xf]
    %v6787 = vld [vmem:[#allocation4 + $0xc4] sm:$0xf]
    %v6788 = vld [vmem:[#allocation4 + $0xc8] sm:$0xf]
    %v6789 = vld [vmem:[#allocation4 + $0xcc] sm:$0xf]
    %v6790 = vld [vmem:[#allocation4 + $0xd0] sm:$0xf]
    %v6791 = vld [vmem:[#allocation4 + $0xd4] sm:$0xf]
    %v6792 = vld [vmem:[#allocation4 + $0xd8] sm:$0xf]
    %v6793 = vld [vmem:[#allocation4 + $0xdc] sm:$0xf]
    %v6794 = vld [vmem:[#allocation4 + $0xe0] sm:$0xf]
    %v6795 = vld [vmem:[#allocation4 + $0xe4] sm:$0xf]
    %v6796 = vld [vmem:[#allocation4 + $0xe8] sm:$0xf]
    %v6797 = vld [vmem:[#allocation4 + $0xec] sm:$0xf]
    %v6798 = vld [vmem:[#allocation4 + $0xf0] sm:$0xf]
    %v6799 = vld [vmem:[#allocation4 + $0xf4] sm:$0xf]
    %v6800 = vld [vmem:[#allocation4 + $0xf8] sm:$0xf]
    %v6801 = vld [vmem:[#allocation4 + $0xfc] sm:$0xf]
    %v6802 = vpack.c.bf16 %v6730, %v6730
    %v6803 = vpack.c.bf16 %v6731, %v6731
    %v6804 = vpack.c.bf16 %v6732, %v6732
    %v6805 = vpack.c.bf16 %v6733, %v6733
    %v6806 = vld [vmem:[%s10] sm:$0x1]
    %v6808 = vperm.slane %v6806, 0
    %v6874 = vunpack.c.l.b16 %v6738
    %v6875 = vunpack.c.l.b16 %v6739
    %v6876 = vunpack.c.l.b16 %v6740
    %v6877 = vunpack.c.l.b16 %v6741
    %v6878 = vunpack.c.l.b16 %v6742
    %v6879 = vunpack.c.l.b16 %v6743
    %v6880 = vunpack.c.l.b16 %v6744
    %v6881 = vunpack.c.l.b16 %v6745
    %v6882 = vunpack.c.l.b16 %v6746
    %v6883 = vunpack.c.l.b16 %v6747
    %v6884 = vunpack.c.l.b16 %v6748
    %v6885 = vunpack.c.l.b16 %v6749
    %v6886 = vunpack.c.l.b16 %v6750
    %v6887 = vunpack.c.l.b16 %v6751
    %v6888 = vunpack.c.l.b16 %v6752
    %v6889 = vunpack.c.l.b16 %v6753
    %v6890 = vunpack.c.l.b16 %v6754
    %v6891 = vunpack.c.l.b16 %v6755
    %v6892 = vunpack.c.l.b16 %v6756
    %v6893 = vunpack.c.l.b16 %v6757
    %v6894 = vunpack.c.l.b16 %v6758
    %v6895 = vunpack.c.l.b16 %v6759
    %v6896 = vunpack.c.l.b16 %v6760
    %v6897 = vunpack.c.l.b16 %v6761
    %v6898 = vunpack.c.l.b16 %v6762
    %v6899 = vunpack.c.l.b16 %v6763
    %v6900 = vunpack.c.l.b16 %v6764
    %v6901 = vunpack.c.l.b16 %v6765
    %v6902 = vunpack.c.l.b16 %v6766
    %v6903 = vunpack.c.l.b16 %v6767
    %v6904 = vunpack.c.l.b16 %v6768
    %v6905 = vunpack.c.l.b16 %v6769
    %v6906 = vunpack.c.l.b16 %v6770
    %v6907 = vunpack.c.l.b16 %v6771
    %v6908 = vunpack.c.l.b16 %v6772
    %v6909 = vunpack.c.l.b16 %v6773
    %v6910 = vunpack.c.l.b16 %v6774
    %v6911 = vunpack.c.l.b16 %v6775
    %v6912 = vunpack.c.l.b16 %v6776
    %v6913 = vunpack.c.l.b16 %v6777
    %v6914 = vunpack.c.l.b16 %v6778
    %v6915 = vunpack.c.l.b16 %v6779
    %v6916 = vunpack.c.l.b16 %v6780
    %v6917 = vunpack.c.l.b16 %v6781
    %v6918 = vunpack.c.l.b16 %v6782
    %v6919 = vunpack.c.l.b16 %v6783
    %v6920 = vunpack.c.l.b16 %v6784
    %v6921 = vunpack.c.l.b16 %v6785
    %v6922 = vunpack.c.l.b16 %v6786
    %v6923 = vunpack.c.l.b16 %v6787
    %v6924 = vunpack.c.l.b16 %v6788
    %v6925 = vunpack.c.l.b16 %v6789
    %v6926 = vunpack.c.l.b16 %v6790
    %v6927 = vunpack.c.l.b16 %v6791
    %v6928 = vunpack.c.l.b16 %v6792
    %v6929 = vunpack.c.l.b16 %v6793
    %v6930 = vunpack.c.l.b16 %v6794
    %v6931 = vunpack.c.l.b16 %v6795
    %v6932 = vunpack.c.l.b16 %v6796
    %v6933 = vunpack.c.l.b16 %v6797
    %v6934 = vunpack.c.l.b16 %v6798
    %v6935 = vunpack.c.l.b16 %v6799
    %v6936 = vunpack.c.l.b16 %v6800
    %v6937 = vunpack.c.l.b16 %v6801
    %v6938 = vpack.c.b16 %v6875, %v6874
    %v6939 = vpack.c.b16 %v6877, %v6876
    %v6940 = vpack.c.b16 %v6879, %v6878
    %v6941 = vpack.c.b16 %v6881, %v6880
    %v6942 = vpack.c.b16 %v6883, %v6882
    %v6943 = vpack.c.b16 %v6885, %v6884
    %v6944 = vpack.c.b16 %v6887, %v6886
    %v6945 = vpack.c.b16 %v6889, %v6888
    %v6946 = vpack.c.b16 %v6891, %v6890
    %v6947 = vpack.c.b16 %v6893, %v6892
    %v6948 = vpack.c.b16 %v6895, %v6894
    %v6949 = vpack.c.b16 %v6897, %v6896
    %v6950 = vpack.c.b16 %v6899, %v6898
    %v6951 = vpack.c.b16 %v6901, %v6900
    %v6952 = vpack.c.b16 %v6903, %v6902
    %v6953 = vpack.c.b16 %v6905, %v6904
    %v6954 = vpack.c.b16 %v6907, %v6906
    %v6955 = vpack.c.b16 %v6909, %v6908
    %v6956 = vpack.c.b16 %v6911, %v6910
    %v6957 = vpack.c.b16 %v6913, %v6912
    %v6958 = vpack.c.b16 %v6915, %v6914
    %v6959 = vpack.c.b16 %v6917, %v6916
    %v6960 = vpack.c.b16 %v6919, %v6918
    %v6961 = vpack.c.b16 %v6921, %v6920
    %v6962 = vpack.c.b16 %v6923, %v6922
    %v6963 = vpack.c.b16 %v6925, %v6924
    %v6964 = vpack.c.b16 %v6927, %v6926
    %v6965 = vpack.c.b16 %v6929, %v6928
    %v6966 = vpack.c.b16 %v6931, %v6930
    %v6967 = vpack.c.b16 %v6933, %v6932
    %v6968 = vpack.c.b16 %v6935, %v6934
    %v6969 = vpack.c.b16 %v6937, %v6936
    %7002 = vmatpush.bf16.msra.mxu0 %v6945
    %7003 = vmatpush.bf16.msra.mxu0 %v6944
    %7004 = vmatpush.bf16.msra.mxu0 %v6943
    %7005 = vmatpush.bf16.msra.mxu0 %v6942
    %7006 = vmatpush.bf16.msra.mxu0 %v6941
    %7007 = vmatpush.bf16.msra.mxu0 %v6940
    %7008 = vmatpush.bf16.msra.mxu0 %v6939
    %7009 = vmatpush.bf16.msra.mxu0 %v6938
    %7010 = vmatmul.bf16.gmra.mxu0 %v6802
    %v7011 = vpop.f32.mrf.mxu0
    %v7012 = vadd.f32 %v6808, %v7011
    %v7013 = vpop.f32.mrf.mxu0
    %7014 = vdwg.mxu0
    %7015 = vmatpush.bf16.msra.mxu0 %v6953
    %7016 = vmatpush.bf16.msra.mxu0 %v6952
    %7017 = vmatpush.bf16.msra.mxu0 %v6951
    %7018 = vmatpush.bf16.msra.mxu0 %v6950
    %7019 = vmatpush.bf16.msra.mxu0 %v6949
    %7020 = vmatpush.bf16.msra.mxu0 %v6948
    %7021 = vmatpush.bf16.msra.mxu0 %v6947
    %7022 = vmatpush.bf16.msra.mxu0 %v6946
    %7023 = vmatmul.bf16.gmra.mxu0 %v6803
    %v7024 = vpop.f32.mrf.mxu0
    %v7025 = vadd.f32 %v7012, %v7024
    %v7026 = vpop.f32.mrf.mxu0
    %7027 = vdwg.mxu0
    %7028 = vmatpush.bf16.msra.mxu0 %v6961
    %7029 = vmatpush.bf16.msra.mxu0 %v6960
    %7030 = vmatpush.bf16.msra.mxu0 %v6959
    %7031 = vmatpush.bf16.msra.mxu0 %v6958
    %7032 = vmatpush.bf16.msra.mxu0 %v6957
    %7033 = vmatpush.bf16.msra.mxu0 %v6956
    %7034 = vmatpush.bf16.msra.mxu0 %v6955
    %7035 = vmatpush.bf16.msra.mxu0 %v6954
    %7036 = vmatmul.bf16.gmra.mxu0 %v6804
    %v7037 = vpop.f32.mrf.mxu0
    %v7038 = vadd.f32 %v7025, %v7037
    %v7039 = vpop.f32.mrf.mxu0
    %7040 = vdwg.mxu0
    %7041 = vmatpush.bf16.msra.mxu0 %v6969
    %7042 = vmatpush.bf16.msra.mxu0 %v6968
    %7043 = vmatpush.bf16.msra.mxu0 %v6967
    %7044 = vmatpush.bf16.msra.mxu0 %v6966
    %7045 = vmatpush.bf16.msra.mxu0 %v6965
    %7046 = vmatpush.bf16.msra.mxu0 %v6964
    %7047 = vmatpush.bf16.msra.mxu0 %v6963
    %7048 = vmatpush.bf16.msra.mxu0 %v6962
    %7049 = vmatmul.bf16.gmra.mxu0 %v6805
    %v7050 = vpop.f32.mrf.mxu0
    %v7051 = vadd.f32 %v7038, %v7050
    %v7052 = vpop.f32.mrf.mxu0
    %7053 = vdwg.mxu0
    %v7054 = vsub.f32 0.0, %v7051
    %v7055 = vmul.f32 %v7054, 1.442695
    %v7056 = vpow.pop %v7055
    %v7057 = vadd.f32 %v7056, 1.0
    %v7058 = vrcp.pop %v7057
    %v7059 = vmul.f32 %v7057, %v7058
    %v7060 = vsub.f32 1.0, %v7059
    %v7061 = vmul.f32 %v7058, %v7060
    %v7062 = vadd.f32 %v7058, %v7061
    %vm7063 = vweird.f32 %v7057
    %vm7064 = vweird.f32 %v7058
    %vm7065 = vmor %vm7063, %vm7064
    %v7066 = vsel %vm7065, %v7058, %v7062
    %v7067 = vand.u32 2147483647, %v7057
    %vm7068 = vcmp.eq.f32.partialorder %v7067, 8.507059e+37
    %v7069 = vand.u32 %v7057, 2147483648
    %v7070 = vor.u32 1.1754944e-38, %v7069
    %v7071 = vsel %vm7068, %v7070, %v7066
    %v7072 = vmul.f32 1.0, %v7071
    %7073 = vst [vmem:[#allocation20] sm:$0xff] %v7072
    // Predicated region
    $region90: #{tpu_custom_call.1} parent=1 // pred_check
      _
    $region91: #{tpu_custom_call.1} parent=1 // pred_check_branch
      %7075 = sbr.rel (0) target = $region93
    $region92: #{tpu_custom_call.1} parent=1 // pred_region
      %7077 = vsyncadd [#allocation8], 0
      %s7079 = sshll.u32 [#allocation20], 4
      %s7080 = int_to_ptr.vmem [resolvable:$true] %s7079
      %s7081 = sshll.u32 %s14, 4
      %s7082 = int_to_ptr.hbm [resolvable:$true] %s7081
      %7084 = dma.vmem_to_hbm [thread:$0]  %s7080, 128, %s7082, [#allocation8]
    $region93: #{tpu_custom_call.1} parent=1 // pred_fallthru
      _
    // Predicated region
    $region94: #{tpu_custom_call.1} parent=1 // pred_check
      _
    $region95: #{tpu_custom_call.1} parent=1 // pred_check_branch
      %7086 = sbr.rel (0) target = $region97
    $region96: #{tpu_custom_call.1} parent=1 // pred_region
      %7088 = dma.done [#allocation8], 128
    $region97: #{tpu_custom_call.1} parent=1 // pred_fallthru
      _
    %7089 = vsyncpa [#allocation7], 1
    %7090 = vsyncpa [#allocation10], 1
    %7091 = vsyncpa [#allocation13], 1
    %7092 = vsyncpa [#allocation16], 1
    %7093 = vsyncpa [#allocation19], 1
    %7094 = vsyncpa [#allocation8], 1
  %7095 = vsyncmov [#allocation5]
  %s7096 = vpop.sfrf %7095
  %p7097 = scmp.eq.s32.totalorder %s7096, 0
  %p7098 = pneg %p7097
  %7100 = shalt.err (%p7098)
  %s7101 = scalar_lea.sflag [#allocation5], 1
  %7102 = vsyncmov %s7101
  %s7103 = vpop.sfrf %7102
  %p7104 = scmp.eq.s32.totalorder %s7103, 0
  %p7105 = pneg %p7104
  %7107 = shalt.err (%p7105)
  %s7108 = scalar_lea.sflag [#allocation5], 2
  %7109 = vsyncmov %s7108
  %s7110 = vpop.sfrf %7109
  %p7111 = scmp.eq.s32.totalorder %s7110, 0
  %p7112 = pneg %p7111
  %7114 = shalt.err (%p7112)

</llo_original>
